<compile_context>
chip_gen: v7x
topology: tpu7x:2x2x1
jax: 0.10.0
libtpu: 0.0.40
codegen_flags: <defaults>
</compile_context>

<pallas_src>
import functools

import numpy as np
import jax
import jax.numpy as jnp
from jax import lax
from jax.experimental import pallas as pl
from jax.experimental.pallas import tpu as pltpu


# ---------------------------------------------------------------------------
# Fused Pallas kernel: conv1..conv4 (ReLU, norm folded into conv1)
#                      -> Linear -> LayerNorm -> Tanh, for B_TILE samples.
# ---------------------------------------------------------------------------
def _encoder_kernel(obs_ref, w1, b1, w2, b2, w3, b3, w4, b4,
                    wt, bt, g, be, o_ref,
                    x1, x2, x3, x4, *, dims, btile, eps):
    oh1, oh2, oh3, oh4, ow4, cout = dims
    B = btile

    def conv(load, w_ref, b_ref):
        # 3x3 conv as 3 matmuls (one per kernel row) against banded weights.
        # load(i) returns a (oh_out * B, Win * Cin) slab (rows = spatial row
        # major, batch minor), so the whole batch tile rides in the M dim.
        y = jnp.dot(load(0), w_ref[0], preferred_element_type=jnp.float32)
        y = y + jnp.dot(load(1), w_ref[1], preferred_element_type=jnp.float32)
        y = y + jnp.dot(load(2), w_ref[2], preferred_element_type=jnp.float32)
        return jnp.maximum(y + b_ref[...], 0.0)

    # conv1 (stride 2): obs rows are de-interleaved by parity in the wrapper;
    # input row (2*q + p) of sample b lives at obs_ref[p, q*B + b, :].
    # Normalization (x/255 - 0.5) is folded into w1/b1 at pack time.
    x1[...] = conv(
        lambda i: obs_ref[i % 2, (i // 2) * B:((i // 2) + oh1) * B, :],
        w1, b1)
    # conv2..conv4 (stride 1): contiguous, sublane-aligned (row, batch) slabs.
    x2[...] = conv(lambda i: x1[i * B:(i + oh2) * B, :], w2, b2)
    x3[...] = conv(lambda i: x2[i * B:(i + oh3) * B, :], w3, b3)
    x4[...] = conv(lambda i: x3[i * B:(i + oh4) * B, :], w4, b4)

    # Trunk: Linear -> LayerNorm -> Tanh.  wt is pre-permuted to (H, W, C)
    # flatten order, so each conv4 spatial row (all B samples at once, M = B)
    # multiplies one row-chunk of wt — no transpose of x4 needed.
    row_k = ow4 * cout
    y = bt[...]                                            # (1, F) -> broadcast
    for r in range(oh4):
        y = y + jnp.dot(x4[r * B:(r + 1) * B, :],
                        wt[r * row_k:(r + 1) * row_k, :],
                        preferred_element_type=jnp.float32)
    mean = jnp.mean(y, axis=-1, keepdims=True)
    var = jnp.mean((y - mean) ** 2, axis=-1, keepdims=True)
    yn = (y - mean) * lax.rsqrt(var + eps)
    o_ref[...] = jnp.tanh(yn * g[...] + be[...])           # (B, F)


# ---------------------------------------------------------------------------
# Wrapper: one pallas_call, B_TILE samples per grid step
# ---------------------------------------------------------------------------
@functools.partial(jax.jit, static_argnames=("b_tile",))
def encoder_forward(obs_nchw, kp, b_tile=8):
    """obs_nchw: (N, C, H, W) float32 in [0, 255]; kp: packed kernel params."""
    N, C, H, W = obs_nchw.shape
    assert H % 2 == 0, "stride-2 parity de-interleave assumes even H"
    oh1, ow1 = (H - 3) // 2 + 1, (W - 3) // 2 + 1
    oh2, ow2 = oh1 - 2, ow1 - 2
    oh3, ow3 = oh2 - 2, ow2 - 2
    oh4, ow4 = oh3 - 2, ow3 - 2
    assert oh4 >= 1 and ow4 >= 1, "obs too small for the 3x3 conv chain"
    cout = 32
    F = kp["bt"].shape[-1]
    hh = H // 2

    # Pad batch up to a multiple of the batch tile.
    n_pad = -(-N // b_tile) * b_tile
    if n_pad != N:
        obs_nchw = jnp.pad(obs_nchw,
                           ((0, n_pad - N), (0, 0), (0, 0), (0, 0)))
    T = n_pad // b_tile

    # NCHW -> (tile, parity, q, batch, W*C) -> (T*2, hh*b_tile, W*C).
    # Row index within a parity block is q*b_tile + b (batch minor), matching
    # the in-kernel activation layout so conv1 loads are contiguous slices.
    # TODO(synk): store replay-buffer obs in this layout (and as uint8) to
    #             remove these wrapper-side HBM relayout passes entirely.
    x = jnp.transpose(obs_nchw, (0, 2, 3, 1)).reshape(n_pad, hh, 2, W * C)
    x = x.reshape(T, b_tile, hh, 2, W * C).transpose(0, 3, 2, 1, 4)
    x = x.reshape(T * 2, hh * b_tile, W * C)

    def full_spec(arr):
        return pl.BlockSpec(arr.shape, lambda n, nd=arr.ndim: (0,) * nd)

    in_specs = [pl.BlockSpec((2, hh * b_tile, W * C), lambda n: (n, 0, 0))]
    args = [x]
    for name in ("w1", "b1", "w2", "b2", "w3", "b3", "w4", "b4",
                 "wt", "bt", "ln_g", "ln_b"):
        a = kp[name]
        in_specs.append(full_spec(a))
        args.append(a)

    out = pl.pallas_call(
        functools.partial(_encoder_kernel,
                          dims=(oh1, oh2, oh3, oh4, ow4, cout),
                          btile=b_tile, eps=1e-5),
        grid_spec=pltpu.PrefetchScalarGridSpec(
            num_scalar_prefetch=0,
            grid=(T,),
            in_specs=in_specs,
            out_specs=pl.BlockSpec((b_tile, F), lambda n: (n, 0)),
            scratch_shapes=[
                pltpu.VMEM((oh1 * b_tile, ow1 * cout), jnp.float32),  # conv1
                pltpu.VMEM((oh2 * b_tile, ow2 * cout), jnp.float32),  # conv2
                pltpu.VMEM((oh3 * b_tile, ow3 * cout), jnp.float32),  # conv3
                pltpu.VMEM((oh4 * b_tile, ow4 * cout), jnp.float32),  # conv4
            ]),
        out_shape=jax.ShapeDtypeStruct((n_pad, F), jnp.float32),
        compiler_params=pltpu.CompilerParams(
            dimension_semantics=("parallel",)),
    )(*args)
    return out[:N]


# ---------------------------------------------------------------------------
# Host-side parameter packing (numpy; one-time weight prep)
# ---------------------------------------------------------------------------
def pack_params(params, obs_shape):
    """Band conv weights, fold obs normalization into conv1, permute trunk."""
    C, H, W = obs_shape
    cout = 32
    oh1, ow1 = (H - 3) // 2 + 1, (W - 3) // 2 + 1
    oh4, ow4 = oh1 - 6, ow1 - 6

    def band(w_hwio, win, stride):
        w = np.asarray(w_hwio, np.float32)                 # (3, 3, cin, cout)
        kh, kw, cin, co = w.shape
        wout = (win - kw) // stride + 1
        m = np.zeros((kh, win * cin, wout * co), np.float32)
        for i in range(kh):
            for j in range(kw):
                for wo in range(wout):
                    wi = stride * wo + j
                    m[i, wi * cin:(wi + 1) * cin, wo * co:(wo + 1) * co] = w[i, j]
        return jnp.asarray(m)

    def tile_bias(b, wout):
        return jnp.asarray(np.tile(np.asarray(b, np.float32), wout)[None, :])

    # Fold `obs/255 - 0.5` into conv1:
    #   conv(x/255 - 0.5; W, b) = conv(x; W/255, b - 0.5 * sum_{kh,kw,cin} W).
    w1 = np.asarray(params["w1"], np.float32)
    b1 = np.asarray(params["b1"], np.float32)
    w1_eff = w1 * (1.0 / 255.0)
    b1_eff = b1 - 0.5 * w1.sum(axis=(0, 1, 2))

    wt = np.asarray(params["wt"], np.float32)              # (cout*oh4*ow4, F)
    F = wt.shape[1]
    # PyTorch flatten order (C, H, W)  ->  kernel layout order (H, W, C).
    wt_hwc = (wt.reshape(cout, oh4, ow4, F)
                .transpose(1, 2, 0, 3)
                .reshape(oh4 * ow4 * cout, F))

    return {
        "w1": band(w1_eff, W, 2),             "b1": tile_bias(b1_eff, ow1),
        "w2": band(params["w2"], ow1, 1),     "b2": tile_bias(params["b2"], ow1 - 2),
        "w3": band(params["w3"], ow1 - 2, 1), "b3": tile_bias(params["b3"], ow1 - 4),
        "w4": band(params["w4"], ow1 - 4, 1), "b4": tile_bias(params["b4"], ow1 - 6),
        "wt": jnp.asarray(wt_hwc),
        "bt": jnp.asarray(np.asarray(params["bt"], np.float32).reshape(1, F)),
        "ln_g": jnp.asarray(np.asarray(params["ln_g"], np.float32).reshape(1, F)),
        "ln_b": jnp.asarray(np.asarray(params["ln_b"], np.float32).reshape(1, F)),
    }


# ---------------------------------------------------------------------------
# Pure-JAX reference (for correctness check)
# ---------------------------------------------------------------------------
def encoder_reference(obs_nchw, params):
    x = jnp.transpose(obs_nchw, (0, 2, 3, 1)) / 255.0 - 0.5
    dn = ("NHWC", "HWIO", "NHWC")
    for (w, b, s) in [(params["w1"], params["b1"], 2),
                      (params["w2"], params["b2"], 1),
                      (params["w3"], params["b3"], 1),
                      (params["w4"], params["b4"], 1)]:
        x = lax.conv_general_dilated(x, w, (s, s), "VALID",
                                     dimension_numbers=dn) + b
        x = jnp.maximum(x, 0.0)
    h = jnp.transpose(x, (0, 3, 1, 2)).reshape(x.shape[0], -1)
    y = h @ params["wt"] + params["bt"]
    mean = jnp.mean(y, axis=-1, keepdims=True)
    var = jnp.mean((y - mean) ** 2, axis=-1, keepdims=True)
    yn = (y - mean) * lax.rsqrt(var + 1e-5)
    return jnp.tanh(yn * params["ln_g"] + params["ln_b"])


# ---------------------------------------------------------------------------
# Deterministic synthetic parameters
# ---------------------------------------------------------------------------
def make_params(key, in_ch, feature_dim, repr_dim):
    ks = jax.random.split(key, 6)

    def w(k, shape, scale=0.05):
        return (scale * jax.random.normal(k, shape)).astype(jnp.float32)

    return {
        "w1": w(ks[0], (3, 3, in_ch, 32)), "b1": jnp.zeros((32,), jnp.float32),
        "w2": w(ks[1], (3, 3, 32, 32)),    "b2": jnp.zeros((32,), jnp.float32),
        "w3": w(ks[2], (3, 3, 32, 32)),    "b3": jnp.zeros((32,), jnp.float32),
        "w4": w(ks[3], (3, 3, 32, 32)),    "b4": jnp.zeros((32,), jnp.float32),
        "wt": w(ks[4], (repr_dim, feature_dim)),
        "bt": jnp.zeros((feature_dim,), jnp.float32),
        "ln_g": jnp.ones((1, feature_dim), jnp.float32),
        "ln_b": jnp.zeros((1, feature_dim), jnp.float32),
    }


if __name__ == "__main__":
    # Small shapes consistent with the module: obs_shape = (4, 24, 24),
    # feature_dim = 32.  Conv chain: 24 --s2--> 11 -> 9 -> 7 -> 5, so
    # repr_dim = 32 * 5 * 5 = 800.  N = 16 -> 2 grid steps of B_TILE = 8.
    N, C, H, W = 16, 4, 24, 24
    feature_dim = 32
    oh1, ow1 = (H - 3) // 2 + 1, (W - 3) // 2 + 1
    repr_dim = 32 * (oh1 - 6) * (ow1 - 6)

    key = jax.random.PRNGKey(0)
    k_obs, k_par = jax.random.split(key)
    obs = jax.random.uniform(k_obs, (N, C, H, W), jnp.float32,
                             minval=0.0, maxval=255.0)
    params = make_params(k_par, C, feature_dim, repr_dim)
    kparams = pack_params(params, (C, H, W))

    out = jax.block_until_ready(encoder_forward(obs, kparams))
    ref = jax.block_until_ready(encoder_reference(obs, params))

    assert out.shape == (N, feature_dim), out.shape
    assert jnp.allclose(out, ref, rtol=1e-4, atol=1e-4), \
        float(jnp.max(jnp.abs(out - ref)))

    print("KERNEL_OK")
</pallas_src>

<mosaic_0001>
module attributes {stable_mosaic.version = 11 : i64} {
  func.func @_encoder_kernel(%arg0: i32, %arg1: memref<2x96x96xf32, #tpu.memory_space<vmem>>, %arg2: memref<3x96x352xf32, #tpu.memory_space<vmem>>, %arg3: memref<1x352xf32, #tpu.memory_space<vmem>>, %arg4: memref<3x352x288xf32, #tpu.memory_space<vmem>>, %arg5: memref<1x288xf32, #tpu.memory_space<vmem>>, %arg6: memref<3x288x224xf32, #tpu.memory_space<vmem>>, %arg7: memref<1x224xf32, #tpu.memory_space<vmem>>, %arg8: memref<3x224x160xf32, #tpu.memory_space<vmem>>, %arg9: memref<1x160xf32, #tpu.memory_space<vmem>>, %arg10: memref<800x32xf32, #tpu.memory_space<vmem>>, %arg11: memref<1x32xf32, #tpu.memory_space<vmem>>, %arg12: memref<1x32xf32, #tpu.memory_space<vmem>>, %arg13: memref<1x32xf32, #tpu.memory_space<vmem>>, %arg14: memref<8x32xf32, #tpu.memory_space<vmem>>, %arg15: memref<88x352xf32, #tpu.memory_space<vmem>>, %arg16: memref<72x288xf32, #tpu.memory_space<vmem>>, %arg17: memref<56x224xf32, #tpu.memory_space<vmem>>, %arg18: memref<40x160xf32, #tpu.memory_space<vmem>>) attributes {dimension_semantics = [#tpu.dimension_semantics<parallel>], iteration_bounds = array<i64: 2>, scalar_prefetch = 0 : i64, scratch_operands = 4 : i64, tpu.core_type = #tpu.core_type<tc>, window_params = [{transform_indices = @transform_0, window_bounds = array<i64: 2, 96, 96>}, {pipeline_mode = #tpu.pipeline_mode<synchronous>, transform_indices = @transform_1, window_bounds = array<i64: 3, 96, 352>}, {pipeline_mode = #tpu.pipeline_mode<synchronous>, transform_indices = @transform_2, window_bounds = array<i64: 1, 352>}, {pipeline_mode = #tpu.pipeline_mode<synchronous>, transform_indices = @transform_3, window_bounds = array<i64: 3, 352, 288>}, {pipeline_mode = #tpu.pipeline_mode<synchronous>, transform_indices = @transform_4, window_bounds = array<i64: 1, 288>}, {pipeline_mode = #tpu.pipeline_mode<synchronous>, transform_indices = @transform_5, window_bounds = array<i64: 3, 288, 224>}, {pipeline_mode = #tpu.pipeline_mode<synchronous>, transform_indices = @transform_6, window_bounds = array<i64: 1, 224>}, {pipeline_mode = #tpu.pipeline_mode<synchronous>, transform_indices = @transform_7, window_bounds = array<i64: 3, 224, 160>}, {pipeline_mode = #tpu.pipeline_mode<synchronous>, transform_indices = @transform_8, window_bounds = array<i64: 1, 160>}, {pipeline_mode = #tpu.pipeline_mode<synchronous>, transform_indices = @transform_9, window_bounds = array<i64: 800, 32>}, {pipeline_mode = #tpu.pipeline_mode<synchronous>, transform_indices = @transform_10, window_bounds = array<i64: 1, 32>}, {pipeline_mode = #tpu.pipeline_mode<synchronous>, transform_indices = @transform_11, window_bounds = array<i64: 1, 32>}, {pipeline_mode = #tpu.pipeline_mode<synchronous>, transform_indices = @transform_12, window_bounds = array<i64: 1, 32>}, {transform_indices = @transform_13, window_bounds = array<i64: 8, 32>}]} {
    %c0 = arith.constant 0 : index
    %c0_0 = arith.constant 0 : index
    %c0_1 = arith.constant 0 : index
    %0 = vector.load %arg1[%c0, %c0_0, %c0_1] : memref<2x96x96xf32, #tpu.memory_space<vmem>>, vector<1x88x96xf32>
    %1 = vector.shape_cast %0 : vector<1x88x96xf32> to vector<88x96xf32>
    %c0_2 = arith.constant 0 : index
    %c0_3 = arith.constant 0 : index
    %c0_4 = arith.constant 0 : index
    %2 = vector.load %arg2[%c0_2, %c0_3, %c0_4] : memref<3x96x352xf32, #tpu.memory_space<vmem>>, vector<1x96x352xf32>
    %3 = vector.shape_cast %2 : vector<1x96x352xf32> to vector<96x352xf32>
    %cst = arith.constant dense<0.000000e+00> : vector<88x352xf32>
    %4 = tpu.matmul %1, %3, %cst {dimension_numbers = #tpu.dot_dimension_numbers<[1], [0], [0], [1], [0, 0, 1, 1], [], []>} : vector<88x96xf32>, vector<96x352xf32>, vector<88x352xf32> -> vector<88x352xf32>
    %c1 = arith.constant 1 : index
    %c0_5 = arith.constant 0 : index
    %c0_6 = arith.constant 0 : index
    %5 = vector.load %arg1[%c1, %c0_5, %c0_6] : memref<2x96x96xf32, #tpu.memory_space<vmem>>, vector<1x88x96xf32>
    %6 = vector.shape_cast %5 : vector<1x88x96xf32> to vector<88x96xf32>
    %c1_7 = arith.constant 1 : index
    %c0_8 = arith.constant 0 : index
    %c0_9 = arith.constant 0 : index
    %7 = vector.load %arg2[%c1_7, %c0_8, %c0_9] : memref<3x96x352xf32, #tpu.memory_space<vmem>>, vector<1x96x352xf32>
    %8 = vector.shape_cast %7 : vector<1x96x352xf32> to vector<96x352xf32>
    %cst_10 = arith.constant dense<0.000000e+00> : vector<88x352xf32>
    %9 = tpu.matmul %6, %8, %cst_10 {dimension_numbers = #tpu.dot_dimension_numbers<[1], [0], [0], [1], [0, 0, 1, 1], [], []>} : vector<88x96xf32>, vector<96x352xf32>, vector<88x352xf32> -> vector<88x352xf32>
    %10 = arith.addf %4, %9 : vector<88x352xf32>
    %c0_11 = arith.constant 0 : index
    %c8 = arith.constant 8 : index
    %c0_12 = arith.constant 0 : index
    %11 = vector.load %arg1[%c0_11, %c8, %c0_12] : memref<2x96x96xf32, #tpu.memory_space<vmem>>, vector<1x88x96xf32>
    %12 = vector.shape_cast %11 : vector<1x88x96xf32> to vector<88x96xf32>
    %c2 = arith.constant 2 : index
    %c0_13 = arith.constant 0 : index
    %c0_14 = arith.constant 0 : index
    %13 = vector.load %arg2[%c2, %c0_13, %c0_14] : memref<3x96x352xf32, #tpu.memory_space<vmem>>, vector<1x96x352xf32>
    %14 = vector.shape_cast %13 : vector<1x96x352xf32> to vector<96x352xf32>
    %cst_15 = arith.constant dense<0.000000e+00> : vector<88x352xf32>
    %15 = tpu.matmul %12, %14, %cst_15 {dimension_numbers = #tpu.dot_dimension_numbers<[1], [0], [0], [1], [0, 0, 1, 1], [], []>} : vector<88x96xf32>, vector<96x352xf32>, vector<88x352xf32> -> vector<88x352xf32>
    %16 = arith.addf %10, %15 : vector<88x352xf32>
    %c0_16 = arith.constant 0 : index
    %c0_17 = arith.constant 0 : index
    %17 = vector.load %arg3[%c0_16, %c0_17] : memref<1x352xf32, #tpu.memory_space<vmem>>, vector<1x352xf32>
    %18 = vector.broadcast %17 : vector<1x352xf32> to vector<88x352xf32>
    %19 = arith.addf %16, %18 : vector<88x352xf32>
    %cst_18 = arith.constant 0.000000e+00 : f32
    %20 = vector.broadcast %cst_18 : f32 to vector<88x352xf32>
    %21 = arith.maximumf %19, %20 : vector<88x352xf32>
    %c0_19 = arith.constant 0 : index
    %c0_20 = arith.constant 0 : index
    %22 = vector.load %arg15[%c0_19, %c0_20] : memref<88x352xf32, #tpu.memory_space<vmem>>, vector<88x352xf32>
    tpu.vector_store %arg15[%c0_19, %c0_20], %21 {strides = array<i32>} : memref<88x352xf32, #tpu.memory_space<vmem>>, vector<88x352xf32>,
    %c0_21 = arith.constant 0 : index
    %c0_22 = arith.constant 0 : index
    %23 = vector.load %arg15[%c0_21, %c0_22] : memref<88x352xf32, #tpu.memory_space<vmem>>, vector<72x352xf32>
    %c0_23 = arith.constant 0 : index
    %c0_24 = arith.constant 0 : index
    %c0_25 = arith.constant 0 : index
    %24 = vector.load %arg4[%c0_23, %c0_24, %c0_25] : memref<3x352x288xf32, #tpu.memory_space<vmem>>, vector<1x352x288xf32>
    %25 = vector.shape_cast %24 : vector<1x352x288xf32> to vector<352x288xf32>
    %cst_26 = arith.constant dense<0.000000e+00> : vector<72x288xf32>
    %26 = tpu.matmul %23, %25, %cst_26 {dimension_numbers = #tpu.dot_dimension_numbers<[1], [0], [0], [1], [0, 0, 1, 1], [], []>} : vector<72x352xf32>, vector<352x288xf32>, vector<72x288xf32> -> vector<72x288xf32>
    %c8_27 = arith.constant 8 : index
    %c0_28 = arith.constant 0 : index
    %27 = vector.load %arg15[%c8_27, %c0_28] : memref<88x352xf32, #tpu.memory_space<vmem>>, vector<72x352xf32>
    %c1_29 = arith.constant 1 : index
    %c0_30 = arith.constant 0 : index
    %c0_31 = arith.constant 0 : index
    %28 = vector.load %arg4[%c1_29, %c0_30, %c0_31] : memref<3x352x288xf32, #tpu.memory_space<vmem>>, vector<1x352x288xf32>
    %29 = vector.shape_cast %28 : vector<1x352x288xf32> to vector<352x288xf32>
    %cst_32 = arith.constant dense<0.000000e+00> : vector<72x288xf32>
    %30 = tpu.matmul %27, %29, %cst_32 {dimension_numbers = #tpu.dot_dimension_numbers<[1], [0], [0], [1], [0, 0, 1, 1], [], []>} : vector<72x352xf32>, vector<352x288xf32>, vector<72x288xf32> -> vector<72x288xf32>
    %31 = arith.addf %26, %30 : vector<72x288xf32>
    %c16 = arith.constant 16 : index
    %c0_33 = arith.constant 0 : index
    %32 = vector.load %arg15[%c16, %c0_33] : memref<88x352xf32, #tpu.memory_space<vmem>>, vector<72x352xf32>
    %c2_34 = arith.constant 2 : index
    %c0_35 = arith.constant 0 : index
    %c0_36 = arith.constant 0 : index
    %33 = vector.load %arg4[%c2_34, %c0_35, %c0_36] : memref<3x352x288xf32, #tpu.memory_space<vmem>>, vector<1x352x288xf32>
    %34 = vector.shape_cast %33 : vector<1x352x288xf32> to vector<352x288xf32>
    %cst_37 = arith.constant dense<0.000000e+00> : vector<72x288xf32>
    %35 = tpu.matmul %32, %34, %cst_37 {dimension_numbers = #tpu.dot_dimension_numbers<[1], [0], [0], [1], [0, 0, 1, 1], [], []>} : vector<72x352xf32>, vector<352x288xf32>, vector<72x288xf32> -> vector<72x288xf32>
    %36 = arith.addf %31, %35 : vector<72x288xf32>
    %c0_38 = arith.constant 0 : index
    %c0_39 = arith.constant 0 : index
    %37 = vector.load %arg5[%c0_38, %c0_39] : memref<1x288xf32, #tpu.memory_space<vmem>>, vector<1x288xf32>
    %38 = vector.broadcast %37 : vector<1x288xf32> to vector<72x288xf32>
    %39 = arith.addf %36, %38 : vector<72x288xf32>
    %cst_40 = arith.constant 0.000000e+00 : f32
    %40 = vector.broadcast %cst_40 : f32 to vector<72x288xf32>
    %41 = arith.maximumf %39, %40 : vector<72x288xf32>
    %c0_41 = arith.constant 0 : index
    %c0_42 = arith.constant 0 : index
    %42 = vector.load %arg16[%c0_41, %c0_42] : memref<72x288xf32, #tpu.memory_space<vmem>>, vector<72x288xf32>
    tpu.vector_store %arg16[%c0_41, %c0_42], %41 {strides = array<i32>} : memref<72x288xf32, #tpu.memory_space<vmem>>, vector<72x288xf32>,
    %c0_43 = arith.constant 0 : index
    %c0_44 = arith.constant 0 : index
    %43 = vector.load %arg16[%c0_43, %c0_44] : memref<72x288xf32, #tpu.memory_space<vmem>>, vector<56x288xf32>
    %c0_45 = arith.constant 0 : index
    %c0_46 = arith.constant 0 : index
    %c0_47 = arith.constant 0 : index
    %44 = vector.load %arg6[%c0_45, %c0_46, %c0_47] : memref<3x288x224xf32, #tpu.memory_space<vmem>>, vector<1x288x224xf32>
    %45 = vector.shape_cast %44 : vector<1x288x224xf32> to vector<288x224xf32>
    %cst_48 = arith.constant dense<0.000000e+00> : vector<56x224xf32>
    %46 = tpu.matmul %43, %45, %cst_48 {dimension_numbers = #tpu.dot_dimension_numbers<[1], [0], [0], [1], [0, 0, 1, 1], [], []>} : vector<56x288xf32>, vector<288x224xf32>, vector<56x224xf32> -> vector<56x224xf32>
    %c8_49 = arith.constant 8 : index
    %c0_50 = arith.constant 0 : index
    %47 = vector.load %arg16[%c8_49, %c0_50] : memref<72x288xf32, #tpu.memory_space<vmem>>, vector<56x288xf32>
    %c1_51 = arith.constant 1 : index
    %c0_52 = arith.constant 0 : index
    %c0_53 = arith.constant 0 : index
    %48 = vector.load %arg6[%c1_51, %c0_52, %c0_53] : memref<3x288x224xf32, #tpu.memory_space<vmem>>, vector<1x288x224xf32>
    %49 = vector.shape_cast %48 : vector<1x288x224xf32> to vector<288x224xf32>
    %cst_54 = arith.constant dense<0.000000e+00> : vector<56x224xf32>
    %50 = tpu.matmul %47, %49, %cst_54 {dimension_numbers = #tpu.dot_dimension_numbers<[1], [0], [0], [1], [0, 0, 1, 1], [], []>} : vector<56x288xf32>, vector<288x224xf32>, vector<56x224xf32> -> vector<56x224xf32>
    %51 = arith.addf %46, %50 : vector<56x224xf32>
    %c16_55 = arith.constant 16 : index
    %c0_56 = arith.constant 0 : index
    %52 = vector.load %arg16[%c16_55, %c0_56] : memref<72x288xf32, #tpu.memory_space<vmem>>, vector<56x288xf32>
    %c2_57 = arith.constant 2 : index
    %c0_58 = arith.constant 0 : index
    %c0_59 = arith.constant 0 : index
    %53 = vector.load %arg6[%c2_57, %c0_58, %c0_59] : memref<3x288x224xf32, #tpu.memory_space<vmem>>, vector<1x288x224xf32>
    %54 = vector.shape_cast %53 : vector<1x288x224xf32> to vector<288x224xf32>
    %cst_60 = arith.constant dense<0.000000e+00> : vector<56x224xf32>
    %55 = tpu.matmul %52, %54, %cst_60 {dimension_numbers = #tpu.dot_dimension_numbers<[1], [0], [0], [1], [0, 0, 1, 1], [], []>} : vector<56x288xf32>, vector<288x224xf32>, vector<56x224xf32> -> vector<56x224xf32>
    %56 = arith.addf %51, %55 : vector<56x224xf32>
    %c0_61 = arith.constant 0 : index
    %c0_62 = arith.constant 0 : index
    %57 = vector.load %arg7[%c0_61, %c0_62] : memref<1x224xf32, #tpu.memory_space<vmem>>, vector<1x224xf32>
    %58 = vector.broadcast %57 : vector<1x224xf32> to vector<56x224xf32>
    %59 = arith.addf %56, %58 : vector<56x224xf32>
    %cst_63 = arith.constant 0.000000e+00 : f32
    %60 = vector.broadcast %cst_63 : f32 to vector<56x224xf32>
    %61 = arith.maximumf %59, %60 : vector<56x224xf32>
    %c0_64 = arith.constant 0 : index
    %c0_65 = arith.constant 0 : index
    %62 = vector.load %arg17[%c0_64, %c0_65] : memref<56x224xf32, #tpu.memory_space<vmem>>, vector<56x224xf32>
    tpu.vector_store %arg17[%c0_64, %c0_65], %61 {strides = array<i32>} : memref<56x224xf32, #tpu.memory_space<vmem>>, vector<56x224xf32>,
    %c0_66 = arith.constant 0 : index
    %c0_67 = arith.constant 0 : index
    %63 = vector.load %arg17[%c0_66, %c0_67] : memref<56x224xf32, #tpu.memory_space<vmem>>, vector<40x224xf32>
    %c0_68 = arith.constant 0 : index
    %c0_69 = arith.constant 0 : index
    %c0_70 = arith.constant 0 : index
    %64 = vector.load %arg8[%c0_68, %c0_69, %c0_70] : memref<3x224x160xf32, #tpu.memory_space<vmem>>, vector<1x224x160xf32>
    %65 = vector.shape_cast %64 : vector<1x224x160xf32> to vector<224x160xf32>
    %cst_71 = arith.constant dense<0.000000e+00> : vector<40x160xf32>
    %66 = tpu.matmul %63, %65, %cst_71 {dimension_numbers = #tpu.dot_dimension_numbers<[1], [0], [0], [1], [0, 0, 1, 1], [], []>} : vector<40x224xf32>, vector<224x160xf32>, vector<40x160xf32> -> vector<40x160xf32>
    %c8_72 = arith.constant 8 : index
    %c0_73 = arith.constant 0 : index
    %67 = vector.load %arg17[%c8_72, %c0_73] : memref<56x224xf32, #tpu.memory_space<vmem>>, vector<40x224xf32>
    %c1_74 = arith.constant 1 : index
    %c0_75 = arith.constant 0 : index
    %c0_76 = arith.constant 0 : index
    %68 = vector.load %arg8[%c1_74, %c0_75, %c0_76] : memref<3x224x160xf32, #tpu.memory_space<vmem>>, vector<1x224x160xf32>
    %69 = vector.shape_cast %68 : vector<1x224x160xf32> to vector<224x160xf32>
    %cst_77 = arith.constant dense<0.000000e+00> : vector<40x160xf32>
    %70 = tpu.matmul %67, %69, %cst_77 {dimension_numbers = #tpu.dot_dimension_numbers<[1], [0], [0], [1], [0, 0, 1, 1], [], []>} : vector<40x224xf32>, vector<224x160xf32>, vector<40x160xf32> -> vector<40x160xf32>
    %71 = arith.addf %66, %70 : vector<40x160xf32>
    %c16_78 = arith.constant 16 : index
    %c0_79 = arith.constant 0 : index
    %72 = vector.load %arg17[%c16_78, %c0_79] : memref<56x224xf32, #tpu.memory_space<vmem>>, vector<40x224xf32>
    %c2_80 = arith.constant 2 : index
    %c0_81 = arith.constant 0 : index
    %c0_82 = arith.constant 0 : index
    %73 = vector.load %arg8[%c2_80, %c0_81, %c0_82] : memref<3x224x160xf32, #tpu.memory_space<vmem>>, vector<1x224x160xf32>
    %74 = vector.shape_cast %73 : vector<1x224x160xf32> to vector<224x160xf32>
    %cst_83 = arith.constant dense<0.000000e+00> : vector<40x160xf32>
    %75 = tpu.matmul %72, %74, %cst_83 {dimension_numbers = #tpu.dot_dimension_numbers<[1], [0], [0], [1], [0, 0, 1, 1], [], []>} : vector<40x224xf32>, vector<224x160xf32>, vector<40x160xf32> -> vector<40x160xf32>
    %76 = arith.addf %71, %75 : vector<40x160xf32>
    %c0_84 = arith.constant 0 : index
    %c0_85 = arith.constant 0 : index
    %77 = vector.load %arg9[%c0_84, %c0_85] : memref<1x160xf32, #tpu.memory_space<vmem>>, vector<1x160xf32>
    %78 = vector.broadcast %77 : vector<1x160xf32> to vector<40x160xf32>
    %79 = arith.addf %76, %78 : vector<40x160xf32>
    %cst_86 = arith.constant 0.000000e+00 : f32
    %80 = vector.broadcast %cst_86 : f32 to vector<40x160xf32>
    %81 = arith.maximumf %79, %80 : vector<40x160xf32>
    %c0_87 = arith.constant 0 : index
    %c0_88 = arith.constant 0 : index
    %82 = vector.load %arg18[%c0_87, %c0_88] : memref<40x160xf32, #tpu.memory_space<vmem>>, vector<40x160xf32>
    tpu.vector_store %arg18[%c0_87, %c0_88], %81 {strides = array<i32>} : memref<40x160xf32, #tpu.memory_space<vmem>>, vector<40x160xf32>,
    %c0_89 = arith.constant 0 : index
    %c0_90 = arith.constant 0 : index
    %83 = vector.load %arg11[%c0_89, %c0_90] : memref<1x32xf32, #tpu.memory_space<vmem>>, vector<1x32xf32>
    %c0_91 = arith.constant 0 : index
    %c0_92 = arith.constant 0 : index
    %84 = vector.load %arg18[%c0_91, %c0_92] : memref<40x160xf32, #tpu.memory_space<vmem>>, vector<8x160xf32>
    %c0_93 = arith.constant 0 : index
    %c0_94 = arith.constant 0 : index
    %85 = vector.load %arg10[%c0_93, %c0_94] : memref<800x32xf32, #tpu.memory_space<vmem>>, vector<160x32xf32>
    %cst_95 = arith.constant dense<0.000000e+00> : vector<8x32xf32>
    %86 = tpu.matmul %84, %85, %cst_95 {dimension_numbers = #tpu.dot_dimension_numbers<[1], [0], [0], [1], [0, 0, 1, 1], [], []>} : vector<8x160xf32>, vector<160x32xf32>, vector<8x32xf32> -> vector<8x32xf32>
    %87 = vector.broadcast %83 : vector<1x32xf32> to vector<8x32xf32>
    %88 = arith.addf %87, %86 : vector<8x32xf32>
    %c8_96 = arith.constant 8 : index
    %c0_97 = arith.constant 0 : index
    %89 = vector.load %arg18[%c8_96, %c0_97] : memref<40x160xf32, #tpu.memory_space<vmem>>, vector<8x160xf32>
    %c160 = arith.constant 160 : index
    %c0_98 = arith.constant 0 : index
    %90 = vector.load %arg10[%c160, %c0_98] : memref<800x32xf32, #tpu.memory_space<vmem>>, vector<160x32xf32>
    %cst_99 = arith.constant dense<0.000000e+00> : vector<8x32xf32>
    %91 = tpu.matmul %89, %90, %cst_99 {dimension_numbers = #tpu.dot_dimension_numbers<[1], [0], [0], [1], [0, 0, 1, 1], [], []>} : vector<8x160xf32>, vector<160x32xf32>, vector<8x32xf32> -> vector<8x32xf32>
    %92 = arith.addf %88, %91 : vector<8x32xf32>
    %c16_100 = arith.constant 16 : index
    %c0_101 = arith.constant 0 : index
    %93 = vector.load %arg18[%c16_100, %c0_101] : memref<40x160xf32, #tpu.memory_space<vmem>>, vector<8x160xf32>
    %c320 = arith.constant 320 : index
    %c0_102 = arith.constant 0 : index
    %94 = vector.load %arg10[%c320, %c0_102] : memref<800x32xf32, #tpu.memory_space<vmem>>, vector<160x32xf32>
    %cst_103 = arith.constant dense<0.000000e+00> : vector<8x32xf32>
    %95 = tpu.matmul %93, %94, %cst_103 {dimension_numbers = #tpu.dot_dimension_numbers<[1], [0], [0], [1], [0, 0, 1, 1], [], []>} : vector<8x160xf32>, vector<160x32xf32>, vector<8x32xf32> -> vector<8x32xf32>
    %96 = arith.addf %92, %95 : vector<8x32xf32>
    %c24 = arith.constant 24 : index
    %c0_104 = arith.constant 0 : index
    %97 = vector.load %arg18[%c24, %c0_104] : memref<40x160xf32, #tpu.memory_space<vmem>>, vector<8x160xf32>
    %c480 = arith.constant 480 : index
    %c0_105 = arith.constant 0 : index
    %98 = vector.load %arg10[%c480, %c0_105] : memref<800x32xf32, #tpu.memory_space<vmem>>, vector<160x32xf32>
    %cst_106 = arith.constant dense<0.000000e+00> : vector<8x32xf32>
    %99 = tpu.matmul %97, %98, %cst_106 {dimension_numbers = #tpu.dot_dimension_numbers<[1], [0], [0], [1], [0, 0, 1, 1], [], []>} : vector<8x160xf32>, vector<160x32xf32>, vector<8x32xf32> -> vector<8x32xf32>
    %100 = arith.addf %96, %99 : vector<8x32xf32>
    %c32 = arith.constant 32 : index
    %c0_107 = arith.constant 0 : index
    %101 = vector.load %arg18[%c32, %c0_107] : memref<40x160xf32, #tpu.memory_space<vmem>>, vector<8x160xf32>
    %c640 = arith.constant 640 : index
    %c0_108 = arith.constant 0 : index
    %102 = vector.load %arg10[%c640, %c0_108] : memref<800x32xf32, #tpu.memory_space<vmem>>, vector<160x32xf32>
    %cst_109 = arith.constant dense<0.000000e+00> : vector<8x32xf32>
    %103 = tpu.matmul %101, %102, %cst_109 {dimension_numbers = #tpu.dot_dimension_numbers<[1], [0], [0], [1], [0, 0, 1, 1], [], []>} : vector<8x160xf32>, vector<160x32xf32>, vector<8x32xf32> -> vector<8x32xf32>
    %104 = arith.addf %100, %103 : vector<8x32xf32>
    %cst_110 = arith.constant dense<0.000000e+00> : vector<8xf32>
    %105 = vector.multi_reduction <add>, %104, %cst_110 [1] : vector<8x32xf32> to vector<8xf32>
    %106 = vector.shape_cast %105 : vector<8xf32> to vector<8x1xf32>
    %cst_111 = arith.constant 3.200000e+01 : f32
    %107 = vector.broadcast %cst_111 : f32 to vector<8x1xf32>
    %108 = arith.divf %106, %107 : vector<8x1xf32>
    %109 = vector.broadcast %108 : vector<8x1xf32> to vector<8x32xf32>
    %110 = arith.subf %104, %109 : vector<8x32xf32>
    %111 = arith.mulf %110, %110 : vector<8x32xf32>
    %cst_112 = arith.constant dense<0.000000e+00> : vector<8xf32>
    %112 = vector.multi_reduction <add>, %111, %cst_112 [1] : vector<8x32xf32> to vector<8xf32>
    %113 = vector.shape_cast %112 : vector<8xf32> to vector<8x1xf32>
    %cst_113 = arith.constant 3.200000e+01 : f32
    %114 = vector.broadcast %cst_113 : f32 to vector<8x1xf32>
    %115 = arith.divf %113, %114 : vector<8x1xf32>
    %116 = vector.broadcast %108 : vector<8x1xf32> to vector<8x32xf32>
    %117 = arith.subf %104, %116 : vector<8x32xf32>
    %cst_114 = arith.constant 9.99999974E-6 : f32
    %118 = vector.broadcast %cst_114 : f32 to vector<8x1xf32>
    %119 = arith.addf %115, %118 : vector<8x1xf32>
    %120 = math.rsqrt %119 : vector<8x1xf32>
    %121 = vector.broadcast %120 : vector<8x1xf32> to vector<8x32xf32>
    %122 = arith.mulf %117, %121 : vector<8x32xf32>
    %c0_115 = arith.constant 0 : index
    %c0_116 = arith.constant 0 : index
    %123 = vector.load %arg12[%c0_115, %c0_116] : memref<1x32xf32, #tpu.memory_space<vmem>>, vector<1x32xf32>
    %124 = vector.broadcast %123 : vector<1x32xf32> to vector<8x32xf32>
    %125 = arith.mulf %122, %124 : vector<8x32xf32>
    %c0_117 = arith.constant 0 : index
    %c0_118 = arith.constant 0 : index
    %126 = vector.load %arg13[%c0_117, %c0_118] : memref<1x32xf32, #tpu.memory_space<vmem>>, vector<1x32xf32>
    %127 = vector.broadcast %126 : vector<1x32xf32> to vector<8x32xf32>
    %128 = arith.addf %125, %127 : vector<8x32xf32>
    %129 = math.tanh %128 : vector<8x32xf32>
    %c0_119 = arith.constant 0 : index
    %c0_120 = arith.constant 0 : index
    %130 = vector.load %arg14[%c0_119, %c0_120] : memref<8x32xf32, #tpu.memory_space<vmem>>, vector<8x32xf32>
    tpu.vector_store %arg14[%c0_119, %c0_120], %129 {strides = array<i32>} : memref<8x32xf32, #tpu.memory_space<vmem>>, vector<8x32xf32>,
    return
  }
  func.func @transform_0(%arg0: i32) -> (i32, i32, i32) {
    %c0_i32 = arith.constant 0 : i32
    %c0_i32_0 = arith.constant 0 : i32
    %c0_i32_1 = arith.constant 0 : i32
    return %arg0, %c0_i32, %c0_i32_0 : i32, i32, i32
  }
  func.func @transform_1(%arg0: i32) -> (i32, i32, i32) {
    %c0_i32 = arith.constant 0 : i32
    %c0_i32_0 = arith.constant 0 : i32
    %c0_i32_1 = arith.constant 0 : i32
    %c0_i32_2 = arith.constant 0 : i32
    return %c0_i32, %c0_i32_0, %c0_i32_1 : i32, i32, i32
  }
  func.func @transform_2(%arg0: i32) -> (i32, i32) {
    %c0_i32 = arith.constant 0 : i32
    %c0_i32_0 = arith.constant 0 : i32
    %c0_i32_1 = arith.constant 0 : i32
    return %c0_i32, %c0_i32_0 : i32, i32
  }
  func.func @transform_3(%arg0: i32) -> (i32, i32, i32) {
    %c0_i32 = arith.constant 0 : i32
    %c0_i32_0 = arith.constant 0 : i32
    %c0_i32_1 = arith.constant 0 : i32
    %c0_i32_2 = arith.constant 0 : i32
    return %c0_i32, %c0_i32_0, %c0_i32_1 : i32, i32, i32
  }
  func.func @transform_4(%arg0: i32) -> (i32, i32) {
    %c0_i32 = arith.constant 0 : i32
    %c0_i32_0 = arith.constant 0 : i32
    %c0_i32_1 = arith.constant 0 : i32
    return %c0_i32, %c0_i32_0 : i32, i32
  }
  func.func @transform_5(%arg0: i32) -> (i32, i32, i32) {
    %c0_i32 = arith.constant 0 : i32
    %c0_i32_0 = arith.constant 0 : i32
    %c0_i32_1 = arith.constant 0 : i32
    %c0_i32_2 = arith.constant 0 : i32
    return %c0_i32, %c0_i32_0, %c0_i32_1 : i32, i32, i32
  }
  func.func @transform_6(%arg0: i32) -> (i32, i32) {
    %c0_i32 = arith.constant 0 : i32
    %c0_i32_0 = arith.constant 0 : i32
    %c0_i32_1 = arith.constant 0 : i32
    return %c0_i32, %c0_i32_0 : i32, i32
  }
  func.func @transform_7(%arg0: i32) -> (i32, i32, i32) {
    %c0_i32 = arith.constant 0 : i32
    %c0_i32_0 = arith.constant 0 : i32
    %c0_i32_1 = arith.constant 0 : i32
    %c0_i32_2 = arith.constant 0 : i32
    return %c0_i32, %c0_i32_0, %c0_i32_1 : i32, i32, i32
  }
  func.func @transform_8(%arg0: i32) -> (i32, i32) {
    %c0_i32 = arith.constant 0 : i32
    %c0_i32_0 = arith.constant 0 : i32
    %c0_i32_1 = arith.constant 0 : i32
    return %c0_i32, %c0_i32_0 : i32, i32
  }
  func.func @transform_9(%arg0: i32) -> (i32, i32) {
    %c0_i32 = arith.constant 0 : i32
    %c0_i32_0 = arith.constant 0 : i32
    %c0_i32_1 = arith.constant 0 : i32
    return %c0_i32, %c0_i32_0 : i32, i32
  }
  func.func @transform_10(%arg0: i32) -> (i32, i32) {
    %c0_i32 = arith.constant 0 : i32
    %c0_i32_0 = arith.constant 0 : i32
    %c0_i32_1 = arith.constant 0 : i32
    return %c0_i32, %c0_i32_0 : i32, i32
  }
  func.func @transform_11(%arg0: i32) -> (i32, i32) {
    %c0_i32 = arith.constant 0 : i32
    %c0_i32_0 = arith.constant 0 : i32
    %c0_i32_1 = arith.constant 0 : i32
    return %c0_i32, %c0_i32_0 : i32, i32
  }
  func.func @transform_12(%arg0: i32) -> (i32, i32) {
    %c0_i32 = arith.constant 0 : i32
    %c0_i32_0 = arith.constant 0 : i32
    %c0_i32_1 = arith.constant 0 : i32
    return %c0_i32, %c0_i32_0 : i32, i32
  }
  func.func @transform_13(%arg0: i32) -> (i32, i32) {
    %c0_i32 = arith.constant 0 : i32
    %c0_i32_0 = arith.constant 0 : i32
    return %arg0, %c0_i32 : i32, i32
  }
}

</mosaic_0001>

<llo_original>
// kernel: encoder_forward.1
$region0: #{encoder_forward.1}
  #allocation0 [shape = 'u32[]', space=smem, size = 0x4, offset = 0x4, fixed_abs, tag = 'smem constant byte address 0x4 - core index']
  #allocation1 [shape = 'u32[144,128]{1,0:T(1,128)}', space=vmem, size = 0x12000, scoped, tag = 'internal scratch']
  #allocation2 [shape = 'f32[88,352]{1,0:T(8,128)}', space=vmem, size = 0x21000, scoped, tag = 'scratch operand']
  #allocation3 [shape = 'f32[72,288]{1,0:T(8,128)}', space=vmem, size = 0x1b000, scoped, tag = 'scratch operand']
  #allocation4 [shape = 'f32[56,224]{1,0:T(8,128)}', space=vmem, size = 0xe000, scoped, tag = 'scratch operand']
  #allocation5 [shape = 'f32[40,160]{1,0:T(8,128)}', space=vmem, size = 0xa000, scoped, tag = 'scratch operand']
  %s0 = inlined_call_operand.vmem [shape: f32[4,96,96], index: 0, kind: input, shape index: {}]
  %s1 = inlined_call_operand.vmem [shape: f32[3,96,352], index: 1, kind: input, shape index: {}]
  %s2 = inlined_call_operand.vmem [shape: f32[1,352], index: 2, kind: input, shape index: {}]
  %s3 = inlined_call_operand.vmem [shape: f32[3,352,288], index: 3, kind: input, shape index: {}]
  %s4 = inlined_call_operand.vmem [shape: f32[1,288], index: 4, kind: input, shape index: {}]
  %s5 = inlined_call_operand.vmem [shape: f32[3,288,224], index: 5, kind: input, shape index: {}]
  %s6 = inlined_call_operand.vmem [shape: f32[1,224], index: 6, kind: input, shape index: {}]
  %s7 = inlined_call_operand.vmem [shape: f32[3,224,160], index: 7, kind: input, shape index: {}]
  %s8 = inlined_call_operand.vmem [shape: f32[1,160], index: 8, kind: input, shape index: {}]
  %s9 = inlined_call_operand.vmem [shape: f32[800,32], index: 9, kind: input, shape index: {}]
  %s10 = inlined_call_operand.vmem [shape: f32[1,32], index: 10, kind: input, shape index: {}]
  %s11 = inlined_call_operand.vmem [shape: f32[1,32], index: 11, kind: input, shape index: {}]
  %s12 = inlined_call_operand.vmem [shape: f32[1,32], index: 12, kind: input, shape index: {}]
  %s13 = inlined_call_operand.hbm [shape: f32[16,32], index: 13, kind: output, shape index: {}]
  %s14 = sld [smem:[#allocation0]]
  $region85: #{encoder_forward.1} parent=0
    _
  %s16 = ssub.s32 1, %s14
  %s17 = scalar_select 0, %s16, %s14
  $region1: #{encoder_forward.1} parent=0
    #allocation6 [shape = 'u8[8192]{0}', space=vmem, size = 0x2000, scoped, tag = 'output window, operand 0']
    #allocation7 [shape = 's32[2]{0}', space=sflag, size = 0x8, scoped, tag = 'scoped memory for encoder_forward.1']
    %18 = vsyncpa [#allocation7], 0
    %s19 = scalar_lea.sflag [#allocation7], 1
    %20 = vsyncpa %s19, 0
    loop: start=0, step=1, limit=4
    $region2: #{encoder_forward.1} parent=1 // loop_pre_header
      _
    $region3: #{encoder_forward.1} parent=1 // loop_header
      %s22 = sphi 0, %s26
      %p23 = scmp.ge.s32.totalorder %s22, 4
      %s32 = sphi 0, %s34
      %s35 = sphi 0, %s32
      %s36 = sphi 0, %s35
      %s52 = sphi 0, %s36
      %s56 = sphi 0, %s56
      %s58 = sphi 0, %s56
      %s59 = sphi 0, %s58
      %s73 = sphi 0, %s59
      %s77 = sphi 0, %s77
      %s79 = sphi 0, %s77
      %s80 = sphi 0, %s79
      %s94 = sphi 0, %s80
      %s98 = sphi 0, %s98
      %s100 = sphi 0, %s98
      %s101 = sphi 0, %s100
      %s115 = sphi 0, %s101
      %s119 = sphi 0, %s119
      %s121 = sphi 0, %s119
      %s122 = sphi 0, %s121
      %s136 = sphi 0, %s122
      %s140 = sphi 0, %s140
      %s142 = sphi 0, %s140
      %s143 = sphi 0, %s142
      %s157 = sphi 0, %s143
      %s161 = sphi 0, %s161
      %s163 = sphi 0, %s161
      %s164 = sphi 0, %s163
      %s178 = sphi 0, %s164
      %s182 = sphi 0, %s182
      %s184 = sphi 0, %s182
      %s185 = sphi 0, %s184
      %s199 = sphi 0, %s185
      %s203 = sphi 0, %s203
      %s205 = sphi 0, %s203
      %s206 = sphi 0, %s205
      %s220 = sphi 0, %s206
      %s224 = sphi 0, %s224
      %s226 = sphi 0, %s224
      %s227 = sphi 0, %s226
      %s241 = sphi 0, %s227
      %s245 = sphi 0, %s245
      %s247 = sphi 0, %s245
      %s248 = sphi 0, %s247
      %s262 = sphi 0, %s248
      %s266 = sphi 0, %s266
      %s268 = sphi 0, %s266
      %s269 = sphi 0, %s268
      %s283 = sphi 0, %s269
      %s287 = sphi 0, %s287
      %s289 = sphi 0, %s287
      %s290 = sphi 0, %s289
      %s304 = sphi 0, %s290
      %s310 = sphi 0, %s312
      %s313 = sphi 0, %s310
      %s314 = sphi 0, %s313
      %s330 = sphi 0, %s314
    $region4: #{encoder_forward.1} parent=1 // loop_header_branch
      %25 = sbr.rel (%p23) target = $region8
    $region5: #{encoder_forward.1} parent=1 // loop_body
      %s27 = ssub.s32 %s22, 1
      %s28 = ssub.s32 %s22, 2
      %s29 = sadd.s32 %s22, 1
      %s30 = ssub.s32 %s22, %s29
      %p31 = scmp.eq.s32.totalorder %s30, 0
      %s33 = sadd.s32 %s32, 1
      %s34 = scalar_select %p31, %s32, %s33
      %p37 = pneg %p31
      %p38 = scmp.eq.s32.totalorder %s22, 1
      %p39 = por %p37, %p38
      %p40 = scmp.ne.s32.totalorder %s32, %s35
      %p41 = scmp.eq.s32.totalorder %s22, 0
      %p42 = por %p40, %p41
      %p43 = scmp.ne.s32.totalorder %s32, %s35
      %p44 = scmp.eq.s32.totalorder %s27, 1
      %p45 = por %p43, %p44
      %p46 = scmp.ne.s32.totalorder %s35, %s36
      %p47 = scmp.eq.s32.totalorder %s27, 0
      %p48 = por %p46, %p47
      %p49 = scmp.ne.s32.totalorder %s35, %s36
      %p50 = scmp.eq.s32.totalorder %s28, 1
      %p51 = por %p49, %p50
      %p53 = scmp.ne.s32.totalorder %s36, %s52
      %p54 = scmp.eq.s32.totalorder %s28, 0
      %p55 = por %p53, %p54
      %s57 = sadd.s32 %s56, 1
      %p60 = scmp.eq.s32.totalorder %s22, 1
      %p61 = scmp.ne.s32.totalorder %s56, %s58
      %p62 = scmp.eq.s32.totalorder %s22, 0
      %p63 = por %p61, %p62
      %p64 = scmp.ne.s32.totalorder %s56, %s58
      %p65 = scmp.eq.s32.totalorder %s27, 1
      %p66 = por %p64, %p65
      %p67 = scmp.ne.s32.totalorder %s58, %s59
      %p68 = scmp.eq.s32.totalorder %s27, 0
      %p69 = por %p67, %p68
      %p70 = scmp.ne.s32.totalorder %s58, %s59
      %p71 = scmp.eq.s32.totalorder %s28, 1
      %p72 = por %p70, %p71
      %p74 = scmp.ne.s32.totalorder %s59, %s73
      %p75 = scmp.eq.s32.totalorder %s28, 0
      %p76 = por %p74, %p75
      %s78 = sadd.s32 %s77, 1
      %p81 = scmp.eq.s32.totalorder %s22, 1
      %p82 = scmp.ne.s32.totalorder %s77, %s79
      %p83 = scmp.eq.s32.totalorder %s22, 0
      %p84 = por %p82, %p83
      %p85 = scmp.ne.s32.totalorder %s77, %s79
      %p86 = scmp.eq.s32.totalorder %s27, 1
      %p87 = por %p85, %p86
      %p88 = scmp.ne.s32.totalorder %s79, %s80
      %p89 = scmp.eq.s32.totalorder %s27, 0
      %p90 = por %p88, %p89
      %p91 = scmp.ne.s32.totalorder %s79, %s80
      %p92 = scmp.eq.s32.totalorder %s28, 1
      %p93 = por %p91, %p92
      %p95 = scmp.ne.s32.totalorder %s80, %s94
      %p96 = scmp.eq.s32.totalorder %s28, 0
      %p97 = por %p95, %p96
      %s99 = sadd.s32 %s98, 1
      %p102 = scmp.eq.s32.totalorder %s22, 1
      %p103 = scmp.ne.s32.totalorder %s98, %s100
      %p104 = scmp.eq.s32.totalorder %s22, 0
      %p105 = por %p103, %p104
      %p106 = scmp.ne.s32.totalorder %s98, %s100
      %p107 = scmp.eq.s32.totalorder %s27, 1
      %p108 = por %p106, %p107
      %p109 = scmp.ne.s32.totalorder %s100, %s101
      %p110 = scmp.eq.s32.totalorder %s27, 0
      %p111 = por %p109, %p110
      %p112 = scmp.ne.s32.totalorder %s100, %s101
      %p113 = scmp.eq.s32.totalorder %s28, 1
      %p114 = por %p112, %p113
      %p116 = scmp.ne.s32.totalorder %s101, %s115
      %p117 = scmp.eq.s32.totalorder %s28, 0
      %p118 = por %p116, %p117
      %s120 = sadd.s32 %s119, 1
      %p123 = scmp.eq.s32.totalorder %s22, 1
      %p124 = scmp.ne.s32.totalorder %s119, %s121
      %p125 = scmp.eq.s32.totalorder %s22, 0
      %p126 = por %p124, %p125
      %p127 = scmp.ne.s32.totalorder %s119, %s121
      %p128 = scmp.eq.s32.totalorder %s27, 1
      %p129 = por %p127, %p128
      %p130 = scmp.ne.s32.totalorder %s121, %s122
      %p131 = scmp.eq.s32.totalorder %s27, 0
      %p132 = por %p130, %p131
      %p133 = scmp.ne.s32.totalorder %s121, %s122
      %p134 = scmp.eq.s32.totalorder %s28, 1
      %p135 = por %p133, %p134
      %p137 = scmp.ne.s32.totalorder %s122, %s136
      %p138 = scmp.eq.s32.totalorder %s28, 0
      %p139 = por %p137, %p138
      %s141 = sadd.s32 %s140, 1
      %p144 = scmp.eq.s32.totalorder %s22, 1
      %p145 = scmp.ne.s32.totalorder %s140, %s142
      %p146 = scmp.eq.s32.totalorder %s22, 0
      %p147 = por %p145, %p146
      %p148 = scmp.ne.s32.totalorder %s140, %s142
      %p149 = scmp.eq.s32.totalorder %s27, 1
      %p150 = por %p148, %p149
      %p151 = scmp.ne.s32.totalorder %s142, %s143
      %p152 = scmp.eq.s32.totalorder %s27, 0
      %p153 = por %p151, %p152
      %p154 = scmp.ne.s32.totalorder %s142, %s143
      %p155 = scmp.eq.s32.totalorder %s28, 1
      %p156 = por %p154, %p155
      %p158 = scmp.ne.s32.totalorder %s143, %s157
      %p159 = scmp.eq.s32.totalorder %s28, 0
      %p160 = por %p158, %p159
      %s162 = sadd.s32 %s161, 1
      %p165 = scmp.eq.s32.totalorder %s22, 1
      %p166 = scmp.ne.s32.totalorder %s161, %s163
      %p167 = scmp.eq.s32.totalorder %s22, 0
      %p168 = por %p166, %p167
      %p169 = scmp.ne.s32.totalorder %s161, %s163
      %p170 = scmp.eq.s32.totalorder %s27, 1
      %p171 = por %p169, %p170
      %p172 = scmp.ne.s32.totalorder %s163, %s164
      %p173 = scmp.eq.s32.totalorder %s27, 0
      %p174 = por %p172, %p173
      %p175 = scmp.ne.s32.totalorder %s163, %s164
      %p176 = scmp.eq.s32.totalorder %s28, 1
      %p177 = por %p175, %p176
      %p179 = scmp.ne.s32.totalorder %s164, %s178
      %p180 = scmp.eq.s32.totalorder %s28, 0
      %p181 = por %p179, %p180
      %s183 = sadd.s32 %s182, 1
      %p186 = scmp.eq.s32.totalorder %s22, 1
      %p187 = scmp.ne.s32.totalorder %s182, %s184
      %p188 = scmp.eq.s32.totalorder %s22, 0
      %p189 = por %p187, %p188
      %p190 = scmp.ne.s32.totalorder %s182, %s184
      %p191 = scmp.eq.s32.totalorder %s27, 1
      %p192 = por %p190, %p191
      %p193 = scmp.ne.s32.totalorder %s184, %s185
      %p194 = scmp.eq.s32.totalorder %s27, 0
      %p195 = por %p193, %p194
      %p196 = scmp.ne.s32.totalorder %s184, %s185
      %p197 = scmp.eq.s32.totalorder %s28, 1
      %p198 = por %p196, %p197
      %p200 = scmp.ne.s32.totalorder %s185, %s199
      %p201 = scmp.eq.s32.totalorder %s28, 0
      %p202 = por %p200, %p201
      %s204 = sadd.s32 %s203, 1
      %p207 = scmp.eq.s32.totalorder %s22, 1
      %p208 = scmp.ne.s32.totalorder %s203, %s205
      %p209 = scmp.eq.s32.totalorder %s22, 0
      %p210 = por %p208, %p209
      %p211 = scmp.ne.s32.totalorder %s203, %s205
      %p212 = scmp.eq.s32.totalorder %s27, 1
      %p213 = por %p211, %p212
      %p214 = scmp.ne.s32.totalorder %s205, %s206
      %p215 = scmp.eq.s32.totalorder %s27, 0
      %p216 = por %p214, %p215
      %p217 = scmp.ne.s32.totalorder %s205, %s206
      %p218 = scmp.eq.s32.totalorder %s28, 1
      %p219 = por %p217, %p218
      %p221 = scmp.ne.s32.totalorder %s206, %s220
      %p222 = scmp.eq.s32.totalorder %s28, 0
      %p223 = por %p221, %p222
      %s225 = sadd.s32 %s224, 1
      %p228 = scmp.eq.s32.totalorder %s22, 1
      %p229 = scmp.ne.s32.totalorder %s224, %s226
      %p230 = scmp.eq.s32.totalorder %s22, 0
      %p231 = por %p229, %p230
      %p232 = scmp.ne.s32.totalorder %s224, %s226
      %p233 = scmp.eq.s32.totalorder %s27, 1
      %p234 = por %p232, %p233
      %p235 = scmp.ne.s32.totalorder %s226, %s227
      %p236 = scmp.eq.s32.totalorder %s27, 0
      %p237 = por %p235, %p236
      %p238 = scmp.ne.s32.totalorder %s226, %s227
      %p239 = scmp.eq.s32.totalorder %s28, 1
      %p240 = por %p238, %p239
      %p242 = scmp.ne.s32.totalorder %s227, %s241
      %p243 = scmp.eq.s32.totalorder %s28, 0
      %p244 = por %p242, %p243
      %s246 = sadd.s32 %s245, 1
      %p249 = scmp.eq.s32.totalorder %s22, 1
      %p250 = scmp.ne.s32.totalorder %s245, %s247
      %p251 = scmp.eq.s32.totalorder %s22, 0
      %p252 = por %p250, %p251
      %p253 = scmp.ne.s32.totalorder %s245, %s247
      %p254 = scmp.eq.s32.totalorder %s27, 1
      %p255 = por %p253, %p254
      %p256 = scmp.ne.s32.totalorder %s247, %s248
      %p257 = scmp.eq.s32.totalorder %s27, 0
      %p258 = por %p256, %p257
      %p259 = scmp.ne.s32.totalorder %s247, %s248
      %p260 = scmp.eq.s32.totalorder %s28, 1
      %p261 = por %p259, %p260
      %p263 = scmp.ne.s32.totalorder %s248, %s262
      %p264 = scmp.eq.s32.totalorder %s28, 0
      %p265 = por %p263, %p264
      %s267 = sadd.s32 %s266, 1
      %p270 = scmp.eq.s32.totalorder %s22, 1
      %p271 = scmp.ne.s32.totalorder %s266, %s268
      %p272 = scmp.eq.s32.totalorder %s22, 0
      %p273 = por %p271, %p272
      %p274 = scmp.ne.s32.totalorder %s266, %s268
      %p275 = scmp.eq.s32.totalorder %s27, 1
      %p276 = por %p274, %p275
      %p277 = scmp.ne.s32.totalorder %s268, %s269
      %p278 = scmp.eq.s32.totalorder %s27, 0
      %p279 = por %p277, %p278
      %p280 = scmp.ne.s32.totalorder %s268, %s269
      %p281 = scmp.eq.s32.totalorder %s28, 1
      %p282 = por %p280, %p281
      %p284 = scmp.ne.s32.totalorder %s269, %s283
      %p285 = scmp.eq.s32.totalorder %s28, 0
      %p286 = por %p284, %p285
      %s288 = sadd.s32 %s287, 1
      %p291 = scmp.eq.s32.totalorder %s22, 1
      %p292 = scmp.ne.s32.totalorder %s287, %s289
      %p293 = scmp.eq.s32.totalorder %s22, 0
      %p294 = por %p292, %p293
      %p295 = scmp.ne.s32.totalorder %s287, %s289
      %p296 = scmp.eq.s32.totalorder %s27, 1
      %p297 = por %p295, %p296
      %p298 = scmp.ne.s32.totalorder %s289, %s290
      %p299 = scmp.eq.s32.totalorder %s27, 0
      %p300 = por %p298, %p299
      %p301 = scmp.ne.s32.totalorder %s289, %s290
      %p302 = scmp.eq.s32.totalorder %s28, 1
      %p303 = por %p301, %p302
      %p305 = scmp.ne.s32.totalorder %s290, %s304
      %p306 = scmp.eq.s32.totalorder %s28, 0
      %p307 = por %p305, %p306
      %s308 = ssub.s32 %s22, %s29
      %p309 = scmp.eq.s32.totalorder %s308, 0
      %s311 = sadd.s32 %s310, 1
      %s312 = scalar_select %p309, %s310, %s311
      %p315 = pneg %p309
      %p316 = scmp.eq.s32.totalorder %s22, 1
      %p317 = por %p315, %p316
      %p318 = scmp.ne.s32.totalorder %s310, %s313
      %p319 = scmp.eq.s32.totalorder %s22, 0
      %p320 = por %p318, %p319
      %p321 = scmp.ne.s32.totalorder %s310, %s313
      %p322 = scmp.eq.s32.totalorder %s27, 1
      %p323 = por %p321, %p322
      %p324 = scmp.ne.s32.totalorder %s313, %s314
      %p325 = scmp.eq.s32.totalorder %s27, 0
      %p326 = por %p324, %p325
      %p327 = scmp.ne.s32.totalorder %s313, %s314
      %p328 = scmp.eq.s32.totalorder %s28, 1
      %p329 = por %p327, %p328
      %p331 = scmp.ne.s32.totalorder %s314, %s330
      %p332 = scmp.eq.s32.totalorder %s28, 0
      %p333 = por %p331, %p332
      %p334 = scmp.le.s32.totalorder 1, %s22
      %p335 = scmp.lt.s32.totalorder %s22, 3
      %p336 = pnand %p334, %p335
      %p337 = pneg %p336
      // Predicated region
      $region9: #{encoder_forward.1} parent=5 // pred_check
        _
      $region10: #{encoder_forward.1} parent=5 // pred_check_branch
        %339 = sbr.rel (%p336) target = $region12
      $region11: #{encoder_forward.1} parent=5 // pred_region
        %s340 = ssub.s32 %s22, 1
        // Predicated region
        $region13: #{encoder_forward.1} parent=11 // pred_check
          %p341 = pneg %p69
        $region14: #{encoder_forward.1} parent=11 // pred_check_branch
          %343 = sbr.rel (%p341) target = $region16
        $region15: #{encoder_forward.1} parent=11 // pred_region
          _
        $region16: #{encoder_forward.1} parent=11 // pred_fallthru
          _
        // Predicated region
        $region17: #{encoder_forward.1} parent=11 // pred_check
          %p344 = pneg %p90
        $region18: #{encoder_forward.1} parent=11 // pred_check_branch
          %346 = sbr.rel (%p344) target = $region20
        $region19: #{encoder_forward.1} parent=11 // pred_region
          _
        $region20: #{encoder_forward.1} parent=11 // pred_fallthru
          _
        // Predicated region
        $region21: #{encoder_forward.1} parent=11 // pred_check
          %p347 = pneg %p111
        $region22: #{encoder_forward.1} parent=11 // pred_check_branch
          %349 = sbr.rel (%p347) target = $region24
        $region23: #{encoder_forward.1} parent=11 // pred_region
          _
        $region24: #{encoder_forward.1} parent=11 // pred_fallthru
          _
        // Predicated region
        $region25: #{encoder_forward.1} parent=11 // pred_check
          %p350 = pneg %p132
        $region26: #{encoder_forward.1} parent=11 // pred_check_branch
          %352 = sbr.rel (%p350) target = $region28
        $region27: #{encoder_forward.1} parent=11 // pred_region
          _
        $region28: #{encoder_forward.1} parent=11 // pred_fallthru
          _
        // Predicated region
        $region29: #{encoder_forward.1} parent=11 // pred_check
          %p353 = pneg %p153
        $region30: #{encoder_forward.1} parent=11 // pred_check_branch
          %355 = sbr.rel (%p353) target = $region32
        $region31: #{encoder_forward.1} parent=11 // pred_region
          _
        $region32: #{encoder_forward.1} parent=11 // pred_fallthru
          _
        // Predicated region
        $region33: #{encoder_forward.1} parent=11 // pred_check
          %p356 = pneg %p174
        $region34: #{encoder_forward.1} parent=11 // pred_check_branch
          %358 = sbr.rel (%p356) target = $region36
        $region35: #{encoder_forward.1} parent=11 // pred_region
          _
        $region36: #{encoder_forward.1} parent=11 // pred_fallthru
          _
        // Predicated region
        $region37: #{encoder_forward.1} parent=11 // pred_check
          %p359 = pneg %p195
        $region38: #{encoder_forward.1} parent=11 // pred_check_branch
          %361 = sbr.rel (%p359) target = $region40
        $region39: #{encoder_forward.1} parent=11 // pred_region
          _
        $region40: #{encoder_forward.1} parent=11 // pred_fallthru
          _
        // Predicated region
        $region41: #{encoder_forward.1} parent=11 // pred_check
          %p362 = pneg %p216
        $region42: #{encoder_forward.1} parent=11 // pred_check_branch
          %364 = sbr.rel (%p362) target = $region44
        $region43: #{encoder_forward.1} parent=11 // pred_region
          _
        $region44: #{encoder_forward.1} parent=11 // pred_fallthru
          _
        // Predicated region
        $region45: #{encoder_forward.1} parent=11 // pred_check
          %p365 = pneg %p237
        $region46: #{encoder_forward.1} parent=11 // pred_check_branch
          %367 = sbr.rel (%p365) target = $region48
        $region47: #{encoder_forward.1} parent=11 // pred_region
          _
        $region48: #{encoder_forward.1} parent=11 // pred_fallthru
          _
        // Predicated region
        $region49: #{encoder_forward.1} parent=11 // pred_check
          %p368 = pneg %p258
        $region50: #{encoder_forward.1} parent=11 // pred_check_branch
          %370 = sbr.rel (%p368) target = $region52
        $region51: #{encoder_forward.1} parent=11 // pred_region
          _
        $region52: #{encoder_forward.1} parent=11 // pred_fallthru
          _
        // Predicated region
        $region53: #{encoder_forward.1} parent=11 // pred_check
          %p371 = pneg %p279
        $region54: #{encoder_forward.1} parent=11 // pred_check_branch
          %373 = sbr.rel (%p371) target = $region56
        $region55: #{encoder_forward.1} parent=11 // pred_region
          _
        $region56: #{encoder_forward.1} parent=11 // pred_fallthru
          _
        // Predicated region
        $region57: #{encoder_forward.1} parent=11 // pred_check
          %p374 = pneg %p300
        $region58: #{encoder_forward.1} parent=11 // pred_check_branch
          %376 = sbr.rel (%p374) target = $region60
        $region59: #{encoder_forward.1} parent=11 // pred_region
          _
        $region60: #{encoder_forward.1} parent=11 // pred_fallthru
          _
      $region12: #{encoder_forward.1} parent=5 // pred_fallthru
        _
      %p377 = scmp.lt.s32.totalorder %s22, 2
      // Predicated region
      $region61: #{encoder_forward.1} parent=5 // pred_check
        %p378 = pneg %p377
      $region62: #{encoder_forward.1} parent=5 // pred_check_branch
        %380 = sbr.rel (%p378) target = $region64
      $region63: #{encoder_forward.1} parent=5 // pred_region
        // Predicated region
        $region65: #{encoder_forward.1} parent=63 // pred_check
          %p381 = pneg %p42
        $region66: #{encoder_forward.1} parent=63 // pred_check_branch
          %383 = sbr.rel (%p381) target = $region68
        $region67: #{encoder_forward.1} parent=63 // pred_region
          %s384 = smul.u32 2, %s22
          %p385 = scmp.lt.s32.totalorder %s384, 3
          %s386 = scalar_select %p385, %s384, 3
          %s387 = smul.addr %s386, 12
          %s388 = smul.addr %s387, 8
          %s389 = scalar_lea.vmem %s0, %s388
          %s390 = smul.u32 2, %s22
        $region68: #{encoder_forward.1} parent=63 // pred_fallthru
          _
      $region64: #{encoder_forward.1} parent=5 // pred_fallthru
        _
      %p391 = scmp.le.s32.totalorder 1, %s22
      %p392 = scmp.lt.s32.totalorder %s22, 3
      %p393 = pnand %p391, %p392
      %p394 = pneg %p393
      // Predicated region
      $region69: #{encoder_forward.1} parent=5 // pred_check
        _
      $region70: #{encoder_forward.1} parent=5 // pred_check_branch
        %396 = sbr.rel (%p393) target = $region72
      $region71: #{encoder_forward.1} parent=5 // pred_region
        %s397 = ssub.s32 %s22, 1
        %s398 = smul.u32 2, %s27
        %p399 = scmp.lt.s32.totalorder %s398, 3
        %s400 = scalar_select %p399, %s398, 3
        %s401 = smul.addr %s400, 12
        %s402 = smul.addr %s401, 8
        %s403 = scalar_lea.vmem %s0, %s402
        %p404 = pneg %p48
        %p405 = pneg %p45
        %p406 = pneg %p69
        %p407 = pneg %p66
        %p408 = pneg %p90
        %p409 = pneg %p87
        %p410 = pneg %p111
        %p411 = pneg %p108
        %p412 = pneg %p132
        %p413 = pneg %p129
        %p414 = pneg %p153
        %p415 = pneg %p150
        %p416 = pneg %p174
        %p417 = pneg %p171
        %p418 = pneg %p195
        %p419 = pneg %p192
        %p420 = pneg %p216
        %p421 = pneg %p213
        %p422 = pneg %p237
        %p423 = pneg %p234
        %p424 = pneg %p258
        %p425 = pneg %p255
        %p426 = pneg %p279
        %p427 = pneg %p276
        %p428 = pneg %p300
        %p429 = pneg %p297
        %p430 = pneg %p326
        %p431 = pneg %p323
        %s432 = sand.u32 %s313, 1
        %s433 = scalar_lea.sflag [#allocation7], %s432
        %s434 = sand.u32 %s313, 1
        %s435 = smul.addr %s434, 8
        %s436 = scalar_lea.vmem [#allocation6], %s435
        %s437 = smul.u32 2, %s27
        %p438 = scmp.lt.s32.totalorder %s437, 3
        %s439 = scalar_select %p438, %s437, 3
        %s440 = smul.addr %s439, 12
        %s441 = smul.addr %s440, 8
        %s442 = scalar_lea.vmem %s0, %s441
        %s443 = smul.u32 2, %s27
        %v444 = vld [vmem:[%s442] sm:$0xff]
        %v445 = vld [vmem:[%s442 + $0x8] sm:$0xff]
        %v446 = vld [vmem:[%s442 + $0x10] sm:$0xff]
        %v447 = vld [vmem:[%s442 + $0x18] sm:$0xff]
        %v448 = vld [vmem:[%s442 + $0x20] sm:$0xff]
        %v449 = vld [vmem:[%s442 + $0x28] sm:$0xff]
        %v450 = vld [vmem:[%s442 + $0x30] sm:$0xff]
        %v451 = vld [vmem:[%s442 + $0x38] sm:$0xff]
        %v452 = vld [vmem:[%s442 + $0x40] sm:$0xff]
        %v453 = vld [vmem:[%s442 + $0x48] sm:$0xff]
        %v454 = vld [vmem:[%s442 + $0x50] sm:$0xff]
        %v455 = vld [vmem:[%s1] sm:$0xff]
        %v456 = vld [vmem:[%s1 + $0x8] sm:$0xff]
        %v457 = vld [vmem:[%s1 + $0x10] sm:$0xff]
        %v458 = vld [vmem:[%s1 + $0x18] sm:$0xff]
        %v459 = vld [vmem:[%s1 + $0x20] sm:$0xff]
        %v460 = vld [vmem:[%s1 + $0x28] sm:$0xff]
        %v461 = vld [vmem:[%s1 + $0x30] sm:$0xff]
        %v462 = vld [vmem:[%s1 + $0x38] sm:$0xff]
        %v463 = vld [vmem:[%s1 + $0x40] sm:$0xff]
        %v464 = vld [vmem:[%s1 + $0x48] sm:$0xff]
        %v465 = vld [vmem:[%s1 + $0x50] sm:$0xff]
        %v466 = vld [vmem:[%s1 + $0x58] sm:$0xff]
        %v467 = vld [vmem:[%s1 + $0x60] sm:$0xff]
        %v468 = vld [vmem:[%s1 + $0x68] sm:$0xff]
        %v469 = vld [vmem:[%s1 + $0x70] sm:$0xff]
        %v470 = vld [vmem:[%s1 + $0x78] sm:$0xff]
        %v471 = vld [vmem:[%s1 + $0x80] sm:$0xff]
        %v472 = vld [vmem:[%s1 + $0x88] sm:$0xff]
        %v473 = vld [vmem:[%s1 + $0x90] sm:$0xff]
        %v474 = vld [vmem:[%s1 + $0x98] sm:$0xff]
        %v475 = vld [vmem:[%s1 + $0xa0] sm:$0xff]
        %v476 = vld [vmem:[%s1 + $0xa8] sm:$0xff]
        %v477 = vld [vmem:[%s1 + $0xb0] sm:$0xff]
        %v478 = vld [vmem:[%s1 + $0xb8] sm:$0xff]
        %v479 = vld [vmem:[%s1 + $0xc0] sm:$0xff]
        %v480 = vld [vmem:[%s1 + $0xc8] sm:$0xff]
        %v481 = vld [vmem:[%s1 + $0xd0] sm:$0xff]
        %v482 = vld [vmem:[%s1 + $0xd8] sm:$0xff]
        %v483 = vld [vmem:[%s1 + $0xe0] sm:$0xff]
        %v484 = vld [vmem:[%s1 + $0xe8] sm:$0xff]
        %v485 = vld [vmem:[%s1 + $0xf0] sm:$0xff]
        %v486 = vld [vmem:[%s1 + $0xf8] sm:$0xff]
        %v487 = vld [vmem:[%s1 + $0x100] sm:$0xff]
        %v488 = vld [vmem:[%s1 + $0x108] sm:$0xff]
        %v489 = vld [vmem:[%s1 + $0x110] sm:$0xff]
        %v490 = vld [vmem:[%s1 + $0x118] sm:$0xff]
        %s491 = scalar_lea.vmem %s442, 96
        %v492 = vld [vmem:[%s491] sm:$0xff]
        %v493 = vld [vmem:[%s491 + $0x8] sm:$0xff]
        %v494 = vld [vmem:[%s491 + $0x10] sm:$0xff]
        %v495 = vld [vmem:[%s491 + $0x18] sm:$0xff]
        %v496 = vld [vmem:[%s491 + $0x20] sm:$0xff]
        %v497 = vld [vmem:[%s491 + $0x28] sm:$0xff]
        %v498 = vld [vmem:[%s491 + $0x30] sm:$0xff]
        %v499 = vld [vmem:[%s491 + $0x38] sm:$0xff]
        %v500 = vld [vmem:[%s491 + $0x40] sm:$0xff]
        %v501 = vld [vmem:[%s491 + $0x48] sm:$0xff]
        %v502 = vld [vmem:[%s491 + $0x50] sm:$0xff]
        %s503 = scalar_lea.vmem %s1, 288
        %v504 = vld [vmem:[%s503] sm:$0xff]
        %v505 = vld [vmem:[%s503 + $0x8] sm:$0xff]
        %v506 = vld [vmem:[%s503 + $0x10] sm:$0xff]
        %v507 = vld [vmem:[%s503 + $0x18] sm:$0xff]
        %v508 = vld [vmem:[%s503 + $0x20] sm:$0xff]
        %v509 = vld [vmem:[%s503 + $0x28] sm:$0xff]
        %v510 = vld [vmem:[%s503 + $0x30] sm:$0xff]
        %v511 = vld [vmem:[%s503 + $0x38] sm:$0xff]
        %v512 = vld [vmem:[%s503 + $0x40] sm:$0xff]
        %v513 = vld [vmem:[%s503 + $0x48] sm:$0xff]
        %v514 = vld [vmem:[%s503 + $0x50] sm:$0xff]
        %v515 = vld [vmem:[%s503 + $0x58] sm:$0xff]
        %v516 = vld [vmem:[%s503 + $0x60] sm:$0xff]
        %v517 = vld [vmem:[%s503 + $0x68] sm:$0xff]
        %v518 = vld [vmem:[%s503 + $0x70] sm:$0xff]
        %v519 = vld [vmem:[%s503 + $0x78] sm:$0xff]
        %v520 = vld [vmem:[%s503 + $0x80] sm:$0xff]
        %v521 = vld [vmem:[%s503 + $0x88] sm:$0xff]
        %v522 = vld [vmem:[%s503 + $0x90] sm:$0xff]
        %v523 = vld [vmem:[%s503 + $0x98] sm:$0xff]
        %v524 = vld [vmem:[%s503 + $0xa0] sm:$0xff]
        %v525 = vld [vmem:[%s503 + $0xa8] sm:$0xff]
        %v526 = vld [vmem:[%s503 + $0xb0] sm:$0xff]
        %v527 = vld [vmem:[%s503 + $0xb8] sm:$0xff]
        %v528 = vld [vmem:[%s503 + $0xc0] sm:$0xff]
        %v529 = vld [vmem:[%s503 + $0xc8] sm:$0xff]
        %v530 = vld [vmem:[%s503 + $0xd0] sm:$0xff]
        %v531 = vld [vmem:[%s503 + $0xd8] sm:$0xff]
        %v532 = vld [vmem:[%s503 + $0xe0] sm:$0xff]
        %v533 = vld [vmem:[%s503 + $0xe8] sm:$0xff]
        %v534 = vld [vmem:[%s503 + $0xf0] sm:$0xff]
        %v535 = vld [vmem:[%s503 + $0xf8] sm:$0xff]
        %v536 = vld [vmem:[%s503 + $0x100] sm:$0xff]
        %v537 = vld [vmem:[%s503 + $0x108] sm:$0xff]
        %v538 = vld [vmem:[%s503 + $0x110] sm:$0xff]
        %v539 = vld [vmem:[%s503 + $0x118] sm:$0xff]
        %vm540 = vcmask 785408
        %v542 = vsel %vm540, %v492, 0
        %v545 = vsel %vm540, %v493, 0
        %v548 = vsel %vm540, %v494, 0
        %v551 = vsel %vm540, %v495, 0
        %v554 = vsel %vm540, %v496, 0
        %v557 = vsel %vm540, %v497, 0
        %v560 = vsel %vm540, %v498, 0
        %v563 = vsel %vm540, %v499, 0
        %v566 = vsel %vm540, %v500, 0
        %v569 = vsel %vm540, %v501, 0
        %v572 = vsel %vm540, %v502, 0
        %574 = vmatprep.subr.mxu0 %v505
        %575 = vmatpush1.msra.mxu0 %v504
        %576 = vmatprep.subr.mxu0 %v508
        %577 = vmatpush1.msra.mxu0 %v507
        %578 = vmatprep.subr.mxu0 %v511
        %579 = vmatpush1.msra.mxu0 %v510
        %580 = vmatprep.subr.mxu0 %v514
        %581 = vmatpush1.msra.mxu0 %v513
        %582 = vmatprep.subr.mxu0 %v517
        %583 = vmatpush1.msra.mxu0 %v516
        %584 = vmatprep.subr.mxu0 %v520
        %585 = vmatpush1.msra.mxu0 %v519
        %586 = vmatprep.subr.mxu0 %v523
        %587 = vmatpush1.msra.mxu0 %v522
        %588 = vmatprep.subr.mxu0 %v526
        %589 = vmatpush1.msra.mxu0 %v525
        %590 = vmatprep.subr.mxu0 %v529
        %591 = vmatpush1.msra.mxu0 %v528
        %592 = vmatprep.subr.mxu0 %v532
        %593 = vmatpush1.msra.mxu0 %v531
        %594 = vmatprep.subr.mxu0 %v535
        %595 = vmatpush1.msra.mxu0 %v534
        %596 = vmatprep.subr.mxu0 %v538
        %597 = vmatpush1.msra.mxu0 %v537
        %598 = vmatprep.subr.mxu0 0.0
        %599 = vmatpush1.msra.mxu0 0.0
        %600 = vmatprep.subr.mxu0 0.0
        %601 = vmatpush1.msra.mxu0 0.0
        %602 = vmatprep.subr.mxu0 0.0
        %603 = vmatpush1.msra.mxu0 0.0
        %604 = vmatprep.subr.mxu0 0.0
        %605 = vmatpush1.msra.mxu0 0.0
        %606 = vmatprep.subr.mxu0 0.0
        %607 = vmatpush1.msra.mxu0 0.0
        %608 = vmatprep.subr.mxu0 0.0
        %609 = vmatpush1.msra.mxu0 0.0
        %610 = vmatprep.subr.mxu0 0.0
        %611 = vmatpush1.msra.mxu0 0.0
        %612 = vmatprep.subr.mxu0 0.0
        %613 = vmatpush1.msra.mxu0 0.0
        %614 = vmatprep.subr.mxu0 0.0
        %615 = vmatpush1.msra.mxu0 0.0
        %616 = vmatprep.subr.mxu0 0.0
        %617 = vmatpush1.msra.mxu0 0.0
        %618 = vmatprep.subr.mxu0 0.0
        %619 = vmatpush1.msra.mxu0 0.0
        %620 = vmatprep.subr.mxu0 0.0
        %621 = vmatpush1.msra.mxu0 0.0
        %622 = vmatprep.subr.mxu0 0.0
        %623 = vmatpush1.msra.mxu0 0.0
        %624 = vmatprep.subr.mxu0 0.0
        %625 = vmatpush1.msra.mxu0 0.0
        %626 = vmatprep.subr.mxu0 0.0
        %627 = vmatpush1.msra.mxu0 0.0
        %628 = vmatprep.subr.mxu0 0.0
        %629 = vmatpush1.msra.mxu0 0.0
        %630 = vmatprep.subr.mxu0 0.0
        %631 = vmatpush1.msra.mxu0 0.0
        %632 = vmatprep.subr.mxu0 0.0
        %633 = vmatpush1.msra.mxu0 0.0
        %634 = vmatprep.subr.mxu0 0.0
        %635 = vmatpush1.msra.mxu0 0.0
        %636 = vmatprep.subr.mxu0 0.0
        %637 = vmatpush1.msra.mxu0 0.0
        %638 = vmatprep.mubr.f32.mxu0 0.0
        %639 = vmatmul.mubr.f32.gmra.mrb[0].mxu0 %v542
        %v640 = vpop.f32.mrb[0].mxu0
        %v641 = vadd.f32 0.0, %v640
        %v642 = vpop.f32.mrb[0].mxu0
        %v643 = vadd.f32 0.0, %v642
        %644 = vmatprep.mubr.f32.mxu0 0.0
        %645 = vmatmul.mubr.f32.gmra.mrb[0].mxu0 %v545
        %v646 = vpop.f32.mrb[0].mxu0
        %v647 = vadd.f32 0.0, %v646
        %v648 = vpop.f32.mrb[0].mxu0
        %v649 = vadd.f32 0.0, %v648
        %650 = vmatprep.mubr.f32.mxu0 0.0
        %651 = vmatmul.mubr.f32.gmra.mrb[0].mxu0 %v548
        %v652 = vpop.f32.mrb[0].mxu0
        %v653 = vadd.f32 0.0, %v652
        %v654 = vpop.f32.mrb[0].mxu0
        %v655 = vadd.f32 0.0, %v654
        %656 = vmatprep.mubr.f32.mxu0 0.0
        %657 = vmatmul.mubr.f32.gmra.mrb[0].mxu0 %v551
        %v658 = vpop.f32.mrb[0].mxu0
        %v659 = vadd.f32 0.0, %v658
        %v660 = vpop.f32.mrb[0].mxu0
        %v661 = vadd.f32 0.0, %v660
        %662 = vmatprep.mubr.f32.mxu0 0.0
        %663 = vmatmul.mubr.f32.gmra.mrb[0].mxu0 %v554
        %v664 = vpop.f32.mrb[0].mxu0
        %v665 = vadd.f32 0.0, %v664
        %v666 = vpop.f32.mrb[0].mxu0
        %v667 = vadd.f32 0.0, %v666
        %668 = vmatprep.mubr.f32.mxu0 0.0
        %669 = vmatmul.mubr.f32.gmra.mrb[0].mxu0 %v557
        %v670 = vpop.f32.mrb[0].mxu0
        %v671 = vadd.f32 0.0, %v670
        %v672 = vpop.f32.mrb[0].mxu0
        %v673 = vadd.f32 0.0, %v672
        %674 = vmatprep.mubr.f32.mxu0 0.0
        %675 = vmatmul.mubr.f32.gmra.mrb[0].mxu0 %v560
        %v676 = vpop.f32.mrb[0].mxu0
        %v677 = vadd.f32 0.0, %v676
        %v678 = vpop.f32.mrb[0].mxu0
        %v679 = vadd.f32 0.0, %v678
        %680 = vmatprep.mubr.f32.mxu0 0.0
        %681 = vmatmul.mubr.f32.gmra.mrb[0].mxu0 %v563
        %v682 = vpop.f32.mrb[0].mxu0
        %v683 = vadd.f32 0.0, %v682
        %v684 = vpop.f32.mrb[0].mxu0
        %v685 = vadd.f32 0.0, %v684
        %686 = vmatprep.mubr.f32.mxu0 0.0
        %687 = vmatmul.mubr.f32.gmra.mrb[0].mxu0 %v566
        %v688 = vpop.f32.mrb[0].mxu0
        %v689 = vadd.f32 0.0, %v688
        %v690 = vpop.f32.mrb[0].mxu0
        %v691 = vadd.f32 0.0, %v690
        %692 = vmatprep.mubr.f32.mxu0 0.0
        %693 = vmatmul.mubr.f32.gmra.mrb[0].mxu0 %v569
        %v694 = vpop.f32.mrb[0].mxu0
        %v695 = vadd.f32 0.0, %v694
        %v696 = vpop.f32.mrb[0].mxu0
        %v697 = vadd.f32 0.0, %v696
        %698 = vmatprep.mubr.f32.mxu0 0.0
        %699 = vmatmul.mubr.f32.gmra.mrb[0].mxu0 %v572
        %v700 = vpop.f32.mrb[0].mxu0
        %v701 = vadd.f32 0.0, %v700
        %v702 = vpop.f32.mrb[0].mxu0
        %v703 = vadd.f32 0.0, %v702
        %704 = vdwg.mxu0
        %705 = vmatprep.subr.mxu0 0.0
        %706 = vmatpush1.msra.mxu0 %v506
        %707 = vmatprep.subr.mxu0 0.0
        %708 = vmatpush1.msra.mxu0 %v509
        %709 = vmatprep.subr.mxu0 0.0
        %710 = vmatpush1.msra.mxu0 %v512
        %711 = vmatprep.subr.mxu0 0.0
        %712 = vmatpush1.msra.mxu0 %v515
        %713 = vmatprep.subr.mxu0 0.0
        %714 = vmatpush1.msra.mxu0 %v518
        %715 = vmatprep.subr.mxu0 0.0
        %716 = vmatpush1.msra.mxu0 %v521
        %717 = vmatprep.subr.mxu0 0.0
        %718 = vmatpush1.msra.mxu0 %v524
        %719 = vmatprep.subr.mxu0 0.0
        %720 = vmatpush1.msra.mxu0 %v527
        %721 = vmatprep.subr.mxu0 0.0
        %722 = vmatpush1.msra.mxu0 %v530
        %723 = vmatprep.subr.mxu0 0.0
        %724 = vmatpush1.msra.mxu0 %v533
        %725 = vmatprep.subr.mxu0 0.0
        %726 = vmatpush1.msra.mxu0 %v536
        %727 = vmatprep.subr.mxu0 0.0
        %728 = vmatpush1.msra.mxu0 %v539
        %729 = vmatprep.subr.mxu0 0.0
        %730 = vmatpush1.msra.mxu0 0.0
        %731 = vmatprep.subr.mxu0 0.0
        %732 = vmatpush1.msra.mxu0 0.0
        %733 = vmatprep.subr.mxu0 0.0
        %734 = vmatpush1.msra.mxu0 0.0
        %735 = vmatprep.subr.mxu0 0.0
        %736 = vmatpush1.msra.mxu0 0.0
        %737 = vmatprep.subr.mxu0 0.0
        %738 = vmatpush1.msra.mxu0 0.0
        %739 = vmatprep.subr.mxu0 0.0
        %740 = vmatpush1.msra.mxu0 0.0
        %741 = vmatprep.subr.mxu0 0.0
        %742 = vmatpush1.msra.mxu0 0.0
        %743 = vmatprep.subr.mxu0 0.0
        %744 = vmatpush1.msra.mxu0 0.0
        %745 = vmatprep.subr.mxu0 0.0
        %746 = vmatpush1.msra.mxu0 0.0
        %747 = vmatprep.subr.mxu0 0.0
        %748 = vmatpush1.msra.mxu0 0.0
        %749 = vmatprep.subr.mxu0 0.0
        %750 = vmatpush1.msra.mxu0 0.0
        %751 = vmatprep.subr.mxu0 0.0
        %752 = vmatpush1.msra.mxu0 0.0
        %753 = vmatprep.subr.mxu0 0.0
        %754 = vmatpush1.msra.mxu0 0.0
        %755 = vmatprep.subr.mxu0 0.0
        %756 = vmatpush1.msra.mxu0 0.0
        %757 = vmatprep.subr.mxu0 0.0
        %758 = vmatpush1.msra.mxu0 0.0
        %759 = vmatprep.subr.mxu0 0.0
        %760 = vmatpush1.msra.mxu0 0.0
        %761 = vmatprep.subr.mxu0 0.0
        %762 = vmatpush1.msra.mxu0 0.0
        %763 = vmatprep.subr.mxu0 0.0
        %764 = vmatpush1.msra.mxu0 0.0
        %765 = vmatprep.subr.mxu0 0.0
        %766 = vmatpush1.msra.mxu0 0.0
        %767 = vmatprep.subr.mxu0 0.0
        %768 = vmatpush1.msra.mxu0 0.0
        %769 = vmatprep.mubr.f32.mxu0 0.0
        %770 = vmatmul.mubr.f32.gmra.mrb[0].mxu0 %v542
        %v771 = vpop.f32.mrb[0].mxu0
        %v772 = vadd.f32 0.0, %v771
        %v773 = vpop.f32.mrb[0].mxu0
        %774 = vmatprep.mubr.f32.mxu0 0.0
        %775 = vmatmul.mubr.f32.gmra.mrb[0].mxu0 %v545
        %v776 = vpop.f32.mrb[0].mxu0
        %v777 = vadd.f32 0.0, %v776
        %v778 = vpop.f32.mrb[0].mxu0
        %779 = vmatprep.mubr.f32.mxu0 0.0
        %780 = vmatmul.mubr.f32.gmra.mrb[0].mxu0 %v548
        %v781 = vpop.f32.mrb[0].mxu0
        %v782 = vadd.f32 0.0, %v781
        %v783 = vpop.f32.mrb[0].mxu0
        %784 = vmatprep.mubr.f32.mxu0 0.0
        %785 = vmatmul.mubr.f32.gmra.mrb[0].mxu0 %v551
        %v786 = vpop.f32.mrb[0].mxu0
        %v787 = vadd.f32 0.0, %v786
        %v788 = vpop.f32.mrb[0].mxu0
        %789 = vmatprep.mubr.f32.mxu0 0.0
        %790 = vmatmul.mubr.f32.gmra.mrb[0].mxu0 %v554
        %v791 = vpop.f32.mrb[0].mxu0
        %v792 = vadd.f32 0.0, %v791
        %v793 = vpop.f32.mrb[0].mxu0
        %794 = vmatprep.mubr.f32.mxu0 0.0
        %795 = vmatmul.mubr.f32.gmra.mrb[0].mxu0 %v557
        %v796 = vpop.f32.mrb[0].mxu0
        %v797 = vadd.f32 0.0, %v796
        %v798 = vpop.f32.mrb[0].mxu0
        %799 = vmatprep.mubr.f32.mxu0 0.0
        %800 = vmatmul.mubr.f32.gmra.mrb[0].mxu0 %v560
        %v801 = vpop.f32.mrb[0].mxu0
        %v802 = vadd.f32 0.0, %v801
        %v803 = vpop.f32.mrb[0].mxu0
        %804 = vmatprep.mubr.f32.mxu0 0.0
        %805 = vmatmul.mubr.f32.gmra.mrb[0].mxu0 %v563
        %v806 = vpop.f32.mrb[0].mxu0
        %v807 = vadd.f32 0.0, %v806
        %v808 = vpop.f32.mrb[0].mxu0
        %809 = vmatprep.mubr.f32.mxu0 0.0
        %810 = vmatmul.mubr.f32.gmra.mrb[0].mxu0 %v566
        %v811 = vpop.f32.mrb[0].mxu0
        %v812 = vadd.f32 0.0, %v811
        %v813 = vpop.f32.mrb[0].mxu0
        %814 = vmatprep.mubr.f32.mxu0 0.0
        %815 = vmatmul.mubr.f32.gmra.mrb[0].mxu0 %v569
        %v816 = vpop.f32.mrb[0].mxu0
        %v817 = vadd.f32 0.0, %v816
        %v818 = vpop.f32.mrb[0].mxu0
        %819 = vmatprep.mubr.f32.mxu0 0.0
        %820 = vmatmul.mubr.f32.gmra.mrb[0].mxu0 %v572
        %v821 = vpop.f32.mrb[0].mxu0
        %v822 = vadd.f32 0.0, %v821
        %v823 = vpop.f32.mrb[0].mxu0
        %824 = vdwg.mxu0
        %v826 = vsel %vm540, %v444, 0
        %v829 = vsel %vm540, %v445, 0
        %v832 = vsel %vm540, %v446, 0
        %v835 = vsel %vm540, %v447, 0
        %v838 = vsel %vm540, %v448, 0
        %v841 = vsel %vm540, %v449, 0
        %v844 = vsel %vm540, %v450, 0
        %v847 = vsel %vm540, %v451, 0
        %v850 = vsel %vm540, %v452, 0
        %v853 = vsel %vm540, %v453, 0
        %v856 = vsel %vm540, %v454, 0
        %858 = vmatprep.subr.mxu0 %v456
        %859 = vmatpush1.msra.mxu0 %v455
        %860 = vmatprep.subr.mxu0 %v459
        %861 = vmatpush1.msra.mxu0 %v458
        %862 = vmatprep.subr.mxu0 %v462
        %863 = vmatpush1.msra.mxu0 %v461
        %864 = vmatprep.subr.mxu0 %v465
        %865 = vmatpush1.msra.mxu0 %v464
        %866 = vmatprep.subr.mxu0 %v468
        %867 = vmatpush1.msra.mxu0 %v467
        %868 = vmatprep.subr.mxu0 %v471
        %869 = vmatpush1.msra.mxu0 %v470
        %870 = vmatprep.subr.mxu0 %v474
        %871 = vmatpush1.msra.mxu0 %v473
        %872 = vmatprep.subr.mxu0 %v477
        %873 = vmatpush1.msra.mxu0 %v476
        %874 = vmatprep.subr.mxu0 %v480
        %875 = vmatpush1.msra.mxu0 %v479
        %876 = vmatprep.subr.mxu0 %v483
        %877 = vmatpush1.msra.mxu0 %v482
        %878 = vmatprep.subr.mxu0 %v486
        %879 = vmatpush1.msra.mxu0 %v485
        %880 = vmatprep.subr.mxu0 %v489
        %881 = vmatpush1.msra.mxu0 %v488
        %882 = vmatprep.subr.mxu0 0.0
        %883 = vmatpush1.msra.mxu0 0.0
        %884 = vmatprep.subr.mxu0 0.0
        %885 = vmatpush1.msra.mxu0 0.0
        %886 = vmatprep.subr.mxu0 0.0
        %887 = vmatpush1.msra.mxu0 0.0
        %888 = vmatprep.subr.mxu0 0.0
        %889 = vmatpush1.msra.mxu0 0.0
        %890 = vmatprep.subr.mxu0 0.0
        %891 = vmatpush1.msra.mxu0 0.0
        %892 = vmatprep.subr.mxu0 0.0
        %893 = vmatpush1.msra.mxu0 0.0
        %894 = vmatprep.subr.mxu0 0.0
        %895 = vmatpush1.msra.mxu0 0.0
        %896 = vmatprep.subr.mxu0 0.0
        %897 = vmatpush1.msra.mxu0 0.0
        %898 = vmatprep.subr.mxu0 0.0
        %899 = vmatpush1.msra.mxu0 0.0
        %900 = vmatprep.subr.mxu0 0.0
        %901 = vmatpush1.msra.mxu0 0.0
        %902 = vmatprep.subr.mxu0 0.0
        %903 = vmatpush1.msra.mxu0 0.0
        %904 = vmatprep.subr.mxu0 0.0
        %905 = vmatpush1.msra.mxu0 0.0
        %906 = vmatprep.subr.mxu0 0.0
        %907 = vmatpush1.msra.mxu0 0.0
        %908 = vmatprep.subr.mxu0 0.0
        %909 = vmatpush1.msra.mxu0 0.0
        %910 = vmatprep.subr.mxu0 0.0
        %911 = vmatpush1.msra.mxu0 0.0
        %912 = vmatprep.subr.mxu0 0.0
        %913 = vmatpush1.msra.mxu0 0.0
        %914 = vmatprep.subr.mxu0 0.0
        %915 = vmatpush1.msra.mxu0 0.0
        %916 = vmatprep.subr.mxu0 0.0
        %917 = vmatpush1.msra.mxu0 0.0
        %918 = vmatprep.subr.mxu0 0.0
        %919 = vmatpush1.msra.mxu0 0.0
        %920 = vmatprep.subr.mxu0 0.0
        %921 = vmatpush1.msra.mxu0 0.0
        %922 = vmatprep.mubr.f32.mxu0 0.0
        %923 = vmatmul.mubr.f32.gmra.mrb[0].mxu0 %v826
        %v924 = vpop.f32.mrb[0].mxu0
        %v925 = vadd.f32 %v641, %v924
        %v926 = vpop.f32.mrb[0].mxu0
        %v927 = vadd.f32 %v643, %v926
        %928 = vmatprep.mubr.f32.mxu0 0.0
        %929 = vmatmul.mubr.f32.gmra.mrb[0].mxu0 %v829
        %v930 = vpop.f32.mrb[0].mxu0
        %v931 = vadd.f32 %v647, %v930
        %v932 = vpop.f32.mrb[0].mxu0
        %v933 = vadd.f32 %v649, %v932
        %934 = vmatprep.mubr.f32.mxu0 0.0
        %935 = vmatmul.mubr.f32.gmra.mrb[0].mxu0 %v832
        %v936 = vpop.f32.mrb[0].mxu0
        %v937 = vadd.f32 %v653, %v936
        %v938 = vpop.f32.mrb[0].mxu0
        %v939 = vadd.f32 %v655, %v938
        %940 = vmatprep.mubr.f32.mxu0 0.0
        %941 = vmatmul.mubr.f32.gmra.mrb[0].mxu0 %v835
        %v942 = vpop.f32.mrb[0].mxu0
        %v943 = vadd.f32 %v659, %v942
        %v944 = vpop.f32.mrb[0].mxu0
        %v945 = vadd.f32 %v661, %v944
        %946 = vmatprep.mubr.f32.mxu0 0.0
        %947 = vmatmul.mubr.f32.gmra.mrb[0].mxu0 %v838
        %v948 = vpop.f32.mrb[0].mxu0
        %v949 = vadd.f32 %v665, %v948
        %v950 = vpop.f32.mrb[0].mxu0
        %v951 = vadd.f32 %v667, %v950
        %952 = vmatprep.mubr.f32.mxu0 0.0
        %953 = vmatmul.mubr.f32.gmra.mrb[0].mxu0 %v841
        %v954 = vpop.f32.mrb[0].mxu0
        %v955 = vadd.f32 %v671, %v954
        %v956 = vpop.f32.mrb[0].mxu0
        %v957 = vadd.f32 %v673, %v956
        %958 = vmatprep.mubr.f32.mxu0 0.0
        %959 = vmatmul.mubr.f32.gmra.mrb[0].mxu0 %v844
        %v960 = vpop.f32.mrb[0].mxu0
        %v961 = vadd.f32 %v677, %v960
        %v962 = vpop.f32.mrb[0].mxu0
        %v963 = vadd.f32 %v679, %v962
        %964 = vmatprep.mubr.f32.mxu0 0.0
        %965 = vmatmul.mubr.f32.gmra.mrb[0].mxu0 %v847
        %v966 = vpop.f32.mrb[0].mxu0
        %v967 = vadd.f32 %v683, %v966
        %v968 = vpop.f32.mrb[0].mxu0
        %v969 = vadd.f32 %v685, %v968
        %970 = vmatprep.mubr.f32.mxu0 0.0
        %971 = vmatmul.mubr.f32.gmra.mrb[0].mxu0 %v850
        %v972 = vpop.f32.mrb[0].mxu0
        %v973 = vadd.f32 %v689, %v972
        %v974 = vpop.f32.mrb[0].mxu0
        %v975 = vadd.f32 %v691, %v974
        %976 = vmatprep.mubr.f32.mxu0 0.0
        %977 = vmatmul.mubr.f32.gmra.mrb[0].mxu0 %v853
        %v978 = vpop.f32.mrb[0].mxu0
        %v979 = vadd.f32 %v695, %v978
        %v980 = vpop.f32.mrb[0].mxu0
        %v981 = vadd.f32 %v697, %v980
        %982 = vmatprep.mubr.f32.mxu0 0.0
        %983 = vmatmul.mubr.f32.gmra.mrb[0].mxu0 %v856
        %v984 = vpop.f32.mrb[0].mxu0
        %v985 = vadd.f32 %v701, %v984
        %v986 = vpop.f32.mrb[0].mxu0
        %v987 = vadd.f32 %v703, %v986
        %988 = vdwg.mxu0
        %989 = vmatprep.subr.mxu0 0.0
        %990 = vmatpush1.msra.mxu0 %v457
        %991 = vmatprep.subr.mxu0 0.0
        %992 = vmatpush1.msra.mxu0 %v460
        %993 = vmatprep.subr.mxu0 0.0
        %994 = vmatpush1.msra.mxu0 %v463
        %995 = vmatprep.subr.mxu0 0.0
        %996 = vmatpush1.msra.mxu0 %v466
        %997 = vmatprep.subr.mxu0 0.0
        %998 = vmatpush1.msra.mxu0 %v469
        %999 = vmatprep.subr.mxu0 0.0
        %1000 = vmatpush1.msra.mxu0 %v472
        %1001 = vmatprep.subr.mxu0 0.0
        %1002 = vmatpush1.msra.mxu0 %v475
        %1003 = vmatprep.subr.mxu0 0.0
        %1004 = vmatpush1.msra.mxu0 %v478
        %1005 = vmatprep.subr.mxu0 0.0
        %1006 = vmatpush1.msra.mxu0 %v481
        %1007 = vmatprep.subr.mxu0 0.0
        %1008 = vmatpush1.msra.mxu0 %v484
        %1009 = vmatprep.subr.mxu0 0.0
        %1010 = vmatpush1.msra.mxu0 %v487
        %1011 = vmatprep.subr.mxu0 0.0
        %1012 = vmatpush1.msra.mxu0 %v490
        %1013 = vmatprep.subr.mxu0 0.0
        %1014 = vmatpush1.msra.mxu0 0.0
        %1015 = vmatprep.subr.mxu0 0.0
        %1016 = vmatpush1.msra.mxu0 0.0
        %1017 = vmatprep.subr.mxu0 0.0
        %1018 = vmatpush1.msra.mxu0 0.0
        %1019 = vmatprep.subr.mxu0 0.0
        %1020 = vmatpush1.msra.mxu0 0.0
        %1021 = vmatprep.subr.mxu0 0.0
        %1022 = vmatpush1.msra.mxu0 0.0
        %1023 = vmatprep.subr.mxu0 0.0
        %1024 = vmatpush1.msra.mxu0 0.0
        %1025 = vmatprep.subr.mxu0 0.0
        %1026 = vmatpush1.msra.mxu0 0.0
        %1027 = vmatprep.subr.mxu0 0.0
        %1028 = vmatpush1.msra.mxu0 0.0
        %1029 = vmatprep.subr.mxu0 0.0
        %1030 = vmatpush1.msra.mxu0 0.0
        %1031 = vmatprep.subr.mxu0 0.0
        %1032 = vmatpush1.msra.mxu0 0.0
        %1033 = vmatprep.subr.mxu0 0.0
        %1034 = vmatpush1.msra.mxu0 0.0
        %1035 = vmatprep.subr.mxu0 0.0
        %1036 = vmatpush1.msra.mxu0 0.0
        %1037 = vmatprep.subr.mxu0 0.0
        %1038 = vmatpush1.msra.mxu0 0.0
        %1039 = vmatprep.subr.mxu0 0.0
        %1040 = vmatpush1.msra.mxu0 0.0
        %1041 = vmatprep.subr.mxu0 0.0
        %1042 = vmatpush1.msra.mxu0 0.0
        %1043 = vmatprep.subr.mxu0 0.0
        %1044 = vmatpush1.msra.mxu0 0.0
        %1045 = vmatprep.subr.mxu0 0.0
        %1046 = vmatpush1.msra.mxu0 0.0
        %1047 = vmatprep.subr.mxu0 0.0
        %1048 = vmatpush1.msra.mxu0 0.0
        %1049 = vmatprep.subr.mxu0 0.0
        %1050 = vmatpush1.msra.mxu0 0.0
        %1051 = vmatprep.subr.mxu0 0.0
        %1052 = vmatpush1.msra.mxu0 0.0
        %1053 = vmatprep.mubr.f32.mxu0 0.0
        %1054 = vmatmul.mubr.f32.gmra.mrb[0].mxu0 %v826
        %v1055 = vpop.f32.mrb[0].mxu0
        %v1056 = vadd.f32 %v772, %v1055
        %v1057 = vpop.f32.mrb[0].mxu0
        %1058 = vmatprep.mubr.f32.mxu0 0.0
        %1059 = vmatmul.mubr.f32.gmra.mrb[0].mxu0 %v829
        %v1060 = vpop.f32.mrb[0].mxu0
        %v1061 = vadd.f32 %v777, %v1060
        %v1062 = vpop.f32.mrb[0].mxu0
        %1063 = vmatprep.mubr.f32.mxu0 0.0
        %1064 = vmatmul.mubr.f32.gmra.mrb[0].mxu0 %v832
        %v1065 = vpop.f32.mrb[0].mxu0
        %v1066 = vadd.f32 %v782, %v1065
        %v1067 = vpop.f32.mrb[0].mxu0
        %1068 = vmatprep.mubr.f32.mxu0 0.0
        %1069 = vmatmul.mubr.f32.gmra.mrb[0].mxu0 %v835
        %v1070 = vpop.f32.mrb[0].mxu0
        %v1071 = vadd.f32 %v787, %v1070
        %v1072 = vpop.f32.mrb[0].mxu0
        %1073 = vmatprep.mubr.f32.mxu0 0.0
        %1074 = vmatmul.mubr.f32.gmra.mrb[0].mxu0 %v838
        %v1075 = vpop.f32.mrb[0].mxu0
        %v1076 = vadd.f32 %v792, %v1075
        %v1077 = vpop.f32.mrb[0].mxu0
        %1078 = vmatprep.mubr.f32.mxu0 0.0
        %1079 = vmatmul.mubr.f32.gmra.mrb[0].mxu0 %v841
        %v1080 = vpop.f32.mrb[0].mxu0
        %v1081 = vadd.f32 %v797, %v1080
        %v1082 = vpop.f32.mrb[0].mxu0
        %1083 = vmatprep.mubr.f32.mxu0 0.0
        %1084 = vmatmul.mubr.f32.gmra.mrb[0].mxu0 %v844
        %v1085 = vpop.f32.mrb[0].mxu0
        %v1086 = vadd.f32 %v802, %v1085
        %v1087 = vpop.f32.mrb[0].mxu0
        %1088 = vmatprep.mubr.f32.mxu0 0.0
        %1089 = vmatmul.mubr.f32.gmra.mrb[0].mxu0 %v847
        %v1090 = vpop.f32.mrb[0].mxu0
        %v1091 = vadd.f32 %v807, %v1090
        %v1092 = vpop.f32.mrb[0].mxu0
        %1093 = vmatprep.mubr.f32.mxu0 0.0
        %1094 = vmatmul.mubr.f32.gmra.mrb[0].mxu0 %v850
        %v1095 = vpop.f32.mrb[0].mxu0
        %v1096 = vadd.f32 %v812, %v1095
        %v1097 = vpop.f32.mrb[0].mxu0
        %1098 = vmatprep.mubr.f32.mxu0 0.0
        %1099 = vmatmul.mubr.f32.gmra.mrb[0].mxu0 %v853
        %v1100 = vpop.f32.mrb[0].mxu0
        %v1101 = vadd.f32 %v817, %v1100
        %v1102 = vpop.f32.mrb[0].mxu0
        %1103 = vmatprep.mubr.f32.mxu0 0.0
        %1104 = vmatmul.mubr.f32.gmra.mrb[0].mxu0 %v856
        %v1105 = vpop.f32.mrb[0].mxu0
        %v1106 = vadd.f32 %v822, %v1105
        %v1107 = vpop.f32.mrb[0].mxu0
        %1108 = vdwg.mxu0
        %v1109 = vld [vmem:[%s442 + $0x8] sm:$0xff]
        %v1110 = vld [vmem:[%s442 + $0x10] sm:$0xff]
        %v1111 = vld [vmem:[%s442 + $0x18] sm:$0xff]
        %v1112 = vld [vmem:[%s442 + $0x20] sm:$0xff]
        %v1113 = vld [vmem:[%s442 + $0x28] sm:$0xff]
        %v1114 = vld [vmem:[%s442 + $0x30] sm:$0xff]
        %v1115 = vld [vmem:[%s442 + $0x38] sm:$0xff]
        %v1116 = vld [vmem:[%s442 + $0x40] sm:$0xff]
        %v1117 = vld [vmem:[%s442 + $0x48] sm:$0xff]
        %v1118 = vld [vmem:[%s442 + $0x50] sm:$0xff]
        %v1119 = vld [vmem:[%s442 + $0x58] sm:$0xff]
        %s1120 = scalar_lea.vmem %s1, 576
        %v1121 = vld [vmem:[%s1120] sm:$0xff]
        %v1122 = vld [vmem:[%s1120 + $0x8] sm:$0xff]
        %v1123 = vld [vmem:[%s1120 + $0x10] sm:$0xff]
        %v1124 = vld [vmem:[%s1120 + $0x18] sm:$0xff]
        %v1125 = vld [vmem:[%s1120 + $0x20] sm:$0xff]
        %v1126 = vld [vmem:[%s1120 + $0x28] sm:$0xff]
        %v1127 = vld [vmem:[%s1120 + $0x30] sm:$0xff]
        %v1128 = vld [vmem:[%s1120 + $0x38] sm:$0xff]
        %v1129 = vld [vmem:[%s1120 + $0x40] sm:$0xff]
        %v1130 = vld [vmem:[%s1120 + $0x48] sm:$0xff]
        %v1131 = vld [vmem:[%s1120 + $0x50] sm:$0xff]
        %v1132 = vld [vmem:[%s1120 + $0x58] sm:$0xff]
        %v1133 = vld [vmem:[%s1120 + $0x60] sm:$0xff]
        %v1134 = vld [vmem:[%s1120 + $0x68] sm:$0xff]
        %v1135 = vld [vmem:[%s1120 + $0x70] sm:$0xff]
        %v1136 = vld [vmem:[%s1120 + $0x78] sm:$0xff]
        %v1137 = vld [vmem:[%s1120 + $0x80] sm:$0xff]
        %v1138 = vld [vmem:[%s1120 + $0x88] sm:$0xff]
        %v1139 = vld [vmem:[%s1120 + $0x90] sm:$0xff]
        %v1140 = vld [vmem:[%s1120 + $0x98] sm:$0xff]
        %v1141 = vld [vmem:[%s1120 + $0xa0] sm:$0xff]
        %v1142 = vld [vmem:[%s1120 + $0xa8] sm:$0xff]
        %v1143 = vld [vmem:[%s1120 + $0xb0] sm:$0xff]
        %v1144 = vld [vmem:[%s1120 + $0xb8] sm:$0xff]
        %v1145 = vld [vmem:[%s1120 + $0xc0] sm:$0xff]
        %v1146 = vld [vmem:[%s1120 + $0xc8] sm:$0xff]
        %v1147 = vld [vmem:[%s1120 + $0xd0] sm:$0xff]
        %v1148 = vld [vmem:[%s1120 + $0xd8] sm:$0xff]
        %v1149 = vld [vmem:[%s1120 + $0xe0] sm:$0xff]
        %v1150 = vld [vmem:[%s1120 + $0xe8] sm:$0xff]
        %v1151 = vld [vmem:[%s1120 + $0xf0] sm:$0xff]
        %v1152 = vld [vmem:[%s1120 + $0xf8] sm:$0xff]
        %v1153 = vld [vmem:[%s1120 + $0x100] sm:$0xff]
        %v1154 = vld [vmem:[%s1120 + $0x108] sm:$0xff]
        %v1155 = vld [vmem:[%s1120 + $0x110] sm:$0xff]
        %v1156 = vld [vmem:[%s1120 + $0x118] sm:$0xff]
        %v1158 = vsel %vm540, %v1109, 0
        %v1161 = vsel %vm540, %v1110, 0
        %v1164 = vsel %vm540, %v1111, 0
        %v1167 = vsel %vm540, %v1112, 0
        %v1170 = vsel %vm540, %v1113, 0
        %v1173 = vsel %vm540, %v1114, 0
        %v1176 = vsel %vm540, %v1115, 0
        %v1179 = vsel %vm540, %v1116, 0
        %v1182 = vsel %vm540, %v1117, 0
        %v1185 = vsel %vm540, %v1118, 0
        %v1188 = vsel %vm540, %v1119, 0
        %1190 = vmatprep.subr.mxu0 %v1122
        %1191 = vmatpush1.msra.mxu0 %v1121
        %1192 = vmatprep.subr.mxu0 %v1125
        %1193 = vmatpush1.msra.mxu0 %v1124
        %1194 = vmatprep.subr.mxu0 %v1128
        %1195 = vmatpush1.msra.mxu0 %v1127
        %1196 = vmatprep.subr.mxu0 %v1131
        %1197 = vmatpush1.msra.mxu0 %v1130
        %1198 = vmatprep.subr.mxu0 %v1134
        %1199 = vmatpush1.msra.mxu0 %v1133
        %1200 = vmatprep.subr.mxu0 %v1137
        %1201 = vmatpush1.msra.mxu0 %v1136
        %1202 = vmatprep.subr.mxu0 %v1140
        %1203 = vmatpush1.msra.mxu0 %v1139
        %1204 = vmatprep.subr.mxu0 %v1143
        %1205 = vmatpush1.msra.mxu0 %v1142
        %1206 = vmatprep.subr.mxu0 %v1146
        %1207 = vmatpush1.msra.mxu0 %v1145
        %1208 = vmatprep.subr.mxu0 %v1149
        %1209 = vmatpush1.msra.mxu0 %v1148
        %1210 = vmatprep.subr.mxu0 %v1152
        %1211 = vmatpush1.msra.mxu0 %v1151
        %1212 = vmatprep.subr.mxu0 %v1155
        %1213 = vmatpush1.msra.mxu0 %v1154
        %1214 = vmatprep.subr.mxu0 0.0
        %1215 = vmatpush1.msra.mxu0 0.0
        %1216 = vmatprep.subr.mxu0 0.0
        %1217 = vmatpush1.msra.mxu0 0.0
        %1218 = vmatprep.subr.mxu0 0.0
        %1219 = vmatpush1.msra.mxu0 0.0
        %1220 = vmatprep.subr.mxu0 0.0
        %1221 = vmatpush1.msra.mxu0 0.0
        %1222 = vmatprep.subr.mxu0 0.0
        %1223 = vmatpush1.msra.mxu0 0.0
        %1224 = vmatprep.subr.mxu0 0.0
        %1225 = vmatpush1.msra.mxu0 0.0
        %1226 = vmatprep.subr.mxu0 0.0
        %1227 = vmatpush1.msra.mxu0 0.0
        %1228 = vmatprep.subr.mxu0 0.0
        %1229 = vmatpush1.msra.mxu0 0.0
        %1230 = vmatprep.subr.mxu0 0.0
        %1231 = vmatpush1.msra.mxu0 0.0
        %1232 = vmatprep.subr.mxu0 0.0
        %1233 = vmatpush1.msra.mxu0 0.0
        %1234 = vmatprep.subr.mxu0 0.0
        %1235 = vmatpush1.msra.mxu0 0.0
        %1236 = vmatprep.subr.mxu0 0.0
        %1237 = vmatpush1.msra.mxu0 0.0
        %1238 = vmatprep.subr.mxu0 0.0
        %1239 = vmatpush1.msra.mxu0 0.0
        %1240 = vmatprep.subr.mxu0 0.0
        %1241 = vmatpush1.msra.mxu0 0.0
        %1242 = vmatprep.subr.mxu0 0.0
        %1243 = vmatpush1.msra.mxu0 0.0
        %1244 = vmatprep.subr.mxu0 0.0
        %1245 = vmatpush1.msra.mxu0 0.0
        %1246 = vmatprep.subr.mxu0 0.0
        %1247 = vmatpush1.msra.mxu0 0.0
        %1248 = vmatprep.subr.mxu0 0.0
        %1249 = vmatpush1.msra.mxu0 0.0
        %1250 = vmatprep.subr.mxu0 0.0
        %1251 = vmatpush1.msra.mxu0 0.0
        %1252 = vmatprep.subr.mxu0 0.0
        %1253 = vmatpush1.msra.mxu0 0.0
        %1254 = vmatprep.mubr.f32.mxu0 0.0
        %1255 = vmatmul.mubr.f32.gmra.mrb[0].mxu0 %v1158
        %v1256 = vpop.f32.mrb[0].mxu0
        %v1257 = vadd.f32 0.0, %v1256
        %v1258 = vpop.f32.mrb[0].mxu0
        %v1259 = vadd.f32 0.0, %v1258
        %1260 = vmatprep.mubr.f32.mxu0 0.0
        %1261 = vmatmul.mubr.f32.gmra.mrb[0].mxu0 %v1161
        %v1262 = vpop.f32.mrb[0].mxu0
        %v1263 = vadd.f32 0.0, %v1262
        %v1264 = vpop.f32.mrb[0].mxu0
        %v1265 = vadd.f32 0.0, %v1264
        %1266 = vmatprep.mubr.f32.mxu0 0.0
        %1267 = vmatmul.mubr.f32.gmra.mrb[0].mxu0 %v1164
        %v1268 = vpop.f32.mrb[0].mxu0
        %v1269 = vadd.f32 0.0, %v1268
        %v1270 = vpop.f32.mrb[0].mxu0
        %v1271 = vadd.f32 0.0, %v1270
        %1272 = vmatprep.mubr.f32.mxu0 0.0
        %1273 = vmatmul.mubr.f32.gmra.mrb[0].mxu0 %v1167
        %v1274 = vpop.f32.mrb[0].mxu0
        %v1275 = vadd.f32 0.0, %v1274
        %v1276 = vpop.f32.mrb[0].mxu0
        %v1277 = vadd.f32 0.0, %v1276
        %1278 = vmatprep.mubr.f32.mxu0 0.0
        %1279 = vmatmul.mubr.f32.gmra.mrb[0].mxu0 %v1170
        %v1280 = vpop.f32.mrb[0].mxu0
        %v1281 = vadd.f32 0.0, %v1280
        %v1282 = vpop.f32.mrb[0].mxu0
        %v1283 = vadd.f32 0.0, %v1282
        %1284 = vmatprep.mubr.f32.mxu0 0.0
        %1285 = vmatmul.mubr.f32.gmra.mrb[0].mxu0 %v1173
        %v1286 = vpop.f32.mrb[0].mxu0
        %v1287 = vadd.f32 0.0, %v1286
        %v1288 = vpop.f32.mrb[0].mxu0
        %v1289 = vadd.f32 0.0, %v1288
        %1290 = vmatprep.mubr.f32.mxu0 0.0
        %1291 = vmatmul.mubr.f32.gmra.mrb[0].mxu0 %v1176
        %v1292 = vpop.f32.mrb[0].mxu0
        %v1293 = vadd.f32 0.0, %v1292
        %v1294 = vpop.f32.mrb[0].mxu0
        %v1295 = vadd.f32 0.0, %v1294
        %1296 = vmatprep.mubr.f32.mxu0 0.0
        %1297 = vmatmul.mubr.f32.gmra.mrb[0].mxu0 %v1179
        %v1298 = vpop.f32.mrb[0].mxu0
        %v1299 = vadd.f32 0.0, %v1298
        %v1300 = vpop.f32.mrb[0].mxu0
        %v1301 = vadd.f32 0.0, %v1300
        %1302 = vmatprep.mubr.f32.mxu0 0.0
        %1303 = vmatmul.mubr.f32.gmra.mrb[0].mxu0 %v1182
        %v1304 = vpop.f32.mrb[0].mxu0
        %v1305 = vadd.f32 0.0, %v1304
        %v1306 = vpop.f32.mrb[0].mxu0
        %v1307 = vadd.f32 0.0, %v1306
        %1308 = vmatprep.mubr.f32.mxu0 0.0
        %1309 = vmatmul.mubr.f32.gmra.mrb[0].mxu0 %v1185
        %v1310 = vpop.f32.mrb[0].mxu0
        %v1311 = vadd.f32 0.0, %v1310
        %v1312 = vpop.f32.mrb[0].mxu0
        %v1313 = vadd.f32 0.0, %v1312
        %1314 = vmatprep.mubr.f32.mxu0 0.0
        %1315 = vmatmul.mubr.f32.gmra.mrb[0].mxu0 %v1188
        %v1316 = vpop.f32.mrb[0].mxu0
        %v1317 = vadd.f32 0.0, %v1316
        %v1318 = vpop.f32.mrb[0].mxu0
        %v1319 = vadd.f32 0.0, %v1318
        %1320 = vdwg.mxu0
        %1321 = vmatprep.subr.mxu0 0.0
        %1322 = vmatpush1.msra.mxu0 %v1123
        %1323 = vmatprep.subr.mxu0 0.0
        %1324 = vmatpush1.msra.mxu0 %v1126
        %1325 = vmatprep.subr.mxu0 0.0
        %1326 = vmatpush1.msra.mxu0 %v1129
        %1327 = vmatprep.subr.mxu0 0.0
        %1328 = vmatpush1.msra.mxu0 %v1132
        %1329 = vmatprep.subr.mxu0 0.0
        %1330 = vmatpush1.msra.mxu0 %v1135
        %1331 = vmatprep.subr.mxu0 0.0
        %1332 = vmatpush1.msra.mxu0 %v1138
        %1333 = vmatprep.subr.mxu0 0.0
        %1334 = vmatpush1.msra.mxu0 %v1141
        %1335 = vmatprep.subr.mxu0 0.0
        %1336 = vmatpush1.msra.mxu0 %v1144
        %1337 = vmatprep.subr.mxu0 0.0
        %1338 = vmatpush1.msra.mxu0 %v1147
        %1339 = vmatprep.subr.mxu0 0.0
        %1340 = vmatpush1.msra.mxu0 %v1150
        %1341 = vmatprep.subr.mxu0 0.0
        %1342 = vmatpush1.msra.mxu0 %v1153
        %1343 = vmatprep.subr.mxu0 0.0
        %1344 = vmatpush1.msra.mxu0 %v1156
        %1345 = vmatprep.subr.mxu0 0.0
        %1346 = vmatpush1.msra.mxu0 0.0
        %1347 = vmatprep.subr.mxu0 0.0
        %1348 = vmatpush1.msra.mxu0 0.0
        %1349 = vmatprep.subr.mxu0 0.0
        %1350 = vmatpush1.msra.mxu0 0.0
        %1351 = vmatprep.subr.mxu0 0.0
        %1352 = vmatpush1.msra.mxu0 0.0
        %1353 = vmatprep.subr.mxu0 0.0
        %1354 = vmatpush1.msra.mxu0 0.0
        %1355 = vmatprep.subr.mxu0 0.0
        %1356 = vmatpush1.msra.mxu0 0.0
        %1357 = vmatprep.subr.mxu0 0.0
        %1358 = vmatpush1.msra.mxu0 0.0
        %1359 = vmatprep.subr.mxu0 0.0
        %1360 = vmatpush1.msra.mxu0 0.0
        %1361 = vmatprep.subr.mxu0 0.0
        %1362 = vmatpush1.msra.mxu0 0.0
        %1363 = vmatprep.subr.mxu0 0.0
        %1364 = vmatpush1.msra.mxu0 0.0
        %1365 = vmatprep.subr.mxu0 0.0
        %1366 = vmatpush1.msra.mxu0 0.0
        %1367 = vmatprep.subr.mxu0 0.0
        %1368 = vmatpush1.msra.mxu0 0.0
        %1369 = vmatprep.subr.mxu0 0.0
        %1370 = vmatpush1.msra.mxu0 0.0
        %1371 = vmatprep.subr.mxu0 0.0
        %1372 = vmatpush1.msra.mxu0 0.0
        %1373 = vmatprep.subr.mxu0 0.0
        %1374 = vmatpush1.msra.mxu0 0.0
        %1375 = vmatprep.subr.mxu0 0.0
        %1376 = vmatpush1.msra.mxu0 0.0
        %1377 = vmatprep.subr.mxu0 0.0
        %1378 = vmatpush1.msra.mxu0 0.0
        %1379 = vmatprep.subr.mxu0 0.0
        %1380 = vmatpush1.msra.mxu0 0.0
        %1381 = vmatprep.subr.mxu0 0.0
        %1382 = vmatpush1.msra.mxu0 0.0
        %1383 = vmatprep.subr.mxu0 0.0
        %1384 = vmatpush1.msra.mxu0 0.0
        %1385 = vmatprep.mubr.f32.mxu0 0.0
        %1386 = vmatmul.mubr.f32.gmra.mrb[0].mxu0 %v1158
        %v1387 = vpop.f32.mrb[0].mxu0
        %v1388 = vadd.f32 0.0, %v1387
        %v1389 = vpop.f32.mrb[0].mxu0
        %1390 = vmatprep.mubr.f32.mxu0 0.0
        %1391 = vmatmul.mubr.f32.gmra.mrb[0].mxu0 %v1161
        %v1392 = vpop.f32.mrb[0].mxu0
        %v1393 = vadd.f32 0.0, %v1392
        %v1394 = vpop.f32.mrb[0].mxu0
        %1395 = vmatprep.mubr.f32.mxu0 0.0
        %1396 = vmatmul.mubr.f32.gmra.mrb[0].mxu0 %v1164
        %v1397 = vpop.f32.mrb[0].mxu0
        %v1398 = vadd.f32 0.0, %v1397
        %v1399 = vpop.f32.mrb[0].mxu0
        %1400 = vmatprep.mubr.f32.mxu0 0.0
        %1401 = vmatmul.mubr.f32.gmra.mrb[0].mxu0 %v1167
        %v1402 = vpop.f32.mrb[0].mxu0
        %v1403 = vadd.f32 0.0, %v1402
        %v1404 = vpop.f32.mrb[0].mxu0
        %1405 = vmatprep.mubr.f32.mxu0 0.0
        %1406 = vmatmul.mubr.f32.gmra.mrb[0].mxu0 %v1170
        %v1407 = vpop.f32.mrb[0].mxu0
        %v1408 = vadd.f32 0.0, %v1407
        %v1409 = vpop.f32.mrb[0].mxu0
        %1410 = vmatprep.mubr.f32.mxu0 0.0
        %1411 = vmatmul.mubr.f32.gmra.mrb[0].mxu0 %v1173
        %v1412 = vpop.f32.mrb[0].mxu0
        %v1413 = vadd.f32 0.0, %v1412
        %v1414 = vpop.f32.mrb[0].mxu0
        %1415 = vmatprep.mubr.f32.mxu0 0.0
        %1416 = vmatmul.mubr.f32.gmra.mrb[0].mxu0 %v1176
        %v1417 = vpop.f32.mrb[0].mxu0
        %v1418 = vadd.f32 0.0, %v1417
        %v1419 = vpop.f32.mrb[0].mxu0
        %1420 = vmatprep.mubr.f32.mxu0 0.0
        %1421 = vmatmul.mubr.f32.gmra.mrb[0].mxu0 %v1179
        %v1422 = vpop.f32.mrb[0].mxu0
        %v1423 = vadd.f32 0.0, %v1422
        %v1424 = vpop.f32.mrb[0].mxu0
        %1425 = vmatprep.mubr.f32.mxu0 0.0
        %1426 = vmatmul.mubr.f32.gmra.mrb[0].mxu0 %v1182
        %v1427 = vpop.f32.mrb[0].mxu0
        %v1428 = vadd.f32 0.0, %v1427
        %v1429 = vpop.f32.mrb[0].mxu0
        %1430 = vmatprep.mubr.f32.mxu0 0.0
        %1431 = vmatmul.mubr.f32.gmra.mrb[0].mxu0 %v1185
        %v1432 = vpop.f32.mrb[0].mxu0
        %v1433 = vadd.f32 0.0, %v1432
        %v1434 = vpop.f32.mrb[0].mxu0
        %1435 = vmatprep.mubr.f32.mxu0 0.0
        %1436 = vmatmul.mubr.f32.gmra.mrb[0].mxu0 %v1188
        %v1437 = vpop.f32.mrb[0].mxu0
        %v1438 = vadd.f32 0.0, %v1437
        %v1439 = vpop.f32.mrb[0].mxu0
        %1440 = vdwg.mxu0
        %v1441 = vadd.f32 %v925, %v1257
        %v1442 = vadd.f32 %v927, %v1259
        %v1443 = vadd.f32 %v1056, %v1388
        %v1444 = vadd.f32 %v931, %v1263
        %v1445 = vadd.f32 %v933, %v1265
        %v1446 = vadd.f32 %v1061, %v1393
        %v1447 = vadd.f32 %v937, %v1269
        %v1448 = vadd.f32 %v939, %v1271
        %v1449 = vadd.f32 %v1066, %v1398
        %v1450 = vadd.f32 %v943, %v1275
        %v1451 = vadd.f32 %v945, %v1277
        %v1452 = vadd.f32 %v1071, %v1403
        %v1453 = vadd.f32 %v949, %v1281
        %v1454 = vadd.f32 %v951, %v1283
        %v1455 = vadd.f32 %v1076, %v1408
        %v1456 = vadd.f32 %v955, %v1287
        %v1457 = vadd.f32 %v957, %v1289
        %v1458 = vadd.f32 %v1081, %v1413
        %v1459 = vadd.f32 %v961, %v1293
        %v1460 = vadd.f32 %v963, %v1295
        %v1461 = vadd.f32 %v1086, %v1418
        %v1462 = vadd.f32 %v967, %v1299
        %v1463 = vadd.f32 %v969, %v1301
        %v1464 = vadd.f32 %v1091, %v1423
        %v1465 = vadd.f32 %v973, %v1305
        %v1466 = vadd.f32 %v975, %v1307
        %v1467 = vadd.f32 %v1096, %v1428
        %v1468 = vadd.f32 %v979, %v1311
        %v1469 = vadd.f32 %v981, %v1313
        %v1470 = vadd.f32 %v1101, %v1433
        %v1471 = vadd.f32 %v985, %v1317
        %v1472 = vadd.f32 %v987, %v1319
        %v1473 = vadd.f32 %v1106, %v1438
        %v1474 = vld [vmem:[%s2] sm:$0x7]
        %v1476 = vlaneseq
        %v1477 = vshrl.u32 %v1476, 7
        %v1478 = vsub.s32 0, %v1477
        %v1479 = vrot.slane %v1474, %v1478
        %v1480 = vlaneseq
        %v1481 = vshrl.u32 %v1480, 7
        %v1482 = vsub.s32 1, %v1481
        %v1483 = vrot.slane %v1474, %v1482
        %v1484 = vlaneseq
        %v1485 = vshrl.u32 %v1484, 7
        %v1486 = vsub.s32 2, %v1485
        %v1487 = vrot.slane %v1474, %v1486
        %v1491 = vadd.f32 %v1441, %v1479
        %v1492 = vadd.f32 %v1442, %v1483
        %v1493 = vadd.f32 %v1443, %v1487
        %v1494 = vadd.f32 %v1444, %v1479
        %v1495 = vadd.f32 %v1445, %v1483
        %v1496 = vadd.f32 %v1446, %v1487
        %v1497 = vadd.f32 %v1447, %v1479
        %v1498 = vadd.f32 %v1448, %v1483
        %v1499 = vadd.f32 %v1449, %v1487
        %v1500 = vadd.f32 %v1450, %v1479
        %v1501 = vadd.f32 %v1451, %v1483
        %v1502 = vadd.f32 %v1452, %v1487
        %v1503 = vadd.f32 %v1453, %v1479
        %v1504 = vadd.f32 %v1454, %v1483
        %v1505 = vadd.f32 %v1455, %v1487
        %v1506 = vadd.f32 %v1456, %v1479
        %v1507 = vadd.f32 %v1457, %v1483
        %v1508 = vadd.f32 %v1458, %v1487
        %v1509 = vadd.f32 %v1459, %v1479
        %v1510 = vadd.f32 %v1460, %v1483
        %v1511 = vadd.f32 %v1461, %v1487
        %v1512 = vadd.f32 %v1462, %v1479
        %v1513 = vadd.f32 %v1463, %v1483
        %v1514 = vadd.f32 %v1464, %v1487
        %v1515 = vadd.f32 %v1465, %v1479
        %v1516 = vadd.f32 %v1466, %v1483
        %v1517 = vadd.f32 %v1467, %v1487
        %v1518 = vadd.f32 %v1468, %v1479
        %v1519 = vadd.f32 %v1469, %v1483
        %v1520 = vadd.f32 %v1470, %v1487
        %v1521 = vadd.f32 %v1471, %v1479
        %v1522 = vadd.f32 %v1472, %v1483
        %v1523 = vadd.f32 %v1473, %v1487
        %v1524 = vmax.f32 %v1491, 0.0
        %v1525 = vmax.f32 %v1492, 0.0
        %v1526 = vmax.f32 %v1493, 0.0
        %v1527 = vmax.f32 %v1494, 0.0
        %v1528 = vmax.f32 %v1495, 0.0
        %v1529 = vmax.f32 %v1496, 0.0
        %v1530 = vmax.f32 %v1497, 0.0
        %v1531 = vmax.f32 %v1498, 0.0
        %v1532 = vmax.f32 %v1499, 0.0
        %v1533 = vmax.f32 %v1500, 0.0
        %v1534 = vmax.f32 %v1501, 0.0
        %v1535 = vmax.f32 %v1502, 0.0
        %v1536 = vmax.f32 %v1503, 0.0
        %v1537 = vmax.f32 %v1504, 0.0
        %v1538 = vmax.f32 %v1505, 0.0
        %v1539 = vmax.f32 %v1506, 0.0
        %v1540 = vmax.f32 %v1507, 0.0
        %v1541 = vmax.f32 %v1508, 0.0
        %v1542 = vmax.f32 %v1509, 0.0
        %v1543 = vmax.f32 %v1510, 0.0
        %v1544 = vmax.f32 %v1511, 0.0
        %v1545 = vmax.f32 %v1512, 0.0
        %v1546 = vmax.f32 %v1513, 0.0
        %v1547 = vmax.f32 %v1514, 0.0
        %v1548 = vmax.f32 %v1515, 0.0
        %v1549 = vmax.f32 %v1516, 0.0
        %v1550 = vmax.f32 %v1517, 0.0
        %v1551 = vmax.f32 %v1518, 0.0
        %v1552 = vmax.f32 %v1519, 0.0
        %v1553 = vmax.f32 %v1520, 0.0
        %v1554 = vmax.f32 %v1521, 0.0
        %v1555 = vmax.f32 %v1522, 0.0
        %v1556 = vmax.f32 %v1523, 0.0
        %1557 = vst [vmem:[#allocation2] sm:$0xff] %v1524
        %1558 = vst [vmem:[#allocation2 + $0x8] sm:$0xff] %v1525
        %1559 = vst.msk [vmem:[#allocation2 + $0x10] sm:$0xff] %vm540, %v1526
        %1560 = vst [vmem:[#allocation2 + $0x18] sm:$0xff] %v1527
        %1561 = vst [vmem:[#allocation2 + $0x20] sm:$0xff] %v1528
        %1562 = vst.msk [vmem:[#allocation2 + $0x28] sm:$0xff] %vm540, %v1529
        %1563 = vst [vmem:[#allocation2 + $0x30] sm:$0xff] %v1530
        %1564 = vst [vmem:[#allocation2 + $0x38] sm:$0xff] %v1531
        %1565 = vst.msk [vmem:[#allocation2 + $0x40] sm:$0xff] %vm540, %v1532
        %1566 = vst [vmem:[#allocation2 + $0x48] sm:$0xff] %v1533
        %1567 = vst [vmem:[#allocation2 + $0x50] sm:$0xff] %v1534
        %1568 = vst.msk [vmem:[#allocation2 + $0x58] sm:$0xff] %vm540, %v1535
        %1569 = vst [vmem:[#allocation2 + $0x60] sm:$0xff] %v1536
        %1570 = vst [vmem:[#allocation2 + $0x68] sm:$0xff] %v1537
        %1571 = vst.msk [vmem:[#allocation2 + $0x70] sm:$0xff] %vm540, %v1538
        %1572 = vst [vmem:[#allocation2 + $0x78] sm:$0xff] %v1539
        %1573 = vst [vmem:[#allocation2 + $0x80] sm:$0xff] %v1540
        %1574 = vst.msk [vmem:[#allocation2 + $0x88] sm:$0xff] %vm540, %v1541
        %1575 = vst [vmem:[#allocation2 + $0x90] sm:$0xff] %v1542
        %1576 = vst [vmem:[#allocation2 + $0x98] sm:$0xff] %v1543
        %1577 = vst.msk [vmem:[#allocation2 + $0xa0] sm:$0xff] %vm540, %v1544
        %1578 = vst [vmem:[#allocation2 + $0xa8] sm:$0xff] %v1545
        %1579 = vst [vmem:[#allocation2 + $0xb0] sm:$0xff] %v1546
        %1580 = vst.msk [vmem:[#allocation2 + $0xb8] sm:$0xff] %vm540, %v1547
        %1581 = vst [vmem:[#allocation2 + $0xc0] sm:$0xff] %v1548
        %1582 = vst [vmem:[#allocation2 + $0xc8] sm:$0xff] %v1549
        %1583 = vst.msk [vmem:[#allocation2 + $0xd0] sm:$0xff] %vm540, %v1550
        %1584 = vst [vmem:[#allocation2 + $0xd8] sm:$0xff] %v1551
        %1585 = vst [vmem:[#allocation2 + $0xe0] sm:$0xff] %v1552
        %1586 = vst.msk [vmem:[#allocation2 + $0xe8] sm:$0xff] %vm540, %v1553
        %1587 = vst [vmem:[#allocation2 + $0xf0] sm:$0xff] %v1554
        %1588 = vst [vmem:[#allocation2 + $0xf8] sm:$0xff] %v1555
        %1589 = vst.msk [vmem:[#allocation2 + $0x100] sm:$0xff] %vm540, %v1556
        %v1590 = vld [vmem:[#allocation2] sm:$0xff]
        %v1591 = vld [vmem:[#allocation2 + $0x8] sm:$0xff]
        %v1592 = vld [vmem:[#allocation2 + $0x10] sm:$0xff]
        %v1593 = vld [vmem:[#allocation2 + $0x18] sm:$0xff]
        %v1594 = vld [vmem:[#allocation2 + $0x20] sm:$0xff]
        %v1595 = vld [vmem:[#allocation2 + $0x28] sm:$0xff]
        %v1596 = vld [vmem:[#allocation2 + $0x30] sm:$0xff]
        %v1597 = vld [vmem:[#allocation2 + $0x38] sm:$0xff]
        %v1598 = vld [vmem:[#allocation2 + $0x40] sm:$0xff]
        %v1599 = vld [vmem:[#allocation2 + $0x48] sm:$0xff]
        %v1600 = vld [vmem:[#allocation2 + $0x50] sm:$0xff]
        %v1601 = vld [vmem:[#allocation2 + $0x58] sm:$0xff]
        %v1602 = vld [vmem:[#allocation2 + $0x60] sm:$0xff]
        %v1603 = vld [vmem:[#allocation2 + $0x68] sm:$0xff]
        %v1604 = vld [vmem:[#allocation2 + $0x70] sm:$0xff]
        %v1605 = vld [vmem:[#allocation2 + $0x78] sm:$0xff]
        %v1606 = vld [vmem:[#allocation2 + $0x80] sm:$0xff]
        %v1607 = vld [vmem:[#allocation2 + $0x88] sm:$0xff]
        %v1608 = vld [vmem:[#allocation2 + $0x90] sm:$0xff]
        %v1609 = vld [vmem:[#allocation2 + $0x98] sm:$0xff]
        %v1610 = vld [vmem:[#allocation2 + $0xa0] sm:$0xff]
        %v1611 = vld [vmem:[#allocation2 + $0xa8] sm:$0xff]
        %v1612 = vld [vmem:[#allocation2 + $0xb0] sm:$0xff]
        %v1613 = vld [vmem:[#allocation2 + $0xb8] sm:$0xff]
        %v1614 = vld [vmem:[#allocation2 + $0xc0] sm:$0xff]
        %v1615 = vld [vmem:[#allocation2 + $0xc8] sm:$0xff]
        %v1616 = vld [vmem:[#allocation2 + $0xd0] sm:$0xff]
        %v1617 = vld [vmem:[%s3] sm:$0xff]
        %v1618 = vld [vmem:[%s3 + $0x8] sm:$0xff]
        %v1619 = vld [vmem:[%s3 + $0x10] sm:$0xff]
        %v1620 = vld [vmem:[%s3 + $0x18] sm:$0xff]
        %v1621 = vld [vmem:[%s3 + $0x20] sm:$0xff]
        %v1622 = vld [vmem:[%s3 + $0x28] sm:$0xff]
        %v1623 = vld [vmem:[%s3 + $0x30] sm:$0xff]
        %v1624 = vld [vmem:[%s3 + $0x38] sm:$0xff]
        %v1625 = vld [vmem:[%s3 + $0x40] sm:$0xff]
        %v1626 = vld [vmem:[%s3 + $0x48] sm:$0xff]
        %v1627 = vld [vmem:[%s3 + $0x50] sm:$0xff]
        %v1628 = vld [vmem:[%s3 + $0x58] sm:$0xff]
        %v1629 = vld [vmem:[%s3 + $0x60] sm:$0xff]
        %v1630 = vld [vmem:[%s3 + $0x68] sm:$0xff]
        %v1631 = vld [vmem:[%s3 + $0x70] sm:$0xff]
        %v1632 = vld [vmem:[%s3 + $0x78] sm:$0xff]
        %v1633 = vld [vmem:[%s3 + $0x80] sm:$0xff]
        %v1634 = vld [vmem:[%s3 + $0x88] sm:$0xff]
        %v1635 = vld [vmem:[%s3 + $0x90] sm:$0xff]
        %v1636 = vld [vmem:[%s3 + $0x98] sm:$0xff]
        %v1637 = vld [vmem:[%s3 + $0xa0] sm:$0xff]
        %v1638 = vld [vmem:[%s3 + $0xa8] sm:$0xff]
        %v1639 = vld [vmem:[%s3 + $0xb0] sm:$0xff]
        %v1640 = vld [vmem:[%s3 + $0xb8] sm:$0xff]
        %v1641 = vld [vmem:[%s3 + $0xc0] sm:$0xff]
        %v1642 = vld [vmem:[%s3 + $0xc8] sm:$0xff]
        %v1643 = vld [vmem:[%s3 + $0xd0] sm:$0xff]
        %v1644 = vld [vmem:[%s3 + $0xd8] sm:$0xff]
        %v1645 = vld [vmem:[%s3 + $0xe0] sm:$0xff]
        %v1646 = vld [vmem:[%s3 + $0xe8] sm:$0xff]
        %v1647 = vld [vmem:[%s3 + $0xf0] sm:$0xff]
        %v1648 = vld [vmem:[%s3 + $0xf8] sm:$0xff]
        %v1649 = vld [vmem:[%s3 + $0x100] sm:$0xff]
        %v1650 = vld [vmem:[%s3 + $0x108] sm:$0xff]
        %v1651 = vld [vmem:[%s3 + $0x110] sm:$0xff]
        %v1652 = vld [vmem:[%s3 + $0x118] sm:$0xff]
        %v1653 = vld [vmem:[%s3 + $0x120] sm:$0xff]
        %v1654 = vld [vmem:[%s3 + $0x128] sm:$0xff]
        %v1655 = vld [vmem:[%s3 + $0x130] sm:$0xff]
        %v1656 = vld [vmem:[%s3 + $0x138] sm:$0xff]
        %v1657 = vld [vmem:[%s3 + $0x140] sm:$0xff]
        %v1658 = vld [vmem:[%s3 + $0x148] sm:$0xff]
        %v1659 = vld [vmem:[%s3 + $0x150] sm:$0xff]
        %v1660 = vld [vmem:[%s3 + $0x158] sm:$0xff]
        %v1661 = vld [vmem:[%s3 + $0x160] sm:$0xff]
        %v1662 = vld [vmem:[%s3 + $0x168] sm:$0xff]
        %v1663 = vld [vmem:[%s3 + $0x170] sm:$0xff]
        %v1664 = vld [vmem:[%s3 + $0x178] sm:$0xff]
        %v1665 = vld [vmem:[%s3 + $0x180] sm:$0xff]
        %v1666 = vld [vmem:[%s3 + $0x188] sm:$0xff]
        %v1667 = vld [vmem:[%s3 + $0x190] sm:$0xff]
        %v1668 = vld [vmem:[%s3 + $0x198] sm:$0xff]
        %v1669 = vld [vmem:[%s3 + $0x1a0] sm:$0xff]
        %v1670 = vld [vmem:[%s3 + $0x1a8] sm:$0xff]
        %v1671 = vld [vmem:[%s3 + $0x1b0] sm:$0xff]
        %v1672 = vld [vmem:[%s3 + $0x1b8] sm:$0xff]
        %v1673 = vld [vmem:[%s3 + $0x1c0] sm:$0xff]
        %v1674 = vld [vmem:[%s3 + $0x1c8] sm:$0xff]
        %v1675 = vld [vmem:[%s3 + $0x1d0] sm:$0xff]
        %v1676 = vld [vmem:[%s3 + $0x1d8] sm:$0xff]
        %v1677 = vld [vmem:[%s3 + $0x1e0] sm:$0xff]
        %v1678 = vld [vmem:[%s3 + $0x1e8] sm:$0xff]
        %v1679 = vld [vmem:[%s3 + $0x1f0] sm:$0xff]
        %v1680 = vld [vmem:[%s3 + $0x1f8] sm:$0xff]
        %v1681 = vld [vmem:[%s3 + $0x200] sm:$0xff]
        %v1682 = vld [vmem:[%s3 + $0x208] sm:$0xff]
        %v1683 = vld [vmem:[%s3 + $0x210] sm:$0xff]
        %v1684 = vld [vmem:[%s3 + $0x218] sm:$0xff]
        %v1685 = vld [vmem:[%s3 + $0x220] sm:$0xff]
        %v1686 = vld [vmem:[%s3 + $0x228] sm:$0xff]
        %v1687 = vld [vmem:[%s3 + $0x230] sm:$0xff]
        %v1688 = vld [vmem:[%s3 + $0x238] sm:$0xff]
        %v1689 = vld [vmem:[%s3 + $0x240] sm:$0xff]
        %v1690 = vld [vmem:[%s3 + $0x248] sm:$0xff]
        %v1691 = vld [vmem:[%s3 + $0x250] sm:$0xff]
        %v1692 = vld [vmem:[%s3 + $0x258] sm:$0xff]
        %v1693 = vld [vmem:[%s3 + $0x260] sm:$0xff]
        %v1694 = vld [vmem:[%s3 + $0x268] sm:$0xff]
        %v1695 = vld [vmem:[%s3 + $0x270] sm:$0xff]
        %v1696 = vld [vmem:[%s3 + $0x278] sm:$0xff]
        %v1697 = vld [vmem:[%s3 + $0x280] sm:$0xff]
        %v1698 = vld [vmem:[%s3 + $0x288] sm:$0xff]
        %v1699 = vld [vmem:[%s3 + $0x290] sm:$0xff]
        %v1700 = vld [vmem:[%s3 + $0x298] sm:$0xff]
        %v1701 = vld [vmem:[%s3 + $0x2a0] sm:$0xff]
        %v1702 = vld [vmem:[%s3 + $0x2a8] sm:$0xff]
        %v1703 = vld [vmem:[%s3 + $0x2b0] sm:$0xff]
        %v1704 = vld [vmem:[%s3 + $0x2b8] sm:$0xff]
        %v1705 = vld [vmem:[%s3 + $0x2c0] sm:$0xff]
        %v1706 = vld [vmem:[%s3 + $0x2c8] sm:$0xff]
        %v1707 = vld [vmem:[%s3 + $0x2d0] sm:$0xff]
        %v1708 = vld [vmem:[%s3 + $0x2d8] sm:$0xff]
        %v1709 = vld [vmem:[%s3 + $0x2e0] sm:$0xff]
        %v1710 = vld [vmem:[%s3 + $0x2e8] sm:$0xff]
        %v1711 = vld [vmem:[%s3 + $0x2f0] sm:$0xff]
        %v1712 = vld [vmem:[%s3 + $0x2f8] sm:$0xff]
        %v1713 = vld [vmem:[%s3 + $0x300] sm:$0xff]
        %v1714 = vld [vmem:[%s3 + $0x308] sm:$0xff]
        %v1715 = vld [vmem:[%s3 + $0x310] sm:$0xff]
        %v1716 = vld [vmem:[%s3 + $0x318] sm:$0xff]
        %v1717 = vld [vmem:[%s3 + $0x320] sm:$0xff]
        %v1718 = vld [vmem:[%s3 + $0x328] sm:$0xff]
        %v1719 = vld [vmem:[%s3 + $0x330] sm:$0xff]
        %v1720 = vld [vmem:[%s3 + $0x338] sm:$0xff]
        %v1721 = vld [vmem:[%s3 + $0x340] sm:$0xff]
        %v1722 = vld [vmem:[%s3 + $0x348] sm:$0xff]
        %v1723 = vld [vmem:[%s3 + $0x350] sm:$0xff]
        %v1724 = vld [vmem:[%s3 + $0x358] sm:$0xff]
        %v1725 = vld [vmem:[%s3 + $0x360] sm:$0xff]
        %v1726 = vld [vmem:[%s3 + $0x368] sm:$0xff]
        %v1727 = vld [vmem:[%s3 + $0x370] sm:$0xff]
        %v1728 = vld [vmem:[%s3 + $0x378] sm:$0xff]
        %v1729 = vld [vmem:[%s3 + $0x380] sm:$0xff]
        %v1730 = vld [vmem:[%s3 + $0x388] sm:$0xff]
        %v1731 = vld [vmem:[%s3 + $0x390] sm:$0xff]
        %v1732 = vld [vmem:[%s3 + $0x398] sm:$0xff]
        %v1733 = vld [vmem:[%s3 + $0x3a0] sm:$0xff]
        %v1734 = vld [vmem:[%s3 + $0x3a8] sm:$0xff]
        %v1735 = vld [vmem:[%s3 + $0x3b0] sm:$0xff]
        %v1736 = vld [vmem:[%s3 + $0x3b8] sm:$0xff]
        %v1737 = vld [vmem:[%s3 + $0x3c0] sm:$0xff]
        %v1738 = vld [vmem:[%s3 + $0x3c8] sm:$0xff]
        %v1739 = vld [vmem:[%s3 + $0x3d0] sm:$0xff]
        %v1740 = vld [vmem:[%s3 + $0x3d8] sm:$0xff]
        %v1741 = vld [vmem:[%s3 + $0x3e0] sm:$0xff]
        %v1742 = vld [vmem:[%s3 + $0x3e8] sm:$0xff]
        %v1743 = vld [vmem:[%s3 + $0x3f0] sm:$0xff]
        %v1744 = vld [vmem:[%s3 + $0x3f8] sm:$0xff]
        %v1745 = vld [vmem:[%s3 + $0x400] sm:$0xff]
        %v1746 = vld [vmem:[%s3 + $0x408] sm:$0xff]
        %v1747 = vld [vmem:[%s3 + $0x410] sm:$0xff]
        %v1748 = vld [vmem:[%s3 + $0x418] sm:$0xff]
        %v1749 = vld [vmem:[#allocation2 + $0xd8] sm:$0xff]
        %v1750 = vld [vmem:[#allocation2 + $0xe0] sm:$0xff]
        %v1751 = vld [vmem:[#allocation2 + $0xe8] sm:$0xff]
        %s1752 = scalar_lea.vmem %s3, 1056
        %v1753 = vld [vmem:[%s1752] sm:$0xff]
        %v1754 = vld [vmem:[%s1752 + $0x8] sm:$0xff]
        %v1755 = vld [vmem:[%s1752 + $0x10] sm:$0xff]
        %v1756 = vld [vmem:[%s1752 + $0x18] sm:$0xff]
        %v1757 = vld [vmem:[%s1752 + $0x20] sm:$0xff]
        %v1758 = vld [vmem:[%s1752 + $0x28] sm:$0xff]
        %v1759 = vld [vmem:[%s1752 + $0x30] sm:$0xff]
        %v1760 = vld [vmem:[%s1752 + $0x38] sm:$0xff]
        %v1761 = vld [vmem:[%s1752 + $0x40] sm:$0xff]
        %v1762 = vld [vmem:[%s1752 + $0x48] sm:$0xff]
        %v1763 = vld [vmem:[%s1752 + $0x50] sm:$0xff]
        %v1764 = vld [vmem:[%s1752 + $0x58] sm:$0xff]
        %v1765 = vld [vmem:[%s1752 + $0x60] sm:$0xff]
        %v1766 = vld [vmem:[%s1752 + $0x68] sm:$0xff]
        %v1767 = vld [vmem:[%s1752 + $0x70] sm:$0xff]
        %v1768 = vld [vmem:[%s1752 + $0x78] sm:$0xff]
        %v1769 = vld [vmem:[%s1752 + $0x80] sm:$0xff]
        %v1770 = vld [vmem:[%s1752 + $0x88] sm:$0xff]
        %v1771 = vld [vmem:[%s1752 + $0x90] sm:$0xff]
        %v1772 = vld [vmem:[%s1752 + $0x98] sm:$0xff]
        %v1773 = vld [vmem:[%s1752 + $0xa0] sm:$0xff]
        %v1774 = vld [vmem:[%s1752 + $0xa8] sm:$0xff]
        %v1775 = vld [vmem:[%s1752 + $0xb0] sm:$0xff]
        %v1776 = vld [vmem:[%s1752 + $0xb8] sm:$0xff]
        %v1777 = vld [vmem:[%s1752 + $0xc0] sm:$0xff]
        %v1778 = vld [vmem:[%s1752 + $0xc8] sm:$0xff]
        %v1779 = vld [vmem:[%s1752 + $0xd0] sm:$0xff]
        %v1780 = vld [vmem:[%s1752 + $0xd8] sm:$0xff]
        %v1781 = vld [vmem:[%s1752 + $0xe0] sm:$0xff]
        %v1782 = vld [vmem:[%s1752 + $0xe8] sm:$0xff]
        %v1783 = vld [vmem:[%s1752 + $0xf0] sm:$0xff]
        %v1784 = vld [vmem:[%s1752 + $0xf8] sm:$0xff]
        %v1785 = vld [vmem:[%s1752 + $0x100] sm:$0xff]
        %v1786 = vld [vmem:[%s1752 + $0x108] sm:$0xff]
        %v1787 = vld [vmem:[%s1752 + $0x110] sm:$0xff]
        %v1788 = vld [vmem:[%s1752 + $0x118] sm:$0xff]
        %v1789 = vld [vmem:[%s1752 + $0x120] sm:$0xff]
        %v1790 = vld [vmem:[%s1752 + $0x128] sm:$0xff]
        %v1791 = vld [vmem:[%s1752 + $0x130] sm:$0xff]
        %v1792 = vld [vmem:[%s1752 + $0x138] sm:$0xff]
        %v1793 = vld [vmem:[%s1752 + $0x140] sm:$0xff]
        %v1794 = vld [vmem:[%s1752 + $0x148] sm:$0xff]
        %v1795 = vld [vmem:[%s1752 + $0x150] sm:$0xff]
        %v1796 = vld [vmem:[%s1752 + $0x158] sm:$0xff]
        %v1797 = vld [vmem:[%s1752 + $0x160] sm:$0xff]
        %v1798 = vld [vmem:[%s1752 + $0x168] sm:$0xff]
        %v1799 = vld [vmem:[%s1752 + $0x170] sm:$0xff]
        %v1800 = vld [vmem:[%s1752 + $0x178] sm:$0xff]
        %v1801 = vld [vmem:[%s1752 + $0x180] sm:$0xff]
        %v1802 = vld [vmem:[%s1752 + $0x188] sm:$0xff]
        %v1803 = vld [vmem:[%s1752 + $0x190] sm:$0xff]
        %v1804 = vld [vmem:[%s1752 + $0x198] sm:$0xff]
        %v1805 = vld [vmem:[%s1752 + $0x1a0] sm:$0xff]
        %v1806 = vld [vmem:[%s1752 + $0x1a8] sm:$0xff]
        %v1807 = vld [vmem:[%s1752 + $0x1b0] sm:$0xff]
        %v1808 = vld [vmem:[%s1752 + $0x1b8] sm:$0xff]
        %v1809 = vld [vmem:[%s1752 + $0x1c0] sm:$0xff]
        %v1810 = vld [vmem:[%s1752 + $0x1c8] sm:$0xff]
        %v1811 = vld [vmem:[%s1752 + $0x1d0] sm:$0xff]
        %v1812 = vld [vmem:[%s1752 + $0x1d8] sm:$0xff]
        %v1813 = vld [vmem:[%s1752 + $0x1e0] sm:$0xff]
        %v1814 = vld [vmem:[%s1752 + $0x1e8] sm:$0xff]
        %v1815 = vld [vmem:[%s1752 + $0x1f0] sm:$0xff]
        %v1816 = vld [vmem:[%s1752 + $0x1f8] sm:$0xff]
        %v1817 = vld [vmem:[%s1752 + $0x200] sm:$0xff]
        %v1818 = vld [vmem:[%s1752 + $0x208] sm:$0xff]
        %v1819 = vld [vmem:[%s1752 + $0x210] sm:$0xff]
        %v1820 = vld [vmem:[%s1752 + $0x218] sm:$0xff]
        %v1821 = vld [vmem:[%s1752 + $0x220] sm:$0xff]
        %v1822 = vld [vmem:[%s1752 + $0x228] sm:$0xff]
        %v1823 = vld [vmem:[%s1752 + $0x230] sm:$0xff]
        %v1824 = vld [vmem:[%s1752 + $0x238] sm:$0xff]
        %v1825 = vld [vmem:[%s1752 + $0x240] sm:$0xff]
        %v1826 = vld [vmem:[%s1752 + $0x248] sm:$0xff]
        %v1827 = vld [vmem:[%s1752 + $0x250] sm:$0xff]
        %v1828 = vld [vmem:[%s1752 + $0x258] sm:$0xff]
        %v1829 = vld [vmem:[%s1752 + $0x260] sm:$0xff]
        %v1830 = vld [vmem:[%s1752 + $0x268] sm:$0xff]
        %v1831 = vld [vmem:[%s1752 + $0x270] sm:$0xff]
        %v1832 = vld [vmem:[%s1752 + $0x278] sm:$0xff]
        %v1833 = vld [vmem:[%s1752 + $0x280] sm:$0xff]
        %v1834 = vld [vmem:[%s1752 + $0x288] sm:$0xff]
        %v1835 = vld [vmem:[%s1752 + $0x290] sm:$0xff]
        %v1836 = vld [vmem:[%s1752 + $0x298] sm:$0xff]
        %v1837 = vld [vmem:[%s1752 + $0x2a0] sm:$0xff]
        %v1838 = vld [vmem:[%s1752 + $0x2a8] sm:$0xff]
        %v1839 = vld [vmem:[%s1752 + $0x2b0] sm:$0xff]
        %v1840 = vld [vmem:[%s1752 + $0x2b8] sm:$0xff]
        %v1841 = vld [vmem:[%s1752 + $0x2c0] sm:$0xff]
        %v1842 = vld [vmem:[%s1752 + $0x2c8] sm:$0xff]
        %v1843 = vld [vmem:[%s1752 + $0x2d0] sm:$0xff]
        %v1844 = vld [vmem:[%s1752 + $0x2d8] sm:$0xff]
        %v1845 = vld [vmem:[%s1752 + $0x2e0] sm:$0xff]
        %v1846 = vld [vmem:[%s1752 + $0x2e8] sm:$0xff]
        %v1847 = vld [vmem:[%s1752 + $0x2f0] sm:$0xff]
        %v1848 = vld [vmem:[%s1752 + $0x2f8] sm:$0xff]
        %v1849 = vld [vmem:[%s1752 + $0x300] sm:$0xff]
        %v1850 = vld [vmem:[%s1752 + $0x308] sm:$0xff]
        %v1851 = vld [vmem:[%s1752 + $0x310] sm:$0xff]
        %v1852 = vld [vmem:[%s1752 + $0x318] sm:$0xff]
        %v1853 = vld [vmem:[%s1752 + $0x320] sm:$0xff]
        %v1854 = vld [vmem:[%s1752 + $0x328] sm:$0xff]
        %v1855 = vld [vmem:[%s1752 + $0x330] sm:$0xff]
        %v1856 = vld [vmem:[%s1752 + $0x338] sm:$0xff]
        %v1857 = vld [vmem:[%s1752 + $0x340] sm:$0xff]
        %v1858 = vld [vmem:[%s1752 + $0x348] sm:$0xff]
        %v1859 = vld [vmem:[%s1752 + $0x350] sm:$0xff]
        %v1860 = vld [vmem:[%s1752 + $0x358] sm:$0xff]
        %v1861 = vld [vmem:[%s1752 + $0x360] sm:$0xff]
        %v1862 = vld [vmem:[%s1752 + $0x368] sm:$0xff]
        %v1863 = vld [vmem:[%s1752 + $0x370] sm:$0xff]
        %v1864 = vld [vmem:[%s1752 + $0x378] sm:$0xff]
        %v1865 = vld [vmem:[%s1752 + $0x380] sm:$0xff]
        %v1866 = vld [vmem:[%s1752 + $0x388] sm:$0xff]
        %v1867 = vld [vmem:[%s1752 + $0x390] sm:$0xff]
        %v1868 = vld [vmem:[%s1752 + $0x398] sm:$0xff]
        %v1869 = vld [vmem:[%s1752 + $0x3a0] sm:$0xff]
        %v1870 = vld [vmem:[%s1752 + $0x3a8] sm:$0xff]
        %v1871 = vld [vmem:[%s1752 + $0x3b0] sm:$0xff]
        %v1872 = vld [vmem:[%s1752 + $0x3b8] sm:$0xff]
        %v1873 = vld [vmem:[%s1752 + $0x3c0] sm:$0xff]
        %v1874 = vld [vmem:[%s1752 + $0x3c8] sm:$0xff]
        %v1875 = vld [vmem:[%s1752 + $0x3d0] sm:$0xff]
        %v1876 = vld [vmem:[%s1752 + $0x3d8] sm:$0xff]
        %v1877 = vld [vmem:[%s1752 + $0x3e0] sm:$0xff]
        %v1878 = vld [vmem:[%s1752 + $0x3e8] sm:$0xff]
        %v1879 = vld [vmem:[%s1752 + $0x3f0] sm:$0xff]
        %v1880 = vld [vmem:[%s1752 + $0x3f8] sm:$0xff]
        %v1881 = vld [vmem:[%s1752 + $0x400] sm:$0xff]
        %v1882 = vld [vmem:[%s1752 + $0x408] sm:$0xff]
        %v1883 = vld [vmem:[%s1752 + $0x410] sm:$0xff]
        %v1884 = vld [vmem:[%s1752 + $0x418] sm:$0xff]
        %v1886 = vsel %vm540, %v1595, 0
        %v1889 = vsel %vm540, %v1598, 0
        %v1892 = vsel %vm540, %v1601, 0
        %v1895 = vsel %vm540, %v1604, 0
        %v1898 = vsel %vm540, %v1607, 0
        %v1901 = vsel %vm540, %v1610, 0
        %v1904 = vsel %vm540, %v1613, 0
        %v1907 = vsel %vm540, %v1616, 0
        %v1910 = vsel %vm540, %v1751, 0
        %1912 = vmatprep.subr.mxu0 %v1754
        %1913 = vmatpush1.msra.mxu0 %v1753
        %1914 = vmatprep.subr.mxu0 %v1757
        %1915 = vmatpush1.msra.mxu0 %v1756
        %1916 = vmatprep.subr.mxu0 %v1760
        %1917 = vmatpush1.msra.mxu0 %v1759
        %1918 = vmatprep.subr.mxu0 %v1763
        %1919 = vmatpush1.msra.mxu0 %v1762
        %1920 = vmatprep.subr.mxu0 %v1766
        %1921 = vmatpush1.msra.mxu0 %v1765
        %1922 = vmatprep.subr.mxu0 %v1769
        %1923 = vmatpush1.msra.mxu0 %v1768
        %1924 = vmatprep.subr.mxu0 %v1772
        %1925 = vmatpush1.msra.mxu0 %v1771
        %1926 = vmatprep.subr.mxu0 %v1775
        %1927 = vmatpush1.msra.mxu0 %v1774
        %1928 = vmatprep.subr.mxu0 %v1778
        %1929 = vmatpush1.msra.mxu0 %v1777
        %1930 = vmatprep.subr.mxu0 %v1781
        %1931 = vmatpush1.msra.mxu0 %v1780
        %1932 = vmatprep.subr.mxu0 %v1784
        %1933 = vmatpush1.msra.mxu0 %v1783
        %1934 = vmatprep.subr.mxu0 %v1787
        %1935 = vmatpush1.msra.mxu0 %v1786
        %1936 = vmatprep.subr.mxu0 %v1790
        %1937 = vmatpush1.msra.mxu0 %v1789
        %1938 = vmatprep.subr.mxu0 %v1793
        %1939 = vmatpush1.msra.mxu0 %v1792
        %1940 = vmatprep.subr.mxu0 %v1796
        %1941 = vmatpush1.msra.mxu0 %v1795
        %1942 = vmatprep.subr.mxu0 %v1799
        %1943 = vmatpush1.msra.mxu0 %v1798
        %1944 = vmatprep.subr.mxu0 %v1802
        %1945 = vmatpush1.msra.mxu0 %v1801
        %1946 = vmatprep.subr.mxu0 %v1805
        %1947 = vmatpush1.msra.mxu0 %v1804
        %1948 = vmatprep.subr.mxu0 %v1808
        %1949 = vmatpush1.msra.mxu0 %v1807
        %1950 = vmatprep.subr.mxu0 %v1811
        %1951 = vmatpush1.msra.mxu0 %v1810
        %1952 = vmatprep.subr.mxu0 %v1814
        %1953 = vmatpush1.msra.mxu0 %v1813
        %1954 = vmatprep.subr.mxu0 %v1817
        %1955 = vmatpush1.msra.mxu0 %v1816
        %1956 = vmatprep.subr.mxu0 %v1820
        %1957 = vmatpush1.msra.mxu0 %v1819
        %1958 = vmatprep.subr.mxu0 %v1823
        %1959 = vmatpush1.msra.mxu0 %v1822
        %1960 = vmatprep.subr.mxu0 %v1826
        %1961 = vmatpush1.msra.mxu0 %v1825
        %1962 = vmatprep.subr.mxu0 %v1829
        %1963 = vmatpush1.msra.mxu0 %v1828
        %1964 = vmatprep.subr.mxu0 %v1832
        %1965 = vmatpush1.msra.mxu0 %v1831
        %1966 = vmatprep.subr.mxu0 %v1835
        %1967 = vmatpush1.msra.mxu0 %v1834
        %1968 = vmatprep.subr.mxu0 %v1838
        %1969 = vmatpush1.msra.mxu0 %v1837
        %1970 = vmatprep.subr.mxu0 %v1841
        %1971 = vmatpush1.msra.mxu0 %v1840
        %1972 = vmatprep.subr.mxu0 %v1844
        %1973 = vmatpush1.msra.mxu0 %v1843
        %1974 = vmatprep.subr.mxu0 %v1847
        %1975 = vmatpush1.msra.mxu0 %v1846
        %1976 = vmatprep.mubr.f32.mxu0 %v1594
        %1977 = vmatmul.mubr.f32.gmra.mrb[0].mxu0 %v1593
        %v1978 = vpop.f32.mrb[0].mxu0
        %v1979 = vadd.f32 0.0, %v1978
        %v1980 = vpop.f32.mrb[0].mxu0
        %v1981 = vadd.f32 0.0, %v1980
        %1982 = vmatprep.mubr.f32.mxu0 %v1597
        %1983 = vmatmul.mubr.f32.gmra.mrb[0].mxu0 %v1596
        %v1984 = vpop.f32.mrb[0].mxu0
        %v1985 = vadd.f32 0.0, %v1984
        %v1986 = vpop.f32.mrb[0].mxu0
        %v1987 = vadd.f32 0.0, %v1986
        %1988 = vmatprep.mubr.f32.mxu0 %v1600
        %1989 = vmatmul.mubr.f32.gmra.mrb[0].mxu0 %v1599
        %v1990 = vpop.f32.mrb[0].mxu0
        %v1991 = vadd.f32 0.0, %v1990
        %v1992 = vpop.f32.mrb[0].mxu0
        %v1993 = vadd.f32 0.0, %v1992
        %1994 = vmatprep.mubr.f32.mxu0 %v1603
        %1995 = vmatmul.mubr.f32.gmra.mrb[0].mxu0 %v1602
        %v1996 = vpop.f32.mrb[0].mxu0
        %v1997 = vadd.f32 0.0, %v1996
        %v1998 = vpop.f32.mrb[0].mxu0
        %v1999 = vadd.f32 0.0, %v1998
        %2000 = vmatprep.mubr.f32.mxu0 %v1606
        %2001 = vmatmul.mubr.f32.gmra.mrb[0].mxu0 %v1605
        %v2002 = vpop.f32.mrb[0].mxu0
        %v2003 = vadd.f32 0.0, %v2002
        %v2004 = vpop.f32.mrb[0].mxu0
        %v2005 = vadd.f32 0.0, %v2004
        %2006 = vmatprep.mubr.f32.mxu0 %v1609
        %2007 = vmatmul.mubr.f32.gmra.mrb[0].mxu0 %v1608
        %v2008 = vpop.f32.mrb[0].mxu0
        %v2009 = vadd.f32 0.0, %v2008
        %v2010 = vpop.f32.mrb[0].mxu0
        %v2011 = vadd.f32 0.0, %v2010
        %2012 = vmatprep.mubr.f32.mxu0 %v1612
        %2013 = vmatmul.mubr.f32.gmra.mrb[0].mxu0 %v1611
        %v2014 = vpop.f32.mrb[0].mxu0
        %v2015 = vadd.f32 0.0, %v2014
        %v2016 = vpop.f32.mrb[0].mxu0
        %v2017 = vadd.f32 0.0, %v2016
        %2018 = vmatprep.mubr.f32.mxu0 %v1615
        %2019 = vmatmul.mubr.f32.gmra.mrb[0].mxu0 %v1614
        %v2020 = vpop.f32.mrb[0].mxu0
        %v2021 = vadd.f32 0.0, %v2020
        %v2022 = vpop.f32.mrb[0].mxu0
        %v2023 = vadd.f32 0.0, %v2022
        %2024 = vmatprep.mubr.f32.mxu0 %v1750
        %2025 = vmatmul.mubr.f32.gmra.mrb[0].mxu0 %v1749
        %v2026 = vpop.f32.mrb[0].mxu0
        %v2027 = vadd.f32 0.0, %v2026
        %v2028 = vpop.f32.mrb[0].mxu0
        %v2029 = vadd.f32 0.0, %v2028
        %2030 = vdwg.mxu0
        %2031 = vmatprep.subr.mxu0 %v1850
        %2032 = vmatpush1.msra.mxu0 %v1849
        %2033 = vmatprep.subr.mxu0 %v1853
        %2034 = vmatpush1.msra.mxu0 %v1852
        %2035 = vmatprep.subr.mxu0 %v1856
        %2036 = vmatpush1.msra.mxu0 %v1855
        %2037 = vmatprep.subr.mxu0 %v1859
        %2038 = vmatpush1.msra.mxu0 %v1858
        %2039 = vmatprep.subr.mxu0 %v1862
        %2040 = vmatpush1.msra.mxu0 %v1861
        %2041 = vmatprep.subr.mxu0 %v1865
        %2042 = vmatpush1.msra.mxu0 %v1864
        %2043 = vmatprep.subr.mxu0 %v1868
        %2044 = vmatpush1.msra.mxu0 %v1867
        %2045 = vmatprep.subr.mxu0 %v1871
        %2046 = vmatpush1.msra.mxu0 %v1870
        %2047 = vmatprep.subr.mxu0 %v1874
        %2048 = vmatpush1.msra.mxu0 %v1873
        %2049 = vmatprep.subr.mxu0 %v1877
        %2050 = vmatpush1.msra.mxu0 %v1876
        %2051 = vmatprep.subr.mxu0 %v1880
        %2052 = vmatpush1.msra.mxu0 %v1879
        %2053 = vmatprep.subr.mxu0 %v1883
        %2054 = vmatpush1.msra.mxu0 %v1882
        %2055 = vmatprep.subr.mxu0 0.0
        %2056 = vmatpush1.msra.mxu0 0.0
        %2057 = vmatprep.subr.mxu0 0.0
        %2058 = vmatpush1.msra.mxu0 0.0
        %2059 = vmatprep.subr.mxu0 0.0
        %2060 = vmatpush1.msra.mxu0 0.0
        %2061 = vmatprep.subr.mxu0 0.0
        %2062 = vmatpush1.msra.mxu0 0.0
        %2063 = vmatprep.subr.mxu0 0.0
        %2064 = vmatpush1.msra.mxu0 0.0
        %2065 = vmatprep.subr.mxu0 0.0
        %2066 = vmatpush1.msra.mxu0 0.0
        %2067 = vmatprep.subr.mxu0 0.0
        %2068 = vmatpush1.msra.mxu0 0.0
        %2069 = vmatprep.subr.mxu0 0.0
        %2070 = vmatpush1.msra.mxu0 0.0
        %2071 = vmatprep.subr.mxu0 0.0
        %2072 = vmatpush1.msra.mxu0 0.0
        %2073 = vmatprep.subr.mxu0 0.0
        %2074 = vmatpush1.msra.mxu0 0.0
        %2075 = vmatprep.subr.mxu0 0.0
        %2076 = vmatpush1.msra.mxu0 0.0
        %2077 = vmatprep.subr.mxu0 0.0
        %2078 = vmatpush1.msra.mxu0 0.0
        %2079 = vmatprep.subr.mxu0 0.0
        %2080 = vmatpush1.msra.mxu0 0.0
        %2081 = vmatprep.subr.mxu0 0.0
        %2082 = vmatpush1.msra.mxu0 0.0
        %2083 = vmatprep.subr.mxu0 0.0
        %2084 = vmatpush1.msra.mxu0 0.0
        %2085 = vmatprep.subr.mxu0 0.0
        %2086 = vmatpush1.msra.mxu0 0.0
        %2087 = vmatprep.subr.mxu0 0.0
        %2088 = vmatpush1.msra.mxu0 0.0
        %2089 = vmatprep.subr.mxu0 0.0
        %2090 = vmatpush1.msra.mxu0 0.0
        %2091 = vmatprep.subr.mxu0 0.0
        %2092 = vmatpush1.msra.mxu0 0.0
        %2093 = vmatprep.subr.mxu0 0.0
        %2094 = vmatpush1.msra.mxu0 0.0
        %2095 = vmatprep.mubr.f32.mxu0 0.0
        %2096 = vmatmul.mubr.f32.gmra.mrb[0].mxu0 %v1886
        %v2097 = vpop.f32.mrb[0].mxu0
        %v2098 = vadd.f32 %v1979, %v2097
        %v2099 = vpop.f32.mrb[0].mxu0
        %v2100 = vadd.f32 %v1981, %v2099
        %2101 = vmatprep.mubr.f32.mxu0 0.0
        %2102 = vmatmul.mubr.f32.gmra.mrb[0].mxu0 %v1889
        %v2103 = vpop.f32.mrb[0].mxu0
        %v2104 = vadd.f32 %v1985, %v2103
        %v2105 = vpop.f32.mrb[0].mxu0
        %v2106 = vadd.f32 %v1987, %v2105
        %2107 = vmatprep.mubr.f32.mxu0 0.0
        %2108 = vmatmul.mubr.f32.gmra.mrb[0].mxu0 %v1892
        %v2109 = vpop.f32.mrb[0].mxu0
        %v2110 = vadd.f32 %v1991, %v2109
        %v2111 = vpop.f32.mrb[0].mxu0
        %v2112 = vadd.f32 %v1993, %v2111
        %2113 = vmatprep.mubr.f32.mxu0 0.0
        %2114 = vmatmul.mubr.f32.gmra.mrb[0].mxu0 %v1895
        %v2115 = vpop.f32.mrb[0].mxu0
        %v2116 = vadd.f32 %v1997, %v2115
        %v2117 = vpop.f32.mrb[0].mxu0
        %v2118 = vadd.f32 %v1999, %v2117
        %2119 = vmatprep.mubr.f32.mxu0 0.0
        %2120 = vmatmul.mubr.f32.gmra.mrb[0].mxu0 %v1898
        %v2121 = vpop.f32.mrb[0].mxu0
        %v2122 = vadd.f32 %v2003, %v2121
        %v2123 = vpop.f32.mrb[0].mxu0
        %v2124 = vadd.f32 %v2005, %v2123
        %2125 = vmatprep.mubr.f32.mxu0 0.0
        %2126 = vmatmul.mubr.f32.gmra.mrb[0].mxu0 %v1901
        %v2127 = vpop.f32.mrb[0].mxu0
        %v2128 = vadd.f32 %v2009, %v2127
        %v2129 = vpop.f32.mrb[0].mxu0
        %v2130 = vadd.f32 %v2011, %v2129
        %2131 = vmatprep.mubr.f32.mxu0 0.0
        %2132 = vmatmul.mubr.f32.gmra.mrb[0].mxu0 %v1904
        %v2133 = vpop.f32.mrb[0].mxu0
        %v2134 = vadd.f32 %v2015, %v2133
        %v2135 = vpop.f32.mrb[0].mxu0
        %v2136 = vadd.f32 %v2017, %v2135
        %2137 = vmatprep.mubr.f32.mxu0 0.0
        %2138 = vmatmul.mubr.f32.gmra.mrb[0].mxu0 %v1907
        %v2139 = vpop.f32.mrb[0].mxu0
        %v2140 = vadd.f32 %v2021, %v2139
        %v2141 = vpop.f32.mrb[0].mxu0
        %v2142 = vadd.f32 %v2023, %v2141
        %2143 = vmatprep.mubr.f32.mxu0 0.0
        %2144 = vmatmul.mubr.f32.gmra.mrb[0].mxu0 %v1910
        %v2145 = vpop.f32.mrb[0].mxu0
        %v2146 = vadd.f32 %v2027, %v2145
        %v2147 = vpop.f32.mrb[0].mxu0
        %v2148 = vadd.f32 %v2029, %v2147
        %2149 = vdwg.mxu0
        %2150 = vmatprep.subr.mxu0 0.0
        %2151 = vmatpush1.msra.mxu0 %v1755
        %2152 = vmatprep.subr.mxu0 0.0
        %2153 = vmatpush1.msra.mxu0 %v1758
        %2154 = vmatprep.subr.mxu0 0.0
        %2155 = vmatpush1.msra.mxu0 %v1761
        %2156 = vmatprep.subr.mxu0 0.0
        %2157 = vmatpush1.msra.mxu0 %v1764
        %2158 = vmatprep.subr.mxu0 0.0
        %2159 = vmatpush1.msra.mxu0 %v1767
        %2160 = vmatprep.subr.mxu0 0.0
        %2161 = vmatpush1.msra.mxu0 %v1770
        %2162 = vmatprep.subr.mxu0 0.0
        %2163 = vmatpush1.msra.mxu0 %v1773
        %2164 = vmatprep.subr.mxu0 0.0
        %2165 = vmatpush1.msra.mxu0 %v1776
        %2166 = vmatprep.subr.mxu0 0.0
        %2167 = vmatpush1.msra.mxu0 %v1779
        %2168 = vmatprep.subr.mxu0 0.0
        %2169 = vmatpush1.msra.mxu0 %v1782
        %2170 = vmatprep.subr.mxu0 0.0
        %2171 = vmatpush1.msra.mxu0 %v1785
        %2172 = vmatprep.subr.mxu0 0.0
        %2173 = vmatpush1.msra.mxu0 %v1788
        %2174 = vmatprep.subr.mxu0 0.0
        %2175 = vmatpush1.msra.mxu0 %v1791
        %2176 = vmatprep.subr.mxu0 0.0
        %2177 = vmatpush1.msra.mxu0 %v1794
        %2178 = vmatprep.subr.mxu0 0.0
        %2179 = vmatpush1.msra.mxu0 %v1797
        %2180 = vmatprep.subr.mxu0 0.0
        %2181 = vmatpush1.msra.mxu0 %v1800
        %2182 = vmatprep.subr.mxu0 0.0
        %2183 = vmatpush1.msra.mxu0 %v1803
        %2184 = vmatprep.subr.mxu0 0.0
        %2185 = vmatpush1.msra.mxu0 %v1806
        %2186 = vmatprep.subr.mxu0 0.0
        %2187 = vmatpush1.msra.mxu0 %v1809
        %2188 = vmatprep.subr.mxu0 0.0
        %2189 = vmatpush1.msra.mxu0 %v1812
        %2190 = vmatprep.subr.mxu0 0.0
        %2191 = vmatpush1.msra.mxu0 %v1815
        %2192 = vmatprep.subr.mxu0 0.0
        %2193 = vmatpush1.msra.mxu0 %v1818
        %2194 = vmatprep.subr.mxu0 0.0
        %2195 = vmatpush1.msra.mxu0 %v1821
        %2196 = vmatprep.subr.mxu0 0.0
        %2197 = vmatpush1.msra.mxu0 %v1824
        %2198 = vmatprep.subr.mxu0 0.0
        %2199 = vmatpush1.msra.mxu0 %v1827
        %2200 = vmatprep.subr.mxu0 0.0
        %2201 = vmatpush1.msra.mxu0 %v1830
        %2202 = vmatprep.subr.mxu0 0.0
        %2203 = vmatpush1.msra.mxu0 %v1833
        %2204 = vmatprep.subr.mxu0 0.0
        %2205 = vmatpush1.msra.mxu0 %v1836
        %2206 = vmatprep.subr.mxu0 0.0
        %2207 = vmatpush1.msra.mxu0 %v1839
        %2208 = vmatprep.subr.mxu0 0.0
        %2209 = vmatpush1.msra.mxu0 %v1842
        %2210 = vmatprep.subr.mxu0 0.0
        %2211 = vmatpush1.msra.mxu0 %v1845
        %2212 = vmatprep.subr.mxu0 0.0
        %2213 = vmatpush1.msra.mxu0 %v1848
        %2214 = vmatprep.mubr.f32.mxu0 %v1594
        %2215 = vmatmul.mubr.f32.gmra.mrb[0].mxu0 %v1593
        %v2216 = vpop.f32.mrb[0].mxu0
        %v2217 = vadd.f32 0.0, %v2216
        %v2218 = vpop.f32.mrb[0].mxu0
        %2219 = vmatprep.mubr.f32.mxu0 %v1597
        %2220 = vmatmul.mubr.f32.gmra.mrb[0].mxu0 %v1596
        %v2221 = vpop.f32.mrb[0].mxu0
        %v2222 = vadd.f32 0.0, %v2221
        %v2223 = vpop.f32.mrb[0].mxu0
        %2224 = vmatprep.mubr.f32.mxu0 %v1600
        %2225 = vmatmul.mubr.f32.gmra.mrb[0].mxu0 %v1599
        %v2226 = vpop.f32.mrb[0].mxu0
        %v2227 = vadd.f32 0.0, %v2226
        %v2228 = vpop.f32.mrb[0].mxu0
        %2229 = vmatprep.mubr.f32.mxu0 %v1603
        %2230 = vmatmul.mubr.f32.gmra.mrb[0].mxu0 %v1602
        %v2231 = vpop.f32.mrb[0].mxu0
        %v2232 = vadd.f32 0.0, %v2231
        %v2233 = vpop.f32.mrb[0].mxu0
        %2234 = vmatprep.mubr.f32.mxu0 %v1606
        %2235 = vmatmul.mubr.f32.gmra.mrb[0].mxu0 %v1605
        %v2236 = vpop.f32.mrb[0].mxu0
        %v2237 = vadd.f32 0.0, %v2236
        %v2238 = vpop.f32.mrb[0].mxu0
        %2239 = vmatprep.mubr.f32.mxu0 %v1609
        %2240 = vmatmul.mubr.f32.gmra.mrb[0].mxu0 %v1608
        %v2241 = vpop.f32.mrb[0].mxu0
        %v2242 = vadd.f32 0.0, %v2241
        %v2243 = vpop.f32.mrb[0].mxu0
        %2244 = vmatprep.mubr.f32.mxu0 %v1612
        %2245 = vmatmul.mubr.f32.gmra.mrb[0].mxu0 %v1611
        %v2246 = vpop.f32.mrb[0].mxu0
        %v2247 = vadd.f32 0.0, %v2246
        %v2248 = vpop.f32.mrb[0].mxu0
        %2249 = vmatprep.mubr.f32.mxu0 %v1615
        %2250 = vmatmul.mubr.f32.gmra.mrb[0].mxu0 %v1614
        %v2251 = vpop.f32.mrb[0].mxu0
        %v2252 = vadd.f32 0.0, %v2251
        %v2253 = vpop.f32.mrb[0].mxu0
        %2254 = vmatprep.mubr.f32.mxu0 %v1750
        %2255 = vmatmul.mubr.f32.gmra.mrb[0].mxu0 %v1749
        %v2256 = vpop.f32.mrb[0].mxu0
        %v2257 = vadd.f32 0.0, %v2256
        %v2258 = vpop.f32.mrb[0].mxu0
        %2259 = vdwg.mxu0
        %2260 = vmatprep.subr.mxu0 0.0
        %2261 = vmatpush1.msra.mxu0 %v1851
        %2262 = vmatprep.subr.mxu0 0.0
        %2263 = vmatpush1.msra.mxu0 %v1854
        %2264 = vmatprep.subr.mxu0 0.0
        %2265 = vmatpush1.msra.mxu0 %v1857
        %2266 = vmatprep.subr.mxu0 0.0
        %2267 = vmatpush1.msra.mxu0 %v1860
        %2268 = vmatprep.subr.mxu0 0.0
        %2269 = vmatpush1.msra.mxu0 %v1863
        %2270 = vmatprep.subr.mxu0 0.0
        %2271 = vmatpush1.msra.mxu0 %v1866
        %2272 = vmatprep.subr.mxu0 0.0
        %2273 = vmatpush1.msra.mxu0 %v1869
        %2274 = vmatprep.subr.mxu0 0.0
        %2275 = vmatpush1.msra.mxu0 %v1872
        %2276 = vmatprep.subr.mxu0 0.0
        %2277 = vmatpush1.msra.mxu0 %v1875
        %2278 = vmatprep.subr.mxu0 0.0
        %2279 = vmatpush1.msra.mxu0 %v1878
        %2280 = vmatprep.subr.mxu0 0.0
        %2281 = vmatpush1.msra.mxu0 %v1881
        %2282 = vmatprep.subr.mxu0 0.0
        %2283 = vmatpush1.msra.mxu0 %v1884
        %2284 = vmatprep.subr.mxu0 0.0
        %2285 = vmatpush1.msra.mxu0 0.0
        %2286 = vmatprep.subr.mxu0 0.0
        %2287 = vmatpush1.msra.mxu0 0.0
        %2288 = vmatprep.subr.mxu0 0.0
        %2289 = vmatpush1.msra.mxu0 0.0
        %2290 = vmatprep.subr.mxu0 0.0
        %2291 = vmatpush1.msra.mxu0 0.0
        %2292 = vmatprep.subr.mxu0 0.0
        %2293 = vmatpush1.msra.mxu0 0.0
        %2294 = vmatprep.subr.mxu0 0.0
        %2295 = vmatpush1.msra.mxu0 0.0
        %2296 = vmatprep.subr.mxu0 0.0
        %2297 = vmatpush1.msra.mxu0 0.0
        %2298 = vmatprep.subr.mxu0 0.0
        %2299 = vmatpush1.msra.mxu0 0.0
        %2300 = vmatprep.subr.mxu0 0.0
        %2301 = vmatpush1.msra.mxu0 0.0
        %2302 = vmatprep.subr.mxu0 0.0
        %2303 = vmatpush1.msra.mxu0 0.0
        %2304 = vmatprep.subr.mxu0 0.0
        %2305 = vmatpush1.msra.mxu0 0.0
        %2306 = vmatprep.subr.mxu0 0.0
        %2307 = vmatpush1.msra.mxu0 0.0
        %2308 = vmatprep.subr.mxu0 0.0
        %2309 = vmatpush1.msra.mxu0 0.0
        %2310 = vmatprep.subr.mxu0 0.0
        %2311 = vmatpush1.msra.mxu0 0.0
        %2312 = vmatprep.subr.mxu0 0.0
        %2313 = vmatpush1.msra.mxu0 0.0
        %2314 = vmatprep.subr.mxu0 0.0
        %2315 = vmatpush1.msra.mxu0 0.0
        %2316 = vmatprep.subr.mxu0 0.0
        %2317 = vmatpush1.msra.mxu0 0.0
        %2318 = vmatprep.subr.mxu0 0.0
        %2319 = vmatpush1.msra.mxu0 0.0
        %2320 = vmatprep.subr.mxu0 0.0
        %2321 = vmatpush1.msra.mxu0 0.0
        %2322 = vmatprep.subr.mxu0 0.0
        %2323 = vmatpush1.msra.mxu0 0.0
        %2324 = vmatprep.mubr.f32.mxu0 0.0
        %2325 = vmatmul.mubr.f32.gmra.mrb[0].mxu0 %v1886
        %v2326 = vpop.f32.mrb[0].mxu0
        %v2327 = vadd.f32 %v2217, %v2326
        %v2328 = vpop.f32.mrb[0].mxu0
        %2329 = vmatprep.mubr.f32.mxu0 0.0
        %2330 = vmatmul.mubr.f32.gmra.mrb[0].mxu0 %v1889
        %v2331 = vpop.f32.mrb[0].mxu0
        %v2332 = vadd.f32 %v2222, %v2331
        %v2333 = vpop.f32.mrb[0].mxu0
        %2334 = vmatprep.mubr.f32.mxu0 0.0
        %2335 = vmatmul.mubr.f32.gmra.mrb[0].mxu0 %v1892
        %v2336 = vpop.f32.mrb[0].mxu0
        %v2337 = vadd.f32 %v2227, %v2336
        %v2338 = vpop.f32.mrb[0].mxu0
        %2339 = vmatprep.mubr.f32.mxu0 0.0
        %2340 = vmatmul.mubr.f32.gmra.mrb[0].mxu0 %v1895
        %v2341 = vpop.f32.mrb[0].mxu0
        %v2342 = vadd.f32 %v2232, %v2341
        %v2343 = vpop.f32.mrb[0].mxu0
        %2344 = vmatprep.mubr.f32.mxu0 0.0
        %2345 = vmatmul.mubr.f32.gmra.mrb[0].mxu0 %v1898
        %v2346 = vpop.f32.mrb[0].mxu0
        %v2347 = vadd.f32 %v2237, %v2346
        %v2348 = vpop.f32.mrb[0].mxu0
        %2349 = vmatprep.mubr.f32.mxu0 0.0
        %2350 = vmatmul.mubr.f32.gmra.mrb[0].mxu0 %v1901
        %v2351 = vpop.f32.mrb[0].mxu0
        %v2352 = vadd.f32 %v2242, %v2351
        %v2353 = vpop.f32.mrb[0].mxu0
        %2354 = vmatprep.mubr.f32.mxu0 0.0
        %2355 = vmatmul.mubr.f32.gmra.mrb[0].mxu0 %v1904
        %v2356 = vpop.f32.mrb[0].mxu0
        %v2357 = vadd.f32 %v2247, %v2356
        %v2358 = vpop.f32.mrb[0].mxu0
        %2359 = vmatprep.mubr.f32.mxu0 0.0
        %2360 = vmatmul.mubr.f32.gmra.mrb[0].mxu0 %v1907
        %v2361 = vpop.f32.mrb[0].mxu0
        %v2362 = vadd.f32 %v2252, %v2361
        %v2363 = vpop.f32.mrb[0].mxu0
        %2364 = vmatprep.mubr.f32.mxu0 0.0
        %2365 = vmatmul.mubr.f32.gmra.mrb[0].mxu0 %v1910
        %v2366 = vpop.f32.mrb[0].mxu0
        %v2367 = vadd.f32 %v2257, %v2366
        %v2368 = vpop.f32.mrb[0].mxu0
        %2369 = vdwg.mxu0
        %v2371 = vsel %vm540, %v1592, 0
        %2373 = vmatprep.subr.mxu0 %v1618
        %2374 = vmatpush1.msra.mxu0 %v1617
        %2375 = vmatprep.subr.mxu0 %v1621
        %2376 = vmatpush1.msra.mxu0 %v1620
        %2377 = vmatprep.subr.mxu0 %v1624
        %2378 = vmatpush1.msra.mxu0 %v1623
        %2379 = vmatprep.subr.mxu0 %v1627
        %2380 = vmatpush1.msra.mxu0 %v1626
        %2381 = vmatprep.subr.mxu0 %v1630
        %2382 = vmatpush1.msra.mxu0 %v1629
        %2383 = vmatprep.subr.mxu0 %v1633
        %2384 = vmatpush1.msra.mxu0 %v1632
        %2385 = vmatprep.subr.mxu0 %v1636
        %2386 = vmatpush1.msra.mxu0 %v1635
        %2387 = vmatprep.subr.mxu0 %v1639
        %2388 = vmatpush1.msra.mxu0 %v1638
        %2389 = vmatprep.subr.mxu0 %v1642
        %2390 = vmatpush1.msra.mxu0 %v1641
        %2391 = vmatprep.subr.mxu0 %v1645
        %2392 = vmatpush1.msra.mxu0 %v1644
        %2393 = vmatprep.subr.mxu0 %v1648
        %2394 = vmatpush1.msra.mxu0 %v1647
        %2395 = vmatprep.subr.mxu0 %v1651
        %2396 = vmatpush1.msra.mxu0 %v1650
        %2397 = vmatprep.subr.mxu0 %v1654
        %2398 = vmatpush1.msra.mxu0 %v1653
        %2399 = vmatprep.subr.mxu0 %v1657
        %2400 = vmatpush1.msra.mxu0 %v1656
        %2401 = vmatprep.subr.mxu0 %v1660
        %2402 = vmatpush1.msra.mxu0 %v1659
        %2403 = vmatprep.subr.mxu0 %v1663
        %2404 = vmatpush1.msra.mxu0 %v1662
        %2405 = vmatprep.subr.mxu0 %v1666
        %2406 = vmatpush1.msra.mxu0 %v1665
        %2407 = vmatprep.subr.mxu0 %v1669
        %2408 = vmatpush1.msra.mxu0 %v1668
        %2409 = vmatprep.subr.mxu0 %v1672
        %2410 = vmatpush1.msra.mxu0 %v1671
        %2411 = vmatprep.subr.mxu0 %v1675
        %2412 = vmatpush1.msra.mxu0 %v1674
        %2413 = vmatprep.subr.mxu0 %v1678
        %2414 = vmatpush1.msra.mxu0 %v1677
        %2415 = vmatprep.subr.mxu0 %v1681
        %2416 = vmatpush1.msra.mxu0 %v1680
        %2417 = vmatprep.subr.mxu0 %v1684
        %2418 = vmatpush1.msra.mxu0 %v1683
        %2419 = vmatprep.subr.mxu0 %v1687
        %2420 = vmatpush1.msra.mxu0 %v1686
        %2421 = vmatprep.subr.mxu0 %v1690
        %2422 = vmatpush1.msra.mxu0 %v1689
        %2423 = vmatprep.subr.mxu0 %v1693
        %2424 = vmatpush1.msra.mxu0 %v1692
        %2425 = vmatprep.subr.mxu0 %v1696
        %2426 = vmatpush1.msra.mxu0 %v1695
        %2427 = vmatprep.subr.mxu0 %v1699
        %2428 = vmatpush1.msra.mxu0 %v1698
        %2429 = vmatprep.subr.mxu0 %v1702
        %2430 = vmatpush1.msra.mxu0 %v1701
        %2431 = vmatprep.subr.mxu0 %v1705
        %2432 = vmatpush1.msra.mxu0 %v1704
        %2433 = vmatprep.subr.mxu0 %v1708
        %2434 = vmatpush1.msra.mxu0 %v1707
        %2435 = vmatprep.subr.mxu0 %v1711
        %2436 = vmatpush1.msra.mxu0 %v1710
        %2437 = vmatprep.mubr.f32.mxu0 %v1591
        %2438 = vmatmul.mubr.f32.gmra.mrb[0].mxu0 %v1590
        %v2439 = vpop.f32.mrb[0].mxu0
        %v2440 = vadd.f32 %v2098, %v2439
        %v2441 = vpop.f32.mrb[0].mxu0
        %v2442 = vadd.f32 %v2100, %v2441
        %2443 = vmatprep.mubr.f32.mxu0 %v1594
        %2444 = vmatmul.mubr.f32.gmra.mrb[0].mxu0 %v1593
        %v2445 = vpop.f32.mrb[0].mxu0
        %v2446 = vadd.f32 %v2104, %v2445
        %v2447 = vpop.f32.mrb[0].mxu0
        %v2448 = vadd.f32 %v2106, %v2447
        %2449 = vmatprep.mubr.f32.mxu0 %v1597
        %2450 = vmatmul.mubr.f32.gmra.mrb[0].mxu0 %v1596
        %v2451 = vpop.f32.mrb[0].mxu0
        %v2452 = vadd.f32 %v2110, %v2451
        %v2453 = vpop.f32.mrb[0].mxu0
        %v2454 = vadd.f32 %v2112, %v2453
        %2455 = vmatprep.mubr.f32.mxu0 %v1600
        %2456 = vmatmul.mubr.f32.gmra.mrb[0].mxu0 %v1599
        %v2457 = vpop.f32.mrb[0].mxu0
        %v2458 = vadd.f32 %v2116, %v2457
        %v2459 = vpop.f32.mrb[0].mxu0
        %v2460 = vadd.f32 %v2118, %v2459
        %2461 = vmatprep.mubr.f32.mxu0 %v1603
        %2462 = vmatmul.mubr.f32.gmra.mrb[0].mxu0 %v1602
        %v2463 = vpop.f32.mrb[0].mxu0
        %v2464 = vadd.f32 %v2122, %v2463
        %v2465 = vpop.f32.mrb[0].mxu0
        %v2466 = vadd.f32 %v2124, %v2465
        %2467 = vmatprep.mubr.f32.mxu0 %v1606
        %2468 = vmatmul.mubr.f32.gmra.mrb[0].mxu0 %v1605
        %v2469 = vpop.f32.mrb[0].mxu0
        %v2470 = vadd.f32 %v2128, %v2469
        %v2471 = vpop.f32.mrb[0].mxu0
        %v2472 = vadd.f32 %v2130, %v2471
        %2473 = vmatprep.mubr.f32.mxu0 %v1609
        %2474 = vmatmul.mubr.f32.gmra.mrb[0].mxu0 %v1608
        %v2475 = vpop.f32.mrb[0].mxu0
        %v2476 = vadd.f32 %v2134, %v2475
        %v2477 = vpop.f32.mrb[0].mxu0
        %v2478 = vadd.f32 %v2136, %v2477
        %2479 = vmatprep.mubr.f32.mxu0 %v1612
        %2480 = vmatmul.mubr.f32.gmra.mrb[0].mxu0 %v1611
        %v2481 = vpop.f32.mrb[0].mxu0
        %v2482 = vadd.f32 %v2140, %v2481
        %v2483 = vpop.f32.mrb[0].mxu0
        %v2484 = vadd.f32 %v2142, %v2483
        %2485 = vmatprep.mubr.f32.mxu0 %v1615
        %2486 = vmatmul.mubr.f32.gmra.mrb[0].mxu0 %v1614
        %v2487 = vpop.f32.mrb[0].mxu0
        %v2488 = vadd.f32 %v2146, %v2487
        %v2489 = vpop.f32.mrb[0].mxu0
        %v2490 = vadd.f32 %v2148, %v2489
        %2491 = vdwg.mxu0
        %2492 = vmatprep.subr.mxu0 %v1714
        %2493 = vmatpush1.msra.mxu0 %v1713
        %2494 = vmatprep.subr.mxu0 %v1717
        %2495 = vmatpush1.msra.mxu0 %v1716
        %2496 = vmatprep.subr.mxu0 %v1720
        %2497 = vmatpush1.msra.mxu0 %v1719
        %2498 = vmatprep.subr.mxu0 %v1723
        %2499 = vmatpush1.msra.mxu0 %v1722
        %2500 = vmatprep.subr.mxu0 %v1726
        %2501 = vmatpush1.msra.mxu0 %v1725
        %2502 = vmatprep.subr.mxu0 %v1729
        %2503 = vmatpush1.msra.mxu0 %v1728
        %2504 = vmatprep.subr.mxu0 %v1732
        %2505 = vmatpush1.msra.mxu0 %v1731
        %2506 = vmatprep.subr.mxu0 %v1735
        %2507 = vmatpush1.msra.mxu0 %v1734
        %2508 = vmatprep.subr.mxu0 %v1738
        %2509 = vmatpush1.msra.mxu0 %v1737
        %2510 = vmatprep.subr.mxu0 %v1741
        %2511 = vmatpush1.msra.mxu0 %v1740
        %2512 = vmatprep.subr.mxu0 %v1744
        %2513 = vmatpush1.msra.mxu0 %v1743
        %2514 = vmatprep.subr.mxu0 %v1747
        %2515 = vmatpush1.msra.mxu0 %v1746
        %2516 = vmatprep.subr.mxu0 0.0
        %2517 = vmatpush1.msra.mxu0 0.0
        %2518 = vmatprep.subr.mxu0 0.0
        %2519 = vmatpush1.msra.mxu0 0.0
        %2520 = vmatprep.subr.mxu0 0.0
        %2521 = vmatpush1.msra.mxu0 0.0
        %2522 = vmatprep.subr.mxu0 0.0
        %2523 = vmatpush1.msra.mxu0 0.0
        %2524 = vmatprep.subr.mxu0 0.0
        %2525 = vmatpush1.msra.mxu0 0.0
        %2526 = vmatprep.subr.mxu0 0.0
        %2527 = vmatpush1.msra.mxu0 0.0
        %2528 = vmatprep.subr.mxu0 0.0
        %2529 = vmatpush1.msra.mxu0 0.0
        %2530 = vmatprep.subr.mxu0 0.0
        %2531 = vmatpush1.msra.mxu0 0.0
        %2532 = vmatprep.subr.mxu0 0.0
        %2533 = vmatpush1.msra.mxu0 0.0
        %2534 = vmatprep.subr.mxu0 0.0
        %2535 = vmatpush1.msra.mxu0 0.0
        %2536 = vmatprep.subr.mxu0 0.0
        %2537 = vmatpush1.msra.mxu0 0.0
        %2538 = vmatprep.subr.mxu0 0.0
        %2539 = vmatpush1.msra.mxu0 0.0
        %2540 = vmatprep.subr.mxu0 0.0
        %2541 = vmatpush1.msra.mxu0 0.0
        %2542 = vmatprep.subr.mxu0 0.0
        %2543 = vmatpush1.msra.mxu0 0.0
        %2544 = vmatprep.subr.mxu0 0.0
        %2545 = vmatpush1.msra.mxu0 0.0
        %2546 = vmatprep.subr.mxu0 0.0
        %2547 = vmatpush1.msra.mxu0 0.0
        %2548 = vmatprep.subr.mxu0 0.0
        %2549 = vmatpush1.msra.mxu0 0.0
        %2550 = vmatprep.subr.mxu0 0.0
        %2551 = vmatpush1.msra.mxu0 0.0
        %2552 = vmatprep.subr.mxu0 0.0
        %2553 = vmatpush1.msra.mxu0 0.0
        %2554 = vmatprep.subr.mxu0 0.0
        %2555 = vmatpush1.msra.mxu0 0.0
        %2556 = vmatprep.mubr.f32.mxu0 0.0
        %2557 = vmatmul.mubr.f32.gmra.mrb[0].mxu0 %v2371
        %v2558 = vpop.f32.mrb[0].mxu0
        %v2559 = vadd.f32 %v2440, %v2558
        %v2560 = vpop.f32.mrb[0].mxu0
        %v2561 = vadd.f32 %v2442, %v2560
        %2562 = vmatprep.mubr.f32.mxu0 0.0
        %2563 = vmatmul.mubr.f32.gmra.mrb[0].mxu0 %v1886
        %v2564 = vpop.f32.mrb[0].mxu0
        %v2565 = vadd.f32 %v2446, %v2564
        %v2566 = vpop.f32.mrb[0].mxu0
        %v2567 = vadd.f32 %v2448, %v2566
        %2568 = vmatprep.mubr.f32.mxu0 0.0
        %2569 = vmatmul.mubr.f32.gmra.mrb[0].mxu0 %v1889
        %v2570 = vpop.f32.mrb[0].mxu0
        %v2571 = vadd.f32 %v2452, %v2570
        %v2572 = vpop.f32.mrb[0].mxu0
        %v2573 = vadd.f32 %v2454, %v2572
        %2574 = vmatprep.mubr.f32.mxu0 0.0
        %2575 = vmatmul.mubr.f32.gmra.mrb[0].mxu0 %v1892
        %v2576 = vpop.f32.mrb[0].mxu0
        %v2577 = vadd.f32 %v2458, %v2576
        %v2578 = vpop.f32.mrb[0].mxu0
        %v2579 = vadd.f32 %v2460, %v2578
        %2580 = vmatprep.mubr.f32.mxu0 0.0
        %2581 = vmatmul.mubr.f32.gmra.mrb[0].mxu0 %v1895
        %v2582 = vpop.f32.mrb[0].mxu0
        %v2583 = vadd.f32 %v2464, %v2582
        %v2584 = vpop.f32.mrb[0].mxu0
        %v2585 = vadd.f32 %v2466, %v2584
        %2586 = vmatprep.mubr.f32.mxu0 0.0
        %2587 = vmatmul.mubr.f32.gmra.mrb[0].mxu0 %v1898
        %v2588 = vpop.f32.mrb[0].mxu0
        %v2589 = vadd.f32 %v2470, %v2588
        %v2590 = vpop.f32.mrb[0].mxu0
        %v2591 = vadd.f32 %v2472, %v2590
        %2592 = vmatprep.mubr.f32.mxu0 0.0
        %2593 = vmatmul.mubr.f32.gmra.mrb[0].mxu0 %v1901
        %v2594 = vpop.f32.mrb[0].mxu0
        %v2595 = vadd.f32 %v2476, %v2594
        %v2596 = vpop.f32.mrb[0].mxu0
        %v2597 = vadd.f32 %v2478, %v2596
        %2598 = vmatprep.mubr.f32.mxu0 0.0
        %2599 = vmatmul.mubr.f32.gmra.mrb[0].mxu0 %v1904
        %v2600 = vpop.f32.mrb[0].mxu0
        %v2601 = vadd.f32 %v2482, %v2600
        %v2602 = vpop.f32.mrb[0].mxu0
        %v2603 = vadd.f32 %v2484, %v2602
        %2604 = vmatprep.mubr.f32.mxu0 0.0
        %2605 = vmatmul.mubr.f32.gmra.mrb[0].mxu0 %v1907
        %v2606 = vpop.f32.mrb[0].mxu0
        %v2607 = vadd.f32 %v2488, %v2606
        %v2608 = vpop.f32.mrb[0].mxu0
        %v2609 = vadd.f32 %v2490, %v2608
        %2610 = vdwg.mxu0
        %2611 = vmatprep.subr.mxu0 0.0
        %2612 = vmatpush1.msra.mxu0 %v1619
        %2613 = vmatprep.subr.mxu0 0.0
        %2614 = vmatpush1.msra.mxu0 %v1622
        %2615 = vmatprep.subr.mxu0 0.0
        %2616 = vmatpush1.msra.mxu0 %v1625
        %2617 = vmatprep.subr.mxu0 0.0
        %2618 = vmatpush1.msra.mxu0 %v1628
        %2619 = vmatprep.subr.mxu0 0.0
        %2620 = vmatpush1.msra.mxu0 %v1631
        %2621 = vmatprep.subr.mxu0 0.0
        %2622 = vmatpush1.msra.mxu0 %v1634
        %2623 = vmatprep.subr.mxu0 0.0
        %2624 = vmatpush1.msra.mxu0 %v1637
        %2625 = vmatprep.subr.mxu0 0.0
        %2626 = vmatpush1.msra.mxu0 %v1640
        %2627 = vmatprep.subr.mxu0 0.0
        %2628 = vmatpush1.msra.mxu0 %v1643
        %2629 = vmatprep.subr.mxu0 0.0
        %2630 = vmatpush1.msra.mxu0 %v1646
        %2631 = vmatprep.subr.mxu0 0.0
        %2632 = vmatpush1.msra.mxu0 %v1649
        %2633 = vmatprep.subr.mxu0 0.0
        %2634 = vmatpush1.msra.mxu0 %v1652
        %2635 = vmatprep.subr.mxu0 0.0
        %2636 = vmatpush1.msra.mxu0 %v1655
        %2637 = vmatprep.subr.mxu0 0.0
        %2638 = vmatpush1.msra.mxu0 %v1658
        %2639 = vmatprep.subr.mxu0 0.0
        %2640 = vmatpush1.msra.mxu0 %v1661
        %2641 = vmatprep.subr.mxu0 0.0
        %2642 = vmatpush1.msra.mxu0 %v1664
        %2643 = vmatprep.subr.mxu0 0.0
        %2644 = vmatpush1.msra.mxu0 %v1667
        %2645 = vmatprep.subr.mxu0 0.0
        %2646 = vmatpush1.msra.mxu0 %v1670
        %2647 = vmatprep.subr.mxu0 0.0
        %2648 = vmatpush1.msra.mxu0 %v1673
        %2649 = vmatprep.subr.mxu0 0.0
        %2650 = vmatpush1.msra.mxu0 %v1676
        %2651 = vmatprep.subr.mxu0 0.0
        %2652 = vmatpush1.msra.mxu0 %v1679
        %2653 = vmatprep.subr.mxu0 0.0
        %2654 = vmatpush1.msra.mxu0 %v1682
        %2655 = vmatprep.subr.mxu0 0.0
        %2656 = vmatpush1.msra.mxu0 %v1685
        %2657 = vmatprep.subr.mxu0 0.0
        %2658 = vmatpush1.msra.mxu0 %v1688
        %2659 = vmatprep.subr.mxu0 0.0
        %2660 = vmatpush1.msra.mxu0 %v1691
        %2661 = vmatprep.subr.mxu0 0.0
        %2662 = vmatpush1.msra.mxu0 %v1694
        %2663 = vmatprep.subr.mxu0 0.0
        %2664 = vmatpush1.msra.mxu0 %v1697
        %2665 = vmatprep.subr.mxu0 0.0
        %2666 = vmatpush1.msra.mxu0 %v1700
        %2667 = vmatprep.subr.mxu0 0.0
        %2668 = vmatpush1.msra.mxu0 %v1703
        %2669 = vmatprep.subr.mxu0 0.0
        %2670 = vmatpush1.msra.mxu0 %v1706
        %2671 = vmatprep.subr.mxu0 0.0
        %2672 = vmatpush1.msra.mxu0 %v1709
        %2673 = vmatprep.subr.mxu0 0.0
        %2674 = vmatpush1.msra.mxu0 %v1712
        %2675 = vmatprep.mubr.f32.mxu0 %v1591
        %2676 = vmatmul.mubr.f32.gmra.mrb[0].mxu0 %v1590
        %v2677 = vpop.f32.mrb[0].mxu0
        %v2678 = vadd.f32 %v2327, %v2677
        %v2679 = vpop.f32.mrb[0].mxu0
        %2680 = vmatprep.mubr.f32.mxu0 %v1594
        %2681 = vmatmul.mubr.f32.gmra.mrb[0].mxu0 %v1593
        %v2682 = vpop.f32.mrb[0].mxu0
        %v2683 = vadd.f32 %v2332, %v2682
        %v2684 = vpop.f32.mrb[0].mxu0
        %2685 = vmatprep.mubr.f32.mxu0 %v1597
        %2686 = vmatmul.mubr.f32.gmra.mrb[0].mxu0 %v1596
        %v2687 = vpop.f32.mrb[0].mxu0
        %v2688 = vadd.f32 %v2337, %v2687
        %v2689 = vpop.f32.mrb[0].mxu0
        %2690 = vmatprep.mubr.f32.mxu0 %v1600
        %2691 = vmatmul.mubr.f32.gmra.mrb[0].mxu0 %v1599
        %v2692 = vpop.f32.mrb[0].mxu0
        %v2693 = vadd.f32 %v2342, %v2692
        %v2694 = vpop.f32.mrb[0].mxu0
        %2695 = vmatprep.mubr.f32.mxu0 %v1603
        %2696 = vmatmul.mubr.f32.gmra.mrb[0].mxu0 %v1602
        %v2697 = vpop.f32.mrb[0].mxu0
        %v2698 = vadd.f32 %v2347, %v2697
        %v2699 = vpop.f32.mrb[0].mxu0
        %2700 = vmatprep.mubr.f32.mxu0 %v1606
        %2701 = vmatmul.mubr.f32.gmra.mrb[0].mxu0 %v1605
        %v2702 = vpop.f32.mrb[0].mxu0
        %v2703 = vadd.f32 %v2352, %v2702
        %v2704 = vpop.f32.mrb[0].mxu0
        %2705 = vmatprep.mubr.f32.mxu0 %v1609
        %2706 = vmatmul.mubr.f32.gmra.mrb[0].mxu0 %v1608
        %v2707 = vpop.f32.mrb[0].mxu0
        %v2708 = vadd.f32 %v2357, %v2707
        %v2709 = vpop.f32.mrb[0].mxu0
        %2710 = vmatprep.mubr.f32.mxu0 %v1612
        %2711 = vmatmul.mubr.f32.gmra.mrb[0].mxu0 %v1611
        %v2712 = vpop.f32.mrb[0].mxu0
        %v2713 = vadd.f32 %v2362, %v2712
        %v2714 = vpop.f32.mrb[0].mxu0
        %2715 = vmatprep.mubr.f32.mxu0 %v1615
        %2716 = vmatmul.mubr.f32.gmra.mrb[0].mxu0 %v1614
        %v2717 = vpop.f32.mrb[0].mxu0
        %v2718 = vadd.f32 %v2367, %v2717
        %v2719 = vpop.f32.mrb[0].mxu0
        %2720 = vdwg.mxu0
        %2721 = vmatprep.subr.mxu0 0.0
        %2722 = vmatpush1.msra.mxu0 %v1715
        %2723 = vmatprep.subr.mxu0 0.0
        %2724 = vmatpush1.msra.mxu0 %v1718
        %2725 = vmatprep.subr.mxu0 0.0
        %2726 = vmatpush1.msra.mxu0 %v1721
        %2727 = vmatprep.subr.mxu0 0.0
        %2728 = vmatpush1.msra.mxu0 %v1724
        %2729 = vmatprep.subr.mxu0 0.0
        %2730 = vmatpush1.msra.mxu0 %v1727
        %2731 = vmatprep.subr.mxu0 0.0
        %2732 = vmatpush1.msra.mxu0 %v1730
        %2733 = vmatprep.subr.mxu0 0.0
        %2734 = vmatpush1.msra.mxu0 %v1733
        %2735 = vmatprep.subr.mxu0 0.0
        %2736 = vmatpush1.msra.mxu0 %v1736
        %2737 = vmatprep.subr.mxu0 0.0
        %2738 = vmatpush1.msra.mxu0 %v1739
        %2739 = vmatprep.subr.mxu0 0.0
        %2740 = vmatpush1.msra.mxu0 %v1742
        %2741 = vmatprep.subr.mxu0 0.0
        %2742 = vmatpush1.msra.mxu0 %v1745
        %2743 = vmatprep.subr.mxu0 0.0
        %2744 = vmatpush1.msra.mxu0 %v1748
        %2745 = vmatprep.subr.mxu0 0.0
        %2746 = vmatpush1.msra.mxu0 0.0
        %2747 = vmatprep.subr.mxu0 0.0
        %2748 = vmatpush1.msra.mxu0 0.0
        %2749 = vmatprep.subr.mxu0 0.0
        %2750 = vmatpush1.msra.mxu0 0.0
        %2751 = vmatprep.subr.mxu0 0.0
        %2752 = vmatpush1.msra.mxu0 0.0
        %2753 = vmatprep.subr.mxu0 0.0
        %2754 = vmatpush1.msra.mxu0 0.0
        %2755 = vmatprep.subr.mxu0 0.0
        %2756 = vmatpush1.msra.mxu0 0.0
        %2757 = vmatprep.subr.mxu0 0.0
        %2758 = vmatpush1.msra.mxu0 0.0
        %2759 = vmatprep.subr.mxu0 0.0
        %2760 = vmatpush1.msra.mxu0 0.0
        %2761 = vmatprep.subr.mxu0 0.0
        %2762 = vmatpush1.msra.mxu0 0.0
        %2763 = vmatprep.subr.mxu0 0.0
        %2764 = vmatpush1.msra.mxu0 0.0
        %2765 = vmatprep.subr.mxu0 0.0
        %2766 = vmatpush1.msra.mxu0 0.0
        %2767 = vmatprep.subr.mxu0 0.0
        %2768 = vmatpush1.msra.mxu0 0.0
        %2769 = vmatprep.subr.mxu0 0.0
        %2770 = vmatpush1.msra.mxu0 0.0
        %2771 = vmatprep.subr.mxu0 0.0
        %2772 = vmatpush1.msra.mxu0 0.0
        %2773 = vmatprep.subr.mxu0 0.0
        %2774 = vmatpush1.msra.mxu0 0.0
        %2775 = vmatprep.subr.mxu0 0.0
        %2776 = vmatpush1.msra.mxu0 0.0
        %2777 = vmatprep.subr.mxu0 0.0
        %2778 = vmatpush1.msra.mxu0 0.0
        %2779 = vmatprep.subr.mxu0 0.0
        %2780 = vmatpush1.msra.mxu0 0.0
        %2781 = vmatprep.subr.mxu0 0.0
        %2782 = vmatpush1.msra.mxu0 0.0
        %2783 = vmatprep.subr.mxu0 0.0
        %2784 = vmatpush1.msra.mxu0 0.0
        %2785 = vmatprep.mubr.f32.mxu0 0.0
        %2786 = vmatmul.mubr.f32.gmra.mrb[0].mxu0 %v2371
        %v2787 = vpop.f32.mrb[0].mxu0
        %v2788 = vadd.f32 %v2678, %v2787
        %v2789 = vpop.f32.mrb[0].mxu0
        %2790 = vmatprep.mubr.f32.mxu0 0.0
        %2791 = vmatmul.mubr.f32.gmra.mrb[0].mxu0 %v1886
        %v2792 = vpop.f32.mrb[0].mxu0
        %v2793 = vadd.f32 %v2683, %v2792
        %v2794 = vpop.f32.mrb[0].mxu0
        %2795 = vmatprep.mubr.f32.mxu0 0.0
        %2796 = vmatmul.mubr.f32.gmra.mrb[0].mxu0 %v1889
        %v2797 = vpop.f32.mrb[0].mxu0
        %v2798 = vadd.f32 %v2688, %v2797
        %v2799 = vpop.f32.mrb[0].mxu0
        %2800 = vmatprep.mubr.f32.mxu0 0.0
        %2801 = vmatmul.mubr.f32.gmra.mrb[0].mxu0 %v1892
        %v2802 = vpop.f32.mrb[0].mxu0
        %v2803 = vadd.f32 %v2693, %v2802
        %v2804 = vpop.f32.mrb[0].mxu0
        %2805 = vmatprep.mubr.f32.mxu0 0.0
        %2806 = vmatmul.mubr.f32.gmra.mrb[0].mxu0 %v1895
        %v2807 = vpop.f32.mrb[0].mxu0
        %v2808 = vadd.f32 %v2698, %v2807
        %v2809 = vpop.f32.mrb[0].mxu0
        %2810 = vmatprep.mubr.f32.mxu0 0.0
        %2811 = vmatmul.mubr.f32.gmra.mrb[0].mxu0 %v1898
        %v2812 = vpop.f32.mrb[0].mxu0
        %v2813 = vadd.f32 %v2703, %v2812
        %v2814 = vpop.f32.mrb[0].mxu0
        %2815 = vmatprep.mubr.f32.mxu0 0.0
        %2816 = vmatmul.mubr.f32.gmra.mrb[0].mxu0 %v1901
        %v2817 = vpop.f32.mrb[0].mxu0
        %v2818 = vadd.f32 %v2708, %v2817
        %v2819 = vpop.f32.mrb[0].mxu0
        %2820 = vmatprep.mubr.f32.mxu0 0.0
        %2821 = vmatmul.mubr.f32.gmra.mrb[0].mxu0 %v1904
        %v2822 = vpop.f32.mrb[0].mxu0
        %v2823 = vadd.f32 %v2713, %v2822
        %v2824 = vpop.f32.mrb[0].mxu0
        %2825 = vmatprep.mubr.f32.mxu0 0.0
        %2826 = vmatmul.mubr.f32.gmra.mrb[0].mxu0 %v1907
        %v2827 = vpop.f32.mrb[0].mxu0
        %v2828 = vadd.f32 %v2718, %v2827
        %v2829 = vpop.f32.mrb[0].mxu0
        %2830 = vdwg.mxu0
        %v2831 = vld [vmem:[#allocation2 + $0x30] sm:$0xff]
        %v2832 = vld [vmem:[#allocation2 + $0x38] sm:$0xff]
        %v2833 = vld [vmem:[#allocation2 + $0x40] sm:$0xff]
        %v2834 = vld [vmem:[#allocation2 + $0x48] sm:$0xff]
        %v2835 = vld [vmem:[#allocation2 + $0x50] sm:$0xff]
        %v2836 = vld [vmem:[#allocation2 + $0x58] sm:$0xff]
        %v2837 = vld [vmem:[#allocation2 + $0x60] sm:$0xff]
        %v2838 = vld [vmem:[#allocation2 + $0x68] sm:$0xff]
        %v2839 = vld [vmem:[#allocation2 + $0x70] sm:$0xff]
        %v2840 = vld [vmem:[#allocation2 + $0x78] sm:$0xff]
        %v2841 = vld [vmem:[#allocation2 + $0x80] sm:$0xff]
        %v2842 = vld [vmem:[#allocation2 + $0x88] sm:$0xff]
        %v2843 = vld [vmem:[#allocation2 + $0x90] sm:$0xff]
        %v2844 = vld [vmem:[#allocation2 + $0x98] sm:$0xff]
        %v2845 = vld [vmem:[#allocation2 + $0xa0] sm:$0xff]
        %v2846 = vld [vmem:[#allocation2 + $0xa8] sm:$0xff]
        %v2847 = vld [vmem:[#allocation2 + $0xb0] sm:$0xff]
        %v2848 = vld [vmem:[#allocation2 + $0xb8] sm:$0xff]
        %v2849 = vld [vmem:[#allocation2 + $0xc0] sm:$0xff]
        %v2850 = vld [vmem:[#allocation2 + $0xc8] sm:$0xff]
        %v2851 = vld [vmem:[#allocation2 + $0xd0] sm:$0xff]
        %v2852 = vld [vmem:[#allocation2 + $0xd8] sm:$0xff]
        %v2853 = vld [vmem:[#allocation2 + $0xe0] sm:$0xff]
        %v2854 = vld [vmem:[#allocation2 + $0xe8] sm:$0xff]
        %v2855 = vld [vmem:[#allocation2 + $0xf0] sm:$0xff]
        %v2856 = vld [vmem:[#allocation2 + $0xf8] sm:$0xff]
        %v2857 = vld [vmem:[#allocation2 + $0x100] sm:$0xff]
        %s2858 = scalar_lea.vmem %s3, 2112
        %v2859 = vld [vmem:[%s2858] sm:$0xff]
        %v2860 = vld [vmem:[%s2858 + $0x8] sm:$0xff]
        %v2861 = vld [vmem:[%s2858 + $0x10] sm:$0xff]
        %v2862 = vld [vmem:[%s2858 + $0x18] sm:$0xff]
        %v2863 = vld [vmem:[%s2858 + $0x20] sm:$0xff]
        %v2864 = vld [vmem:[%s2858 + $0x28] sm:$0xff]
        %v2865 = vld [vmem:[%s2858 + $0x30] sm:$0xff]
        %v2866 = vld [vmem:[%s2858 + $0x38] sm:$0xff]
        %v2867 = vld [vmem:[%s2858 + $0x40] sm:$0xff]
        %v2868 = vld [vmem:[%s2858 + $0x48] sm:$0xff]
        %v2869 = vld [vmem:[%s2858 + $0x50] sm:$0xff]
        %v2870 = vld [vmem:[%s2858 + $0x58] sm:$0xff]
        %v2871 = vld [vmem:[%s2858 + $0x60] sm:$0xff]
        %v2872 = vld [vmem:[%s2858 + $0x68] sm:$0xff]
        %v2873 = vld [vmem:[%s2858 + $0x70] sm:$0xff]
        %v2874 = vld [vmem:[%s2858 + $0x78] sm:$0xff]
        %v2875 = vld [vmem:[%s2858 + $0x80] sm:$0xff]
        %v2876 = vld [vmem:[%s2858 + $0x88] sm:$0xff]
        %v2877 = vld [vmem:[%s2858 + $0x90] sm:$0xff]
        %v2878 = vld [vmem:[%s2858 + $0x98] sm:$0xff]
        %v2879 = vld [vmem:[%s2858 + $0xa0] sm:$0xff]
        %v2880 = vld [vmem:[%s2858 + $0xa8] sm:$0xff]
        %v2881 = vld [vmem:[%s2858 + $0xb0] sm:$0xff]
        %v2882 = vld [vmem:[%s2858 + $0xb8] sm:$0xff]
        %v2883 = vld [vmem:[%s2858 + $0xc0] sm:$0xff]
        %v2884 = vld [vmem:[%s2858 + $0xc8] sm:$0xff]
        %v2885 = vld [vmem:[%s2858 + $0xd0] sm:$0xff]
        %v2886 = vld [vmem:[%s2858 + $0xd8] sm:$0xff]
        %v2887 = vld [vmem:[%s2858 + $0xe0] sm:$0xff]
        %v2888 = vld [vmem:[%s2858 + $0xe8] sm:$0xff]
        %v2889 = vld [vmem:[%s2858 + $0xf0] sm:$0xff]
        %v2890 = vld [vmem:[%s2858 + $0xf8] sm:$0xff]
        %v2891 = vld [vmem:[%s2858 + $0x100] sm:$0xff]
        %v2892 = vld [vmem:[%s2858 + $0x108] sm:$0xff]
        %v2893 = vld [vmem:[%s2858 + $0x110] sm:$0xff]
        %v2894 = vld [vmem:[%s2858 + $0x118] sm:$0xff]
        %v2895 = vld [vmem:[%s2858 + $0x120] sm:$0xff]
        %v2896 = vld [vmem:[%s2858 + $0x128] sm:$0xff]
        %v2897 = vld [vmem:[%s2858 + $0x130] sm:$0xff]
        %v2898 = vld [vmem:[%s2858 + $0x138] sm:$0xff]
        %v2899 = vld [vmem:[%s2858 + $0x140] sm:$0xff]
        %v2900 = vld [vmem:[%s2858 + $0x148] sm:$0xff]
        %v2901 = vld [vmem:[%s2858 + $0x150] sm:$0xff]
        %v2902 = vld [vmem:[%s2858 + $0x158] sm:$0xff]
        %v2903 = vld [vmem:[%s2858 + $0x160] sm:$0xff]
        %v2904 = vld [vmem:[%s2858 + $0x168] sm:$0xff]
        %v2905 = vld [vmem:[%s2858 + $0x170] sm:$0xff]
        %v2906 = vld [vmem:[%s2858 + $0x178] sm:$0xff]
        %v2907 = vld [vmem:[%s2858 + $0x180] sm:$0xff]
        %v2908 = vld [vmem:[%s2858 + $0x188] sm:$0xff]
        %v2909 = vld [vmem:[%s2858 + $0x190] sm:$0xff]
        %v2910 = vld [vmem:[%s2858 + $0x198] sm:$0xff]
        %v2911 = vld [vmem:[%s2858 + $0x1a0] sm:$0xff]
        %v2912 = vld [vmem:[%s2858 + $0x1a8] sm:$0xff]
        %v2913 = vld [vmem:[%s2858 + $0x1b0] sm:$0xff]
        %v2914 = vld [vmem:[%s2858 + $0x1b8] sm:$0xff]
        %v2915 = vld [vmem:[%s2858 + $0x1c0] sm:$0xff]
        %v2916 = vld [vmem:[%s2858 + $0x1c8] sm:$0xff]
        %v2917 = vld [vmem:[%s2858 + $0x1d0] sm:$0xff]
        %v2918 = vld [vmem:[%s2858 + $0x1d8] sm:$0xff]
        %v2919 = vld [vmem:[%s2858 + $0x1e0] sm:$0xff]
        %v2920 = vld [vmem:[%s2858 + $0x1e8] sm:$0xff]
        %v2921 = vld [vmem:[%s2858 + $0x1f0] sm:$0xff]
        %v2922 = vld [vmem:[%s2858 + $0x1f8] sm:$0xff]
        %v2923 = vld [vmem:[%s2858 + $0x200] sm:$0xff]
        %v2924 = vld [vmem:[%s2858 + $0x208] sm:$0xff]
        %v2925 = vld [vmem:[%s2858 + $0x210] sm:$0xff]
        %v2926 = vld [vmem:[%s2858 + $0x218] sm:$0xff]
        %v2927 = vld [vmem:[%s2858 + $0x220] sm:$0xff]
        %v2928 = vld [vmem:[%s2858 + $0x228] sm:$0xff]
        %v2929 = vld [vmem:[%s2858 + $0x230] sm:$0xff]
        %v2930 = vld [vmem:[%s2858 + $0x238] sm:$0xff]
        %v2931 = vld [vmem:[%s2858 + $0x240] sm:$0xff]
        %v2932 = vld [vmem:[%s2858 + $0x248] sm:$0xff]
        %v2933 = vld [vmem:[%s2858 + $0x250] sm:$0xff]
        %v2934 = vld [vmem:[%s2858 + $0x258] sm:$0xff]
        %v2935 = vld [vmem:[%s2858 + $0x260] sm:$0xff]
        %v2936 = vld [vmem:[%s2858 + $0x268] sm:$0xff]
        %v2937 = vld [vmem:[%s2858 + $0x270] sm:$0xff]
        %v2938 = vld [vmem:[%s2858 + $0x278] sm:$0xff]
        %v2939 = vld [vmem:[%s2858 + $0x280] sm:$0xff]
        %v2940 = vld [vmem:[%s2858 + $0x288] sm:$0xff]
        %v2941 = vld [vmem:[%s2858 + $0x290] sm:$0xff]
        %v2942 = vld [vmem:[%s2858 + $0x298] sm:$0xff]
        %v2943 = vld [vmem:[%s2858 + $0x2a0] sm:$0xff]
        %v2944 = vld [vmem:[%s2858 + $0x2a8] sm:$0xff]
        %v2945 = vld [vmem:[%s2858 + $0x2b0] sm:$0xff]
        %v2946 = vld [vmem:[%s2858 + $0x2b8] sm:$0xff]
        %v2947 = vld [vmem:[%s2858 + $0x2c0] sm:$0xff]
        %v2948 = vld [vmem:[%s2858 + $0x2c8] sm:$0xff]
        %v2949 = vld [vmem:[%s2858 + $0x2d0] sm:$0xff]
        %v2950 = vld [vmem:[%s2858 + $0x2d8] sm:$0xff]
        %v2951 = vld [vmem:[%s2858 + $0x2e0] sm:$0xff]
        %v2952 = vld [vmem:[%s2858 + $0x2e8] sm:$0xff]
        %v2953 = vld [vmem:[%s2858 + $0x2f0] sm:$0xff]
        %v2954 = vld [vmem:[%s2858 + $0x2f8] sm:$0xff]
        %v2955 = vld [vmem:[%s2858 + $0x300] sm:$0xff]
        %v2956 = vld [vmem:[%s2858 + $0x308] sm:$0xff]
        %v2957 = vld [vmem:[%s2858 + $0x310] sm:$0xff]
        %v2958 = vld [vmem:[%s2858 + $0x318] sm:$0xff]
        %v2959 = vld [vmem:[%s2858 + $0x320] sm:$0xff]
        %v2960 = vld [vmem:[%s2858 + $0x328] sm:$0xff]
        %v2961 = vld [vmem:[%s2858 + $0x330] sm:$0xff]
        %v2962 = vld [vmem:[%s2858 + $0x338] sm:$0xff]
        %v2963 = vld [vmem:[%s2858 + $0x340] sm:$0xff]
        %v2964 = vld [vmem:[%s2858 + $0x348] sm:$0xff]
        %v2965 = vld [vmem:[%s2858 + $0x350] sm:$0xff]
        %v2966 = vld [vmem:[%s2858 + $0x358] sm:$0xff]
        %v2967 = vld [vmem:[%s2858 + $0x360] sm:$0xff]
        %v2968 = vld [vmem:[%s2858 + $0x368] sm:$0xff]
        %v2969 = vld [vmem:[%s2858 + $0x370] sm:$0xff]
        %v2970 = vld [vmem:[%s2858 + $0x378] sm:$0xff]
        %v2971 = vld [vmem:[%s2858 + $0x380] sm:$0xff]
        %v2972 = vld [vmem:[%s2858 + $0x388] sm:$0xff]
        %v2973 = vld [vmem:[%s2858 + $0x390] sm:$0xff]
        %v2974 = vld [vmem:[%s2858 + $0x398] sm:$0xff]
        %v2975 = vld [vmem:[%s2858 + $0x3a0] sm:$0xff]
        %v2976 = vld [vmem:[%s2858 + $0x3a8] sm:$0xff]
        %v2977 = vld [vmem:[%s2858 + $0x3b0] sm:$0xff]
        %v2978 = vld [vmem:[%s2858 + $0x3b8] sm:$0xff]
        %v2979 = vld [vmem:[%s2858 + $0x3c0] sm:$0xff]
        %v2980 = vld [vmem:[%s2858 + $0x3c8] sm:$0xff]
        %v2981 = vld [vmem:[%s2858 + $0x3d0] sm:$0xff]
        %v2982 = vld [vmem:[%s2858 + $0x3d8] sm:$0xff]
        %v2983 = vld [vmem:[%s2858 + $0x3e0] sm:$0xff]
        %v2984 = vld [vmem:[%s2858 + $0x3e8] sm:$0xff]
        %v2985 = vld [vmem:[%s2858 + $0x3f0] sm:$0xff]
        %v2986 = vld [vmem:[%s2858 + $0x3f8] sm:$0xff]
        %v2987 = vld [vmem:[%s2858 + $0x400] sm:$0xff]
        %v2988 = vld [vmem:[%s2858 + $0x408] sm:$0xff]
        %v2989 = vld [vmem:[%s2858 + $0x410] sm:$0xff]
        %v2990 = vld [vmem:[%s2858 + $0x418] sm:$0xff]
        %v2992 = vsel %vm540, %v2833, 0
        %v2995 = vsel %vm540, %v2836, 0
        %v2998 = vsel %vm540, %v2839, 0
        %v3001 = vsel %vm540, %v2842, 0
        %v3004 = vsel %vm540, %v2845, 0
        %v3007 = vsel %vm540, %v2848, 0
        %v3010 = vsel %vm540, %v2851, 0
        %v3013 = vsel %vm540, %v2854, 0
        %v3016 = vsel %vm540, %v2857, 0
        %3018 = vmatprep.subr.mxu0 %v2860
        %3019 = vmatpush1.msra.mxu0 %v2859
        %3020 = vmatprep.subr.mxu0 %v2863
        %3021 = vmatpush1.msra.mxu0 %v2862
        %3022 = vmatprep.subr.mxu0 %v2866
        %3023 = vmatpush1.msra.mxu0 %v2865
        %3024 = vmatprep.subr.mxu0 %v2869
        %3025 = vmatpush1.msra.mxu0 %v2868
        %3026 = vmatprep.subr.mxu0 %v2872
        %3027 = vmatpush1.msra.mxu0 %v2871
        %3028 = vmatprep.subr.mxu0 %v2875
        %3029 = vmatpush1.msra.mxu0 %v2874
        %3030 = vmatprep.subr.mxu0 %v2878
        %3031 = vmatpush1.msra.mxu0 %v2877
        %3032 = vmatprep.subr.mxu0 %v2881
        %3033 = vmatpush1.msra.mxu0 %v2880
        %3034 = vmatprep.subr.mxu0 %v2884
        %3035 = vmatpush1.msra.mxu0 %v2883
        %3036 = vmatprep.subr.mxu0 %v2887
        %3037 = vmatpush1.msra.mxu0 %v2886
        %3038 = vmatprep.subr.mxu0 %v2890
        %3039 = vmatpush1.msra.mxu0 %v2889
        %3040 = vmatprep.subr.mxu0 %v2893
        %3041 = vmatpush1.msra.mxu0 %v2892
        %3042 = vmatprep.subr.mxu0 %v2896
        %3043 = vmatpush1.msra.mxu0 %v2895
        %3044 = vmatprep.subr.mxu0 %v2899
        %3045 = vmatpush1.msra.mxu0 %v2898
        %3046 = vmatprep.subr.mxu0 %v2902
        %3047 = vmatpush1.msra.mxu0 %v2901
        %3048 = vmatprep.subr.mxu0 %v2905
        %3049 = vmatpush1.msra.mxu0 %v2904
        %3050 = vmatprep.subr.mxu0 %v2908
        %3051 = vmatpush1.msra.mxu0 %v2907
        %3052 = vmatprep.subr.mxu0 %v2911
        %3053 = vmatpush1.msra.mxu0 %v2910
        %3054 = vmatprep.subr.mxu0 %v2914
        %3055 = vmatpush1.msra.mxu0 %v2913
        %3056 = vmatprep.subr.mxu0 %v2917
        %3057 = vmatpush1.msra.mxu0 %v2916
        %3058 = vmatprep.subr.mxu0 %v2920
        %3059 = vmatpush1.msra.mxu0 %v2919
        %3060 = vmatprep.subr.mxu0 %v2923
        %3061 = vmatpush1.msra.mxu0 %v2922
        %3062 = vmatprep.subr.mxu0 %v2926
        %3063 = vmatpush1.msra.mxu0 %v2925
        %3064 = vmatprep.subr.mxu0 %v2929
        %3065 = vmatpush1.msra.mxu0 %v2928
        %3066 = vmatprep.subr.mxu0 %v2932
        %3067 = vmatpush1.msra.mxu0 %v2931
        %3068 = vmatprep.subr.mxu0 %v2935
        %3069 = vmatpush1.msra.mxu0 %v2934
        %3070 = vmatprep.subr.mxu0 %v2938
        %3071 = vmatpush1.msra.mxu0 %v2937
        %3072 = vmatprep.subr.mxu0 %v2941
        %3073 = vmatpush1.msra.mxu0 %v2940
        %3074 = vmatprep.subr.mxu0 %v2944
        %3075 = vmatpush1.msra.mxu0 %v2943
        %3076 = vmatprep.subr.mxu0 %v2947
        %3077 = vmatpush1.msra.mxu0 %v2946
        %3078 = vmatprep.subr.mxu0 %v2950
        %3079 = vmatpush1.msra.mxu0 %v2949
        %3080 = vmatprep.subr.mxu0 %v2953
        %3081 = vmatpush1.msra.mxu0 %v2952
        %3082 = vmatprep.mubr.f32.mxu0 %v2832
        %3083 = vmatmul.mubr.f32.gmra.mrb[0].mxu0 %v2831
        %v3084 = vpop.f32.mrb[0].mxu0
        %v3085 = vadd.f32 0.0, %v3084
        %v3086 = vpop.f32.mrb[0].mxu0
        %v3087 = vadd.f32 0.0, %v3086
        %3088 = vmatprep.mubr.f32.mxu0 %v2835
        %3089 = vmatmul.mubr.f32.gmra.mrb[0].mxu0 %v2834
        %v3090 = vpop.f32.mrb[0].mxu0
        %v3091 = vadd.f32 0.0, %v3090
        %v3092 = vpop.f32.mrb[0].mxu0
        %v3093 = vadd.f32 0.0, %v3092
        %3094 = vmatprep.mubr.f32.mxu0 %v2838
        %3095 = vmatmul.mubr.f32.gmra.mrb[0].mxu0 %v2837
        %v3096 = vpop.f32.mrb[0].mxu0
        %v3097 = vadd.f32 0.0, %v3096
        %v3098 = vpop.f32.mrb[0].mxu0
        %v3099 = vadd.f32 0.0, %v3098
        %3100 = vmatprep.mubr.f32.mxu0 %v2841
        %3101 = vmatmul.mubr.f32.gmra.mrb[0].mxu0 %v2840
        %v3102 = vpop.f32.mrb[0].mxu0
        %v3103 = vadd.f32 0.0, %v3102
        %v3104 = vpop.f32.mrb[0].mxu0
        %v3105 = vadd.f32 0.0, %v3104
        %3106 = vmatprep.mubr.f32.mxu0 %v2844
        %3107 = vmatmul.mubr.f32.gmra.mrb[0].mxu0 %v2843
        %v3108 = vpop.f32.mrb[0].mxu0
        %v3109 = vadd.f32 0.0, %v3108
        %v3110 = vpop.f32.mrb[0].mxu0
        %v3111 = vadd.f32 0.0, %v3110
        %3112 = vmatprep.mubr.f32.mxu0 %v2847
        %3113 = vmatmul.mubr.f32.gmra.mrb[0].mxu0 %v2846
        %v3114 = vpop.f32.mrb[0].mxu0
        %v3115 = vadd.f32 0.0, %v3114
        %v3116 = vpop.f32.mrb[0].mxu0
        %v3117 = vadd.f32 0.0, %v3116
        %3118 = vmatprep.mubr.f32.mxu0 %v2850
        %3119 = vmatmul.mubr.f32.gmra.mrb[0].mxu0 %v2849
        %v3120 = vpop.f32.mrb[0].mxu0
        %v3121 = vadd.f32 0.0, %v3120
        %v3122 = vpop.f32.mrb[0].mxu0
        %v3123 = vadd.f32 0.0, %v3122
        %3124 = vmatprep.mubr.f32.mxu0 %v2853
        %3125 = vmatmul.mubr.f32.gmra.mrb[0].mxu0 %v2852
        %v3126 = vpop.f32.mrb[0].mxu0
        %v3127 = vadd.f32 0.0, %v3126
        %v3128 = vpop.f32.mrb[0].mxu0
        %v3129 = vadd.f32 0.0, %v3128
        %3130 = vmatprep.mubr.f32.mxu0 %v2856
        %3131 = vmatmul.mubr.f32.gmra.mrb[0].mxu0 %v2855
        %v3132 = vpop.f32.mrb[0].mxu0
        %v3133 = vadd.f32 0.0, %v3132
        %v3134 = vpop.f32.mrb[0].mxu0
        %v3135 = vadd.f32 0.0, %v3134
        %3136 = vdwg.mxu0
        %3137 = vmatprep.subr.mxu0 %v2956
        %3138 = vmatpush1.msra.mxu0 %v2955
        %3139 = vmatprep.subr.mxu0 %v2959
        %3140 = vmatpush1.msra.mxu0 %v2958
        %3141 = vmatprep.subr.mxu0 %v2962
        %3142 = vmatpush1.msra.mxu0 %v2961
        %3143 = vmatprep.subr.mxu0 %v2965
        %3144 = vmatpush1.msra.mxu0 %v2964
        %3145 = vmatprep.subr.mxu0 %v2968
        %3146 = vmatpush1.msra.mxu0 %v2967
        %3147 = vmatprep.subr.mxu0 %v2971
        %3148 = vmatpush1.msra.mxu0 %v2970
        %3149 = vmatprep.subr.mxu0 %v2974
        %3150 = vmatpush1.msra.mxu0 %v2973
        %3151 = vmatprep.subr.mxu0 %v2977
        %3152 = vmatpush1.msra.mxu0 %v2976
        %3153 = vmatprep.subr.mxu0 %v2980
        %3154 = vmatpush1.msra.mxu0 %v2979
        %3155 = vmatprep.subr.mxu0 %v2983
        %3156 = vmatpush1.msra.mxu0 %v2982
        %3157 = vmatprep.subr.mxu0 %v2986
        %3158 = vmatpush1.msra.mxu0 %v2985
        %3159 = vmatprep.subr.mxu0 %v2989
        %3160 = vmatpush1.msra.mxu0 %v2988
        %3161 = vmatprep.subr.mxu0 0.0
        %3162 = vmatpush1.msra.mxu0 0.0
        %3163 = vmatprep.subr.mxu0 0.0
        %3164 = vmatpush1.msra.mxu0 0.0
        %3165 = vmatprep.subr.mxu0 0.0
        %3166 = vmatpush1.msra.mxu0 0.0
        %3167 = vmatprep.subr.mxu0 0.0
        %3168 = vmatpush1.msra.mxu0 0.0
        %3169 = vmatprep.subr.mxu0 0.0
        %3170 = vmatpush1.msra.mxu0 0.0
        %3171 = vmatprep.subr.mxu0 0.0
        %3172 = vmatpush1.msra.mxu0 0.0
        %3173 = vmatprep.subr.mxu0 0.0
        %3174 = vmatpush1.msra.mxu0 0.0
        %3175 = vmatprep.subr.mxu0 0.0
        %3176 = vmatpush1.msra.mxu0 0.0
        %3177 = vmatprep.subr.mxu0 0.0
        %3178 = vmatpush1.msra.mxu0 0.0
        %3179 = vmatprep.subr.mxu0 0.0
        %3180 = vmatpush1.msra.mxu0 0.0
        %3181 = vmatprep.subr.mxu0 0.0
        %3182 = vmatpush1.msra.mxu0 0.0
        %3183 = vmatprep.subr.mxu0 0.0
        %3184 = vmatpush1.msra.mxu0 0.0
        %3185 = vmatprep.subr.mxu0 0.0
        %3186 = vmatpush1.msra.mxu0 0.0
        %3187 = vmatprep.subr.mxu0 0.0
        %3188 = vmatpush1.msra.mxu0 0.0
        %3189 = vmatprep.subr.mxu0 0.0
        %3190 = vmatpush1.msra.mxu0 0.0
        %3191 = vmatprep.subr.mxu0 0.0
        %3192 = vmatpush1.msra.mxu0 0.0
        %3193 = vmatprep.subr.mxu0 0.0
        %3194 = vmatpush1.msra.mxu0 0.0
        %3195 = vmatprep.subr.mxu0 0.0
        %3196 = vmatpush1.msra.mxu0 0.0
        %3197 = vmatprep.subr.mxu0 0.0
        %3198 = vmatpush1.msra.mxu0 0.0
        %3199 = vmatprep.subr.mxu0 0.0
        %3200 = vmatpush1.msra.mxu0 0.0
        %3201 = vmatprep.mubr.f32.mxu0 0.0
        %3202 = vmatmul.mubr.f32.gmra.mrb[0].mxu0 %v2992
        %v3203 = vpop.f32.mrb[0].mxu0
        %v3204 = vadd.f32 %v3085, %v3203
        %v3205 = vpop.f32.mrb[0].mxu0
        %v3206 = vadd.f32 %v3087, %v3205
        %3207 = vmatprep.mubr.f32.mxu0 0.0
        %3208 = vmatmul.mubr.f32.gmra.mrb[0].mxu0 %v2995
        %v3209 = vpop.f32.mrb[0].mxu0
        %v3210 = vadd.f32 %v3091, %v3209
        %v3211 = vpop.f32.mrb[0].mxu0
        %v3212 = vadd.f32 %v3093, %v3211
        %3213 = vmatprep.mubr.f32.mxu0 0.0
        %3214 = vmatmul.mubr.f32.gmra.mrb[0].mxu0 %v2998
        %v3215 = vpop.f32.mrb[0].mxu0
        %v3216 = vadd.f32 %v3097, %v3215
        %v3217 = vpop.f32.mrb[0].mxu0
        %v3218 = vadd.f32 %v3099, %v3217
        %3219 = vmatprep.mubr.f32.mxu0 0.0
        %3220 = vmatmul.mubr.f32.gmra.mrb[0].mxu0 %v3001
        %v3221 = vpop.f32.mrb[0].mxu0
        %v3222 = vadd.f32 %v3103, %v3221
        %v3223 = vpop.f32.mrb[0].mxu0
        %v3224 = vadd.f32 %v3105, %v3223
        %3225 = vmatprep.mubr.f32.mxu0 0.0
        %3226 = vmatmul.mubr.f32.gmra.mrb[0].mxu0 %v3004
        %v3227 = vpop.f32.mrb[0].mxu0
        %v3228 = vadd.f32 %v3109, %v3227
        %v3229 = vpop.f32.mrb[0].mxu0
        %v3230 = vadd.f32 %v3111, %v3229
        %3231 = vmatprep.mubr.f32.mxu0 0.0
        %3232 = vmatmul.mubr.f32.gmra.mrb[0].mxu0 %v3007
        %v3233 = vpop.f32.mrb[0].mxu0
        %v3234 = vadd.f32 %v3115, %v3233
        %v3235 = vpop.f32.mrb[0].mxu0
        %v3236 = vadd.f32 %v3117, %v3235
        %3237 = vmatprep.mubr.f32.mxu0 0.0
        %3238 = vmatmul.mubr.f32.gmra.mrb[0].mxu0 %v3010
        %v3239 = vpop.f32.mrb[0].mxu0
        %v3240 = vadd.f32 %v3121, %v3239
        %v3241 = vpop.f32.mrb[0].mxu0
        %v3242 = vadd.f32 %v3123, %v3241
        %3243 = vmatprep.mubr.f32.mxu0 0.0
        %3244 = vmatmul.mubr.f32.gmra.mrb[0].mxu0 %v3013
        %v3245 = vpop.f32.mrb[0].mxu0
        %v3246 = vadd.f32 %v3127, %v3245
        %v3247 = vpop.f32.mrb[0].mxu0
        %v3248 = vadd.f32 %v3129, %v3247
        %3249 = vmatprep.mubr.f32.mxu0 0.0
        %3250 = vmatmul.mubr.f32.gmra.mrb[0].mxu0 %v3016
        %v3251 = vpop.f32.mrb[0].mxu0
        %v3252 = vadd.f32 %v3133, %v3251
        %v3253 = vpop.f32.mrb[0].mxu0
        %v3254 = vadd.f32 %v3135, %v3253
        %3255 = vdwg.mxu0
        %3256 = vmatprep.subr.mxu0 0.0
        %3257 = vmatpush1.msra.mxu0 %v2861
        %3258 = vmatprep.subr.mxu0 0.0
        %3259 = vmatpush1.msra.mxu0 %v2864
        %3260 = vmatprep.subr.mxu0 0.0
        %3261 = vmatpush1.msra.mxu0 %v2867
        %3262 = vmatprep.subr.mxu0 0.0
        %3263 = vmatpush1.msra.mxu0 %v2870
        %3264 = vmatprep.subr.mxu0 0.0
        %3265 = vmatpush1.msra.mxu0 %v2873
        %3266 = vmatprep.subr.mxu0 0.0
        %3267 = vmatpush1.msra.mxu0 %v2876
        %3268 = vmatprep.subr.mxu0 0.0
        %3269 = vmatpush1.msra.mxu0 %v2879
        %3270 = vmatprep.subr.mxu0 0.0
        %3271 = vmatpush1.msra.mxu0 %v2882
        %3272 = vmatprep.subr.mxu0 0.0
        %3273 = vmatpush1.msra.mxu0 %v2885
        %3274 = vmatprep.subr.mxu0 0.0
        %3275 = vmatpush1.msra.mxu0 %v2888
        %3276 = vmatprep.subr.mxu0 0.0
        %3277 = vmatpush1.msra.mxu0 %v2891
        %3278 = vmatprep.subr.mxu0 0.0
        %3279 = vmatpush1.msra.mxu0 %v2894
        %3280 = vmatprep.subr.mxu0 0.0
        %3281 = vmatpush1.msra.mxu0 %v2897
        %3282 = vmatprep.subr.mxu0 0.0
        %3283 = vmatpush1.msra.mxu0 %v2900
        %3284 = vmatprep.subr.mxu0 0.0
        %3285 = vmatpush1.msra.mxu0 %v2903
        %3286 = vmatprep.subr.mxu0 0.0
        %3287 = vmatpush1.msra.mxu0 %v2906
        %3288 = vmatprep.subr.mxu0 0.0
        %3289 = vmatpush1.msra.mxu0 %v2909
        %3290 = vmatprep.subr.mxu0 0.0
        %3291 = vmatpush1.msra.mxu0 %v2912
        %3292 = vmatprep.subr.mxu0 0.0
        %3293 = vmatpush1.msra.mxu0 %v2915
        %3294 = vmatprep.subr.mxu0 0.0
        %3295 = vmatpush1.msra.mxu0 %v2918
        %3296 = vmatprep.subr.mxu0 0.0
        %3297 = vmatpush1.msra.mxu0 %v2921
        %3298 = vmatprep.subr.mxu0 0.0
        %3299 = vmatpush1.msra.mxu0 %v2924
        %3300 = vmatprep.subr.mxu0 0.0
        %3301 = vmatpush1.msra.mxu0 %v2927
        %3302 = vmatprep.subr.mxu0 0.0
        %3303 = vmatpush1.msra.mxu0 %v2930
        %3304 = vmatprep.subr.mxu0 0.0
        %3305 = vmatpush1.msra.mxu0 %v2933
        %3306 = vmatprep.subr.mxu0 0.0
        %3307 = vmatpush1.msra.mxu0 %v2936
        %3308 = vmatprep.subr.mxu0 0.0
        %3309 = vmatpush1.msra.mxu0 %v2939
        %3310 = vmatprep.subr.mxu0 0.0
        %3311 = vmatpush1.msra.mxu0 %v2942
        %3312 = vmatprep.subr.mxu0 0.0
        %3313 = vmatpush1.msra.mxu0 %v2945
        %3314 = vmatprep.subr.mxu0 0.0
        %3315 = vmatpush1.msra.mxu0 %v2948
        %3316 = vmatprep.subr.mxu0 0.0
        %3317 = vmatpush1.msra.mxu0 %v2951
        %3318 = vmatprep.subr.mxu0 0.0
        %3319 = vmatpush1.msra.mxu0 %v2954
        %3320 = vmatprep.mubr.f32.mxu0 %v2832
        %3321 = vmatmul.mubr.f32.gmra.mrb[0].mxu0 %v2831
        %v3322 = vpop.f32.mrb[0].mxu0
        %v3323 = vadd.f32 0.0, %v3322
        %v3324 = vpop.f32.mrb[0].mxu0
        %3325 = vmatprep.mubr.f32.mxu0 %v2835
        %3326 = vmatmul.mubr.f32.gmra.mrb[0].mxu0 %v2834
        %v3327 = vpop.f32.mrb[0].mxu0
        %v3328 = vadd.f32 0.0, %v3327
        %v3329 = vpop.f32.mrb[0].mxu0
        %3330 = vmatprep.mubr.f32.mxu0 %v2838
        %3331 = vmatmul.mubr.f32.gmra.mrb[0].mxu0 %v2837
        %v3332 = vpop.f32.mrb[0].mxu0
        %v3333 = vadd.f32 0.0, %v3332
        %v3334 = vpop.f32.mrb[0].mxu0
        %3335 = vmatprep.mubr.f32.mxu0 %v2841
        %3336 = vmatmul.mubr.f32.gmra.mrb[0].mxu0 %v2840
        %v3337 = vpop.f32.mrb[0].mxu0
        %v3338 = vadd.f32 0.0, %v3337
        %v3339 = vpop.f32.mrb[0].mxu0
        %3340 = vmatprep.mubr.f32.mxu0 %v2844
        %3341 = vmatmul.mubr.f32.gmra.mrb[0].mxu0 %v2843
        %v3342 = vpop.f32.mrb[0].mxu0
        %v3343 = vadd.f32 0.0, %v3342
        %v3344 = vpop.f32.mrb[0].mxu0
        %3345 = vmatprep.mubr.f32.mxu0 %v2847
        %3346 = vmatmul.mubr.f32.gmra.mrb[0].mxu0 %v2846
        %v3347 = vpop.f32.mrb[0].mxu0
        %v3348 = vadd.f32 0.0, %v3347
        %v3349 = vpop.f32.mrb[0].mxu0
        %3350 = vmatprep.mubr.f32.mxu0 %v2850
        %3351 = vmatmul.mubr.f32.gmra.mrb[0].mxu0 %v2849
        %v3352 = vpop.f32.mrb[0].mxu0
        %v3353 = vadd.f32 0.0, %v3352
        %v3354 = vpop.f32.mrb[0].mxu0
        %3355 = vmatprep.mubr.f32.mxu0 %v2853
        %3356 = vmatmul.mubr.f32.gmra.mrb[0].mxu0 %v2852
        %v3357 = vpop.f32.mrb[0].mxu0
        %v3358 = vadd.f32 0.0, %v3357
        %v3359 = vpop.f32.mrb[0].mxu0
        %3360 = vmatprep.mubr.f32.mxu0 %v2856
        %3361 = vmatmul.mubr.f32.gmra.mrb[0].mxu0 %v2855
        %v3362 = vpop.f32.mrb[0].mxu0
        %v3363 = vadd.f32 0.0, %v3362
        %v3364 = vpop.f32.mrb[0].mxu0
        %3365 = vdwg.mxu0
        %3366 = vmatprep.subr.mxu0 0.0
        %3367 = vmatpush1.msra.mxu0 %v2957
        %3368 = vmatprep.subr.mxu0 0.0
        %3369 = vmatpush1.msra.mxu0 %v2960
        %3370 = vmatprep.subr.mxu0 0.0
        %3371 = vmatpush1.msra.mxu0 %v2963
        %3372 = vmatprep.subr.mxu0 0.0
        %3373 = vmatpush1.msra.mxu0 %v2966
        %3374 = vmatprep.subr.mxu0 0.0
        %3375 = vmatpush1.msra.mxu0 %v2969
        %3376 = vmatprep.subr.mxu0 0.0
        %3377 = vmatpush1.msra.mxu0 %v2972
        %3378 = vmatprep.subr.mxu0 0.0
        %3379 = vmatpush1.msra.mxu0 %v2975
        %3380 = vmatprep.subr.mxu0 0.0
        %3381 = vmatpush1.msra.mxu0 %v2978
        %3382 = vmatprep.subr.mxu0 0.0
        %3383 = vmatpush1.msra.mxu0 %v2981
        %3384 = vmatprep.subr.mxu0 0.0
        %3385 = vmatpush1.msra.mxu0 %v2984
        %3386 = vmatprep.subr.mxu0 0.0
        %3387 = vmatpush1.msra.mxu0 %v2987
        %3388 = vmatprep.subr.mxu0 0.0
        %3389 = vmatpush1.msra.mxu0 %v2990
        %3390 = vmatprep.subr.mxu0 0.0
        %3391 = vmatpush1.msra.mxu0 0.0
        %3392 = vmatprep.subr.mxu0 0.0
        %3393 = vmatpush1.msra.mxu0 0.0
        %3394 = vmatprep.subr.mxu0 0.0
        %3395 = vmatpush1.msra.mxu0 0.0
        %3396 = vmatprep.subr.mxu0 0.0
        %3397 = vmatpush1.msra.mxu0 0.0
        %3398 = vmatprep.subr.mxu0 0.0
        %3399 = vmatpush1.msra.mxu0 0.0
        %3400 = vmatprep.subr.mxu0 0.0
        %3401 = vmatpush1.msra.mxu0 0.0
        %3402 = vmatprep.subr.mxu0 0.0
        %3403 = vmatpush1.msra.mxu0 0.0
        %3404 = vmatprep.subr.mxu0 0.0
        %3405 = vmatpush1.msra.mxu0 0.0
        %3406 = vmatprep.subr.mxu0 0.0
        %3407 = vmatpush1.msra.mxu0 0.0
        %3408 = vmatprep.subr.mxu0 0.0
        %3409 = vmatpush1.msra.mxu0 0.0
        %3410 = vmatprep.subr.mxu0 0.0
        %3411 = vmatpush1.msra.mxu0 0.0
        %3412 = vmatprep.subr.mxu0 0.0
        %3413 = vmatpush1.msra.mxu0 0.0
        %3414 = vmatprep.subr.mxu0 0.0
        %3415 = vmatpush1.msra.mxu0 0.0
        %3416 = vmatprep.subr.mxu0 0.0
        %3417 = vmatpush1.msra.mxu0 0.0
        %3418 = vmatprep.subr.mxu0 0.0
        %3419 = vmatpush1.msra.mxu0 0.0
        %3420 = vmatprep.subr.mxu0 0.0
        %3421 = vmatpush1.msra.mxu0 0.0
        %3422 = vmatprep.subr.mxu0 0.0
        %3423 = vmatpush1.msra.mxu0 0.0
        %3424 = vmatprep.subr.mxu0 0.0
        %3425 = vmatpush1.msra.mxu0 0.0
        %3426 = vmatprep.subr.mxu0 0.0
        %3427 = vmatpush1.msra.mxu0 0.0
        %3428 = vmatprep.subr.mxu0 0.0
        %3429 = vmatpush1.msra.mxu0 0.0
        %3430 = vmatprep.mubr.f32.mxu0 0.0
        %3431 = vmatmul.mubr.f32.gmra.mrb[0].mxu0 %v2992
        %v3432 = vpop.f32.mrb[0].mxu0
        %v3433 = vadd.f32 %v3323, %v3432
        %v3434 = vpop.f32.mrb[0].mxu0
        %3435 = vmatprep.mubr.f32.mxu0 0.0
        %3436 = vmatmul.mubr.f32.gmra.mrb[0].mxu0 %v2995
        %v3437 = vpop.f32.mrb[0].mxu0
        %v3438 = vadd.f32 %v3328, %v3437
        %v3439 = vpop.f32.mrb[0].mxu0
        %3440 = vmatprep.mubr.f32.mxu0 0.0
        %3441 = vmatmul.mubr.f32.gmra.mrb[0].mxu0 %v2998
        %v3442 = vpop.f32.mrb[0].mxu0
        %v3443 = vadd.f32 %v3333, %v3442
        %v3444 = vpop.f32.mrb[0].mxu0
        %3445 = vmatprep.mubr.f32.mxu0 0.0
        %3446 = vmatmul.mubr.f32.gmra.mrb[0].mxu0 %v3001
        %v3447 = vpop.f32.mrb[0].mxu0
        %v3448 = vadd.f32 %v3338, %v3447
        %v3449 = vpop.f32.mrb[0].mxu0
        %3450 = vmatprep.mubr.f32.mxu0 0.0
        %3451 = vmatmul.mubr.f32.gmra.mrb[0].mxu0 %v3004
        %v3452 = vpop.f32.mrb[0].mxu0
        %v3453 = vadd.f32 %v3343, %v3452
        %v3454 = vpop.f32.mrb[0].mxu0
        %3455 = vmatprep.mubr.f32.mxu0 0.0
        %3456 = vmatmul.mubr.f32.gmra.mrb[0].mxu0 %v3007
        %v3457 = vpop.f32.mrb[0].mxu0
        %v3458 = vadd.f32 %v3348, %v3457
        %v3459 = vpop.f32.mrb[0].mxu0
        %3460 = vmatprep.mubr.f32.mxu0 0.0
        %3461 = vmatmul.mubr.f32.gmra.mrb[0].mxu0 %v3010
        %v3462 = vpop.f32.mrb[0].mxu0
        %v3463 = vadd.f32 %v3353, %v3462
        %v3464 = vpop.f32.mrb[0].mxu0
        %3465 = vmatprep.mubr.f32.mxu0 0.0
        %3466 = vmatmul.mubr.f32.gmra.mrb[0].mxu0 %v3013
        %v3467 = vpop.f32.mrb[0].mxu0
        %v3468 = vadd.f32 %v3358, %v3467
        %v3469 = vpop.f32.mrb[0].mxu0
        %3470 = vmatprep.mubr.f32.mxu0 0.0
        %3471 = vmatmul.mubr.f32.gmra.mrb[0].mxu0 %v3016
        %v3472 = vpop.f32.mrb[0].mxu0
        %v3473 = vadd.f32 %v3363, %v3472
        %v3474 = vpop.f32.mrb[0].mxu0
        %3475 = vdwg.mxu0
        %v3476 = vadd.f32 %v2559, %v3204
        %v3477 = vadd.f32 %v2561, %v3206
        %v3478 = vadd.f32 %v2788, %v3433
        %v3479 = vadd.f32 %v2565, %v3210
        %v3480 = vadd.f32 %v2567, %v3212
        %v3481 = vadd.f32 %v2793, %v3438
        %v3482 = vadd.f32 %v2571, %v3216
        %v3483 = vadd.f32 %v2573, %v3218
        %v3484 = vadd.f32 %v2798, %v3443
        %v3485 = vadd.f32 %v2577, %v3222
        %v3486 = vadd.f32 %v2579, %v3224
        %v3487 = vadd.f32 %v2803, %v3448
        %v3488 = vadd.f32 %v2583, %v3228
        %v3489 = vadd.f32 %v2585, %v3230
        %v3490 = vadd.f32 %v2808, %v3453
        %v3491 = vadd.f32 %v2589, %v3234
        %v3492 = vadd.f32 %v2591, %v3236
        %v3493 = vadd.f32 %v2813, %v3458
        %v3494 = vadd.f32 %v2595, %v3240
        %v3495 = vadd.f32 %v2597, %v3242
        %v3496 = vadd.f32 %v2818, %v3463
        %v3497 = vadd.f32 %v2601, %v3246
        %v3498 = vadd.f32 %v2603, %v3248
        %v3499 = vadd.f32 %v2823, %v3468
        %v3500 = vadd.f32 %v2607, %v3252
        %v3501 = vadd.f32 %v2609, %v3254
        %v3502 = vadd.f32 %v2828, %v3473
        %v3503 = vld [vmem:[%s4] sm:$0x7]
        %v3505 = vlaneseq
        %v3506 = vshrl.u32 %v3505, 7
        %v3507 = vsub.s32 0, %v3506
        %v3508 = vrot.slane %v3503, %v3507
        %v3509 = vlaneseq
        %v3510 = vshrl.u32 %v3509, 7
        %v3511 = vsub.s32 1, %v3510
        %v3512 = vrot.slane %v3503, %v3511
        %v3513 = vlaneseq
        %v3514 = vshrl.u32 %v3513, 7
        %v3515 = vsub.s32 2, %v3514
        %v3516 = vrot.slane %v3503, %v3515
        %v3520 = vadd.f32 %v3476, %v3508
        %v3521 = vadd.f32 %v3477, %v3512
        %v3522 = vadd.f32 %v3478, %v3516
        %v3523 = vadd.f32 %v3479, %v3508
        %v3524 = vadd.f32 %v3480, %v3512
        %v3525 = vadd.f32 %v3481, %v3516
        %v3526 = vadd.f32 %v3482, %v3508
        %v3527 = vadd.f32 %v3483, %v3512
        %v3528 = vadd.f32 %v3484, %v3516
        %v3529 = vadd.f32 %v3485, %v3508
        %v3530 = vadd.f32 %v3486, %v3512
        %v3531 = vadd.f32 %v3487, %v3516
        %v3532 = vadd.f32 %v3488, %v3508
        %v3533 = vadd.f32 %v3489, %v3512
        %v3534 = vadd.f32 %v3490, %v3516
        %v3535 = vadd.f32 %v3491, %v3508
        %v3536 = vadd.f32 %v3492, %v3512
        %v3537 = vadd.f32 %v3493, %v3516
        %v3538 = vadd.f32 %v3494, %v3508
        %v3539 = vadd.f32 %v3495, %v3512
        %v3540 = vadd.f32 %v3496, %v3516
        %v3541 = vadd.f32 %v3497, %v3508
        %v3542 = vadd.f32 %v3498, %v3512
        %v3543 = vadd.f32 %v3499, %v3516
        %v3544 = vadd.f32 %v3500, %v3508
        %v3545 = vadd.f32 %v3501, %v3512
        %v3546 = vadd.f32 %v3502, %v3516
        %v3547 = vmax.f32 %v3520, 0.0
        %v3548 = vmax.f32 %v3521, 0.0
        %v3549 = vmax.f32 %v3522, 0.0
        %v3550 = vmax.f32 %v3523, 0.0
        %v3551 = vmax.f32 %v3524, 0.0
        %v3552 = vmax.f32 %v3525, 0.0
        %v3553 = vmax.f32 %v3526, 0.0
        %v3554 = vmax.f32 %v3527, 0.0
        %v3555 = vmax.f32 %v3528, 0.0
        %v3556 = vmax.f32 %v3529, 0.0
        %v3557 = vmax.f32 %v3530, 0.0
        %v3558 = vmax.f32 %v3531, 0.0
        %v3559 = vmax.f32 %v3532, 0.0
        %v3560 = vmax.f32 %v3533, 0.0
        %v3561 = vmax.f32 %v3534, 0.0
        %v3562 = vmax.f32 %v3535, 0.0
        %v3563 = vmax.f32 %v3536, 0.0
        %v3564 = vmax.f32 %v3537, 0.0
        %v3565 = vmax.f32 %v3538, 0.0
        %v3566 = vmax.f32 %v3539, 0.0
        %v3567 = vmax.f32 %v3540, 0.0
        %v3568 = vmax.f32 %v3541, 0.0
        %v3569 = vmax.f32 %v3542, 0.0
        %v3570 = vmax.f32 %v3543, 0.0
        %v3571 = vmax.f32 %v3544, 0.0
        %v3572 = vmax.f32 %v3545, 0.0
        %v3573 = vmax.f32 %v3546, 0.0
        %3574 = vst [vmem:[#allocation3] sm:$0xff] %v3547
        %3575 = vst [vmem:[#allocation3 + $0x8] sm:$0xff] %v3548
        %vm3576 = vcmask 261120
        %3577 = vst.msk [vmem:[#allocation3 + $0x10] sm:$0xff] %vm3576, %v3549
        %3578 = vst [vmem:[#allocation3 + $0x18] sm:$0xff] %v3550
        %3579 = vst [vmem:[#allocation3 + $0x20] sm:$0xff] %v3551
        %3580 = vst.msk [vmem:[#allocation3 + $0x28] sm:$0xff] %vm3576, %v3552
        %3581 = vst [vmem:[#allocation3 + $0x30] sm:$0xff] %v3553
        %3582 = vst [vmem:[#allocation3 + $0x38] sm:$0xff] %v3554
        %3583 = vst.msk [vmem:[#allocation3 + $0x40] sm:$0xff] %vm3576, %v3555
        %3584 = vst [vmem:[#allocation3 + $0x48] sm:$0xff] %v3556
        %3585 = vst [vmem:[#allocation3 + $0x50] sm:$0xff] %v3557
        %3586 = vst.msk [vmem:[#allocation3 + $0x58] sm:$0xff] %vm3576, %v3558
        %3587 = vst [vmem:[#allocation3 + $0x60] sm:$0xff] %v3559
        %3588 = vst [vmem:[#allocation3 + $0x68] sm:$0xff] %v3560
        %3589 = vst.msk [vmem:[#allocation3 + $0x70] sm:$0xff] %vm3576, %v3561
        %3590 = vst [vmem:[#allocation3 + $0x78] sm:$0xff] %v3562
        %3591 = vst [vmem:[#allocation3 + $0x80] sm:$0xff] %v3563
        %3592 = vst.msk [vmem:[#allocation3 + $0x88] sm:$0xff] %vm3576, %v3564
        %3593 = vst [vmem:[#allocation3 + $0x90] sm:$0xff] %v3565
        %3594 = vst [vmem:[#allocation3 + $0x98] sm:$0xff] %v3566
        %3595 = vst.msk [vmem:[#allocation3 + $0xa0] sm:$0xff] %vm3576, %v3567
        %3596 = vst [vmem:[#allocation3 + $0xa8] sm:$0xff] %v3568
        %3597 = vst [vmem:[#allocation3 + $0xb0] sm:$0xff] %v3569
        %3598 = vst.msk [vmem:[#allocation3 + $0xb8] sm:$0xff] %vm3576, %v3570
        %3599 = vst [vmem:[#allocation3 + $0xc0] sm:$0xff] %v3571
        %3600 = vst [vmem:[#allocation3 + $0xc8] sm:$0xff] %v3572
        %3601 = vst.msk [vmem:[#allocation3 + $0xd0] sm:$0xff] %vm3576, %v3573
        %v3602 = vld [vmem:[#allocation3] sm:$0xff]
        %v3603 = vld [vmem:[#allocation3 + $0x8] sm:$0xff]
        %v3604 = vld [vmem:[#allocation3 + $0x10] sm:$0xff]
        %v3605 = vld [vmem:[#allocation3 + $0x18] sm:$0xff]
        %v3606 = vld [vmem:[#allocation3 + $0x20] sm:$0xff]
        %v3607 = vld [vmem:[#allocation3 + $0x28] sm:$0xff]
        %v3608 = vld [vmem:[#allocation3 + $0x30] sm:$0xff]
        %v3609 = vld [vmem:[#allocation3 + $0x38] sm:$0xff]
        %v3610 = vld [vmem:[#allocation3 + $0x40] sm:$0xff]
        %v3611 = vld [vmem:[#allocation3 + $0x48] sm:$0xff]
        %v3612 = vld [vmem:[#allocation3 + $0x50] sm:$0xff]
        %v3613 = vld [vmem:[#allocation3 + $0x58] sm:$0xff]
        %v3614 = vld [vmem:[#allocation3 + $0x60] sm:$0xff]
        %v3615 = vld [vmem:[#allocation3 + $0x68] sm:$0xff]
        %v3616 = vld [vmem:[#allocation3 + $0x70] sm:$0xff]
        %v3617 = vld [vmem:[#allocation3 + $0x78] sm:$0xff]
        %v3618 = vld [vmem:[#allocation3 + $0x80] sm:$0xff]
        %v3619 = vld [vmem:[#allocation3 + $0x88] sm:$0xff]
        %v3620 = vld [vmem:[#allocation3 + $0x90] sm:$0xff]
        %v3621 = vld [vmem:[#allocation3 + $0x98] sm:$0xff]
        %v3622 = vld [vmem:[#allocation3 + $0xa0] sm:$0xff]
        %v3623 = vld [vmem:[%s5] sm:$0xff]
        %v3624 = vld [vmem:[%s5 + $0x8] sm:$0xff]
        %v3625 = vld [vmem:[%s5 + $0x10] sm:$0xff]
        %v3626 = vld [vmem:[%s5 + $0x18] sm:$0xff]
        %v3627 = vld [vmem:[%s5 + $0x20] sm:$0xff]
        %v3628 = vld [vmem:[%s5 + $0x28] sm:$0xff]
        %v3629 = vld [vmem:[%s5 + $0x30] sm:$0xff]
        %v3630 = vld [vmem:[%s5 + $0x38] sm:$0xff]
        %v3631 = vld [vmem:[%s5 + $0x40] sm:$0xff]
        %v3632 = vld [vmem:[%s5 + $0x48] sm:$0xff]
        %v3633 = vld [vmem:[%s5 + $0x50] sm:$0xff]
        %v3634 = vld [vmem:[%s5 + $0x58] sm:$0xff]
        %v3635 = vld [vmem:[%s5 + $0x60] sm:$0xff]
        %v3636 = vld [vmem:[%s5 + $0x68] sm:$0xff]
        %v3637 = vld [vmem:[%s5 + $0x70] sm:$0xff]
        %v3638 = vld [vmem:[%s5 + $0x78] sm:$0xff]
        %v3639 = vld [vmem:[%s5 + $0x80] sm:$0xff]
        %v3640 = vld [vmem:[%s5 + $0x88] sm:$0xff]
        %v3641 = vld [vmem:[%s5 + $0x90] sm:$0xff]
        %v3642 = vld [vmem:[%s5 + $0x98] sm:$0xff]
        %v3643 = vld [vmem:[%s5 + $0xa0] sm:$0xff]
        %v3644 = vld [vmem:[%s5 + $0xa8] sm:$0xff]
        %v3645 = vld [vmem:[%s5 + $0xb0] sm:$0xff]
        %v3646 = vld [vmem:[%s5 + $0xb8] sm:$0xff]
        %v3647 = vld [vmem:[%s5 + $0xc0] sm:$0xff]
        %v3648 = vld [vmem:[%s5 + $0xc8] sm:$0xff]
        %v3649 = vld [vmem:[%s5 + $0xd0] sm:$0xff]
        %v3650 = vld [vmem:[%s5 + $0xd8] sm:$0xff]
        %v3651 = vld [vmem:[%s5 + $0xe0] sm:$0xff]
        %v3652 = vld [vmem:[%s5 + $0xe8] sm:$0xff]
        %v3653 = vld [vmem:[%s5 + $0xf0] sm:$0xff]
        %v3654 = vld [vmem:[%s5 + $0xf8] sm:$0xff]
        %v3655 = vld [vmem:[%s5 + $0x100] sm:$0xff]
        %v3656 = vld [vmem:[%s5 + $0x108] sm:$0xff]
        %v3657 = vld [vmem:[%s5 + $0x110] sm:$0xff]
        %v3658 = vld [vmem:[%s5 + $0x118] sm:$0xff]
        %v3659 = vld [vmem:[%s5 + $0x120] sm:$0xff]
        %v3660 = vld [vmem:[%s5 + $0x128] sm:$0xff]
        %v3661 = vld [vmem:[%s5 + $0x130] sm:$0xff]
        %v3662 = vld [vmem:[%s5 + $0x138] sm:$0xff]
        %v3663 = vld [vmem:[%s5 + $0x140] sm:$0xff]
        %v3664 = vld [vmem:[%s5 + $0x148] sm:$0xff]
        %v3665 = vld [vmem:[%s5 + $0x150] sm:$0xff]
        %v3666 = vld [vmem:[%s5 + $0x158] sm:$0xff]
        %v3667 = vld [vmem:[%s5 + $0x160] sm:$0xff]
        %v3668 = vld [vmem:[%s5 + $0x168] sm:$0xff]
        %v3669 = vld [vmem:[%s5 + $0x170] sm:$0xff]
        %v3670 = vld [vmem:[%s5 + $0x178] sm:$0xff]
        %v3671 = vld [vmem:[%s5 + $0x180] sm:$0xff]
        %v3672 = vld [vmem:[%s5 + $0x188] sm:$0xff]
        %v3673 = vld [vmem:[%s5 + $0x190] sm:$0xff]
        %v3674 = vld [vmem:[%s5 + $0x198] sm:$0xff]
        %v3675 = vld [vmem:[%s5 + $0x1a0] sm:$0xff]
        %v3676 = vld [vmem:[%s5 + $0x1a8] sm:$0xff]
        %v3677 = vld [vmem:[%s5 + $0x1b0] sm:$0xff]
        %v3678 = vld [vmem:[%s5 + $0x1b8] sm:$0xff]
        %v3679 = vld [vmem:[%s5 + $0x1c0] sm:$0xff]
        %v3680 = vld [vmem:[%s5 + $0x1c8] sm:$0xff]
        %v3681 = vld [vmem:[%s5 + $0x1d0] sm:$0xff]
        %v3682 = vld [vmem:[%s5 + $0x1d8] sm:$0xff]
        %v3683 = vld [vmem:[%s5 + $0x1e0] sm:$0xff]
        %v3684 = vld [vmem:[%s5 + $0x1e8] sm:$0xff]
        %v3685 = vld [vmem:[%s5 + $0x1f0] sm:$0xff]
        %v3686 = vld [vmem:[%s5 + $0x1f8] sm:$0xff]
        %v3687 = vld [vmem:[%s5 + $0x200] sm:$0xff]
        %v3688 = vld [vmem:[%s5 + $0x208] sm:$0xff]
        %v3689 = vld [vmem:[%s5 + $0x210] sm:$0xff]
        %v3690 = vld [vmem:[%s5 + $0x218] sm:$0xff]
        %v3691 = vld [vmem:[%s5 + $0x220] sm:$0xff]
        %v3692 = vld [vmem:[%s5 + $0x228] sm:$0xff]
        %v3693 = vld [vmem:[%s5 + $0x230] sm:$0xff]
        %v3694 = vld [vmem:[%s5 + $0x238] sm:$0xff]
        %v3695 = vld [vmem:[#allocation3 + $0xa8] sm:$0xff]
        %v3696 = vld [vmem:[#allocation3 + $0xb0] sm:$0xff]
        %v3697 = vld [vmem:[#allocation3 + $0xb8] sm:$0xff]
        %s3698 = scalar_lea.vmem %s5, 576
        %v3699 = vld [vmem:[%s3698] sm:$0xff]
        %v3700 = vld [vmem:[%s3698 + $0x8] sm:$0xff]
        %v3701 = vld [vmem:[%s3698 + $0x10] sm:$0xff]
        %v3702 = vld [vmem:[%s3698 + $0x18] sm:$0xff]
        %v3703 = vld [vmem:[%s3698 + $0x20] sm:$0xff]
        %v3704 = vld [vmem:[%s3698 + $0x28] sm:$0xff]
        %v3705 = vld [vmem:[%s3698 + $0x30] sm:$0xff]
        %v3706 = vld [vmem:[%s3698 + $0x38] sm:$0xff]
        %v3707 = vld [vmem:[%s3698 + $0x40] sm:$0xff]
        %v3708 = vld [vmem:[%s3698 + $0x48] sm:$0xff]
        %v3709 = vld [vmem:[%s3698 + $0x50] sm:$0xff]
        %v3710 = vld [vmem:[%s3698 + $0x58] sm:$0xff]
        %v3711 = vld [vmem:[%s3698 + $0x60] sm:$0xff]
        %v3712 = vld [vmem:[%s3698 + $0x68] sm:$0xff]
        %v3713 = vld [vmem:[%s3698 + $0x70] sm:$0xff]
        %v3714 = vld [vmem:[%s3698 + $0x78] sm:$0xff]
        %v3715 = vld [vmem:[%s3698 + $0x80] sm:$0xff]
        %v3716 = vld [vmem:[%s3698 + $0x88] sm:$0xff]
        %v3717 = vld [vmem:[%s3698 + $0x90] sm:$0xff]
        %v3718 = vld [vmem:[%s3698 + $0x98] sm:$0xff]
        %v3719 = vld [vmem:[%s3698 + $0xa0] sm:$0xff]
        %v3720 = vld [vmem:[%s3698 + $0xa8] sm:$0xff]
        %v3721 = vld [vmem:[%s3698 + $0xb0] sm:$0xff]
        %v3722 = vld [vmem:[%s3698 + $0xb8] sm:$0xff]
        %v3723 = vld [vmem:[%s3698 + $0xc0] sm:$0xff]
        %v3724 = vld [vmem:[%s3698 + $0xc8] sm:$0xff]
        %v3725 = vld [vmem:[%s3698 + $0xd0] sm:$0xff]
        %v3726 = vld [vmem:[%s3698 + $0xd8] sm:$0xff]
        %v3727 = vld [vmem:[%s3698 + $0xe0] sm:$0xff]
        %v3728 = vld [vmem:[%s3698 + $0xe8] sm:$0xff]
        %v3729 = vld [vmem:[%s3698 + $0xf0] sm:$0xff]
        %v3730 = vld [vmem:[%s3698 + $0xf8] sm:$0xff]
        %v3731 = vld [vmem:[%s3698 + $0x100] sm:$0xff]
        %v3732 = vld [vmem:[%s3698 + $0x108] sm:$0xff]
        %v3733 = vld [vmem:[%s3698 + $0x110] sm:$0xff]
        %v3734 = vld [vmem:[%s3698 + $0x118] sm:$0xff]
        %v3735 = vld [vmem:[%s3698 + $0x120] sm:$0xff]
        %v3736 = vld [vmem:[%s3698 + $0x128] sm:$0xff]
        %v3737 = vld [vmem:[%s3698 + $0x130] sm:$0xff]
        %v3738 = vld [vmem:[%s3698 + $0x138] sm:$0xff]
        %v3739 = vld [vmem:[%s3698 + $0x140] sm:$0xff]
        %v3740 = vld [vmem:[%s3698 + $0x148] sm:$0xff]
        %v3741 = vld [vmem:[%s3698 + $0x150] sm:$0xff]
        %v3742 = vld [vmem:[%s3698 + $0x158] sm:$0xff]
        %v3743 = vld [vmem:[%s3698 + $0x160] sm:$0xff]
        %v3744 = vld [vmem:[%s3698 + $0x168] sm:$0xff]
        %v3745 = vld [vmem:[%s3698 + $0x170] sm:$0xff]
        %v3746 = vld [vmem:[%s3698 + $0x178] sm:$0xff]
        %v3747 = vld [vmem:[%s3698 + $0x180] sm:$0xff]
        %v3748 = vld [vmem:[%s3698 + $0x188] sm:$0xff]
        %v3749 = vld [vmem:[%s3698 + $0x190] sm:$0xff]
        %v3750 = vld [vmem:[%s3698 + $0x198] sm:$0xff]
        %v3751 = vld [vmem:[%s3698 + $0x1a0] sm:$0xff]
        %v3752 = vld [vmem:[%s3698 + $0x1a8] sm:$0xff]
        %v3753 = vld [vmem:[%s3698 + $0x1b0] sm:$0xff]
        %v3754 = vld [vmem:[%s3698 + $0x1b8] sm:$0xff]
        %v3755 = vld [vmem:[%s3698 + $0x1c0] sm:$0xff]
        %v3756 = vld [vmem:[%s3698 + $0x1c8] sm:$0xff]
        %v3757 = vld [vmem:[%s3698 + $0x1d0] sm:$0xff]
        %v3758 = vld [vmem:[%s3698 + $0x1d8] sm:$0xff]
        %v3759 = vld [vmem:[%s3698 + $0x1e0] sm:$0xff]
        %v3760 = vld [vmem:[%s3698 + $0x1e8] sm:$0xff]
        %v3761 = vld [vmem:[%s3698 + $0x1f0] sm:$0xff]
        %v3762 = vld [vmem:[%s3698 + $0x1f8] sm:$0xff]
        %v3763 = vld [vmem:[%s3698 + $0x200] sm:$0xff]
        %v3764 = vld [vmem:[%s3698 + $0x208] sm:$0xff]
        %v3765 = vld [vmem:[%s3698 + $0x210] sm:$0xff]
        %v3766 = vld [vmem:[%s3698 + $0x218] sm:$0xff]
        %v3767 = vld [vmem:[%s3698 + $0x220] sm:$0xff]
        %v3768 = vld [vmem:[%s3698 + $0x228] sm:$0xff]
        %v3769 = vld [vmem:[%s3698 + $0x230] sm:$0xff]
        %v3770 = vld [vmem:[%s3698 + $0x238] sm:$0xff]
        %v3772 = vsel %vm3576, %v3607, 0
        %v3775 = vsel %vm3576, %v3610, 0
        %v3778 = vsel %vm3576, %v3613, 0
        %v3781 = vsel %vm3576, %v3616, 0
        %v3784 = vsel %vm3576, %v3619, 0
        %v3787 = vsel %vm3576, %v3622, 0
        %v3790 = vsel %vm3576, %v3697, 0
        %3792 = vmatprep.subr.mxu0 %v3700
        %3793 = vmatpush1.msra.mxu0 %v3699
        %3794 = vmatprep.subr.mxu0 %v3702
        %3795 = vmatpush1.msra.mxu0 %v3701
        %3796 = vmatprep.subr.mxu0 %v3704
        %3797 = vmatpush1.msra.mxu0 %v3703
        %3798 = vmatprep.subr.mxu0 %v3706
        %3799 = vmatpush1.msra.mxu0 %v3705
        %3800 = vmatprep.subr.mxu0 %v3708
        %3801 = vmatpush1.msra.mxu0 %v3707
        %3802 = vmatprep.subr.mxu0 %v3710
        %3803 = vmatpush1.msra.mxu0 %v3709
        %3804 = vmatprep.subr.mxu0 %v3712
        %3805 = vmatpush1.msra.mxu0 %v3711
        %3806 = vmatprep.subr.mxu0 %v3714
        %3807 = vmatpush1.msra.mxu0 %v3713
        %3808 = vmatprep.subr.mxu0 %v3716
        %3809 = vmatpush1.msra.mxu0 %v3715
        %3810 = vmatprep.subr.mxu0 %v3718
        %3811 = vmatpush1.msra.mxu0 %v3717
        %3812 = vmatprep.subr.mxu0 %v3720
        %3813 = vmatpush1.msra.mxu0 %v3719
        %3814 = vmatprep.subr.mxu0 %v3722
        %3815 = vmatpush1.msra.mxu0 %v3721
        %3816 = vmatprep.subr.mxu0 %v3724
        %3817 = vmatpush1.msra.mxu0 %v3723
        %3818 = vmatprep.subr.mxu0 %v3726
        %3819 = vmatpush1.msra.mxu0 %v3725
        %3820 = vmatprep.subr.mxu0 %v3728
        %3821 = vmatpush1.msra.mxu0 %v3727
        %3822 = vmatprep.subr.mxu0 %v3730
        %3823 = vmatpush1.msra.mxu0 %v3729
        %3824 = vmatprep.subr.mxu0 %v3732
        %3825 = vmatpush1.msra.mxu0 %v3731
        %3826 = vmatprep.subr.mxu0 %v3734
        %3827 = vmatpush1.msra.mxu0 %v3733
        %3828 = vmatprep.subr.mxu0 %v3736
        %3829 = vmatpush1.msra.mxu0 %v3735
        %3830 = vmatprep.subr.mxu0 %v3738
        %3831 = vmatpush1.msra.mxu0 %v3737
        %3832 = vmatprep.subr.mxu0 %v3740
        %3833 = vmatpush1.msra.mxu0 %v3739
        %3834 = vmatprep.subr.mxu0 %v3742
        %3835 = vmatpush1.msra.mxu0 %v3741
        %3836 = vmatprep.subr.mxu0 %v3744
        %3837 = vmatpush1.msra.mxu0 %v3743
        %3838 = vmatprep.subr.mxu0 %v3746
        %3839 = vmatpush1.msra.mxu0 %v3745
        %3840 = vmatprep.subr.mxu0 %v3748
        %3841 = vmatpush1.msra.mxu0 %v3747
        %3842 = vmatprep.subr.mxu0 %v3750
        %3843 = vmatpush1.msra.mxu0 %v3749
        %3844 = vmatprep.subr.mxu0 %v3752
        %3845 = vmatpush1.msra.mxu0 %v3751
        %3846 = vmatprep.subr.mxu0 %v3754
        %3847 = vmatpush1.msra.mxu0 %v3753
        %3848 = vmatprep.subr.mxu0 %v3756
        %3849 = vmatpush1.msra.mxu0 %v3755
        %3850 = vmatprep.subr.mxu0 %v3758
        %3851 = vmatpush1.msra.mxu0 %v3757
        %3852 = vmatprep.subr.mxu0 %v3760
        %3853 = vmatpush1.msra.mxu0 %v3759
        %3854 = vmatprep.subr.mxu0 %v3762
        %3855 = vmatpush1.msra.mxu0 %v3761
        %3856 = vmatprep.mubr.f32.mxu0 %v3606
        %3857 = vmatmul.mubr.f32.gmra.mrb[0].mxu0 %v3605
        %v3858 = vpop.f32.mrb[0].mxu0
        %v3859 = vadd.f32 0.0, %v3858
        %v3860 = vpop.f32.mrb[0].mxu0
        %v3861 = vadd.f32 0.0, %v3860
        %3862 = vmatprep.mubr.f32.mxu0 %v3609
        %3863 = vmatmul.mubr.f32.gmra.mrb[0].mxu0 %v3608
        %v3864 = vpop.f32.mrb[0].mxu0
        %v3865 = vadd.f32 0.0, %v3864
        %v3866 = vpop.f32.mrb[0].mxu0
        %v3867 = vadd.f32 0.0, %v3866
        %3868 = vmatprep.mubr.f32.mxu0 %v3612
        %3869 = vmatmul.mubr.f32.gmra.mrb[0].mxu0 %v3611
        %v3870 = vpop.f32.mrb[0].mxu0
        %v3871 = vadd.f32 0.0, %v3870
        %v3872 = vpop.f32.mrb[0].mxu0
        %v3873 = vadd.f32 0.0, %v3872
        %3874 = vmatprep.mubr.f32.mxu0 %v3615
        %3875 = vmatmul.mubr.f32.gmra.mrb[0].mxu0 %v3614
        %v3876 = vpop.f32.mrb[0].mxu0
        %v3877 = vadd.f32 0.0, %v3876
        %v3878 = vpop.f32.mrb[0].mxu0
        %v3879 = vadd.f32 0.0, %v3878
        %3880 = vmatprep.mubr.f32.mxu0 %v3618
        %3881 = vmatmul.mubr.f32.gmra.mrb[0].mxu0 %v3617
        %v3882 = vpop.f32.mrb[0].mxu0
        %v3883 = vadd.f32 0.0, %v3882
        %v3884 = vpop.f32.mrb[0].mxu0
        %v3885 = vadd.f32 0.0, %v3884
        %3886 = vmatprep.mubr.f32.mxu0 %v3621
        %3887 = vmatmul.mubr.f32.gmra.mrb[0].mxu0 %v3620
        %v3888 = vpop.f32.mrb[0].mxu0
        %v3889 = vadd.f32 0.0, %v3888
        %v3890 = vpop.f32.mrb[0].mxu0
        %v3891 = vadd.f32 0.0, %v3890
        %3892 = vmatprep.mubr.f32.mxu0 %v3696
        %3893 = vmatmul.mubr.f32.gmra.mrb[0].mxu0 %v3695
        %v3894 = vpop.f32.mrb[0].mxu0
        %v3895 = vadd.f32 0.0, %v3894
        %v3896 = vpop.f32.mrb[0].mxu0
        %v3897 = vadd.f32 0.0, %v3896
        %3898 = vdwg.mxu0
        %3899 = vmatprep.subr.mxu0 %v3764
        %3900 = vmatpush1.msra.mxu0 %v3763
        %3901 = vmatprep.subr.mxu0 %v3766
        %3902 = vmatpush1.msra.mxu0 %v3765
        %3903 = vmatprep.subr.mxu0 %v3768
        %3904 = vmatpush1.msra.mxu0 %v3767
        %3905 = vmatprep.subr.mxu0 %v3770
        %3906 = vmatpush1.msra.mxu0 %v3769
        %3907 = vmatprep.subr.mxu0 0.0
        %3908 = vmatpush1.msra.mxu0 0.0
        %3909 = vmatprep.subr.mxu0 0.0
        %3910 = vmatpush1.msra.mxu0 0.0
        %3911 = vmatprep.subr.mxu0 0.0
        %3912 = vmatpush1.msra.mxu0 0.0
        %3913 = vmatprep.subr.mxu0 0.0
        %3914 = vmatpush1.msra.mxu0 0.0
        %3915 = vmatprep.subr.mxu0 0.0
        %3916 = vmatpush1.msra.mxu0 0.0
        %3917 = vmatprep.subr.mxu0 0.0
        %3918 = vmatpush1.msra.mxu0 0.0
        %3919 = vmatprep.subr.mxu0 0.0
        %3920 = vmatpush1.msra.mxu0 0.0
        %3921 = vmatprep.subr.mxu0 0.0
        %3922 = vmatpush1.msra.mxu0 0.0
        %3923 = vmatprep.subr.mxu0 0.0
        %3924 = vmatpush1.msra.mxu0 0.0
        %3925 = vmatprep.subr.mxu0 0.0
        %3926 = vmatpush1.msra.mxu0 0.0
        %3927 = vmatprep.subr.mxu0 0.0
        %3928 = vmatpush1.msra.mxu0 0.0
        %3929 = vmatprep.subr.mxu0 0.0
        %3930 = vmatpush1.msra.mxu0 0.0
        %3931 = vmatprep.subr.mxu0 0.0
        %3932 = vmatpush1.msra.mxu0 0.0
        %3933 = vmatprep.subr.mxu0 0.0
        %3934 = vmatpush1.msra.mxu0 0.0
        %3935 = vmatprep.subr.mxu0 0.0
        %3936 = vmatpush1.msra.mxu0 0.0
        %3937 = vmatprep.subr.mxu0 0.0
        %3938 = vmatpush1.msra.mxu0 0.0
        %3939 = vmatprep.subr.mxu0 0.0
        %3940 = vmatpush1.msra.mxu0 0.0
        %3941 = vmatprep.subr.mxu0 0.0
        %3942 = vmatpush1.msra.mxu0 0.0
        %3943 = vmatprep.subr.mxu0 0.0
        %3944 = vmatpush1.msra.mxu0 0.0
        %3945 = vmatprep.subr.mxu0 0.0
        %3946 = vmatpush1.msra.mxu0 0.0
        %3947 = vmatprep.subr.mxu0 0.0
        %3948 = vmatpush1.msra.mxu0 0.0
        %3949 = vmatprep.subr.mxu0 0.0
        %3950 = vmatpush1.msra.mxu0 0.0
        %3951 = vmatprep.subr.mxu0 0.0
        %3952 = vmatpush1.msra.mxu0 0.0
        %3953 = vmatprep.subr.mxu0 0.0
        %3954 = vmatpush1.msra.mxu0 0.0
        %3955 = vmatprep.subr.mxu0 0.0
        %3956 = vmatpush1.msra.mxu0 0.0
        %3957 = vmatprep.subr.mxu0 0.0
        %3958 = vmatpush1.msra.mxu0 0.0
        %3959 = vmatprep.subr.mxu0 0.0
        %3960 = vmatpush1.msra.mxu0 0.0
        %3961 = vmatprep.subr.mxu0 0.0
        %3962 = vmatpush1.msra.mxu0 0.0
        %3963 = vmatprep.mubr.f32.mxu0 0.0
        %3964 = vmatmul.mubr.f32.gmra.mrb[0].mxu0 %v3772
        %v3965 = vpop.f32.mrb[0].mxu0
        %v3966 = vadd.f32 %v3859, %v3965
        %v3967 = vpop.f32.mrb[0].mxu0
        %v3968 = vadd.f32 %v3861, %v3967
        %3969 = vmatprep.mubr.f32.mxu0 0.0
        %3970 = vmatmul.mubr.f32.gmra.mrb[0].mxu0 %v3775
        %v3971 = vpop.f32.mrb[0].mxu0
        %v3972 = vadd.f32 %v3865, %v3971
        %v3973 = vpop.f32.mrb[0].mxu0
        %v3974 = vadd.f32 %v3867, %v3973
        %3975 = vmatprep.mubr.f32.mxu0 0.0
        %3976 = vmatmul.mubr.f32.gmra.mrb[0].mxu0 %v3778
        %v3977 = vpop.f32.mrb[0].mxu0
        %v3978 = vadd.f32 %v3871, %v3977
        %v3979 = vpop.f32.mrb[0].mxu0
        %v3980 = vadd.f32 %v3873, %v3979
        %3981 = vmatprep.mubr.f32.mxu0 0.0
        %3982 = vmatmul.mubr.f32.gmra.mrb[0].mxu0 %v3781
        %v3983 = vpop.f32.mrb[0].mxu0
        %v3984 = vadd.f32 %v3877, %v3983
        %v3985 = vpop.f32.mrb[0].mxu0
        %v3986 = vadd.f32 %v3879, %v3985
        %3987 = vmatprep.mubr.f32.mxu0 0.0
        %3988 = vmatmul.mubr.f32.gmra.mrb[0].mxu0 %v3784
        %v3989 = vpop.f32.mrb[0].mxu0
        %v3990 = vadd.f32 %v3883, %v3989
        %v3991 = vpop.f32.mrb[0].mxu0
        %v3992 = vadd.f32 %v3885, %v3991
        %3993 = vmatprep.mubr.f32.mxu0 0.0
        %3994 = vmatmul.mubr.f32.gmra.mrb[0].mxu0 %v3787
        %v3995 = vpop.f32.mrb[0].mxu0
        %v3996 = vadd.f32 %v3889, %v3995
        %v3997 = vpop.f32.mrb[0].mxu0
        %v3998 = vadd.f32 %v3891, %v3997
        %3999 = vmatprep.mubr.f32.mxu0 0.0
        %4000 = vmatmul.mubr.f32.gmra.mrb[0].mxu0 %v3790
        %v4001 = vpop.f32.mrb[0].mxu0
        %v4002 = vadd.f32 %v3895, %v4001
        %v4003 = vpop.f32.mrb[0].mxu0
        %v4004 = vadd.f32 %v3897, %v4003
        %4005 = vdwg.mxu0
        %v4007 = vsel %vm3576, %v3604, 0
        %4009 = vmatprep.subr.mxu0 %v3624
        %4010 = vmatpush1.msra.mxu0 %v3623
        %4011 = vmatprep.subr.mxu0 %v3626
        %4012 = vmatpush1.msra.mxu0 %v3625
        %4013 = vmatprep.subr.mxu0 %v3628
        %4014 = vmatpush1.msra.mxu0 %v3627
        %4015 = vmatprep.subr.mxu0 %v3630
        %4016 = vmatpush1.msra.mxu0 %v3629
        %4017 = vmatprep.subr.mxu0 %v3632
        %4018 = vmatpush1.msra.mxu0 %v3631
        %4019 = vmatprep.subr.mxu0 %v3634
        %4020 = vmatpush1.msra.mxu0 %v3633
        %4021 = vmatprep.subr.mxu0 %v3636
        %4022 = vmatpush1.msra.mxu0 %v3635
        %4023 = vmatprep.subr.mxu0 %v3638
        %4024 = vmatpush1.msra.mxu0 %v3637
        %4025 = vmatprep.subr.mxu0 %v3640
        %4026 = vmatpush1.msra.mxu0 %v3639
        %4027 = vmatprep.subr.mxu0 %v3642
        %4028 = vmatpush1.msra.mxu0 %v3641
        %4029 = vmatprep.subr.mxu0 %v3644
        %4030 = vmatpush1.msra.mxu0 %v3643
        %4031 = vmatprep.subr.mxu0 %v3646
        %4032 = vmatpush1.msra.mxu0 %v3645
        %4033 = vmatprep.subr.mxu0 %v3648
        %4034 = vmatpush1.msra.mxu0 %v3647
        %4035 = vmatprep.subr.mxu0 %v3650
        %4036 = vmatpush1.msra.mxu0 %v3649
        %4037 = vmatprep.subr.mxu0 %v3652
        %4038 = vmatpush1.msra.mxu0 %v3651
        %4039 = vmatprep.subr.mxu0 %v3654
        %4040 = vmatpush1.msra.mxu0 %v3653
        %4041 = vmatprep.subr.mxu0 %v3656
        %4042 = vmatpush1.msra.mxu0 %v3655
        %4043 = vmatprep.subr.mxu0 %v3658
        %4044 = vmatpush1.msra.mxu0 %v3657
        %4045 = vmatprep.subr.mxu0 %v3660
        %4046 = vmatpush1.msra.mxu0 %v3659
        %4047 = vmatprep.subr.mxu0 %v3662
        %4048 = vmatpush1.msra.mxu0 %v3661
        %4049 = vmatprep.subr.mxu0 %v3664
        %4050 = vmatpush1.msra.mxu0 %v3663
        %4051 = vmatprep.subr.mxu0 %v3666
        %4052 = vmatpush1.msra.mxu0 %v3665
        %4053 = vmatprep.subr.mxu0 %v3668
        %4054 = vmatpush1.msra.mxu0 %v3667
        %4055 = vmatprep.subr.mxu0 %v3670
        %4056 = vmatpush1.msra.mxu0 %v3669
        %4057 = vmatprep.subr.mxu0 %v3672
        %4058 = vmatpush1.msra.mxu0 %v3671
        %4059 = vmatprep.subr.mxu0 %v3674
        %4060 = vmatpush1.msra.mxu0 %v3673
        %4061 = vmatprep.subr.mxu0 %v3676
        %4062 = vmatpush1.msra.mxu0 %v3675
        %4063 = vmatprep.subr.mxu0 %v3678
        %4064 = vmatpush1.msra.mxu0 %v3677
        %4065 = vmatprep.subr.mxu0 %v3680
        %4066 = vmatpush1.msra.mxu0 %v3679
        %4067 = vmatprep.subr.mxu0 %v3682
        %4068 = vmatpush1.msra.mxu0 %v3681
        %4069 = vmatprep.subr.mxu0 %v3684
        %4070 = vmatpush1.msra.mxu0 %v3683
        %4071 = vmatprep.subr.mxu0 %v3686
        %4072 = vmatpush1.msra.mxu0 %v3685
        %4073 = vmatprep.mubr.f32.mxu0 %v3603
        %4074 = vmatmul.mubr.f32.gmra.mrb[0].mxu0 %v3602
        %v4075 = vpop.f32.mrb[0].mxu0
        %v4076 = vadd.f32 %v3966, %v4075
        %v4077 = vpop.f32.mrb[0].mxu0
        %v4078 = vadd.f32 %v3968, %v4077
        %4079 = vmatprep.mubr.f32.mxu0 %v3606
        %4080 = vmatmul.mubr.f32.gmra.mrb[0].mxu0 %v3605
        %v4081 = vpop.f32.mrb[0].mxu0
        %v4082 = vadd.f32 %v3972, %v4081
        %v4083 = vpop.f32.mrb[0].mxu0
        %v4084 = vadd.f32 %v3974, %v4083
        %4085 = vmatprep.mubr.f32.mxu0 %v3609
        %4086 = vmatmul.mubr.f32.gmra.mrb[0].mxu0 %v3608
        %v4087 = vpop.f32.mrb[0].mxu0
        %v4088 = vadd.f32 %v3978, %v4087
        %v4089 = vpop.f32.mrb[0].mxu0
        %v4090 = vadd.f32 %v3980, %v4089
        %4091 = vmatprep.mubr.f32.mxu0 %v3612
        %4092 = vmatmul.mubr.f32.gmra.mrb[0].mxu0 %v3611
        %v4093 = vpop.f32.mrb[0].mxu0
        %v4094 = vadd.f32 %v3984, %v4093
        %v4095 = vpop.f32.mrb[0].mxu0
        %v4096 = vadd.f32 %v3986, %v4095
        %4097 = vmatprep.mubr.f32.mxu0 %v3615
        %4098 = vmatmul.mubr.f32.gmra.mrb[0].mxu0 %v3614
        %v4099 = vpop.f32.mrb[0].mxu0
        %v4100 = vadd.f32 %v3990, %v4099
        %v4101 = vpop.f32.mrb[0].mxu0
        %v4102 = vadd.f32 %v3992, %v4101
        %4103 = vmatprep.mubr.f32.mxu0 %v3618
        %4104 = vmatmul.mubr.f32.gmra.mrb[0].mxu0 %v3617
        %v4105 = vpop.f32.mrb[0].mxu0
        %v4106 = vadd.f32 %v3996, %v4105
        %v4107 = vpop.f32.mrb[0].mxu0
        %v4108 = vadd.f32 %v3998, %v4107
        %4109 = vmatprep.mubr.f32.mxu0 %v3621
        %4110 = vmatmul.mubr.f32.gmra.mrb[0].mxu0 %v3620
        %v4111 = vpop.f32.mrb[0].mxu0
        %v4112 = vadd.f32 %v4002, %v4111
        %v4113 = vpop.f32.mrb[0].mxu0
        %v4114 = vadd.f32 %v4004, %v4113
        %4115 = vdwg.mxu0
        %4116 = vmatprep.subr.mxu0 %v3688
        %4117 = vmatpush1.msra.mxu0 %v3687
        %4118 = vmatprep.subr.mxu0 %v3690
        %4119 = vmatpush1.msra.mxu0 %v3689
        %4120 = vmatprep.subr.mxu0 %v3692
        %4121 = vmatpush1.msra.mxu0 %v3691
        %4122 = vmatprep.subr.mxu0 %v3694
        %4123 = vmatpush1.msra.mxu0 %v3693
        %4124 = vmatprep.subr.mxu0 0.0
        %4125 = vmatpush1.msra.mxu0 0.0
        %4126 = vmatprep.subr.mxu0 0.0
        %4127 = vmatpush1.msra.mxu0 0.0
        %4128 = vmatprep.subr.mxu0 0.0
        %4129 = vmatpush1.msra.mxu0 0.0
        %4130 = vmatprep.subr.mxu0 0.0
        %4131 = vmatpush1.msra.mxu0 0.0
        %4132 = vmatprep.subr.mxu0 0.0
        %4133 = vmatpush1.msra.mxu0 0.0
        %4134 = vmatprep.subr.mxu0 0.0
        %4135 = vmatpush1.msra.mxu0 0.0
        %4136 = vmatprep.subr.mxu0 0.0
        %4137 = vmatpush1.msra.mxu0 0.0
        %4138 = vmatprep.subr.mxu0 0.0
        %4139 = vmatpush1.msra.mxu0 0.0
        %4140 = vmatprep.subr.mxu0 0.0
        %4141 = vmatpush1.msra.mxu0 0.0
        %4142 = vmatprep.subr.mxu0 0.0
        %4143 = vmatpush1.msra.mxu0 0.0
        %4144 = vmatprep.subr.mxu0 0.0
        %4145 = vmatpush1.msra.mxu0 0.0
        %4146 = vmatprep.subr.mxu0 0.0
        %4147 = vmatpush1.msra.mxu0 0.0
        %4148 = vmatprep.subr.mxu0 0.0
        %4149 = vmatpush1.msra.mxu0 0.0
        %4150 = vmatprep.subr.mxu0 0.0
        %4151 = vmatpush1.msra.mxu0 0.0
        %4152 = vmatprep.subr.mxu0 0.0
        %4153 = vmatpush1.msra.mxu0 0.0
        %4154 = vmatprep.subr.mxu0 0.0
        %4155 = vmatpush1.msra.mxu0 0.0
        %4156 = vmatprep.subr.mxu0 0.0
        %4157 = vmatpush1.msra.mxu0 0.0
        %4158 = vmatprep.subr.mxu0 0.0
        %4159 = vmatpush1.msra.mxu0 0.0
        %4160 = vmatprep.subr.mxu0 0.0
        %4161 = vmatpush1.msra.mxu0 0.0
        %4162 = vmatprep.subr.mxu0 0.0
        %4163 = vmatpush1.msra.mxu0 0.0
        %4164 = vmatprep.subr.mxu0 0.0
        %4165 = vmatpush1.msra.mxu0 0.0
        %4166 = vmatprep.subr.mxu0 0.0
        %4167 = vmatpush1.msra.mxu0 0.0
        %4168 = vmatprep.subr.mxu0 0.0
        %4169 = vmatpush1.msra.mxu0 0.0
        %4170 = vmatprep.subr.mxu0 0.0
        %4171 = vmatpush1.msra.mxu0 0.0
        %4172 = vmatprep.subr.mxu0 0.0
        %4173 = vmatpush1.msra.mxu0 0.0
        %4174 = vmatprep.subr.mxu0 0.0
        %4175 = vmatpush1.msra.mxu0 0.0
        %4176 = vmatprep.subr.mxu0 0.0
        %4177 = vmatpush1.msra.mxu0 0.0
        %4178 = vmatprep.subr.mxu0 0.0
        %4179 = vmatpush1.msra.mxu0 0.0
        %4180 = vmatprep.mubr.f32.mxu0 0.0
        %4181 = vmatmul.mubr.f32.gmra.mrb[0].mxu0 %v4007
        %v4182 = vpop.f32.mrb[0].mxu0
        %v4183 = vadd.f32 %v4076, %v4182
        %v4184 = vpop.f32.mrb[0].mxu0
        %v4185 = vadd.f32 %v4078, %v4184
        %4186 = vmatprep.mubr.f32.mxu0 0.0
        %4187 = vmatmul.mubr.f32.gmra.mrb[0].mxu0 %v3772
        %v4188 = vpop.f32.mrb[0].mxu0
        %v4189 = vadd.f32 %v4082, %v4188
        %v4190 = vpop.f32.mrb[0].mxu0
        %v4191 = vadd.f32 %v4084, %v4190
        %4192 = vmatprep.mubr.f32.mxu0 0.0
        %4193 = vmatmul.mubr.f32.gmra.mrb[0].mxu0 %v3775
        %v4194 = vpop.f32.mrb[0].mxu0
        %v4195 = vadd.f32 %v4088, %v4194
        %v4196 = vpop.f32.mrb[0].mxu0
        %v4197 = vadd.f32 %v4090, %v4196
        %4198 = vmatprep.mubr.f32.mxu0 0.0
        %4199 = vmatmul.mubr.f32.gmra.mrb[0].mxu0 %v3778
        %v4200 = vpop.f32.mrb[0].mxu0
        %v4201 = vadd.f32 %v4094, %v4200
        %v4202 = vpop.f32.mrb[0].mxu0
        %v4203 = vadd.f32 %v4096, %v4202
        %4204 = vmatprep.mubr.f32.mxu0 0.0
        %4205 = vmatmul.mubr.f32.gmra.mrb[0].mxu0 %v3781
        %v4206 = vpop.f32.mrb[0].mxu0
        %v4207 = vadd.f32 %v4100, %v4206
        %v4208 = vpop.f32.mrb[0].mxu0
        %v4209 = vadd.f32 %v4102, %v4208
        %4210 = vmatprep.mubr.f32.mxu0 0.0
        %4211 = vmatmul.mubr.f32.gmra.mrb[0].mxu0 %v3784
        %v4212 = vpop.f32.mrb[0].mxu0
        %v4213 = vadd.f32 %v4106, %v4212
        %v4214 = vpop.f32.mrb[0].mxu0
        %v4215 = vadd.f32 %v4108, %v4214
        %4216 = vmatprep.mubr.f32.mxu0 0.0
        %4217 = vmatmul.mubr.f32.gmra.mrb[0].mxu0 %v3787
        %v4218 = vpop.f32.mrb[0].mxu0
        %v4219 = vadd.f32 %v4112, %v4218
        %v4220 = vpop.f32.mrb[0].mxu0
        %v4221 = vadd.f32 %v4114, %v4220
        %4222 = vdwg.mxu0
        %v4223 = vld [vmem:[#allocation3 + $0x30] sm:$0xff]
        %v4224 = vld [vmem:[#allocation3 + $0x38] sm:$0xff]
        %v4225 = vld [vmem:[#allocation3 + $0x40] sm:$0xff]
        %v4226 = vld [vmem:[#allocation3 + $0x48] sm:$0xff]
        %v4227 = vld [vmem:[#allocation3 + $0x50] sm:$0xff]
        %v4228 = vld [vmem:[#allocation3 + $0x58] sm:$0xff]
        %v4229 = vld [vmem:[#allocation3 + $0x60] sm:$0xff]
        %v4230 = vld [vmem:[#allocation3 + $0x68] sm:$0xff]
        %v4231 = vld [vmem:[#allocation3 + $0x70] sm:$0xff]
        %v4232 = vld [vmem:[#allocation3 + $0x78] sm:$0xff]
        %v4233 = vld [vmem:[#allocation3 + $0x80] sm:$0xff]
        %v4234 = vld [vmem:[#allocation3 + $0x88] sm:$0xff]
        %v4235 = vld [vmem:[#allocation3 + $0x90] sm:$0xff]
        %v4236 = vld [vmem:[#allocation3 + $0x98] sm:$0xff]
        %v4237 = vld [vmem:[#allocation3 + $0xa0] sm:$0xff]
        %v4238 = vld [vmem:[#allocation3 + $0xa8] sm:$0xff]
        %v4239 = vld [vmem:[#allocation3 + $0xb0] sm:$0xff]
        %v4240 = vld [vmem:[#allocation3 + $0xb8] sm:$0xff]
        %v4241 = vld [vmem:[#allocation3 + $0xc0] sm:$0xff]
        %v4242 = vld [vmem:[#allocation3 + $0xc8] sm:$0xff]
        %v4243 = vld [vmem:[#allocation3 + $0xd0] sm:$0xff]
        %s4244 = scalar_lea.vmem %s5, 1152
        %v4245 = vld [vmem:[%s4244] sm:$0xff]
        %v4246 = vld [vmem:[%s4244 + $0x8] sm:$0xff]
        %v4247 = vld [vmem:[%s4244 + $0x10] sm:$0xff]
        %v4248 = vld [vmem:[%s4244 + $0x18] sm:$0xff]
        %v4249 = vld [vmem:[%s4244 + $0x20] sm:$0xff]
        %v4250 = vld [vmem:[%s4244 + $0x28] sm:$0xff]
        %v4251 = vld [vmem:[%s4244 + $0x30] sm:$0xff]
        %v4252 = vld [vmem:[%s4244 + $0x38] sm:$0xff]
        %v4253 = vld [vmem:[%s4244 + $0x40] sm:$0xff]
        %v4254 = vld [vmem:[%s4244 + $0x48] sm:$0xff]
        %v4255 = vld [vmem:[%s4244 + $0x50] sm:$0xff]
        %v4256 = vld [vmem:[%s4244 + $0x58] sm:$0xff]
        %v4257 = vld [vmem:[%s4244 + $0x60] sm:$0xff]
        %v4258 = vld [vmem:[%s4244 + $0x68] sm:$0xff]
        %v4259 = vld [vmem:[%s4244 + $0x70] sm:$0xff]
        %v4260 = vld [vmem:[%s4244 + $0x78] sm:$0xff]
        %v4261 = vld [vmem:[%s4244 + $0x80] sm:$0xff]
        %v4262 = vld [vmem:[%s4244 + $0x88] sm:$0xff]
        %v4263 = vld [vmem:[%s4244 + $0x90] sm:$0xff]
        %v4264 = vld [vmem:[%s4244 + $0x98] sm:$0xff]
        %v4265 = vld [vmem:[%s4244 + $0xa0] sm:$0xff]
        %v4266 = vld [vmem:[%s4244 + $0xa8] sm:$0xff]
        %v4267 = vld [vmem:[%s4244 + $0xb0] sm:$0xff]
        %v4268 = vld [vmem:[%s4244 + $0xb8] sm:$0xff]
        %v4269 = vld [vmem:[%s4244 + $0xc0] sm:$0xff]
        %v4270 = vld [vmem:[%s4244 + $0xc8] sm:$0xff]
        %v4271 = vld [vmem:[%s4244 + $0xd0] sm:$0xff]
        %v4272 = vld [vmem:[%s4244 + $0xd8] sm:$0xff]
        %v4273 = vld [vmem:[%s4244 + $0xe0] sm:$0xff]
        %v4274 = vld [vmem:[%s4244 + $0xe8] sm:$0xff]
        %v4275 = vld [vmem:[%s4244 + $0xf0] sm:$0xff]
        %v4276 = vld [vmem:[%s4244 + $0xf8] sm:$0xff]
        %v4277 = vld [vmem:[%s4244 + $0x100] sm:$0xff]
        %v4278 = vld [vmem:[%s4244 + $0x108] sm:$0xff]
        %v4279 = vld [vmem:[%s4244 + $0x110] sm:$0xff]
        %v4280 = vld [vmem:[%s4244 + $0x118] sm:$0xff]
        %v4281 = vld [vmem:[%s4244 + $0x120] sm:$0xff]
        %v4282 = vld [vmem:[%s4244 + $0x128] sm:$0xff]
        %v4283 = vld [vmem:[%s4244 + $0x130] sm:$0xff]
        %v4284 = vld [vmem:[%s4244 + $0x138] sm:$0xff]
        %v4285 = vld [vmem:[%s4244 + $0x140] sm:$0xff]
        %v4286 = vld [vmem:[%s4244 + $0x148] sm:$0xff]
        %v4287 = vld [vmem:[%s4244 + $0x150] sm:$0xff]
        %v4288 = vld [vmem:[%s4244 + $0x158] sm:$0xff]
        %v4289 = vld [vmem:[%s4244 + $0x160] sm:$0xff]
        %v4290 = vld [vmem:[%s4244 + $0x168] sm:$0xff]
        %v4291 = vld [vmem:[%s4244 + $0x170] sm:$0xff]
        %v4292 = vld [vmem:[%s4244 + $0x178] sm:$0xff]
        %v4293 = vld [vmem:[%s4244 + $0x180] sm:$0xff]
        %v4294 = vld [vmem:[%s4244 + $0x188] sm:$0xff]
        %v4295 = vld [vmem:[%s4244 + $0x190] sm:$0xff]
        %v4296 = vld [vmem:[%s4244 + $0x198] sm:$0xff]
        %v4297 = vld [vmem:[%s4244 + $0x1a0] sm:$0xff]
        %v4298 = vld [vmem:[%s4244 + $0x1a8] sm:$0xff]
        %v4299 = vld [vmem:[%s4244 + $0x1b0] sm:$0xff]
        %v4300 = vld [vmem:[%s4244 + $0x1b8] sm:$0xff]
        %v4301 = vld [vmem:[%s4244 + $0x1c0] sm:$0xff]
        %v4302 = vld [vmem:[%s4244 + $0x1c8] sm:$0xff]
        %v4303 = vld [vmem:[%s4244 + $0x1d0] sm:$0xff]
        %v4304 = vld [vmem:[%s4244 + $0x1d8] sm:$0xff]
        %v4305 = vld [vmem:[%s4244 + $0x1e0] sm:$0xff]
        %v4306 = vld [vmem:[%s4244 + $0x1e8] sm:$0xff]
        %v4307 = vld [vmem:[%s4244 + $0x1f0] sm:$0xff]
        %v4308 = vld [vmem:[%s4244 + $0x1f8] sm:$0xff]
        %v4309 = vld [vmem:[%s4244 + $0x200] sm:$0xff]
        %v4310 = vld [vmem:[%s4244 + $0x208] sm:$0xff]
        %v4311 = vld [vmem:[%s4244 + $0x210] sm:$0xff]
        %v4312 = vld [vmem:[%s4244 + $0x218] sm:$0xff]
        %v4313 = vld [vmem:[%s4244 + $0x220] sm:$0xff]
        %v4314 = vld [vmem:[%s4244 + $0x228] sm:$0xff]
        %v4315 = vld [vmem:[%s4244 + $0x230] sm:$0xff]
        %v4316 = vld [vmem:[%s4244 + $0x238] sm:$0xff]
        %v4318 = vsel %vm3576, %v4225, 0
        %v4321 = vsel %vm3576, %v4228, 0
        %v4324 = vsel %vm3576, %v4231, 0
        %v4327 = vsel %vm3576, %v4234, 0
        %v4330 = vsel %vm3576, %v4237, 0
        %v4333 = vsel %vm3576, %v4240, 0
        %v4336 = vsel %vm3576, %v4243, 0
        %4338 = vmatprep.subr.mxu0 %v4246
        %4339 = vmatpush1.msra.mxu0 %v4245
        %4340 = vmatprep.subr.mxu0 %v4248
        %4341 = vmatpush1.msra.mxu0 %v4247
        %4342 = vmatprep.subr.mxu0 %v4250
        %4343 = vmatpush1.msra.mxu0 %v4249
        %4344 = vmatprep.subr.mxu0 %v4252
        %4345 = vmatpush1.msra.mxu0 %v4251
        %4346 = vmatprep.subr.mxu0 %v4254
        %4347 = vmatpush1.msra.mxu0 %v4253
        %4348 = vmatprep.subr.mxu0 %v4256
        %4349 = vmatpush1.msra.mxu0 %v4255
        %4350 = vmatprep.subr.mxu0 %v4258
        %4351 = vmatpush1.msra.mxu0 %v4257
        %4352 = vmatprep.subr.mxu0 %v4260
        %4353 = vmatpush1.msra.mxu0 %v4259
        %4354 = vmatprep.subr.mxu0 %v4262
        %4355 = vmatpush1.msra.mxu0 %v4261
        %4356 = vmatprep.subr.mxu0 %v4264
        %4357 = vmatpush1.msra.mxu0 %v4263
        %4358 = vmatprep.subr.mxu0 %v4266
        %4359 = vmatpush1.msra.mxu0 %v4265
        %4360 = vmatprep.subr.mxu0 %v4268
        %4361 = vmatpush1.msra.mxu0 %v4267
        %4362 = vmatprep.subr.mxu0 %v4270
        %4363 = vmatpush1.msra.mxu0 %v4269
        %4364 = vmatprep.subr.mxu0 %v4272
        %4365 = vmatpush1.msra.mxu0 %v4271
        %4366 = vmatprep.subr.mxu0 %v4274
        %4367 = vmatpush1.msra.mxu0 %v4273
        %4368 = vmatprep.subr.mxu0 %v4276
        %4369 = vmatpush1.msra.mxu0 %v4275
        %4370 = vmatprep.subr.mxu0 %v4278
        %4371 = vmatpush1.msra.mxu0 %v4277
        %4372 = vmatprep.subr.mxu0 %v4280
        %4373 = vmatpush1.msra.mxu0 %v4279
        %4374 = vmatprep.subr.mxu0 %v4282
        %4375 = vmatpush1.msra.mxu0 %v4281
        %4376 = vmatprep.subr.mxu0 %v4284
        %4377 = vmatpush1.msra.mxu0 %v4283
        %4378 = vmatprep.subr.mxu0 %v4286
        %4379 = vmatpush1.msra.mxu0 %v4285
        %4380 = vmatprep.subr.mxu0 %v4288
        %4381 = vmatpush1.msra.mxu0 %v4287
        %4382 = vmatprep.subr.mxu0 %v4290
        %4383 = vmatpush1.msra.mxu0 %v4289
        %4384 = vmatprep.subr.mxu0 %v4292
        %4385 = vmatpush1.msra.mxu0 %v4291
        %4386 = vmatprep.subr.mxu0 %v4294
        %4387 = vmatpush1.msra.mxu0 %v4293
        %4388 = vmatprep.subr.mxu0 %v4296
        %4389 = vmatpush1.msra.mxu0 %v4295
        %4390 = vmatprep.subr.mxu0 %v4298
        %4391 = vmatpush1.msra.mxu0 %v4297
        %4392 = vmatprep.subr.mxu0 %v4300
        %4393 = vmatpush1.msra.mxu0 %v4299
        %4394 = vmatprep.subr.mxu0 %v4302
        %4395 = vmatpush1.msra.mxu0 %v4301
        %4396 = vmatprep.subr.mxu0 %v4304
        %4397 = vmatpush1.msra.mxu0 %v4303
        %4398 = vmatprep.subr.mxu0 %v4306
        %4399 = vmatpush1.msra.mxu0 %v4305
        %4400 = vmatprep.subr.mxu0 %v4308
        %4401 = vmatpush1.msra.mxu0 %v4307
        %4402 = vmatprep.mubr.f32.mxu0 %v4224
        %4403 = vmatmul.mubr.f32.gmra.mrb[0].mxu0 %v4223
        %v4404 = vpop.f32.mrb[0].mxu0
        %v4405 = vadd.f32 0.0, %v4404
        %v4406 = vpop.f32.mrb[0].mxu0
        %v4407 = vadd.f32 0.0, %v4406
        %4408 = vmatprep.mubr.f32.mxu0 %v4227
        %4409 = vmatmul.mubr.f32.gmra.mrb[0].mxu0 %v4226
        %v4410 = vpop.f32.mrb[0].mxu0
        %v4411 = vadd.f32 0.0, %v4410
        %v4412 = vpop.f32.mrb[0].mxu0
        %v4413 = vadd.f32 0.0, %v4412
        %4414 = vmatprep.mubr.f32.mxu0 %v4230
        %4415 = vmatmul.mubr.f32.gmra.mrb[0].mxu0 %v4229
        %v4416 = vpop.f32.mrb[0].mxu0
        %v4417 = vadd.f32 0.0, %v4416
        %v4418 = vpop.f32.mrb[0].mxu0
        %v4419 = vadd.f32 0.0, %v4418
        %4420 = vmatprep.mubr.f32.mxu0 %v4233
        %4421 = vmatmul.mubr.f32.gmra.mrb[0].mxu0 %v4232
        %v4422 = vpop.f32.mrb[0].mxu0
        %v4423 = vadd.f32 0.0, %v4422
        %v4424 = vpop.f32.mrb[0].mxu0
        %v4425 = vadd.f32 0.0, %v4424
        %4426 = vmatprep.mubr.f32.mxu0 %v4236
        %4427 = vmatmul.mubr.f32.gmra.mrb[0].mxu0 %v4235
        %v4428 = vpop.f32.mrb[0].mxu0
        %v4429 = vadd.f32 0.0, %v4428
        %v4430 = vpop.f32.mrb[0].mxu0
        %v4431 = vadd.f32 0.0, %v4430
        %4432 = vmatprep.mubr.f32.mxu0 %v4239
        %4433 = vmatmul.mubr.f32.gmra.mrb[0].mxu0 %v4238
        %v4434 = vpop.f32.mrb[0].mxu0
        %v4435 = vadd.f32 0.0, %v4434
        %v4436 = vpop.f32.mrb[0].mxu0
        %v4437 = vadd.f32 0.0, %v4436
        %4438 = vmatprep.mubr.f32.mxu0 %v4242
        %4439 = vmatmul.mubr.f32.gmra.mrb[0].mxu0 %v4241
        %v4440 = vpop.f32.mrb[0].mxu0
        %v4441 = vadd.f32 0.0, %v4440
        %v4442 = vpop.f32.mrb[0].mxu0
        %v4443 = vadd.f32 0.0, %v4442
        %4444 = vdwg.mxu0
        %4445 = vmatprep.subr.mxu0 %v4310
        %4446 = vmatpush1.msra.mxu0 %v4309
        %4447 = vmatprep.subr.mxu0 %v4312
        %4448 = vmatpush1.msra.mxu0 %v4311
        %4449 = vmatprep.subr.mxu0 %v4314
        %4450 = vmatpush1.msra.mxu0 %v4313
        %4451 = vmatprep.subr.mxu0 %v4316
        %4452 = vmatpush1.msra.mxu0 %v4315
        %4453 = vmatprep.subr.mxu0 0.0
        %4454 = vmatpush1.msra.mxu0 0.0
        %4455 = vmatprep.subr.mxu0 0.0
        %4456 = vmatpush1.msra.mxu0 0.0
        %4457 = vmatprep.subr.mxu0 0.0
        %4458 = vmatpush1.msra.mxu0 0.0
        %4459 = vmatprep.subr.mxu0 0.0
        %4460 = vmatpush1.msra.mxu0 0.0
        %4461 = vmatprep.subr.mxu0 0.0
        %4462 = vmatpush1.msra.mxu0 0.0
        %4463 = vmatprep.subr.mxu0 0.0
        %4464 = vmatpush1.msra.mxu0 0.0
        %4465 = vmatprep.subr.mxu0 0.0
        %4466 = vmatpush1.msra.mxu0 0.0
        %4467 = vmatprep.subr.mxu0 0.0
        %4468 = vmatpush1.msra.mxu0 0.0
        %4469 = vmatprep.subr.mxu0 0.0
        %4470 = vmatpush1.msra.mxu0 0.0
        %4471 = vmatprep.subr.mxu0 0.0
        %4472 = vmatpush1.msra.mxu0 0.0
        %4473 = vmatprep.subr.mxu0 0.0
        %4474 = vmatpush1.msra.mxu0 0.0
        %4475 = vmatprep.subr.mxu0 0.0
        %4476 = vmatpush1.msra.mxu0 0.0
        %4477 = vmatprep.subr.mxu0 0.0
        %4478 = vmatpush1.msra.mxu0 0.0
        %4479 = vmatprep.subr.mxu0 0.0
        %4480 = vmatpush1.msra.mxu0 0.0
        %4481 = vmatprep.subr.mxu0 0.0
        %4482 = vmatpush1.msra.mxu0 0.0
        %4483 = vmatprep.subr.mxu0 0.0
        %4484 = vmatpush1.msra.mxu0 0.0
        %4485 = vmatprep.subr.mxu0 0.0
        %4486 = vmatpush1.msra.mxu0 0.0
        %4487 = vmatprep.subr.mxu0 0.0
        %4488 = vmatpush1.msra.mxu0 0.0
        %4489 = vmatprep.subr.mxu0 0.0
        %4490 = vmatpush1.msra.mxu0 0.0
        %4491 = vmatprep.subr.mxu0 0.0
        %4492 = vmatpush1.msra.mxu0 0.0
        %4493 = vmatprep.subr.mxu0 0.0
        %4494 = vmatpush1.msra.mxu0 0.0
        %4495 = vmatprep.subr.mxu0 0.0
        %4496 = vmatpush1.msra.mxu0 0.0
        %4497 = vmatprep.subr.mxu0 0.0
        %4498 = vmatpush1.msra.mxu0 0.0
        %4499 = vmatprep.subr.mxu0 0.0
        %4500 = vmatpush1.msra.mxu0 0.0
        %4501 = vmatprep.subr.mxu0 0.0
        %4502 = vmatpush1.msra.mxu0 0.0
        %4503 = vmatprep.subr.mxu0 0.0
        %4504 = vmatpush1.msra.mxu0 0.0
        %4505 = vmatprep.subr.mxu0 0.0
        %4506 = vmatpush1.msra.mxu0 0.0
        %4507 = vmatprep.subr.mxu0 0.0
        %4508 = vmatpush1.msra.mxu0 0.0
        %4509 = vmatprep.mubr.f32.mxu0 0.0
        %4510 = vmatmul.mubr.f32.gmra.mrb[0].mxu0 %v4318
        %v4511 = vpop.f32.mrb[0].mxu0
        %v4512 = vadd.f32 %v4405, %v4511
        %v4513 = vpop.f32.mrb[0].mxu0
        %v4514 = vadd.f32 %v4407, %v4513
        %4515 = vmatprep.mubr.f32.mxu0 0.0
        %4516 = vmatmul.mubr.f32.gmra.mrb[0].mxu0 %v4321
        %v4517 = vpop.f32.mrb[0].mxu0
        %v4518 = vadd.f32 %v4411, %v4517
        %v4519 = vpop.f32.mrb[0].mxu0
        %v4520 = vadd.f32 %v4413, %v4519
        %4521 = vmatprep.mubr.f32.mxu0 0.0
        %4522 = vmatmul.mubr.f32.gmra.mrb[0].mxu0 %v4324
        %v4523 = vpop.f32.mrb[0].mxu0
        %v4524 = vadd.f32 %v4417, %v4523
        %v4525 = vpop.f32.mrb[0].mxu0
        %v4526 = vadd.f32 %v4419, %v4525
        %4527 = vmatprep.mubr.f32.mxu0 0.0
        %4528 = vmatmul.mubr.f32.gmra.mrb[0].mxu0 %v4327
        %v4529 = vpop.f32.mrb[0].mxu0
        %v4530 = vadd.f32 %v4423, %v4529
        %v4531 = vpop.f32.mrb[0].mxu0
        %v4532 = vadd.f32 %v4425, %v4531
        %4533 = vmatprep.mubr.f32.mxu0 0.0
        %4534 = vmatmul.mubr.f32.gmra.mrb[0].mxu0 %v4330
        %v4535 = vpop.f32.mrb[0].mxu0
        %v4536 = vadd.f32 %v4429, %v4535
        %v4537 = vpop.f32.mrb[0].mxu0
        %v4538 = vadd.f32 %v4431, %v4537
        %4539 = vmatprep.mubr.f32.mxu0 0.0
        %4540 = vmatmul.mubr.f32.gmra.mrb[0].mxu0 %v4333
        %v4541 = vpop.f32.mrb[0].mxu0
        %v4542 = vadd.f32 %v4435, %v4541
        %v4543 = vpop.f32.mrb[0].mxu0
        %v4544 = vadd.f32 %v4437, %v4543
        %4545 = vmatprep.mubr.f32.mxu0 0.0
        %4546 = vmatmul.mubr.f32.gmra.mrb[0].mxu0 %v4336
        %v4547 = vpop.f32.mrb[0].mxu0
        %v4548 = vadd.f32 %v4441, %v4547
        %v4549 = vpop.f32.mrb[0].mxu0
        %v4550 = vadd.f32 %v4443, %v4549
        %4551 = vdwg.mxu0
        %v4552 = vadd.f32 %v4183, %v4512
        %v4553 = vadd.f32 %v4185, %v4514
        %v4554 = vadd.f32 %v4189, %v4518
        %v4555 = vadd.f32 %v4191, %v4520
        %v4556 = vadd.f32 %v4195, %v4524
        %v4557 = vadd.f32 %v4197, %v4526
        %v4558 = vadd.f32 %v4201, %v4530
        %v4559 = vadd.f32 %v4203, %v4532
        %v4560 = vadd.f32 %v4207, %v4536
        %v4561 = vadd.f32 %v4209, %v4538
        %v4562 = vadd.f32 %v4213, %v4542
        %v4563 = vadd.f32 %v4215, %v4544
        %v4564 = vadd.f32 %v4219, %v4548
        %v4565 = vadd.f32 %v4221, %v4550
        %v4566 = vld [vmem:[%s6] sm:$0x3]
        %v4568 = vlaneseq
        %v4569 = vshrl.u32 %v4568, 7
        %v4570 = vsub.s32 0, %v4569
        %v4571 = vrot.slane %v4566, %v4570
        %v4572 = vlaneseq
        %v4573 = vshrl.u32 %v4572, 7
        %v4574 = vsub.s32 1, %v4573
        %v4575 = vrot.slane %v4566, %v4574
        %v4578 = vadd.f32 %v4552, %v4571
        %v4579 = vadd.f32 %v4553, %v4575
        %v4580 = vadd.f32 %v4554, %v4571
        %v4581 = vadd.f32 %v4555, %v4575
        %v4582 = vadd.f32 %v4556, %v4571
        %v4583 = vadd.f32 %v4557, %v4575
        %v4584 = vadd.f32 %v4558, %v4571
        %v4585 = vadd.f32 %v4559, %v4575
        %v4586 = vadd.f32 %v4560, %v4571
        %v4587 = vadd.f32 %v4561, %v4575
        %v4588 = vadd.f32 %v4562, %v4571
        %v4589 = vadd.f32 %v4563, %v4575
        %v4590 = vadd.f32 %v4564, %v4571
        %v4591 = vadd.f32 %v4565, %v4575
        %v4592 = vmax.f32 %v4578, 0.0
        %v4593 = vmax.f32 %v4579, 0.0
        %v4594 = vmax.f32 %v4580, 0.0
        %v4595 = vmax.f32 %v4581, 0.0
        %v4596 = vmax.f32 %v4582, 0.0
        %v4597 = vmax.f32 %v4583, 0.0
        %v4598 = vmax.f32 %v4584, 0.0
        %v4599 = vmax.f32 %v4585, 0.0
        %v4600 = vmax.f32 %v4586, 0.0
        %v4601 = vmax.f32 %v4587, 0.0
        %v4602 = vmax.f32 %v4588, 0.0
        %v4603 = vmax.f32 %v4589, 0.0
        %v4604 = vmax.f32 %v4590, 0.0
        %v4605 = vmax.f32 %v4591, 0.0
        %4606 = vst [vmem:[#allocation4] sm:$0xff] %v4592
        %4607 = vst.msk [vmem:[#allocation4 + $0x8] sm:$0xff] %vm540, %v4593
        %4608 = vst [vmem:[#allocation4 + $0x10] sm:$0xff] %v4594
        %4609 = vst.msk [vmem:[#allocation4 + $0x18] sm:$0xff] %vm540, %v4595
        %4610 = vst [vmem:[#allocation4 + $0x20] sm:$0xff] %v4596
        %4611 = vst.msk [vmem:[#allocation4 + $0x28] sm:$0xff] %vm540, %v4597
        %4612 = vst [vmem:[#allocation4 + $0x30] sm:$0xff] %v4598
        %4613 = vst.msk [vmem:[#allocation4 + $0x38] sm:$0xff] %vm540, %v4599
        %4614 = vst [vmem:[#allocation4 + $0x40] sm:$0xff] %v4600
        %4615 = vst.msk [vmem:[#allocation4 + $0x48] sm:$0xff] %vm540, %v4601
        %4616 = vst [vmem:[#allocation4 + $0x50] sm:$0xff] %v4602
        %4617 = vst.msk [vmem:[#allocation4 + $0x58] sm:$0xff] %vm540, %v4603
        %4618 = vst [vmem:[#allocation4 + $0x60] sm:$0xff] %v4604
        %4619 = vst.msk [vmem:[#allocation4 + $0x68] sm:$0xff] %vm540, %v4605
        %v4620 = vld [vmem:[#allocation4] sm:$0xff]
        %v4621 = vld [vmem:[#allocation4 + $0x8] sm:$0xff]
        %v4622 = vld [vmem:[#allocation4 + $0x10] sm:$0xff]
        %v4623 = vld [vmem:[#allocation4 + $0x18] sm:$0xff]
        %v4624 = vld [vmem:[#allocation4 + $0x20] sm:$0xff]
        %v4625 = vld [vmem:[#allocation4 + $0x28] sm:$0xff]
        %v4626 = vld [vmem:[#allocation4 + $0x30] sm:$0xff]
        %v4627 = vld [vmem:[#allocation4 + $0x38] sm:$0xff]
        %v4628 = vld [vmem:[#allocation4 + $0x40] sm:$0xff]
        %v4629 = vld [vmem:[#allocation4 + $0x48] sm:$0xff]
        %v4630 = vld [vmem:[%s7] sm:$0xff]
        %v4631 = vld [vmem:[%s7 + $0x8] sm:$0xff]
        %v4632 = vld [vmem:[%s7 + $0x10] sm:$0xff]
        %v4633 = vld [vmem:[%s7 + $0x18] sm:$0xff]
        %v4634 = vld [vmem:[%s7 + $0x20] sm:$0xff]
        %v4635 = vld [vmem:[%s7 + $0x28] sm:$0xff]
        %v4636 = vld [vmem:[%s7 + $0x30] sm:$0xff]
        %v4637 = vld [vmem:[%s7 + $0x38] sm:$0xff]
        %v4638 = vld [vmem:[%s7 + $0x40] sm:$0xff]
        %v4639 = vld [vmem:[%s7 + $0x48] sm:$0xff]
        %v4640 = vld [vmem:[%s7 + $0x50] sm:$0xff]
        %v4641 = vld [vmem:[%s7 + $0x58] sm:$0xff]
        %v4642 = vld [vmem:[%s7 + $0x60] sm:$0xff]
        %v4643 = vld [vmem:[%s7 + $0x68] sm:$0xff]
        %v4644 = vld [vmem:[%s7 + $0x70] sm:$0xff]
        %v4645 = vld [vmem:[%s7 + $0x78] sm:$0xff]
        %v4646 = vld [vmem:[%s7 + $0x80] sm:$0xff]
        %v4647 = vld [vmem:[%s7 + $0x88] sm:$0xff]
        %v4648 = vld [vmem:[%s7 + $0x90] sm:$0xff]
        %v4649 = vld [vmem:[%s7 + $0x98] sm:$0xff]
        %v4650 = vld [vmem:[%s7 + $0xa0] sm:$0xff]
        %v4651 = vld [vmem:[%s7 + $0xa8] sm:$0xff]
        %v4652 = vld [vmem:[%s7 + $0xb0] sm:$0xff]
        %v4653 = vld [vmem:[%s7 + $0xb8] sm:$0xff]
        %v4654 = vld [vmem:[%s7 + $0xc0] sm:$0xff]
        %v4655 = vld [vmem:[%s7 + $0xc8] sm:$0xff]
        %v4656 = vld [vmem:[%s7 + $0xd0] sm:$0xff]
        %v4657 = vld [vmem:[%s7 + $0xd8] sm:$0xff]
        %v4658 = vld [vmem:[%s7 + $0xe0] sm:$0xff]
        %v4659 = vld [vmem:[%s7 + $0xe8] sm:$0xff]
        %v4660 = vld [vmem:[%s7 + $0xf0] sm:$0xff]
        %v4661 = vld [vmem:[%s7 + $0xf8] sm:$0xff]
        %v4662 = vld [vmem:[%s7 + $0x100] sm:$0xff]
        %v4663 = vld [vmem:[%s7 + $0x108] sm:$0xff]
        %v4664 = vld [vmem:[%s7 + $0x110] sm:$0xff]
        %v4665 = vld [vmem:[%s7 + $0x118] sm:$0xff]
        %v4666 = vld [vmem:[%s7 + $0x120] sm:$0xff]
        %v4667 = vld [vmem:[%s7 + $0x128] sm:$0xff]
        %v4668 = vld [vmem:[%s7 + $0x130] sm:$0xff]
        %v4669 = vld [vmem:[%s7 + $0x138] sm:$0xff]
        %v4670 = vld [vmem:[%s7 + $0x140] sm:$0xff]
        %v4671 = vld [vmem:[%s7 + $0x148] sm:$0xff]
        %v4672 = vld [vmem:[%s7 + $0x150] sm:$0xff]
        %v4673 = vld [vmem:[%s7 + $0x158] sm:$0xff]
        %v4674 = vld [vmem:[%s7 + $0x160] sm:$0xff]
        %v4675 = vld [vmem:[%s7 + $0x168] sm:$0xff]
        %v4676 = vld [vmem:[%s7 + $0x170] sm:$0xff]
        %v4677 = vld [vmem:[%s7 + $0x178] sm:$0xff]
        %v4678 = vld [vmem:[%s7 + $0x180] sm:$0xff]
        %v4679 = vld [vmem:[%s7 + $0x188] sm:$0xff]
        %v4680 = vld [vmem:[%s7 + $0x190] sm:$0xff]
        %v4681 = vld [vmem:[%s7 + $0x198] sm:$0xff]
        %v4682 = vld [vmem:[%s7 + $0x1a0] sm:$0xff]
        %v4683 = vld [vmem:[%s7 + $0x1a8] sm:$0xff]
        %v4684 = vld [vmem:[%s7 + $0x1b0] sm:$0xff]
        %v4685 = vld [vmem:[%s7 + $0x1b8] sm:$0xff]
        %v4686 = vld [vmem:[#allocation4 + $0x50] sm:$0xff]
        %v4687 = vld [vmem:[#allocation4 + $0x58] sm:$0xff]
        %s4688 = scalar_lea.vmem %s7, 448
        %v4689 = vld [vmem:[%s4688] sm:$0xff]
        %v4690 = vld [vmem:[%s4688 + $0x8] sm:$0xff]
        %v4691 = vld [vmem:[%s4688 + $0x10] sm:$0xff]
        %v4692 = vld [vmem:[%s4688 + $0x18] sm:$0xff]
        %v4693 = vld [vmem:[%s4688 + $0x20] sm:$0xff]
        %v4694 = vld [vmem:[%s4688 + $0x28] sm:$0xff]
        %v4695 = vld [vmem:[%s4688 + $0x30] sm:$0xff]
        %v4696 = vld [vmem:[%s4688 + $0x38] sm:$0xff]
        %v4697 = vld [vmem:[%s4688 + $0x40] sm:$0xff]
        %v4698 = vld [vmem:[%s4688 + $0x48] sm:$0xff]
        %v4699 = vld [vmem:[%s4688 + $0x50] sm:$0xff]
        %v4700 = vld [vmem:[%s4688 + $0x58] sm:$0xff]
        %v4701 = vld [vmem:[%s4688 + $0x60] sm:$0xff]
        %v4702 = vld [vmem:[%s4688 + $0x68] sm:$0xff]
        %v4703 = vld [vmem:[%s4688 + $0x70] sm:$0xff]
        %v4704 = vld [vmem:[%s4688 + $0x78] sm:$0xff]
        %v4705 = vld [vmem:[%s4688 + $0x80] sm:$0xff]
        %v4706 = vld [vmem:[%s4688 + $0x88] sm:$0xff]
        %v4707 = vld [vmem:[%s4688 + $0x90] sm:$0xff]
        %v4708 = vld [vmem:[%s4688 + $0x98] sm:$0xff]
        %v4709 = vld [vmem:[%s4688 + $0xa0] sm:$0xff]
        %v4710 = vld [vmem:[%s4688 + $0xa8] sm:$0xff]
        %v4711 = vld [vmem:[%s4688 + $0xb0] sm:$0xff]
        %v4712 = vld [vmem:[%s4688 + $0xb8] sm:$0xff]
        %v4713 = vld [vmem:[%s4688 + $0xc0] sm:$0xff]
        %v4714 = vld [vmem:[%s4688 + $0xc8] sm:$0xff]
        %v4715 = vld [vmem:[%s4688 + $0xd0] sm:$0xff]
        %v4716 = vld [vmem:[%s4688 + $0xd8] sm:$0xff]
        %v4717 = vld [vmem:[%s4688 + $0xe0] sm:$0xff]
        %v4718 = vld [vmem:[%s4688 + $0xe8] sm:$0xff]
        %v4719 = vld [vmem:[%s4688 + $0xf0] sm:$0xff]
        %v4720 = vld [vmem:[%s4688 + $0xf8] sm:$0xff]
        %v4721 = vld [vmem:[%s4688 + $0x100] sm:$0xff]
        %v4722 = vld [vmem:[%s4688 + $0x108] sm:$0xff]
        %v4723 = vld [vmem:[%s4688 + $0x110] sm:$0xff]
        %v4724 = vld [vmem:[%s4688 + $0x118] sm:$0xff]
        %v4725 = vld [vmem:[%s4688 + $0x120] sm:$0xff]
        %v4726 = vld [vmem:[%s4688 + $0x128] sm:$0xff]
        %v4727 = vld [vmem:[%s4688 + $0x130] sm:$0xff]
        %v4728 = vld [vmem:[%s4688 + $0x138] sm:$0xff]
        %v4729 = vld [vmem:[%s4688 + $0x140] sm:$0xff]
        %v4730 = vld [vmem:[%s4688 + $0x148] sm:$0xff]
        %v4731 = vld [vmem:[%s4688 + $0x150] sm:$0xff]
        %v4732 = vld [vmem:[%s4688 + $0x158] sm:$0xff]
        %v4733 = vld [vmem:[%s4688 + $0x160] sm:$0xff]
        %v4734 = vld [vmem:[%s4688 + $0x168] sm:$0xff]
        %v4735 = vld [vmem:[%s4688 + $0x170] sm:$0xff]
        %v4736 = vld [vmem:[%s4688 + $0x178] sm:$0xff]
        %v4737 = vld [vmem:[%s4688 + $0x180] sm:$0xff]
        %v4738 = vld [vmem:[%s4688 + $0x188] sm:$0xff]
        %v4739 = vld [vmem:[%s4688 + $0x190] sm:$0xff]
        %v4740 = vld [vmem:[%s4688 + $0x198] sm:$0xff]
        %v4741 = vld [vmem:[%s4688 + $0x1a0] sm:$0xff]
        %v4742 = vld [vmem:[%s4688 + $0x1a8] sm:$0xff]
        %v4743 = vld [vmem:[%s4688 + $0x1b0] sm:$0xff]
        %v4744 = vld [vmem:[%s4688 + $0x1b8] sm:$0xff]
        %v4746 = vsel %vm540, %v4623, 0
        %v4749 = vsel %vm540, %v4625, 0
        %v4752 = vsel %vm540, %v4627, 0
        %v4755 = vsel %vm540, %v4629, 0
        %v4758 = vsel %vm540, %v4687, 0
        %4760 = vmatprep.subr.mxu0 %v4690
        %4761 = vmatpush1.msra.mxu0 %v4689
        %4762 = vmatprep.subr.mxu0 %v4692
        %4763 = vmatpush1.msra.mxu0 %v4691
        %4764 = vmatprep.subr.mxu0 %v4694
        %4765 = vmatpush1.msra.mxu0 %v4693
        %4766 = vmatprep.subr.mxu0 %v4696
        %4767 = vmatpush1.msra.mxu0 %v4695
        %4768 = vmatprep.subr.mxu0 %v4698
        %4769 = vmatpush1.msra.mxu0 %v4697
        %4770 = vmatprep.subr.mxu0 %v4700
        %4771 = vmatpush1.msra.mxu0 %v4699
        %4772 = vmatprep.subr.mxu0 %v4702
        %4773 = vmatpush1.msra.mxu0 %v4701
        %4774 = vmatprep.subr.mxu0 %v4704
        %4775 = vmatpush1.msra.mxu0 %v4703
        %4776 = vmatprep.subr.mxu0 %v4706
        %4777 = vmatpush1.msra.mxu0 %v4705
        %4778 = vmatprep.subr.mxu0 %v4708
        %4779 = vmatpush1.msra.mxu0 %v4707
        %4780 = vmatprep.subr.mxu0 %v4710
        %4781 = vmatpush1.msra.mxu0 %v4709
        %4782 = vmatprep.subr.mxu0 %v4712
        %4783 = vmatpush1.msra.mxu0 %v4711
        %4784 = vmatprep.subr.mxu0 %v4714
        %4785 = vmatpush1.msra.mxu0 %v4713
        %4786 = vmatprep.subr.mxu0 %v4716
        %4787 = vmatpush1.msra.mxu0 %v4715
        %4788 = vmatprep.subr.mxu0 %v4718
        %4789 = vmatpush1.msra.mxu0 %v4717
        %4790 = vmatprep.subr.mxu0 %v4720
        %4791 = vmatpush1.msra.mxu0 %v4719
        %4792 = vmatprep.subr.mxu0 %v4722
        %4793 = vmatpush1.msra.mxu0 %v4721
        %4794 = vmatprep.subr.mxu0 %v4724
        %4795 = vmatpush1.msra.mxu0 %v4723
        %4796 = vmatprep.subr.mxu0 %v4726
        %4797 = vmatpush1.msra.mxu0 %v4725
        %4798 = vmatprep.subr.mxu0 %v4728
        %4799 = vmatpush1.msra.mxu0 %v4727
        %4800 = vmatprep.subr.mxu0 %v4730
        %4801 = vmatpush1.msra.mxu0 %v4729
        %4802 = vmatprep.subr.mxu0 %v4732
        %4803 = vmatpush1.msra.mxu0 %v4731
        %4804 = vmatprep.subr.mxu0 %v4734
        %4805 = vmatpush1.msra.mxu0 %v4733
        %4806 = vmatprep.subr.mxu0 %v4736
        %4807 = vmatpush1.msra.mxu0 %v4735
        %4808 = vmatprep.subr.mxu0 %v4738
        %4809 = vmatpush1.msra.mxu0 %v4737
        %4810 = vmatprep.subr.mxu0 %v4740
        %4811 = vmatpush1.msra.mxu0 %v4739
        %4812 = vmatprep.subr.mxu0 %v4742
        %4813 = vmatpush1.msra.mxu0 %v4741
        %4814 = vmatprep.subr.mxu0 %v4744
        %4815 = vmatpush1.msra.mxu0 %v4743
        %4816 = vmatprep.subr.mxu0 0.0
        %4817 = vmatpush1.msra.mxu0 0.0
        %4818 = vmatprep.subr.mxu0 0.0
        %4819 = vmatpush1.msra.mxu0 0.0
        %4820 = vmatprep.subr.mxu0 0.0
        %4821 = vmatpush1.msra.mxu0 0.0
        %4822 = vmatprep.subr.mxu0 0.0
        %4823 = vmatpush1.msra.mxu0 0.0
        %4824 = vmatprep.mubr.f32.mxu0 %v4746
        %4825 = vmatmul.mubr.f32.gmra.mrb[0].mxu0 %v4622
        %v4826 = vpop.f32.mrb[0].mxu0
        %v4827 = vadd.f32 0.0, %v4826
        %v4828 = vpop.f32.mrb[0].mxu0
        %v4829 = vadd.f32 0.0, %v4828
        %4830 = vmatprep.mubr.f32.mxu0 %v4749
        %4831 = vmatmul.mubr.f32.gmra.mrb[0].mxu0 %v4624
        %v4832 = vpop.f32.mrb[0].mxu0
        %v4833 = vadd.f32 0.0, %v4832
        %v4834 = vpop.f32.mrb[0].mxu0
        %v4835 = vadd.f32 0.0, %v4834
        %4836 = vmatprep.mubr.f32.mxu0 %v4752
        %4837 = vmatmul.mubr.f32.gmra.mrb[0].mxu0 %v4626
        %v4838 = vpop.f32.mrb[0].mxu0
        %v4839 = vadd.f32 0.0, %v4838
        %v4840 = vpop.f32.mrb[0].mxu0
        %v4841 = vadd.f32 0.0, %v4840
        %4842 = vmatprep.mubr.f32.mxu0 %v4755
        %4843 = vmatmul.mubr.f32.gmra.mrb[0].mxu0 %v4628
        %v4844 = vpop.f32.mrb[0].mxu0
        %v4845 = vadd.f32 0.0, %v4844
        %v4846 = vpop.f32.mrb[0].mxu0
        %v4847 = vadd.f32 0.0, %v4846
        %4848 = vmatprep.mubr.f32.mxu0 %v4758
        %4849 = vmatmul.mubr.f32.gmra.mrb[0].mxu0 %v4686
        %v4850 = vpop.f32.mrb[0].mxu0
        %v4851 = vadd.f32 0.0, %v4850
        %v4852 = vpop.f32.mrb[0].mxu0
        %v4853 = vadd.f32 0.0, %v4852
        %4854 = vdwg.mxu0
        %v4856 = vsel %vm540, %v4621, 0
        %4858 = vmatprep.subr.mxu0 %v4631
        %4859 = vmatpush1.msra.mxu0 %v4630
        %4860 = vmatprep.subr.mxu0 %v4633
        %4861 = vmatpush1.msra.mxu0 %v4632
        %4862 = vmatprep.subr.mxu0 %v4635
        %4863 = vmatpush1.msra.mxu0 %v4634
        %4864 = vmatprep.subr.mxu0 %v4637
        %4865 = vmatpush1.msra.mxu0 %v4636
        %4866 = vmatprep.subr.mxu0 %v4639
        %4867 = vmatpush1.msra.mxu0 %v4638
        %4868 = vmatprep.subr.mxu0 %v4641
        %4869 = vmatpush1.msra.mxu0 %v4640
        %4870 = vmatprep.subr.mxu0 %v4643
        %4871 = vmatpush1.msra.mxu0 %v4642
        %4872 = vmatprep.subr.mxu0 %v4645
        %4873 = vmatpush1.msra.mxu0 %v4644
        %4874 = vmatprep.subr.mxu0 %v4647
        %4875 = vmatpush1.msra.mxu0 %v4646
        %4876 = vmatprep.subr.mxu0 %v4649
        %4877 = vmatpush1.msra.mxu0 %v4648
        %4878 = vmatprep.subr.mxu0 %v4651
        %4879 = vmatpush1.msra.mxu0 %v4650
        %4880 = vmatprep.subr.mxu0 %v4653
        %4881 = vmatpush1.msra.mxu0 %v4652
        %4882 = vmatprep.subr.mxu0 %v4655
        %4883 = vmatpush1.msra.mxu0 %v4654
        %4884 = vmatprep.subr.mxu0 %v4657
        %4885 = vmatpush1.msra.mxu0 %v4656
        %4886 = vmatprep.subr.mxu0 %v4659
        %4887 = vmatpush1.msra.mxu0 %v4658
        %4888 = vmatprep.subr.mxu0 %v4661
        %4889 = vmatpush1.msra.mxu0 %v4660
        %4890 = vmatprep.subr.mxu0 %v4663
        %4891 = vmatpush1.msra.mxu0 %v4662
        %4892 = vmatprep.subr.mxu0 %v4665
        %4893 = vmatpush1.msra.mxu0 %v4664
        %4894 = vmatprep.subr.mxu0 %v4667
        %4895 = vmatpush1.msra.mxu0 %v4666
        %4896 = vmatprep.subr.mxu0 %v4669
        %4897 = vmatpush1.msra.mxu0 %v4668
        %4898 = vmatprep.subr.mxu0 %v4671
        %4899 = vmatpush1.msra.mxu0 %v4670
        %4900 = vmatprep.subr.mxu0 %v4673
        %4901 = vmatpush1.msra.mxu0 %v4672
        %4902 = vmatprep.subr.mxu0 %v4675
        %4903 = vmatpush1.msra.mxu0 %v4674
        %4904 = vmatprep.subr.mxu0 %v4677
        %4905 = vmatpush1.msra.mxu0 %v4676
        %4906 = vmatprep.subr.mxu0 %v4679
        %4907 = vmatpush1.msra.mxu0 %v4678
        %4908 = vmatprep.subr.mxu0 %v4681
        %4909 = vmatpush1.msra.mxu0 %v4680
        %4910 = vmatprep.subr.mxu0 %v4683
        %4911 = vmatpush1.msra.mxu0 %v4682
        %4912 = vmatprep.subr.mxu0 %v4685
        %4913 = vmatpush1.msra.mxu0 %v4684
        %4914 = vmatprep.subr.mxu0 0.0
        %4915 = vmatpush1.msra.mxu0 0.0
        %4916 = vmatprep.subr.mxu0 0.0
        %4917 = vmatpush1.msra.mxu0 0.0
        %4918 = vmatprep.subr.mxu0 0.0
        %4919 = vmatpush1.msra.mxu0 0.0
        %4920 = vmatprep.subr.mxu0 0.0
        %4921 = vmatpush1.msra.mxu0 0.0
        %4922 = vmatprep.mubr.f32.mxu0 %v4856
        %4923 = vmatmul.mubr.f32.gmra.mrb[0].mxu0 %v4620
        %v4924 = vpop.f32.mrb[0].mxu0
        %v4925 = vadd.f32 %v4827, %v4924
        %v4926 = vpop.f32.mrb[0].mxu0
        %v4927 = vadd.f32 %v4829, %v4926
        %4928 = vmatprep.mubr.f32.mxu0 %v4746
        %4929 = vmatmul.mubr.f32.gmra.mrb[0].mxu0 %v4622
        %v4930 = vpop.f32.mrb[0].mxu0
        %v4931 = vadd.f32 %v4833, %v4930
        %v4932 = vpop.f32.mrb[0].mxu0
        %v4933 = vadd.f32 %v4835, %v4932
        %4934 = vmatprep.mubr.f32.mxu0 %v4749
        %4935 = vmatmul.mubr.f32.gmra.mrb[0].mxu0 %v4624
        %v4936 = vpop.f32.mrb[0].mxu0
        %v4937 = vadd.f32 %v4839, %v4936
        %v4938 = vpop.f32.mrb[0].mxu0
        %v4939 = vadd.f32 %v4841, %v4938
        %4940 = vmatprep.mubr.f32.mxu0 %v4752
        %4941 = vmatmul.mubr.f32.gmra.mrb[0].mxu0 %v4626
        %v4942 = vpop.f32.mrb[0].mxu0
        %v4943 = vadd.f32 %v4845, %v4942
        %v4944 = vpop.f32.mrb[0].mxu0
        %v4945 = vadd.f32 %v4847, %v4944
        %4946 = vmatprep.mubr.f32.mxu0 %v4755
        %4947 = vmatmul.mubr.f32.gmra.mrb[0].mxu0 %v4628
        %v4948 = vpop.f32.mrb[0].mxu0
        %v4949 = vadd.f32 %v4851, %v4948
        %v4950 = vpop.f32.mrb[0].mxu0
        %v4951 = vadd.f32 %v4853, %v4950
        %4952 = vdwg.mxu0
        %v4953 = vld [vmem:[#allocation4 + $0x20] sm:$0xff]
        %v4954 = vld [vmem:[#allocation4 + $0x28] sm:$0xff]
        %v4955 = vld [vmem:[#allocation4 + $0x30] sm:$0xff]
        %v4956 = vld [vmem:[#allocation4 + $0x38] sm:$0xff]
        %v4957 = vld [vmem:[#allocation4 + $0x40] sm:$0xff]
        %v4958 = vld [vmem:[#allocation4 + $0x48] sm:$0xff]
        %v4959 = vld [vmem:[#allocation4 + $0x50] sm:$0xff]
        %v4960 = vld [vmem:[#allocation4 + $0x58] sm:$0xff]
        %v4961 = vld [vmem:[#allocation4 + $0x60] sm:$0xff]
        %v4962 = vld [vmem:[#allocation4 + $0x68] sm:$0xff]
        %s4963 = scalar_lea.vmem %s7, 896
        %v4964 = vld [vmem:[%s4963] sm:$0xff]
        %v4965 = vld [vmem:[%s4963 + $0x8] sm:$0xff]
        %v4966 = vld [vmem:[%s4963 + $0x10] sm:$0xff]
        %v4967 = vld [vmem:[%s4963 + $0x18] sm:$0xff]
        %v4968 = vld [vmem:[%s4963 + $0x20] sm:$0xff]
        %v4969 = vld [vmem:[%s4963 + $0x28] sm:$0xff]
        %v4970 = vld [vmem:[%s4963 + $0x30] sm:$0xff]
        %v4971 = vld [vmem:[%s4963 + $0x38] sm:$0xff]
        %v4972 = vld [vmem:[%s4963 + $0x40] sm:$0xff]
        %v4973 = vld [vmem:[%s4963 + $0x48] sm:$0xff]
        %v4974 = vld [vmem:[%s4963 + $0x50] sm:$0xff]
        %v4975 = vld [vmem:[%s4963 + $0x58] sm:$0xff]
        %v4976 = vld [vmem:[%s4963 + $0x60] sm:$0xff]
        %v4977 = vld [vmem:[%s4963 + $0x68] sm:$0xff]
        %v4978 = vld [vmem:[%s4963 + $0x70] sm:$0xff]
        %v4979 = vld [vmem:[%s4963 + $0x78] sm:$0xff]
        %v4980 = vld [vmem:[%s4963 + $0x80] sm:$0xff]
        %v4981 = vld [vmem:[%s4963 + $0x88] sm:$0xff]
        %v4982 = vld [vmem:[%s4963 + $0x90] sm:$0xff]
        %v4983 = vld [vmem:[%s4963 + $0x98] sm:$0xff]
        %v4984 = vld [vmem:[%s4963 + $0xa0] sm:$0xff]
        %v4985 = vld [vmem:[%s4963 + $0xa8] sm:$0xff]
        %v4986 = vld [vmem:[%s4963 + $0xb0] sm:$0xff]
        %v4987 = vld [vmem:[%s4963 + $0xb8] sm:$0xff]
        %v4988 = vld [vmem:[%s4963 + $0xc0] sm:$0xff]
        %v4989 = vld [vmem:[%s4963 + $0xc8] sm:$0xff]
        %v4990 = vld [vmem:[%s4963 + $0xd0] sm:$0xff]
        %v4991 = vld [vmem:[%s4963 + $0xd8] sm:$0xff]
        %v4992 = vld [vmem:[%s4963 + $0xe0] sm:$0xff]
        %v4993 = vld [vmem:[%s4963 + $0xe8] sm:$0xff]
        %v4994 = vld [vmem:[%s4963 + $0xf0] sm:$0xff]
        %v4995 = vld [vmem:[%s4963 + $0xf8] sm:$0xff]
        %v4996 = vld [vmem:[%s4963 + $0x100] sm:$0xff]
        %v4997 = vld [vmem:[%s4963 + $0x108] sm:$0xff]
        %v4998 = vld [vmem:[%s4963 + $0x110] sm:$0xff]
        %v4999 = vld [vmem:[%s4963 + $0x118] sm:$0xff]
        %v5000 = vld [vmem:[%s4963 + $0x120] sm:$0xff]
        %v5001 = vld [vmem:[%s4963 + $0x128] sm:$0xff]
        %v5002 = vld [vmem:[%s4963 + $0x130] sm:$0xff]
        %v5003 = vld [vmem:[%s4963 + $0x138] sm:$0xff]
        %v5004 = vld [vmem:[%s4963 + $0x140] sm:$0xff]
        %v5005 = vld [vmem:[%s4963 + $0x148] sm:$0xff]
        %v5006 = vld [vmem:[%s4963 + $0x150] sm:$0xff]
        %v5007 = vld [vmem:[%s4963 + $0x158] sm:$0xff]
        %v5008 = vld [vmem:[%s4963 + $0x160] sm:$0xff]
        %v5009 = vld [vmem:[%s4963 + $0x168] sm:$0xff]
        %v5010 = vld [vmem:[%s4963 + $0x170] sm:$0xff]
        %v5011 = vld [vmem:[%s4963 + $0x178] sm:$0xff]
        %v5012 = vld [vmem:[%s4963 + $0x180] sm:$0xff]
        %v5013 = vld [vmem:[%s4963 + $0x188] sm:$0xff]
        %v5014 = vld [vmem:[%s4963 + $0x190] sm:$0xff]
        %v5015 = vld [vmem:[%s4963 + $0x198] sm:$0xff]
        %v5016 = vld [vmem:[%s4963 + $0x1a0] sm:$0xff]
        %v5017 = vld [vmem:[%s4963 + $0x1a8] sm:$0xff]
        %v5018 = vld [vmem:[%s4963 + $0x1b0] sm:$0xff]
        %v5019 = vld [vmem:[%s4963 + $0x1b8] sm:$0xff]
        %v5021 = vsel %vm540, %v4954, 0
        %v5024 = vsel %vm540, %v4956, 0
        %v5027 = vsel %vm540, %v4958, 0
        %v5030 = vsel %vm540, %v4960, 0
        %v5033 = vsel %vm540, %v4962, 0
        %5035 = vmatprep.subr.mxu0 %v4965
        %5036 = vmatpush1.msra.mxu0 %v4964
        %5037 = vmatprep.subr.mxu0 %v4967
        %5038 = vmatpush1.msra.mxu0 %v4966
        %5039 = vmatprep.subr.mxu0 %v4969
        %5040 = vmatpush1.msra.mxu0 %v4968
        %5041 = vmatprep.subr.mxu0 %v4971
        %5042 = vmatpush1.msra.mxu0 %v4970
        %5043 = vmatprep.subr.mxu0 %v4973
        %5044 = vmatpush1.msra.mxu0 %v4972
        %5045 = vmatprep.subr.mxu0 %v4975
        %5046 = vmatpush1.msra.mxu0 %v4974
        %5047 = vmatprep.subr.mxu0 %v4977
        %5048 = vmatpush1.msra.mxu0 %v4976
        %5049 = vmatprep.subr.mxu0 %v4979
        %5050 = vmatpush1.msra.mxu0 %v4978
        %5051 = vmatprep.subr.mxu0 %v4981
        %5052 = vmatpush1.msra.mxu0 %v4980
        %5053 = vmatprep.subr.mxu0 %v4983
        %5054 = vmatpush1.msra.mxu0 %v4982
        %5055 = vmatprep.subr.mxu0 %v4985
        %5056 = vmatpush1.msra.mxu0 %v4984
        %5057 = vmatprep.subr.mxu0 %v4987
        %5058 = vmatpush1.msra.mxu0 %v4986
        %5059 = vmatprep.subr.mxu0 %v4989
        %5060 = vmatpush1.msra.mxu0 %v4988
        %5061 = vmatprep.subr.mxu0 %v4991
        %5062 = vmatpush1.msra.mxu0 %v4990
        %5063 = vmatprep.subr.mxu0 %v4993
        %5064 = vmatpush1.msra.mxu0 %v4992
        %5065 = vmatprep.subr.mxu0 %v4995
        %5066 = vmatpush1.msra.mxu0 %v4994
        %5067 = vmatprep.subr.mxu0 %v4997
        %5068 = vmatpush1.msra.mxu0 %v4996
        %5069 = vmatprep.subr.mxu0 %v4999
        %5070 = vmatpush1.msra.mxu0 %v4998
        %5071 = vmatprep.subr.mxu0 %v5001
        %5072 = vmatpush1.msra.mxu0 %v5000
        %5073 = vmatprep.subr.mxu0 %v5003
        %5074 = vmatpush1.msra.mxu0 %v5002
        %5075 = vmatprep.subr.mxu0 %v5005
        %5076 = vmatpush1.msra.mxu0 %v5004
        %5077 = vmatprep.subr.mxu0 %v5007
        %5078 = vmatpush1.msra.mxu0 %v5006
        %5079 = vmatprep.subr.mxu0 %v5009
        %5080 = vmatpush1.msra.mxu0 %v5008
        %5081 = vmatprep.subr.mxu0 %v5011
        %5082 = vmatpush1.msra.mxu0 %v5010
        %5083 = vmatprep.subr.mxu0 %v5013
        %5084 = vmatpush1.msra.mxu0 %v5012
        %5085 = vmatprep.subr.mxu0 %v5015
        %5086 = vmatpush1.msra.mxu0 %v5014
        %5087 = vmatprep.subr.mxu0 %v5017
        %5088 = vmatpush1.msra.mxu0 %v5016
        %5089 = vmatprep.subr.mxu0 %v5019
        %5090 = vmatpush1.msra.mxu0 %v5018
        %5091 = vmatprep.subr.mxu0 0.0
        %5092 = vmatpush1.msra.mxu0 0.0
        %5093 = vmatprep.subr.mxu0 0.0
        %5094 = vmatpush1.msra.mxu0 0.0
        %5095 = vmatprep.subr.mxu0 0.0
        %5096 = vmatpush1.msra.mxu0 0.0
        %5097 = vmatprep.subr.mxu0 0.0
        %5098 = vmatpush1.msra.mxu0 0.0
        %5099 = vmatprep.mubr.f32.mxu0 %v5021
        %5100 = vmatmul.mubr.f32.gmra.mrb[0].mxu0 %v4953
        %v5101 = vpop.f32.mrb[0].mxu0
        %v5102 = vadd.f32 0.0, %v5101
        %v5103 = vpop.f32.mrb[0].mxu0
        %v5104 = vadd.f32 0.0, %v5103
        %5105 = vmatprep.mubr.f32.mxu0 %v5024
        %5106 = vmatmul.mubr.f32.gmra.mrb[0].mxu0 %v4955
        %v5107 = vpop.f32.mrb[0].mxu0
        %v5108 = vadd.f32 0.0, %v5107
        %v5109 = vpop.f32.mrb[0].mxu0
        %v5110 = vadd.f32 0.0, %v5109
        %5111 = vmatprep.mubr.f32.mxu0 %v5027
        %5112 = vmatmul.mubr.f32.gmra.mrb[0].mxu0 %v4957
        %v5113 = vpop.f32.mrb[0].mxu0
        %v5114 = vadd.f32 0.0, %v5113
        %v5115 = vpop.f32.mrb[0].mxu0
        %v5116 = vadd.f32 0.0, %v5115
        %5117 = vmatprep.mubr.f32.mxu0 %v5030
        %5118 = vmatmul.mubr.f32.gmra.mrb[0].mxu0 %v4959
        %v5119 = vpop.f32.mrb[0].mxu0
        %v5120 = vadd.f32 0.0, %v5119
        %v5121 = vpop.f32.mrb[0].mxu0
        %v5122 = vadd.f32 0.0, %v5121
        %5123 = vmatprep.mubr.f32.mxu0 %v5033
        %5124 = vmatmul.mubr.f32.gmra.mrb[0].mxu0 %v4961
        %v5125 = vpop.f32.mrb[0].mxu0
        %v5126 = vadd.f32 0.0, %v5125
        %v5127 = vpop.f32.mrb[0].mxu0
        %v5128 = vadd.f32 0.0, %v5127
        %5129 = vdwg.mxu0
        %v5130 = vadd.f32 %v4925, %v5102
        %v5131 = vadd.f32 %v4927, %v5104
        %v5132 = vadd.f32 %v4931, %v5108
        %v5133 = vadd.f32 %v4933, %v5110
        %v5134 = vadd.f32 %v4937, %v5114
        %v5135 = vadd.f32 %v4939, %v5116
        %v5136 = vadd.f32 %v4943, %v5120
        %v5137 = vadd.f32 %v4945, %v5122
        %v5138 = vadd.f32 %v4949, %v5126
        %v5139 = vadd.f32 %v4951, %v5128
        %v5140 = vld [vmem:[%s8] sm:$0x3]
        %v5142 = vlaneseq
        %v5143 = vshrl.u32 %v5142, 7
        %v5144 = vsub.s32 0, %v5143
        %v5145 = vrot.slane %v5140, %v5144
        %v5146 = vlaneseq
        %v5147 = vshrl.u32 %v5146, 7
        %v5148 = vsub.s32 1, %v5147
        %v5149 = vrot.slane %v5140, %v5148
        %v5152 = vadd.f32 %v5130, %v5145
        %v5153 = vadd.f32 %v5131, %v5149
        %v5154 = vadd.f32 %v5132, %v5145
        %v5155 = vadd.f32 %v5133, %v5149
        %v5156 = vadd.f32 %v5134, %v5145
        %v5157 = vadd.f32 %v5135, %v5149
        %v5158 = vadd.f32 %v5136, %v5145
        %v5159 = vadd.f32 %v5137, %v5149
        %v5160 = vadd.f32 %v5138, %v5145
        %v5161 = vadd.f32 %v5139, %v5149
        %v5162 = vmax.f32 %v5152, 0.0
        %v5163 = vmax.f32 %v5153, 0.0
        %v5164 = vmax.f32 %v5154, 0.0
        %v5165 = vmax.f32 %v5155, 0.0
        %v5166 = vmax.f32 %v5156, 0.0
        %v5167 = vmax.f32 %v5157, 0.0
        %v5168 = vmax.f32 %v5158, 0.0
        %v5169 = vmax.f32 %v5159, 0.0
        %v5170 = vmax.f32 %v5160, 0.0
        %v5171 = vmax.f32 %v5161, 0.0
        %5172 = vst [vmem:[#allocation5] sm:$0xff] %v5162
        %5173 = vst.msk [vmem:[#allocation5 + $0x8] sm:$0xff] %vm3576, %v5163
        %5174 = vst [vmem:[#allocation5 + $0x10] sm:$0xff] %v5164
        %5175 = vst.msk [vmem:[#allocation5 + $0x18] sm:$0xff] %vm3576, %v5165
        %5176 = vst [vmem:[#allocation5 + $0x20] sm:$0xff] %v5166
        %5177 = vst.msk [vmem:[#allocation5 + $0x28] sm:$0xff] %vm3576, %v5167
        %5178 = vst [vmem:[#allocation5 + $0x30] sm:$0xff] %v5168
        %5179 = vst.msk [vmem:[#allocation5 + $0x38] sm:$0xff] %vm3576, %v5169
        %5180 = vst [vmem:[#allocation5 + $0x40] sm:$0xff] %v5170
        %5181 = vst.msk [vmem:[#allocation5 + $0x48] sm:$0xff] %vm3576, %v5171
        %v5182 = vld [vmem:[%s10] sm:$0x1]
        %v5183 = vld [vmem:[#allocation5] sm:$0xff]
        %v5184 = vld [vmem:[#allocation5 + $0x8] sm:$0xff]
        %v5185 = vld [vmem:[%s9] sm:$0xff]
        %v5186 = vld [vmem:[%s9 + $0x8] sm:$0xff]
        %v5187 = vld [vmem:[%s9 + $0x10] sm:$0xff]
        %v5188 = vld [vmem:[%s9 + $0x18] sm:$0xff]
        %v5189 = vld [vmem:[%s9 + $0x20] sm:$0xff]
        %v5190 = vld [vmem:[%s9 + $0x28] sm:$0xff]
        %v5191 = vld [vmem:[%s9 + $0x30] sm:$0xff]
        %v5192 = vld [vmem:[%s9 + $0x38] sm:$0xff]
        %v5193 = vld [vmem:[%s9 + $0x40] sm:$0xff]
        %v5194 = vld [vmem:[%s9 + $0x48] sm:$0xff]
        %v5195 = vld [vmem:[%s9 + $0x50] sm:$0xff]
        %v5196 = vld [vmem:[%s9 + $0x58] sm:$0xff]
        %v5197 = vld [vmem:[%s9 + $0x60] sm:$0xff]
        %v5198 = vld [vmem:[%s9 + $0x68] sm:$0xff]
        %v5199 = vld [vmem:[%s9 + $0x70] sm:$0xff]
        %v5200 = vld [vmem:[%s9 + $0x78] sm:$0xff]
        %v5201 = vld [vmem:[%s9 + $0x80] sm:$0xff]
        %v5202 = vld [vmem:[%s9 + $0x88] sm:$0xff]
        %v5203 = vld [vmem:[%s9 + $0x90] sm:$0xff]
        %v5204 = vld [vmem:[%s9 + $0x98] sm:$0xff]
        %v5206 = vsel %vm3576, %v5184, 0
        %5208 = vmatprep.subr.mxu0 0.0
        %5209 = vmatpush1.msra.mxu0 %v5185
        %5210 = vmatprep.subr.mxu0 0.0
        %5211 = vmatpush1.msra.mxu0 %v5186
        %5212 = vmatprep.subr.mxu0 0.0
        %5213 = vmatpush1.msra.mxu0 %v5187
        %5214 = vmatprep.subr.mxu0 0.0
        %5215 = vmatpush1.msra.mxu0 %v5188
        %5216 = vmatprep.subr.mxu0 0.0
        %5217 = vmatpush1.msra.mxu0 %v5189
        %5218 = vmatprep.subr.mxu0 0.0
        %5219 = vmatpush1.msra.mxu0 %v5190
        %5220 = vmatprep.subr.mxu0 0.0
        %5221 = vmatpush1.msra.mxu0 %v5191
        %5222 = vmatprep.subr.mxu0 0.0
        %5223 = vmatpush1.msra.mxu0 %v5192
        %5224 = vmatprep.subr.mxu0 0.0
        %5225 = vmatpush1.msra.mxu0 %v5193
        %5226 = vmatprep.subr.mxu0 0.0
        %5227 = vmatpush1.msra.mxu0 %v5194
        %5228 = vmatprep.subr.mxu0 0.0
        %5229 = vmatpush1.msra.mxu0 %v5195
        %5230 = vmatprep.subr.mxu0 0.0
        %5231 = vmatpush1.msra.mxu0 %v5196
        %5232 = vmatprep.subr.mxu0 0.0
        %5233 = vmatpush1.msra.mxu0 %v5197
        %5234 = vmatprep.subr.mxu0 0.0
        %5235 = vmatpush1.msra.mxu0 %v5198
        %5236 = vmatprep.subr.mxu0 0.0
        %5237 = vmatpush1.msra.mxu0 %v5199
        %5238 = vmatprep.subr.mxu0 0.0
        %5239 = vmatpush1.msra.mxu0 %v5200
        %5240 = vmatprep.subr.mxu0 0.0
        %5241 = vmatpush1.msra.mxu0 %v5201
        %5242 = vmatprep.subr.mxu0 0.0
        %5243 = vmatpush1.msra.mxu0 %v5202
        %5244 = vmatprep.subr.mxu0 0.0
        %5245 = vmatpush1.msra.mxu0 %v5203
        %5246 = vmatprep.subr.mxu0 0.0
        %5247 = vmatpush1.msra.mxu0 %v5204
        %5248 = vmatprep.subr.mxu0 0.0
        %5249 = vmatpush1.msra.mxu0 0.0
        %5250 = vmatprep.subr.mxu0 0.0
        %5251 = vmatpush1.msra.mxu0 0.0
        %5252 = vmatprep.subr.mxu0 0.0
        %5253 = vmatpush1.msra.mxu0 0.0
        %5254 = vmatprep.subr.mxu0 0.0
        %5255 = vmatpush1.msra.mxu0 0.0
        %5256 = vmatprep.subr.mxu0 0.0
        %5257 = vmatpush1.msra.mxu0 0.0
        %5258 = vmatprep.subr.mxu0 0.0
        %5259 = vmatpush1.msra.mxu0 0.0
        %5260 = vmatprep.subr.mxu0 0.0
        %5261 = vmatpush1.msra.mxu0 0.0
        %5262 = vmatprep.subr.mxu0 0.0
        %5263 = vmatpush1.msra.mxu0 0.0
        %5264 = vmatprep.subr.mxu0 0.0
        %5265 = vmatpush1.msra.mxu0 0.0
        %5266 = vmatprep.subr.mxu0 0.0
        %5267 = vmatpush1.msra.mxu0 0.0
        %5268 = vmatprep.subr.mxu0 0.0
        %5269 = vmatpush1.msra.mxu0 0.0
        %5270 = vmatprep.subr.mxu0 0.0
        %5271 = vmatpush1.msra.mxu0 0.0
        %5272 = vmatprep.mubr.f32.mxu0 %v5206
        %5273 = vmatmul.mubr.f32.gmra.mrb[0].mxu0 %v5183
        %v5274 = vpop.f32.mrb[0].mxu0
        %v5275 = vadd.f32 0.0, %v5274
        %v5276 = vpop.f32.mrb[0].mxu0
        %5277 = vdwg.mxu0
        %v5279 = vlaneseq
        %v5280 = vshrl.u32 %v5279, 7
        %v5281 = vsub.s32 0, %v5280
        %v5282 = vrot.slane %v5182, %v5281
        %v5284 = vadd.f32 %v5282, %v5275
        %v5285 = vld [vmem:[#allocation5 + $0x10] sm:$0xff]
        %v5286 = vld [vmem:[#allocation5 + $0x18] sm:$0xff]
        %v5287 = vld [vmem:[%s9 + $0xa0] sm:$0xff]
        %v5288 = vld [vmem:[%s9 + $0xa8] sm:$0xff]
        %v5289 = vld [vmem:[%s9 + $0xb0] sm:$0xff]
        %v5290 = vld [vmem:[%s9 + $0xb8] sm:$0xff]
        %v5291 = vld [vmem:[%s9 + $0xc0] sm:$0xff]
        %v5292 = vld [vmem:[%s9 + $0xc8] sm:$0xff]
        %v5293 = vld [vmem:[%s9 + $0xd0] sm:$0xff]
        %v5294 = vld [vmem:[%s9 + $0xd8] sm:$0xff]
        %v5295 = vld [vmem:[%s9 + $0xe0] sm:$0xff]
        %v5296 = vld [vmem:[%s9 + $0xe8] sm:$0xff]
        %v5297 = vld [vmem:[%s9 + $0xf0] sm:$0xff]
        %v5298 = vld [vmem:[%s9 + $0xf8] sm:$0xff]
        %v5299 = vld [vmem:[%s9 + $0x100] sm:$0xff]
        %v5300 = vld [vmem:[%s9 + $0x108] sm:$0xff]
        %v5301 = vld [vmem:[%s9 + $0x110] sm:$0xff]
        %v5302 = vld [vmem:[%s9 + $0x118] sm:$0xff]
        %v5303 = vld [vmem:[%s9 + $0x120] sm:$0xff]
        %v5304 = vld [vmem:[%s9 + $0x128] sm:$0xff]
        %v5305 = vld [vmem:[%s9 + $0x130] sm:$0xff]
        %v5306 = vld [vmem:[%s9 + $0x138] sm:$0xff]
        %v5308 = vsel %vm3576, %v5286, 0
        %5310 = vmatprep.subr.mxu0 0.0
        %5311 = vmatpush1.msra.mxu0 %v5287
        %5312 = vmatprep.subr.mxu0 0.0
        %5313 = vmatpush1.msra.mxu0 %v5288
        %5314 = vmatprep.subr.mxu0 0.0
        %5315 = vmatpush1.msra.mxu0 %v5289
        %5316 = vmatprep.subr.mxu0 0.0
        %5317 = vmatpush1.msra.mxu0 %v5290
        %5318 = vmatprep.subr.mxu0 0.0
        %5319 = vmatpush1.msra.mxu0 %v5291
        %5320 = vmatprep.subr.mxu0 0.0
        %5321 = vmatpush1.msra.mxu0 %v5292
        %5322 = vmatprep.subr.mxu0 0.0
        %5323 = vmatpush1.msra.mxu0 %v5293
        %5324 = vmatprep.subr.mxu0 0.0
        %5325 = vmatpush1.msra.mxu0 %v5294
        %5326 = vmatprep.subr.mxu0 0.0
        %5327 = vmatpush1.msra.mxu0 %v5295
        %5328 = vmatprep.subr.mxu0 0.0
        %5329 = vmatpush1.msra.mxu0 %v5296
        %5330 = vmatprep.subr.mxu0 0.0
        %5331 = vmatpush1.msra.mxu0 %v5297
        %5332 = vmatprep.subr.mxu0 0.0
        %5333 = vmatpush1.msra.mxu0 %v5298
        %5334 = vmatprep.subr.mxu0 0.0
        %5335 = vmatpush1.msra.mxu0 %v5299
        %5336 = vmatprep.subr.mxu0 0.0
        %5337 = vmatpush1.msra.mxu0 %v5300
        %5338 = vmatprep.subr.mxu0 0.0
        %5339 = vmatpush1.msra.mxu0 %v5301
        %5340 = vmatprep.subr.mxu0 0.0
        %5341 = vmatpush1.msra.mxu0 %v5302
        %5342 = vmatprep.subr.mxu0 0.0
        %5343 = vmatpush1.msra.mxu0 %v5303
        %5344 = vmatprep.subr.mxu0 0.0
        %5345 = vmatpush1.msra.mxu0 %v5304
        %5346 = vmatprep.subr.mxu0 0.0
        %5347 = vmatpush1.msra.mxu0 %v5305
        %5348 = vmatprep.subr.mxu0 0.0
        %5349 = vmatpush1.msra.mxu0 %v5306
        %5350 = vmatprep.subr.mxu0 0.0
        %5351 = vmatpush1.msra.mxu0 0.0
        %5352 = vmatprep.subr.mxu0 0.0
        %5353 = vmatpush1.msra.mxu0 0.0
        %5354 = vmatprep.subr.mxu0 0.0
        %5355 = vmatpush1.msra.mxu0 0.0
        %5356 = vmatprep.subr.mxu0 0.0
        %5357 = vmatpush1.msra.mxu0 0.0
        %5358 = vmatprep.subr.mxu0 0.0
        %5359 = vmatpush1.msra.mxu0 0.0
        %5360 = vmatprep.subr.mxu0 0.0
        %5361 = vmatpush1.msra.mxu0 0.0
        %5362 = vmatprep.subr.mxu0 0.0
        %5363 = vmatpush1.msra.mxu0 0.0
        %5364 = vmatprep.subr.mxu0 0.0
        %5365 = vmatpush1.msra.mxu0 0.0
        %5366 = vmatprep.subr.mxu0 0.0
        %5367 = vmatpush1.msra.mxu0 0.0
        %5368 = vmatprep.subr.mxu0 0.0
        %5369 = vmatpush1.msra.mxu0 0.0
        %5370 = vmatprep.subr.mxu0 0.0
        %5371 = vmatpush1.msra.mxu0 0.0
        %5372 = vmatprep.subr.mxu0 0.0
        %5373 = vmatpush1.msra.mxu0 0.0
        %5374 = vmatprep.mubr.f32.mxu0 %v5308
        %5375 = vmatmul.mubr.f32.gmra.mrb[0].mxu0 %v5285
        %v5376 = vpop.f32.mrb[0].mxu0
        %v5377 = vadd.f32 0.0, %v5376
        %v5378 = vpop.f32.mrb[0].mxu0
        %5379 = vdwg.mxu0
        %v5380 = vadd.f32 %v5284, %v5377
        %v5381 = vld [vmem:[#allocation5 + $0x20] sm:$0xff]
        %v5382 = vld [vmem:[#allocation5 + $0x28] sm:$0xff]
        %v5383 = vld [vmem:[%s9 + $0x140] sm:$0xff]
        %v5384 = vld [vmem:[%s9 + $0x148] sm:$0xff]
        %v5385 = vld [vmem:[%s9 + $0x150] sm:$0xff]
        %v5386 = vld [vmem:[%s9 + $0x158] sm:$0xff]
        %v5387 = vld [vmem:[%s9 + $0x160] sm:$0xff]
        %v5388 = vld [vmem:[%s9 + $0x168] sm:$0xff]
        %v5389 = vld [vmem:[%s9 + $0x170] sm:$0xff]
        %v5390 = vld [vmem:[%s9 + $0x178] sm:$0xff]
        %v5391 = vld [vmem:[%s9 + $0x180] sm:$0xff]
        %v5392 = vld [vmem:[%s9 + $0x188] sm:$0xff]
        %v5393 = vld [vmem:[%s9 + $0x190] sm:$0xff]
        %v5394 = vld [vmem:[%s9 + $0x198] sm:$0xff]
        %v5395 = vld [vmem:[%s9 + $0x1a0] sm:$0xff]
        %v5396 = vld [vmem:[%s9 + $0x1a8] sm:$0xff]
        %v5397 = vld [vmem:[%s9 + $0x1b0] sm:$0xff]
        %v5398 = vld [vmem:[%s9 + $0x1b8] sm:$0xff]
        %v5399 = vld [vmem:[%s9 + $0x1c0] sm:$0xff]
        %v5400 = vld [vmem:[%s9 + $0x1c8] sm:$0xff]
        %v5401 = vld [vmem:[%s9 + $0x1d0] sm:$0xff]
        %v5402 = vld [vmem:[%s9 + $0x1d8] sm:$0xff]
        %v5404 = vsel %vm3576, %v5382, 0
        %5406 = vmatprep.subr.mxu0 0.0
        %5407 = vmatpush1.msra.mxu0 %v5383
        %5408 = vmatprep.subr.mxu0 0.0
        %5409 = vmatpush1.msra.mxu0 %v5384
        %5410 = vmatprep.subr.mxu0 0.0
        %5411 = vmatpush1.msra.mxu0 %v5385
        %5412 = vmatprep.subr.mxu0 0.0
        %5413 = vmatpush1.msra.mxu0 %v5386
        %5414 = vmatprep.subr.mxu0 0.0
        %5415 = vmatpush1.msra.mxu0 %v5387
        %5416 = vmatprep.subr.mxu0 0.0
        %5417 = vmatpush1.msra.mxu0 %v5388
        %5418 = vmatprep.subr.mxu0 0.0
        %5419 = vmatpush1.msra.mxu0 %v5389
        %5420 = vmatprep.subr.mxu0 0.0
        %5421 = vmatpush1.msra.mxu0 %v5390
        %5422 = vmatprep.subr.mxu0 0.0
        %5423 = vmatpush1.msra.mxu0 %v5391
        %5424 = vmatprep.subr.mxu0 0.0
        %5425 = vmatpush1.msra.mxu0 %v5392
        %5426 = vmatprep.subr.mxu0 0.0
        %5427 = vmatpush1.msra.mxu0 %v5393
        %5428 = vmatprep.subr.mxu0 0.0
        %5429 = vmatpush1.msra.mxu0 %v5394
        %5430 = vmatprep.subr.mxu0 0.0
        %5431 = vmatpush1.msra.mxu0 %v5395
        %5432 = vmatprep.subr.mxu0 0.0
        %5433 = vmatpush1.msra.mxu0 %v5396
        %5434 = vmatprep.subr.mxu0 0.0
        %5435 = vmatpush1.msra.mxu0 %v5397
        %5436 = vmatprep.subr.mxu0 0.0
        %5437 = vmatpush1.msra.mxu0 %v5398
        %5438 = vmatprep.subr.mxu0 0.0
        %5439 = vmatpush1.msra.mxu0 %v5399
        %5440 = vmatprep.subr.mxu0 0.0
        %5441 = vmatpush1.msra.mxu0 %v5400
        %5442 = vmatprep.subr.mxu0 0.0
        %5443 = vmatpush1.msra.mxu0 %v5401
        %5444 = vmatprep.subr.mxu0 0.0
        %5445 = vmatpush1.msra.mxu0 %v5402
        %5446 = vmatprep.subr.mxu0 0.0
        %5447 = vmatpush1.msra.mxu0 0.0
        %5448 = vmatprep.subr.mxu0 0.0
        %5449 = vmatpush1.msra.mxu0 0.0
        %5450 = vmatprep.subr.mxu0 0.0
        %5451 = vmatpush1.msra.mxu0 0.0
        %5452 = vmatprep.subr.mxu0 0.0
        %5453 = vmatpush1.msra.mxu0 0.0
        %5454 = vmatprep.subr.mxu0 0.0
        %5455 = vmatpush1.msra.mxu0 0.0
        %5456 = vmatprep.subr.mxu0 0.0
        %5457 = vmatpush1.msra.mxu0 0.0
        %5458 = vmatprep.subr.mxu0 0.0
        %5459 = vmatpush1.msra.mxu0 0.0
        %5460 = vmatprep.subr.mxu0 0.0
        %5461 = vmatpush1.msra.mxu0 0.0
        %5462 = vmatprep.subr.mxu0 0.0
        %5463 = vmatpush1.msra.mxu0 0.0
        %5464 = vmatprep.subr.mxu0 0.0
        %5465 = vmatpush1.msra.mxu0 0.0
        %5466 = vmatprep.subr.mxu0 0.0
        %5467 = vmatpush1.msra.mxu0 0.0
        %5468 = vmatprep.subr.mxu0 0.0
        %5469 = vmatpush1.msra.mxu0 0.0
        %5470 = vmatprep.mubr.f32.mxu0 %v5404
        %5471 = vmatmul.mubr.f32.gmra.mrb[0].mxu0 %v5381
        %v5472 = vpop.f32.mrb[0].mxu0
        %v5473 = vadd.f32 0.0, %v5472
        %v5474 = vpop.f32.mrb[0].mxu0
        %5475 = vdwg.mxu0
        %v5476 = vadd.f32 %v5380, %v5473
        %v5477 = vld [vmem:[#allocation5 + $0x30] sm:$0xff]
        %v5478 = vld [vmem:[#allocation5 + $0x38] sm:$0xff]
        %v5479 = vld [vmem:[%s9 + $0x1e0] sm:$0xff]
        %v5480 = vld [vmem:[%s9 + $0x1e8] sm:$0xff]
        %v5481 = vld [vmem:[%s9 + $0x1f0] sm:$0xff]
        %v5482 = vld [vmem:[%s9 + $0x1f8] sm:$0xff]
        %v5483 = vld [vmem:[%s9 + $0x200] sm:$0xff]
        %v5484 = vld [vmem:[%s9 + $0x208] sm:$0xff]
        %v5485 = vld [vmem:[%s9 + $0x210] sm:$0xff]
        %v5486 = vld [vmem:[%s9 + $0x218] sm:$0xff]
        %v5487 = vld [vmem:[%s9 + $0x220] sm:$0xff]
        %v5488 = vld [vmem:[%s9 + $0x228] sm:$0xff]
        %v5489 = vld [vmem:[%s9 + $0x230] sm:$0xff]
        %v5490 = vld [vmem:[%s9 + $0x238] sm:$0xff]
        %v5491 = vld [vmem:[%s9 + $0x240] sm:$0xff]
        %v5492 = vld [vmem:[%s9 + $0x248] sm:$0xff]
        %v5493 = vld [vmem:[%s9 + $0x250] sm:$0xff]
        %v5494 = vld [vmem:[%s9 + $0x258] sm:$0xff]
        %v5495 = vld [vmem:[%s9 + $0x260] sm:$0xff]
        %v5496 = vld [vmem:[%s9 + $0x268] sm:$0xff]
        %v5497 = vld [vmem:[%s9 + $0x270] sm:$0xff]
        %v5498 = vld [vmem:[%s9 + $0x278] sm:$0xff]
        %v5500 = vsel %vm3576, %v5478, 0
        %5502 = vmatprep.subr.mxu0 0.0
        %5503 = vmatpush1.msra.mxu0 %v5479
        %5504 = vmatprep.subr.mxu0 0.0
        %5505 = vmatpush1.msra.mxu0 %v5480
        %5506 = vmatprep.subr.mxu0 0.0
        %5507 = vmatpush1.msra.mxu0 %v5481
        %5508 = vmatprep.subr.mxu0 0.0
        %5509 = vmatpush1.msra.mxu0 %v5482
        %5510 = vmatprep.subr.mxu0 0.0
        %5511 = vmatpush1.msra.mxu0 %v5483
        %5512 = vmatprep.subr.mxu0 0.0
        %5513 = vmatpush1.msra.mxu0 %v5484
        %5514 = vmatprep.subr.mxu0 0.0
        %5515 = vmatpush1.msra.mxu0 %v5485
        %5516 = vmatprep.subr.mxu0 0.0
        %5517 = vmatpush1.msra.mxu0 %v5486
        %5518 = vmatprep.subr.mxu0 0.0
        %5519 = vmatpush1.msra.mxu0 %v5487
        %5520 = vmatprep.subr.mxu0 0.0
        %5521 = vmatpush1.msra.mxu0 %v5488
        %5522 = vmatprep.subr.mxu0 0.0
        %5523 = vmatpush1.msra.mxu0 %v5489
        %5524 = vmatprep.subr.mxu0 0.0
        %5525 = vmatpush1.msra.mxu0 %v5490
        %5526 = vmatprep.subr.mxu0 0.0
        %5527 = vmatpush1.msra.mxu0 %v5491
        %5528 = vmatprep.subr.mxu0 0.0
        %5529 = vmatpush1.msra.mxu0 %v5492
        %5530 = vmatprep.subr.mxu0 0.0
        %5531 = vmatpush1.msra.mxu0 %v5493
        %5532 = vmatprep.subr.mxu0 0.0
        %5533 = vmatpush1.msra.mxu0 %v5494
        %5534 = vmatprep.subr.mxu0 0.0
        %5535 = vmatpush1.msra.mxu0 %v5495
        %5536 = vmatprep.subr.mxu0 0.0
        %5537 = vmatpush1.msra.mxu0 %v5496
        %5538 = vmatprep.subr.mxu0 0.0
        %5539 = vmatpush1.msra.mxu0 %v5497
        %5540 = vmatprep.subr.mxu0 0.0
        %5541 = vmatpush1.msra.mxu0 %v5498
        %5542 = vmatprep.subr.mxu0 0.0
        %5543 = vmatpush1.msra.mxu0 0.0
        %5544 = vmatprep.subr.mxu0 0.0
        %5545 = vmatpush1.msra.mxu0 0.0
        %5546 = vmatprep.subr.mxu0 0.0
        %5547 = vmatpush1.msra.mxu0 0.0
        %5548 = vmatprep.subr.mxu0 0.0
        %5549 = vmatpush1.msra.mxu0 0.0
        %5550 = vmatprep.subr.mxu0 0.0
        %5551 = vmatpush1.msra.mxu0 0.0
        %5552 = vmatprep.subr.mxu0 0.0
        %5553 = vmatpush1.msra.mxu0 0.0
        %5554 = vmatprep.subr.mxu0 0.0
        %5555 = vmatpush1.msra.mxu0 0.0
        %5556 = vmatprep.subr.mxu0 0.0
        %5557 = vmatpush1.msra.mxu0 0.0
        %5558 = vmatprep.subr.mxu0 0.0
        %5559 = vmatpush1.msra.mxu0 0.0
        %5560 = vmatprep.subr.mxu0 0.0
        %5561 = vmatpush1.msra.mxu0 0.0
        %5562 = vmatprep.subr.mxu0 0.0
        %5563 = vmatpush1.msra.mxu0 0.0
        %5564 = vmatprep.subr.mxu0 0.0
        %5565 = vmatpush1.msra.mxu0 0.0
        %5566 = vmatprep.mubr.f32.mxu0 %v5500
        %5567 = vmatmul.mubr.f32.gmra.mrb[0].mxu0 %v5477
        %v5568 = vpop.f32.mrb[0].mxu0
        %v5569 = vadd.f32 0.0, %v5568
        %v5570 = vpop.f32.mrb[0].mxu0
        %5571 = vdwg.mxu0
        %v5572 = vadd.f32 %v5476, %v5569
        %v5573 = vld [vmem:[#allocation5 + $0x40] sm:$0xff]
        %v5574 = vld [vmem:[#allocation5 + $0x48] sm:$0xff]
        %v5575 = vld [vmem:[%s9 + $0x280] sm:$0xff]
        %v5576 = vld [vmem:[%s9 + $0x288] sm:$0xff]
        %v5577 = vld [vmem:[%s9 + $0x290] sm:$0xff]
        %v5578 = vld [vmem:[%s9 + $0x298] sm:$0xff]
        %v5579 = vld [vmem:[%s9 + $0x2a0] sm:$0xff]
        %v5580 = vld [vmem:[%s9 + $0x2a8] sm:$0xff]
        %v5581 = vld [vmem:[%s9 + $0x2b0] sm:$0xff]
        %v5582 = vld [vmem:[%s9 + $0x2b8] sm:$0xff]
        %v5583 = vld [vmem:[%s9 + $0x2c0] sm:$0xff]
        %v5584 = vld [vmem:[%s9 + $0x2c8] sm:$0xff]
        %v5585 = vld [vmem:[%s9 + $0x2d0] sm:$0xff]
        %v5586 = vld [vmem:[%s9 + $0x2d8] sm:$0xff]
        %v5587 = vld [vmem:[%s9 + $0x2e0] sm:$0xff]
        %v5588 = vld [vmem:[%s9 + $0x2e8] sm:$0xff]
        %v5589 = vld [vmem:[%s9 + $0x2f0] sm:$0xff]
        %v5590 = vld [vmem:[%s9 + $0x2f8] sm:$0xff]
        %v5591 = vld [vmem:[%s9 + $0x300] sm:$0xff]
        %v5592 = vld [vmem:[%s9 + $0x308] sm:$0xff]
        %v5593 = vld [vmem:[%s9 + $0x310] sm:$0xff]
        %v5594 = vld [vmem:[%s9 + $0x318] sm:$0xff]
        %v5596 = vsel %vm3576, %v5574, 0
        %5598 = vmatprep.subr.mxu0 0.0
        %5599 = vmatpush1.msra.mxu0 %v5575
        %5600 = vmatprep.subr.mxu0 0.0
        %5601 = vmatpush1.msra.mxu0 %v5576
        %5602 = vmatprep.subr.mxu0 0.0
        %5603 = vmatpush1.msra.mxu0 %v5577
        %5604 = vmatprep.subr.mxu0 0.0
        %5605 = vmatpush1.msra.mxu0 %v5578
        %5606 = vmatprep.subr.mxu0 0.0
        %5607 = vmatpush1.msra.mxu0 %v5579
        %5608 = vmatprep.subr.mxu0 0.0
        %5609 = vmatpush1.msra.mxu0 %v5580
        %5610 = vmatprep.subr.mxu0 0.0
        %5611 = vmatpush1.msra.mxu0 %v5581
        %5612 = vmatprep.subr.mxu0 0.0
        %5613 = vmatpush1.msra.mxu0 %v5582
        %5614 = vmatprep.subr.mxu0 0.0
        %5615 = vmatpush1.msra.mxu0 %v5583
        %5616 = vmatprep.subr.mxu0 0.0
        %5617 = vmatpush1.msra.mxu0 %v5584
        %5618 = vmatprep.subr.mxu0 0.0
        %5619 = vmatpush1.msra.mxu0 %v5585
        %5620 = vmatprep.subr.mxu0 0.0
        %5621 = vmatpush1.msra.mxu0 %v5586
        %5622 = vmatprep.subr.mxu0 0.0
        %5623 = vmatpush1.msra.mxu0 %v5587
        %5624 = vmatprep.subr.mxu0 0.0
        %5625 = vmatpush1.msra.mxu0 %v5588
        %5626 = vmatprep.subr.mxu0 0.0
        %5627 = vmatpush1.msra.mxu0 %v5589
        %5628 = vmatprep.subr.mxu0 0.0
        %5629 = vmatpush1.msra.mxu0 %v5590
        %5630 = vmatprep.subr.mxu0 0.0
        %5631 = vmatpush1.msra.mxu0 %v5591
        %5632 = vmatprep.subr.mxu0 0.0
        %5633 = vmatpush1.msra.mxu0 %v5592
        %5634 = vmatprep.subr.mxu0 0.0
        %5635 = vmatpush1.msra.mxu0 %v5593
        %5636 = vmatprep.subr.mxu0 0.0
        %5637 = vmatpush1.msra.mxu0 %v5594
        %5638 = vmatprep.subr.mxu0 0.0
        %5639 = vmatpush1.msra.mxu0 0.0
        %5640 = vmatprep.subr.mxu0 0.0
        %5641 = vmatpush1.msra.mxu0 0.0
        %5642 = vmatprep.subr.mxu0 0.0
        %5643 = vmatpush1.msra.mxu0 0.0
        %5644 = vmatprep.subr.mxu0 0.0
        %5645 = vmatpush1.msra.mxu0 0.0
        %5646 = vmatprep.subr.mxu0 0.0
        %5647 = vmatpush1.msra.mxu0 0.0
        %5648 = vmatprep.subr.mxu0 0.0
        %5649 = vmatpush1.msra.mxu0 0.0
        %5650 = vmatprep.subr.mxu0 0.0
        %5651 = vmatpush1.msra.mxu0 0.0
        %5652 = vmatprep.subr.mxu0 0.0
        %5653 = vmatpush1.msra.mxu0 0.0
        %5654 = vmatprep.subr.mxu0 0.0
        %5655 = vmatpush1.msra.mxu0 0.0
        %5656 = vmatprep.subr.mxu0 0.0
        %5657 = vmatpush1.msra.mxu0 0.0
        %5658 = vmatprep.subr.mxu0 0.0
        %5659 = vmatpush1.msra.mxu0 0.0
        %5660 = vmatprep.subr.mxu0 0.0
        %5661 = vmatpush1.msra.mxu0 0.0
        %5662 = vmatprep.mubr.f32.mxu0 %v5596
        %5663 = vmatmul.mubr.f32.gmra.mrb[0].mxu0 %v5573
        %v5664 = vpop.f32.mrb[0].mxu0
        %v5665 = vadd.f32 0.0, %v5664
        %v5666 = vpop.f32.mrb[0].mxu0
        %5667 = vdwg.mxu0
        %v5668 = vadd.f32 %v5572, %v5665
        %v5669 = vsel %vm3576, %v5668, 0.0
        %5670 = vadd.xlane.f32.xlu0 %v5669
        %v5671 = vpop.xlane.xlu0 %5670
        %v5672 = vrcp.pop 32.0
        %v5673 = vmul.f32 %v5671, %v5672
        %v5674 = vsub.f32 %v5668, %v5673
        %v5675 = vmul.f32 %v5674, %v5674
        %v5676 = vsel %vm3576, %v5675, 0.0
        %5677 = vadd.xlane.f32.xlu0 %v5676
        %v5678 = vpop.xlane.xlu0 %5677
        %v5679 = vmul.f32 %v5678, %v5672
        %v5680 = vadd.f32 %v5679, 1e-05
        %v5681 = vrsqrt.pop %v5680
        %v5682 = vmul.f32 %v5674, %v5681
        %v5683 = vld [vmem:[%s11] sm:$0x1]
        %v5685 = vlaneseq
        %v5686 = vshrl.u32 %v5685, 7
        %v5687 = vsub.s32 0, %v5686
        %v5688 = vrot.slane %v5683, %v5687
        %v5690 = vmul.f32 %v5682, %v5688
        %v5691 = vld [vmem:[%s12] sm:$0x1]
        %v5693 = vlaneseq
        %v5694 = vshrl.u32 %v5693, 7
        %v5695 = vsub.s32 0, %v5694
        %v5696 = vrot.slane %v5691, %v5695
        %v5698 = vadd.f32 %v5690, %v5696
        %v5699 = vtanh.pop %v5698
        %5700 = vst.msk [vmem:[%s436] sm:$0xff] %vm3576, %v5699
        %s5701 = sand.u32 %s313, 1
        %s5702 = scalar_lea.sflag [#allocation7], %s5701
        %s5703 = sand.u32 %s313, 1
        %s5704 = smul.addr %s5703, 8
        %s5705 = scalar_lea.vmem [#allocation6], %s5704
        // Predicated region
        $region73: #{encoder_forward.1} parent=71 // pred_check
          %p5706 = pneg %p323
        $region74: #{encoder_forward.1} parent=71 // pred_check_branch
          %5708 = sbr.rel (%p5706) target = $region76
        $region75: #{encoder_forward.1} parent=71 // pred_region
          %s5710 = ssub.s32 128, 128
          %5711 = vsyncadd %s5702, %s5710
          %s5712 = smul.addr %s27, 128
          %s5713 = scalar_lea.hbm %s13, %s5712
          %s5715 = sshll.u32 %s5705, 4
          %s5716 = int_to_ptr.vmem [resolvable:$true] %s5715
          %5718 = dma.vmem_to_hbm [thread:$0]  %s5716, 128, %s5713, %s5702
        $region76: #{encoder_forward.1} parent=71 // pred_fallthru
          _
      $region72: #{encoder_forward.1} parent=5 // pred_fallthru
        _
      %p5719 = scmp.le.s32.totalorder 2, %s22
      // Predicated region
      $region77: #{encoder_forward.1} parent=5 // pred_check
        %p5720 = pneg %p5719
      $region78: #{encoder_forward.1} parent=5 // pred_check_branch
        %5722 = sbr.rel (%p5720) target = $region80
      $region79: #{encoder_forward.1} parent=5 // pred_region
        %s5723 = ssub.s32 %s22, 2
        // Predicated region
        $region81: #{encoder_forward.1} parent=79 // pred_check
          %p5724 = pneg %p329
        $region82: #{encoder_forward.1} parent=79 // pred_check_branch
          %5726 = sbr.rel (%p5724) target = $region84
        $region83: #{encoder_forward.1} parent=79 // pred_region
          %s5727 = sand.u32 %s314, 1
          %s5728 = scalar_lea.sflag [#allocation7], %s5727
          %s5729 = sand.u32 %s314, 1
          %s5730 = smul.addr %s5729, 8
          %s5731 = scalar_lea.vmem [#allocation6], %s5730
          %5732 = dma.done %s5728, 128
        $region84: #{encoder_forward.1} parent=79 // pred_fallthru
          _
      $region80: #{encoder_forward.1} parent=5 // pred_fallthru
        _
    $region6: #{encoder_forward.1} parent=1 // loop_footer
      %s26 = sadd.s32 1, %s22
    $region7: #{encoder_forward.1} parent=1 // loop_footer_branch
      %21 = sbr.rel target = $region3
    $region8: #{encoder_forward.1} parent=1 // loop_exit
      _
    %5733 = vsyncpa [#allocation7], 1
    %s5734 = scalar_lea.sflag [#allocation7], 1
    %5735 = vsyncpa %s5734, 1

</llo_original>
